<compile_context>
chip_gen: v5e
topology: v5e:2x2
jax: 0.10.0
libtpu: 0.0.40
codegen_flags: <defaults>
</compile_context>

<pallas_src>
import math
import numpy as np

import jax
import jax.numpy as jnp
from jax.experimental import pallas as pl
from jax.experimental.pallas import tpu as pltpu

# ---------------- model hyper-parameters (module defaults) -------------------
NUM_FILTERS = 100
FILTER_SIZES = (3, 4, 5)
BANK_ORDER = (3, 5, 4)           # lane-block order in the merged conv (3 & 5 share bins)
D_MODEL = 128
NUM_HEADS = 4
HEAD_DIM = D_MODEL // NUM_HEADS
NUM_CLASSES = 2
POOL_OUT = 50                    # AdaptiveMaxPool1d(50)

F_PAD = 128                      # filters padded 100 -> 128 (lane-dense)
OUT_PAD = 128                    # classifier output padded 2 -> 128 (lane-dense store)
MAX_PAD = max(fs // 2 for fs in FILTER_SIZES)
VOCAB_PAD = 64                   # vocab padded 50 -> 64 for the one-hot matmul

# ---------------- small example shapes ---------------------------------------
BATCH = 2
SEQ_LEN = 64
VOCAB = 50
EMBED_DIM = 32


def _round8(n):
    return ((n + 7) // 8) * 8


def adaptive_pool_bins(l_in, l_out=POOL_OUT):
    """PyTorch AdaptiveMaxPool1d bin boundaries (static python ints)."""
    assert l_in >= l_out, "adaptive pool would produce empty bins"
    return [((i * l_in) // l_out, math.ceil((i + 1) * l_in / l_out))
            for i in range(l_out)]


def merged_layout(seq_len):
    """Static layout of the merged (block-diagonal) conv + pooling stage."""
    banks, k_off, lane_off = [], 0, 0
    for fs in BANK_ORDER:
        pad = fs // 2
        l_out = seq_len + 2 * pad - fs + 1          # PyTorch Conv1d(padding=fs//2)
        banks.append(dict(fs=fs, l_out=l_out,
                          shifts=[MAX_PAD - pad + t for t in range(fs)],
                          k_off=k_off, lane_off=lane_off))
        k_off += fs * EMBED_DIM
        lane_off += F_PAD
    lp_rows = _round8(max(b['l_out'] for b in banks))       # common padded l_out
    max_shift = max(max(b['shifts']) for b in banks)
    xe_len = _round8(max(seq_len + 2 * MAX_PAD, max_shift + lp_rows))
    wmax = max(max(e - s for s, e in adaptive_pool_bins(b['l_out'])) for b in banks)
    # group adjacent banks that share identical pooling bins -> shared selection matmul
    groups = []
    for b in banks:
        if groups and groups[-1]['l_out'] == b['l_out']:
            groups[-1]['lanes'] += F_PAD
        else:
            groups.append(dict(l_out=b['l_out'], lane_off=b['lane_off'], lanes=F_PAD))
    return dict(banks=banks, groups=groups, lp=lp_rows, xe_len=xe_len, wmax=wmax,
                msel=wmax * lp_rows, k_tot=k_off, n_lanes=lane_off)


# =============================================================================
# Fused kernel: embedding -> merged conv -> pool -> linear -> MHA -> mean -> fc
# (B_TILE batch elements per grid step, batch folded into matmul M)
# =============================================================================
def make_fused_kernel(b_tile, seq_len, lay):
    LP, XE, WMAX = lay['lp'], lay['xe_len'], lay['wmax']
    K_TOT, N_LANES, MSEL = lay['k_tot'], lay['n_lanes'], lay['msel']
    banks, groups = lay['banks'], lay['groups']
    n_groups = len(groups)
    BL = b_tile * seq_len
    scale = 1.0 / math.sqrt(HEAD_DIM)

    def kernel(tok_ref, table_ref, wconv_ref, bconv_ref, *rest):
        sel_refs = rest[:n_groups]
        (wc_ref, bc_ref, wqkv_ref, bqkv_ref,
         wo_ref, bo_ref, wfc_ref, bfc_ref, out_ref) = rest[n_groups:]

        # ---- embedding lookup: one-hot matmul, all B_TILE*L tokens in M -----
        tok = tok_ref[0]                                            # (BL, 1) int32
        iota = jax.lax.broadcasted_iota(jnp.int32, (BL, VOCAB_PAD), 1)
        onehot = jnp.where(iota == tok, 1.0, 0.0).astype(jnp.bfloat16)
        emb = jnp.dot(onehot, table_ref[...],
                      preferred_element_type=jnp.float32)           # (BL, E), exact bf16 vals
        emb3 = emb.reshape(b_tile, seq_len, EMBED_DIM)

        # ---- zero-padded sequence; shifted views hoisted (5 instead of 12) --
        xe = jnp.concatenate(
            [jnp.zeros((b_tile, MAX_PAD, EMBED_DIM), jnp.float32),
             emb3,
             jnp.zeros((b_tile, XE - seq_len - MAX_PAD, EMBED_DIM), jnp.float32)],
            axis=1)                                                 # (B, XE, E)
        n_shift = max(max(b['shifts']) for b in banks) + 1
        sh = [xe[:, k:k + LP, :] for k in range(n_shift)]

        # ---- ALL conv banks as ONE block-diagonal im2col matmul + ReLU ------
        cols = jnp.concatenate([sh[s] for b in banks for s in b['shifts']],
                               axis=2)                              # (B, LP, K_TOT)
        cols2 = cols.reshape(b_tile * LP, K_TOT).astype(jnp.bfloat16)
        y = jnp.maximum(
            jnp.dot(cols2, wconv_ref[...], preferred_element_type=jnp.float32)
            + bconv_ref[...], 0.0)                                  # (B*LP, 384)
        y3 = y.reshape(b_tile, LP, N_LANES)

        # ---- adaptive max pool: running window maxes + selection matmuls ----
        # (rows >= l_out hold junk from the shared padding, but the selection
        #  matrices only ever pick in-range windows, so they never leak in)
        y_ext = jnp.concatenate(
            [y3, jnp.zeros((b_tile, WMAX - 1, N_LANES), jnp.float32)], axis=1)
        parts, cur = [y3], y3
        for w in range(2, WMAX + 1):
            cur = jnp.maximum(cur, y_ext[:, w - 1:w - 1 + LP, :])
            parts.append(cur)
        mm = jnp.concatenate(parts, axis=1).astype(jnp.bfloat16)    # (B, MSEL, 384)

        pooled_parts = []
        for grp, s_ref in zip(groups, sel_refs):
            selb = jnp.broadcast_to(s_ref[...], (b_tile, POOL_OUT, MSEL))
            blk = mm[:, :, grp['lane_off']:grp['lane_off'] + grp['lanes']]
            pooled_parts.append(
                jnp.einsum('bpm,bmf->bpf', selb, blk,
                           preferred_element_type=jnp.float32))     # (B, 50, lanes)
        pooled = jnp.concatenate(pooled_parts, axis=2)              # (B, 50, 384)
        feat = jnp.concatenate([pooled[b] for b in range(b_tile)], axis=0)  # (B*50, 384)

        # ---- cnn_to_attention + fused qkv projection (batch folded into M) --
        h = jnp.dot(feat.astype(jnp.bfloat16), wc_ref[...],
                    preferred_element_type=jnp.float32) + bc_ref[...]        # (B*50, 128)
        z = jnp.dot(h.astype(jnp.bfloat16), wqkv_ref[...],
                    preferred_element_type=jnp.float32) + bqkv_ref[...]      # (B*50, 384)
        q = (z[:, 0 * D_MODEL:1 * D_MODEL] * scale).astype(jnp.bfloat16)
        k = z[:, 1 * D_MODEL:2 * D_MODEL].astype(jnp.bfloat16)
        v = z[:, 2 * D_MODEL:3 * D_MODEL].astype(jnp.bfloat16)

        # ---- multi-head attention, (batch, head) folded into one einsum batch
        def split(t):   # (B*50, 128) -> (B*H, 50, HEAD_DIM)
            return jnp.stack(
                [t[b * POOL_OUT:(b + 1) * POOL_OUT, hh * HEAD_DIM:(hh + 1) * HEAD_DIM]
                 for b in range(b_tile) for hh in range(NUM_HEADS)], axis=0)

        qh, kh, vh = split(q), split(k), split(v)
        s = jnp.einsum('zqd,zkd->zqk', qh, kh,
                       preferred_element_type=jnp.float32)          # (B*H, 50, 50)
        m = jnp.max(s, axis=-1, keepdims=True)
        p = jnp.exp(s - m)
        p = p * pl.reciprocal(jnp.sum(p, axis=-1, keepdims=True), approx=True)
        ctx = jnp.einsum('zqk,zkd->zqd', p.astype(jnp.bfloat16), vh,
                         preferred_element_type=jnp.float32)        # (B*H, 50, 32)
        ctx2 = jnp.concatenate(
            [jnp.concatenate([ctx[b * NUM_HEADS + hh] for hh in range(NUM_HEADS)], axis=1)
             for b in range(b_tile)], axis=0)                       # (B*50, 128)

        attn = jnp.dot(ctx2.astype(jnp.bfloat16), wo_ref[...],
                       preferred_element_type=jnp.float32) + bo_ref[...]     # (B*50, 128)

        # ---- mean over sequence (1/50 folded into fc weights) + classifier --
        g = jnp.concatenate(
            [jnp.sum(attn[b * POOL_OUT:(b + 1) * POOL_OUT, :], axis=0, keepdims=True)
             for b in range(b_tile)], axis=0)                       # (B, 128)
        out_ref[...] = jnp.dot(g.astype(jnp.bfloat16), wfc_ref[...],
                               preferred_element_type=jnp.float32) + bfc_ref[...]

    return kernel


def forward(tokens, kernel_args):
    B, L = tokens.shape
    lay = merged_layout(L)
    assert len(kernel_args) == 11 + len(lay['groups'])

    # Batch tiling: whole batch in a single grid step when small (single-TC chips
    # pay pure step overhead for extra steps); otherwise tiles of 8 with an even
    # number of steps so both v7x TensorCores get work.
    if B <= 16:
        b_tile, n_tiles = B, 1
    else:
        b_tile = 8
        n_tiles = pl.cdiv(B, b_tile)
        if n_tiles % 2:
            n_tiles += 1
    b_pad = b_tile * n_tiles

    tok = tokens.astype(jnp.int32)
    if b_pad != B:
        tok = jnp.concatenate([tok, jnp.zeros((b_pad - B, L), jnp.int32)], axis=0)
    tok3 = tok.reshape(n_tiles, b_tile * L, 1)

    kernel = make_fused_kernel(b_tile, L, lay)
    ins = [tok3] + list(kernel_args)

    def full_spec(a):
        zeros = (0,) * a.ndim
        return pl.BlockSpec(a.shape, lambda t, _z=zeros: _z)

    in_specs = [pl.BlockSpec((1, b_tile * L, 1), lambda t: (t, 0, 0))]
    in_specs += [full_spec(a) for a in kernel_args]

    per_elem_macs = (
        L * VOCAB_PAD * EMBED_DIM                       # embedding one-hot matmul
        + lay['lp'] * lay['k_tot'] * lay['n_lanes']     # merged block-diag conv
        + POOL_OUT * lay['msel'] * lay['n_lanes']       # pooling selection matmuls
        + POOL_OUT * lay['n_lanes'] * D_MODEL           # cnn_to_attention
        + POOL_OUT * D_MODEL * 3 * D_MODEL              # qkv projection
        + 2 * NUM_HEADS * POOL_OUT * POOL_OUT * HEAD_DIM  # scores + context
        + POOL_OUT * D_MODEL * D_MODEL                  # output projection
        + D_MODEL * OUT_PAD)                            # classifier
    n_bytes = sum(int(a.size) * a.dtype.itemsize for a in ins) + b_pad * OUT_PAD * 4

    out = pl.pallas_call(
        kernel,
        out_shape=jax.ShapeDtypeStruct((b_pad, OUT_PAD), jnp.float32),
        grid=(n_tiles,),
        in_specs=in_specs,
        out_specs=pl.BlockSpec((b_tile, OUT_PAD), lambda t: (t, 0)),
        compiler_params=pltpu.CompilerParams(
            dimension_semantics=("parallel",)),          # both TCs on v7x
        cost_estimate=pl.CostEstimate(
            flops=2 * per_elem_macs * b_pad,
            transcendentals=b_pad * NUM_HEADS * POOL_OUT * POOL_OUT,
            bytes_accessed=n_bytes),
    )(*ins)
    return out[:B, :NUM_CLASSES]


# =============================================================================
# Parameters: logical (PyTorch layouts) + kernel-side padded/transposed copies
# =============================================================================
def init_logical_params(key):
    """Parameters in PyTorch layouts (Linear: (out,in); Conv1d: (F,E,fs))."""
    ks = jax.random.split(key, 16)
    f3 = NUM_FILTERS * len(FILTER_SIZES)
    p = {
        'emb': 0.1 * jax.random.normal(ks[0], (VOCAB, EMBED_DIM), jnp.float32),
        'conv_w': {}, 'conv_b': {},
        'wc': 0.05 * jax.random.normal(ks[1], (D_MODEL, f3), jnp.float32),
        'bc': 0.01 * jax.random.normal(ks[2], (D_MODEL,), jnp.float32),
        'wqkv': 0.05 * jax.random.normal(ks[3], (3 * D_MODEL, D_MODEL), jnp.float32),
        'bqkv': 0.01 * jax.random.normal(ks[4], (3 * D_MODEL,), jnp.float32),
        'wo': 0.05 * jax.random.normal(ks[5], (D_MODEL, D_MODEL), jnp.float32),
        'bo': 0.01 * jax.random.normal(ks[6], (D_MODEL,), jnp.float32),
        'wfc': 0.05 * jax.random.normal(ks[7], (NUM_CLASSES, D_MODEL), jnp.float32),
        'bfc': 0.01 * jax.random.normal(ks[8], (NUM_CLASSES,), jnp.float32),
    }
    for i, fs in enumerate(FILTER_SIZES):
        p['conv_w'][fs] = 0.05 * jax.random.normal(
            ks[9 + 2 * i], (NUM_FILTERS, EMBED_DIM, fs), jnp.float32)
        p['conv_b'][fs] = 0.01 * jax.random.normal(
            ks[10 + 2 * i], (NUM_FILTERS,), jnp.float32)
    return p


def prepare_kernel_args(lp, seq_len):
    """Pad / transpose / bf16-cast logical params into lane-dense kernel operands."""
    lay = merged_layout(seq_len)
    LP, MSEL, K_TOT, N_LANES = lay['lp'], lay['msel'], lay['k_tot'], lay['n_lanes']

    # embedding table, vocab padded 50 -> 64 (ids >= VOCAB map to zero embedding)
    emb = np.zeros((VOCAB_PAD, EMBED_DIM), np.float32)
    emb[:VOCAB] = np.asarray(lp['emb'])

    # merged block-diagonal im2col conv weight: W[k_off + k*E + e, lane_off + f] = w[f,e,k]
    wconv = np.zeros((K_TOT, N_LANES), np.float32)
    bconv = np.zeros((1, N_LANES), np.float32)
    for b in lay['banks']:
        fs = b['fs']
        w = np.asarray(lp['conv_w'][fs])                           # (F, E, fs)
        w2 = np.transpose(w, (2, 1, 0)).reshape(fs * EMBED_DIM, NUM_FILTERS)
        wconv[b['k_off']:b['k_off'] + fs * EMBED_DIM,
              b['lane_off']:b['lane_off'] + NUM_FILTERS] = w2
        bconv[0, b['lane_off']:b['lane_off'] + NUM_FILTERS] = np.asarray(lp['conv_b'][fs])

    # static 0/1 selection matrices, one per group of banks sharing pool bins
    sels = []
    for grp in lay['groups']:
        sel = np.zeros((POOL_OUT, MSEL), np.float32)
        for i, (s, e) in enumerate(adaptive_pool_bins(grp['l_out'])):
            sel[i, (e - s - 1) * LP + s] = 1.0
        sels.append(jnp.asarray(sel, jnp.bfloat16))

    # cnn_to_attention (300 -> 128): rows re-indexed from PyTorch (3,4,5)x100 order
    # into the kernel's padded BANK_ORDER x 128 lane order
    wc_t = np.asarray(lp['wc']).T                                  # (300, 128)
    wcp = np.zeros((N_LANES, D_MODEL), np.float32)
    orig_off = {fs: i * NUM_FILTERS for i, fs in enumerate(FILTER_SIZES)}
    for b in lay['banks']:
        wcp[b['lane_off']:b['lane_off'] + NUM_FILTERS] = \
            wc_t[orig_off[b['fs']]:orig_off[b['fs']] + NUM_FILTERS]

    # classifier: mean-over-sequence (1/POOL_OUT) folded in, padded to 128 lanes
    wfc = np.zeros((D_MODEL, OUT_PAD), np.float32)
    wfc[:, :NUM_CLASSES] = np.asarray(lp['wfc']).T / float(POOL_OUT)
    bfc = np.zeros((1, OUT_PAD), np.float32)
    bfc[0, :NUM_CLASSES] = np.asarray(lp['bfc'])

    bf = lambda a: jnp.asarray(a, jnp.bfloat16)
    f32 = lambda a: jnp.asarray(a, jnp.float32)
    args = [bf(emb), bf(wconv), f32(bconv)] + sels + [
        bf(wcp), f32(np.asarray(lp['bc']).reshape(1, D_MODEL)),
        bf(np.asarray(lp['wqkv']).T), f32(np.asarray(lp['bqkv']).reshape(1, 3 * D_MODEL)),
        bf(np.asarray(lp['wo']).T), f32(np.asarray(lp['bo']).reshape(1, D_MODEL)),
        bf(wfc), f32(bfc)]
    return args


# =============================================================================
# Pure-JAX reference of the PyTorch forward (eval mode), for a sanity check
# =============================================================================
def reference_forward(tokens, lp):
    with jax.default_matmul_precision("float32"):
        emb = jnp.take(lp['emb'], tokens, axis=0)                  # (B, L, E)
        x = jnp.transpose(emb, (0, 2, 1))                          # (B, E, L)
        feats = []
        for fs in FILTER_SIZES:
            p = fs // 2
            y = jax.lax.conv_general_dilated(
                x, lp['conv_w'][fs], window_strides=(1,), padding=[(p, p)],
                dimension_numbers=('NCH', 'OIH', 'NCH'))
            y = jax.nn.relu(y + lp['conv_b'][fs][None, :, None])   # (B, F, l_out)
            bins = adaptive_pool_bins(y.shape[-1])
            feats.append(jnp.stack([jnp.max(y[..., s:e], axis=-1)
                                    for s, e in bins], axis=-1))   # (B, F, 50)
        cnn = jnp.transpose(jnp.concatenate(feats, axis=1), (0, 2, 1))   # (B, 50, 300)
        h = cnn @ lp['wc'].T + lp['bc']                            # (B, 50, 128)
        qkv = h @ lp['wqkv'].T + lp['bqkv']
        q, k, v = jnp.split(qkv, 3, axis=-1)
        B, S, _ = q.shape

        def split_heads(t):
            return t.reshape(B, S, NUM_HEADS, HEAD_DIM).transpose(0, 2, 1, 3)

        qh, kh, vh = split_heads(q), split_heads(k), split_heads(v)
        s = jnp.einsum('bhqd,bhkd->bhqk', qh, kh) / math.sqrt(HEAD_DIM)
        p = jax.nn.softmax(s, axis=-1)
        ctx = jnp.einsum('bhqk,bhkd->bhqd', p, vh)
        ctx = ctx.transpose(0, 2, 1, 3).reshape(B, S, D_MODEL)
        attn = ctx @ lp['wo'].T + lp['bo']
        g = attn.mean(axis=1)
        return g @ lp['wfc'].T + lp['bfc']


if __name__ == "__main__":
    key = jax.random.PRNGKey(0)
    pkey, xkey = jax.random.split(key)
    lp = init_logical_params(pkey)
    tokens = jax.random.randint(xkey, (BATCH, SEQ_LEN), 0, VOCAB, dtype=jnp.int32)

    kargs = prepare_kernel_args(lp, SEQ_LEN)
    logits = jax.jit(forward)(tokens, kargs)
    jax.block_until_ready(logits)

    assert logits.shape == (BATCH, NUM_CLASSES)
    assert bool(jnp.all(jnp.isfinite(logits)))
    ref = reference_forward(tokens, lp)
    # bf16 weights/activations + approx softmax reciprocal -> ~1% relative deviation
    assert bool(jnp.allclose(logits, ref, rtol=2e-2, atol=2e-3)), (logits, ref)
    print("KERNEL_OK")
</pallas_src>

<mosaic_0001>
module attributes {stable_mosaic.version = 11 : i64} {
  func.func @kernel(%arg0: i32, %arg1: memref<1x128x1xi32, #tpu.memory_space<vmem>>, %arg2: memref<64x32xbf16, #tpu.memory_space<vmem>>, %arg3: memref<384x384xbf16, #tpu.memory_space<vmem>>, %arg4: memref<1x384xf32, #tpu.memory_space<vmem>>, %arg5: memref<50x216xbf16, #tpu.memory_space<vmem>>, %arg6: memref<50x216xbf16, #tpu.memory_space<vmem>>, %arg7: memref<384x128xbf16, #tpu.memory_space<vmem>>, %arg8: memref<1x128xf32, #tpu.memory_space<vmem>>, %arg9: memref<128x384xbf16, #tpu.memory_space<vmem>>, %arg10: memref<1x384xf32, #tpu.memory_space<vmem>>, %arg11: memref<128x128xbf16, #tpu.memory_space<vmem>>, %arg12: memref<1x128xf32, #tpu.memory_space<vmem>>, %arg13: memref<128x128xbf16, #tpu.memory_space<vmem>>, %arg14: memref<1x128xf32, #tpu.memory_space<vmem>>, %arg15: memref<2x128xf32, #tpu.memory_space<vmem>>) attributes {dimension_semantics = [#tpu.dimension_semantics<parallel>], iteration_bounds = array<i64: 1>, scalar_prefetch = 0 : i64, scratch_operands = 0 : i64, tpu.core_type = #tpu.core_type<tc>, window_params = [{transform_indices = @transform_0, window_bounds = array<i64: 1, 128, 1>}, {pipeline_mode = #tpu.pipeline_mode<synchronous>, transform_indices = @transform_1, window_bounds = array<i64: 64, 32>}, {pipeline_mode = #tpu.pipeline_mode<synchronous>, transform_indices = @transform_2, window_bounds = array<i64: 384, 384>}, {pipeline_mode = #tpu.pipeline_mode<synchronous>, transform_indices = @transform_3, window_bounds = array<i64: 1, 384>}, {pipeline_mode = #tpu.pipeline_mode<synchronous>, transform_indices = @transform_4, window_bounds = array<i64: 50, 216>}, {pipeline_mode = #tpu.pipeline_mode<synchronous>, transform_indices = @transform_5, window_bounds = array<i64: 50, 216>}, {pipeline_mode = #tpu.pipeline_mode<synchronous>, transform_indices = @transform_6, window_bounds = array<i64: 384, 128>}, {pipeline_mode = #tpu.pipeline_mode<synchronous>, transform_indices = @transform_7, window_bounds = array<i64: 1, 128>}, {pipeline_mode = #tpu.pipeline_mode<synchronous>, transform_indices = @transform_8, window_bounds = array<i64: 128, 384>}, {pipeline_mode = #tpu.pipeline_mode<synchronous>, transform_indices = @transform_9, window_bounds = array<i64: 1, 384>}, {pipeline_mode = #tpu.pipeline_mode<synchronous>, transform_indices = @transform_10, window_bounds = array<i64: 128, 128>}, {pipeline_mode = #tpu.pipeline_mode<synchronous>, transform_indices = @transform_11, window_bounds = array<i64: 1, 128>}, {pipeline_mode = #tpu.pipeline_mode<synchronous>, transform_indices = @transform_12, window_bounds = array<i64: 128, 128>}, {pipeline_mode = #tpu.pipeline_mode<synchronous>, transform_indices = @transform_13, window_bounds = array<i64: 1, 128>}, {transform_indices = @transform_14, window_bounds = array<i64: 2, 128>}]} {
    %c0 = arith.constant 0 : index
    %c0_0 = arith.constant 0 : index
    %c0_1 = arith.constant 0 : index
    %0 = vector.load %arg1[%c0, %c0_0, %c0_1] : memref<1x128x1xi32, #tpu.memory_space<vmem>>, vector<1x128x1xi32>
    %1 = vector.shape_cast %0 : vector<1x128x1xi32> to vector<128x1xi32>
    %2 = tpu.iota {dimensions = array<i32: 1>} : vector<128x64xi32>
    %3 = vector.broadcast %1 : vector<128x1xi32> to vector<128x64xi32>
    %4 = arith.cmpi eq, %2, %3 : vector<128x64xi32>
    %cst = arith.constant 1.000000e+00 : f32
    %cst_2 = arith.constant 0.000000e+00 : f32
    %5 = vector.broadcast %cst : f32 to vector<128x64xf32>
    %6 = vector.broadcast %cst_2 : f32 to vector<128x64xf32>
    %7 = arith.select %4, %5, %6 : vector<128x64xi1>, vector<128x64xf32>
    %8 = arith.truncf %7 : vector<128x64xf32> to vector<128x64xbf16>
    %c0_3 = arith.constant 0 : index
    %c0_4 = arith.constant 0 : index
    %9 = vector.load %arg2[%c0_3, %c0_4] : memref<64x32xbf16, #tpu.memory_space<vmem>>, vector<64x32xbf16>
    %cst_5 = arith.constant dense<0.000000e+00> : vector<128x32xf32>
    %10 = tpu.matmul %8, %9, %cst_5 {dimension_numbers = #tpu.dot_dimension_numbers<[1], [0], [0], [1], [0, 0, 1, 1], [], []>} : vector<128x64xbf16>, vector<64x32xbf16>, vector<128x32xf32> -> vector<128x32xf32>
    %11 = vector.shape_cast %10 : vector<128x32xf32> to vector<2x64x32xf32>
    %cst_6 = arith.constant 0.000000e+00 : f32
    %12 = vector.broadcast %cst_6 : f32 to vector<2x2x32xf32>
    %cst_7 = arith.constant 0.000000e+00 : f32
    %13 = vector.broadcast %cst_7 : f32 to vector<2x14x32xf32>
    %14 = tpu.concatenate %12, %11, %13 in 1 : vector<2x2x32xf32>, vector<2x64x32xf32>, vector<2x14x32xf32> -> vector<2x80x32xf32>
    %15 = vector.extract_strided_slice %14 {offsets = [0, 0, 0], sizes = [2, 72, 32], strides = [1, 1, 1]} : vector<2x80x32xf32> to vector<2x72x32xf32>
    %16 = vector.extract_strided_slice %14 {offsets = [0, 1, 0], sizes = [2, 72, 32], strides = [1, 1, 1]} : vector<2x80x32xf32> to vector<2x72x32xf32>
    %17 = vector.extract_strided_slice %14 {offsets = [0, 2, 0], sizes = [2, 72, 32], strides = [1, 1, 1]} : vector<2x80x32xf32> to vector<2x72x32xf32>
    %18 = vector.extract_strided_slice %14 {offsets = [0, 3, 0], sizes = [2, 72, 32], strides = [1, 1, 1]} : vector<2x80x32xf32> to vector<2x72x32xf32>
    %19 = vector.extract_strided_slice %14 {offsets = [0, 4, 0], sizes = [2, 72, 32], strides = [1, 1, 1]} : vector<2x80x32xf32> to vector<2x72x32xf32>
    %20 = tpu.concatenate %16, %17, %18, %15, %16, %17, %18, %19, %15, %16, %17, %18 in 2 : vector<2x72x32xf32>, vector<2x72x32xf32>, vector<2x72x32xf32>, vector<2x72x32xf32>, vector<2x72x32xf32>, vector<2x72x32xf32>, vector<2x72x32xf32>, vector<2x72x32xf32>, vector<2x72x32xf32>, vector<2x72x32xf32>, vector<2x72x32xf32>, vector<2x72x32xf32> -> vector<2x72x384xf32>
    %21 = vector.shape_cast %20 : vector<2x72x384xf32> to vector<144x384xf32>
    %22 = arith.truncf %21 : vector<144x384xf32> to vector<144x384xbf16>
    %c0_8 = arith.constant 0 : index
    %c0_9 = arith.constant 0 : index
    %23 = vector.load %arg3[%c0_8, %c0_9] : memref<384x384xbf16, #tpu.memory_space<vmem>>, vector<384x384xbf16>
    %cst_10 = arith.constant dense<0.000000e+00> : vector<144x384xf32>
    %24 = tpu.matmul %22, %23, %cst_10 {dimension_numbers = #tpu.dot_dimension_numbers<[1], [0], [0], [1], [0, 0, 1, 1], [], []>} : vector<144x384xbf16>, vector<384x384xbf16>, vector<144x384xf32> -> vector<144x384xf32>
    %c0_11 = arith.constant 0 : index
    %c0_12 = arith.constant 0 : index
    %25 = vector.load %arg4[%c0_11, %c0_12] : memref<1x384xf32, #tpu.memory_space<vmem>>, vector<1x384xf32>
    %26 = vector.broadcast %25 : vector<1x384xf32> to vector<144x384xf32>
    %27 = arith.addf %24, %26 : vector<144x384xf32>
    %cst_13 = arith.constant 0.000000e+00 : f32
    %28 = vector.broadcast %cst_13 : f32 to vector<144x384xf32>
    %29 = arith.maximumf %27, %28 : vector<144x384xf32>
    %30 = vector.shape_cast %29 : vector<144x384xf32> to vector<2x72x384xf32>
    %cst_14 = arith.constant 0.000000e+00 : f32
    %31 = vector.broadcast %cst_14 : f32 to vector<2x2x384xf32>
    %32 = tpu.concatenate %30, %31 in 1 : vector<2x72x384xf32>, vector<2x2x384xf32> -> vector<2x74x384xf32>
    %33 = vector.extract_strided_slice %32 {offsets = [0, 1, 0], sizes = [2, 72, 384], strides = [1, 1, 1]} : vector<2x74x384xf32> to vector<2x72x384xf32>
    %34 = arith.maximumf %30, %33 : vector<2x72x384xf32>
    %35 = vector.extract_strided_slice %32 {offsets = [0, 2, 0], sizes = [2, 72, 384], strides = [1, 1, 1]} : vector<2x74x384xf32> to vector<2x72x384xf32>
    %36 = arith.maximumf %34, %35 : vector<2x72x384xf32>
    %37 = tpu.concatenate %30, %34, %36 in 1 : vector<2x72x384xf32>, vector<2x72x384xf32>, vector<2x72x384xf32> -> vector<2x216x384xf32>
    %38 = arith.truncf %37 : vector<2x216x384xf32> to vector<2x216x384xbf16>
    %c0_15 = arith.constant 0 : index
    %c0_16 = arith.constant 0 : index
    %39 = vector.load %arg5[%c0_15, %c0_16] : memref<50x216xbf16, #tpu.memory_space<vmem>>, vector<50x216xbf16>
    %40 = vector.shape_cast %39 : vector<50x216xbf16> to vector<1x50x216xbf16>
    %41 = vector.broadcast %40 : vector<1x50x216xbf16> to vector<2x50x216xbf16>
    %42 = vector.extract_strided_slice %38 {offsets = [0, 0, 0], sizes = [2, 216, 256], strides = [1, 1, 1]} : vector<2x216x384xbf16> to vector<2x216x256xbf16>
    "tpu.trace_start"() <{level = 10 : i32, message = "bpm,bmf->bpf"}> : () -> ()
    %cst_17 = arith.constant dense<0.000000e+00> : vector<2x50x256xf32>
    %43 = tpu.matmul %41, %42, %cst_17 {dimension_numbers = #tpu.dot_dimension_numbers<[2], [1], [1], [2], [0, 0, 0, 1, 1, 2], [0], [0]>} : vector<2x50x216xbf16>, vector<2x216x256xbf16>, vector<2x50x256xf32> -> vector<2x50x256xf32>
    "tpu.trace_stop"() : () -> ()
    %c0_18 = arith.constant 0 : index
    %c0_19 = arith.constant 0 : index
    %44 = vector.load %arg6[%c0_18, %c0_19] : memref<50x216xbf16, #tpu.memory_space<vmem>>, vector<50x216xbf16>
    %45 = vector.shape_cast %44 : vector<50x216xbf16> to vector<1x50x216xbf16>
    %46 = vector.broadcast %45 : vector<1x50x216xbf16> to vector<2x50x216xbf16>
    %47 = vector.extract_strided_slice %38 {offsets = [0, 0, 256], sizes = [2, 216, 128], strides = [1, 1, 1]} : vector<2x216x384xbf16> to vector<2x216x128xbf16>
    "tpu.trace_start"() <{level = 10 : i32, message = "bpm,bmf->bpf"}> : () -> ()
    %cst_20 = arith.constant dense<0.000000e+00> : vector<2x50x128xf32>
    %48 = tpu.matmul %46, %47, %cst_20 {dimension_numbers = #tpu.dot_dimension_numbers<[2], [1], [1], [2], [0, 0, 0, 1, 1, 2], [0], [0]>} : vector<2x50x216xbf16>, vector<2x216x128xbf16>, vector<2x50x128xf32> -> vector<2x50x128xf32>
    "tpu.trace_stop"() : () -> ()
    %49 = tpu.concatenate %43, %48 in 2 : vector<2x50x256xf32>, vector<2x50x128xf32> -> vector<2x50x384xf32>
    %50 = vector.extract_strided_slice %49 {offsets = [0, 0, 0], sizes = [1, 50, 384], strides = [1, 1, 1]} : vector<2x50x384xf32> to vector<1x50x384xf32>
    %51 = vector.shape_cast %50 : vector<1x50x384xf32> to vector<50x384xf32>
    %52 = vector.extract_strided_slice %49 {offsets = [1, 0, 0], sizes = [1, 50, 384], strides = [1, 1, 1]} : vector<2x50x384xf32> to vector<1x50x384xf32>
    %53 = vector.shape_cast %52 : vector<1x50x384xf32> to vector<50x384xf32>
    %54 = tpu.concatenate %51, %53 in 0 : vector<50x384xf32>, vector<50x384xf32> -> vector<100x384xf32>
    %55 = arith.truncf %54 : vector<100x384xf32> to vector<100x384xbf16>
    %c0_21 = arith.constant 0 : index
    %c0_22 = arith.constant 0 : index
    %56 = vector.load %arg7[%c0_21, %c0_22] : memref<384x128xbf16, #tpu.memory_space<vmem>>, vector<384x128xbf16>
    %cst_23 = arith.constant dense<0.000000e+00> : vector<100x128xf32>
    %57 = tpu.matmul %55, %56, %cst_23 {dimension_numbers = #tpu.dot_dimension_numbers<[1], [0], [0], [1], [0, 0, 1, 1], [], []>} : vector<100x384xbf16>, vector<384x128xbf16>, vector<100x128xf32> -> vector<100x128xf32>
    %c0_24 = arith.constant 0 : index
    %c0_25 = arith.constant 0 : index
    %58 = vector.load %arg8[%c0_24, %c0_25] : memref<1x128xf32, #tpu.memory_space<vmem>>, vector<1x128xf32>
    %59 = vector.broadcast %58 : vector<1x128xf32> to vector<100x128xf32>
    %60 = arith.addf %57, %59 : vector<100x128xf32>
    %61 = arith.truncf %60 : vector<100x128xf32> to vector<100x128xbf16>
    %c0_26 = arith.constant 0 : index
    %c0_27 = arith.constant 0 : index
    %62 = vector.load %arg9[%c0_26, %c0_27] : memref<128x384xbf16, #tpu.memory_space<vmem>>, vector<128x384xbf16>
    %cst_28 = arith.constant dense<0.000000e+00> : vector<100x384xf32>
    %63 = tpu.matmul %61, %62, %cst_28 {dimension_numbers = #tpu.dot_dimension_numbers<[1], [0], [0], [1], [0, 0, 1, 1], [], []>} : vector<100x128xbf16>, vector<128x384xbf16>, vector<100x384xf32> -> vector<100x384xf32>
    %c0_29 = arith.constant 0 : index
    %c0_30 = arith.constant 0 : index
    %64 = vector.load %arg10[%c0_29, %c0_30] : memref<1x384xf32, #tpu.memory_space<vmem>>, vector<1x384xf32>
    %65 = vector.broadcast %64 : vector<1x384xf32> to vector<100x384xf32>
    %66 = arith.addf %63, %65 : vector<100x384xf32>
    %67 = vector.extract_strided_slice %66 {offsets = [0, 0], sizes = [100, 128], strides = [1, 1]} : vector<100x384xf32> to vector<100x128xf32>
    %cst_31 = arith.constant 0.176776692 : f32
    %68 = vector.broadcast %cst_31 : f32 to vector<100x128xf32>
    %69 = arith.mulf %67, %68 : vector<100x128xf32>
    %70 = arith.truncf %69 : vector<100x128xf32> to vector<100x128xbf16>
    %71 = vector.extract_strided_slice %66 {offsets = [0, 128], sizes = [100, 128], strides = [1, 1]} : vector<100x384xf32> to vector<100x128xf32>
    %72 = arith.truncf %71 : vector<100x128xf32> to vector<100x128xbf16>
    %73 = vector.extract_strided_slice %66 {offsets = [0, 256], sizes = [100, 128], strides = [1, 1]} : vector<100x384xf32> to vector<100x128xf32>
    %74 = arith.truncf %73 : vector<100x128xf32> to vector<100x128xbf16>
    %75 = vector.extract_strided_slice %70 {offsets = [0, 0], sizes = [50, 32], strides = [1, 1]} : vector<100x128xbf16> to vector<50x32xbf16>
    %76 = vector.extract_strided_slice %70 {offsets = [0, 32], sizes = [50, 32], strides = [1, 1]} : vector<100x128xbf16> to vector<50x32xbf16>
    %77 = vector.extract_strided_slice %70 {offsets = [0, 64], sizes = [50, 32], strides = [1, 1]} : vector<100x128xbf16> to vector<50x32xbf16>
    %78 = vector.extract_strided_slice %70 {offsets = [0, 96], sizes = [50, 32], strides = [1, 1]} : vector<100x128xbf16> to vector<50x32xbf16>
    %79 = vector.extract_strided_slice %70 {offsets = [50, 0], sizes = [50, 32], strides = [1, 1]} : vector<100x128xbf16> to vector<50x32xbf16>
    %80 = vector.extract_strided_slice %70 {offsets = [50, 32], sizes = [50, 32], strides = [1, 1]} : vector<100x128xbf16> to vector<50x32xbf16>
    %81 = vector.extract_strided_slice %70 {offsets = [50, 64], sizes = [50, 32], strides = [1, 1]} : vector<100x128xbf16> to vector<50x32xbf16>
    %82 = vector.extract_strided_slice %70 {offsets = [50, 96], sizes = [50, 32], strides = [1, 1]} : vector<100x128xbf16> to vector<50x32xbf16>
    %83 = vector.shape_cast %75 : vector<50x32xbf16> to vector<1x50x32xbf16>
    %84 = vector.shape_cast %76 : vector<50x32xbf16> to vector<1x50x32xbf16>
    %85 = vector.shape_cast %77 : vector<50x32xbf16> to vector<1x50x32xbf16>
    %86 = vector.shape_cast %78 : vector<50x32xbf16> to vector<1x50x32xbf16>
    %87 = vector.shape_cast %79 : vector<50x32xbf16> to vector<1x50x32xbf16>
    %88 = vector.shape_cast %80 : vector<50x32xbf16> to vector<1x50x32xbf16>
    %89 = vector.shape_cast %81 : vector<50x32xbf16> to vector<1x50x32xbf16>
    %90 = vector.shape_cast %82 : vector<50x32xbf16> to vector<1x50x32xbf16>
    %91 = tpu.concatenate %83, %84, %85, %86, %87, %88, %89, %90 in 0 : vector<1x50x32xbf16>, vector<1x50x32xbf16>, vector<1x50x32xbf16>, vector<1x50x32xbf16>, vector<1x50x32xbf16>, vector<1x50x32xbf16>, vector<1x50x32xbf16>, vector<1x50x32xbf16> -> vector<8x50x32xbf16>
    %92 = vector.extract_strided_slice %72 {offsets = [0, 0], sizes = [50, 32], strides = [1, 1]} : vector<100x128xbf16> to vector<50x32xbf16>
    %93 = vector.extract_strided_slice %72 {offsets = [0, 32], sizes = [50, 32], strides = [1, 1]} : vector<100x128xbf16> to vector<50x32xbf16>
    %94 = vector.extract_strided_slice %72 {offsets = [0, 64], sizes = [50, 32], strides = [1, 1]} : vector<100x128xbf16> to vector<50x32xbf16>
    %95 = vector.extract_strided_slice %72 {offsets = [0, 96], sizes = [50, 32], strides = [1, 1]} : vector<100x128xbf16> to vector<50x32xbf16>
    %96 = vector.extract_strided_slice %72 {offsets = [50, 0], sizes = [50, 32], strides = [1, 1]} : vector<100x128xbf16> to vector<50x32xbf16>
    %97 = vector.extract_strided_slice %72 {offsets = [50, 32], sizes = [50, 32], strides = [1, 1]} : vector<100x128xbf16> to vector<50x32xbf16>
    %98 = vector.extract_strided_slice %72 {offsets = [50, 64], sizes = [50, 32], strides = [1, 1]} : vector<100x128xbf16> to vector<50x32xbf16>
    %99 = vector.extract_strided_slice %72 {offsets = [50, 96], sizes = [50, 32], strides = [1, 1]} : vector<100x128xbf16> to vector<50x32xbf16>
    %100 = vector.shape_cast %92 : vector<50x32xbf16> to vector<1x50x32xbf16>
    %101 = vector.shape_cast %93 : vector<50x32xbf16> to vector<1x50x32xbf16>
    %102 = vector.shape_cast %94 : vector<50x32xbf16> to vector<1x50x32xbf16>
    %103 = vector.shape_cast %95 : vector<50x32xbf16> to vector<1x50x32xbf16>
    %104 = vector.shape_cast %96 : vector<50x32xbf16> to vector<1x50x32xbf16>
    %105 = vector.shape_cast %97 : vector<50x32xbf16> to vector<1x50x32xbf16>
    %106 = vector.shape_cast %98 : vector<50x32xbf16> to vector<1x50x32xbf16>
    %107 = vector.shape_cast %99 : vector<50x32xbf16> to vector<1x50x32xbf16>
    %108 = tpu.concatenate %100, %101, %102, %103, %104, %105, %106, %107 in 0 : vector<1x50x32xbf16>, vector<1x50x32xbf16>, vector<1x50x32xbf16>, vector<1x50x32xbf16>, vector<1x50x32xbf16>, vector<1x50x32xbf16>, vector<1x50x32xbf16>, vector<1x50x32xbf16> -> vector<8x50x32xbf16>
    %109 = vector.extract_strided_slice %74 {offsets = [0, 0], sizes = [50, 32], strides = [1, 1]} : vector<100x128xbf16> to vector<50x32xbf16>
    %110 = vector.extract_strided_slice %74 {offsets = [0, 32], sizes = [50, 32], strides = [1, 1]} : vector<100x128xbf16> to vector<50x32xbf16>
    %111 = vector.extract_strided_slice %74 {offsets = [0, 64], sizes = [50, 32], strides = [1, 1]} : vector<100x128xbf16> to vector<50x32xbf16>
    %112 = vector.extract_strided_slice %74 {offsets = [0, 96], sizes = [50, 32], strides = [1, 1]} : vector<100x128xbf16> to vector<50x32xbf16>
    %113 = vector.extract_strided_slice %74 {offsets = [50, 0], sizes = [50, 32], strides = [1, 1]} : vector<100x128xbf16> to vector<50x32xbf16>
    %114 = vector.extract_strided_slice %74 {offsets = [50, 32], sizes = [50, 32], strides = [1, 1]} : vector<100x128xbf16> to vector<50x32xbf16>
    %115 = vector.extract_strided_slice %74 {offsets = [50, 64], sizes = [50, 32], strides = [1, 1]} : vector<100x128xbf16> to vector<50x32xbf16>
    %116 = vector.extract_strided_slice %74 {offsets = [50, 96], sizes = [50, 32], strides = [1, 1]} : vector<100x128xbf16> to vector<50x32xbf16>
    %117 = vector.shape_cast %109 : vector<50x32xbf16> to vector<1x50x32xbf16>
    %118 = vector.shape_cast %110 : vector<50x32xbf16> to vector<1x50x32xbf16>
    %119 = vector.shape_cast %111 : vector<50x32xbf16> to vector<1x50x32xbf16>
    %120 = vector.shape_cast %112 : vector<50x32xbf16> to vector<1x50x32xbf16>
    %121 = vector.shape_cast %113 : vector<50x32xbf16> to vector<1x50x32xbf16>
    %122 = vector.shape_cast %114 : vector<50x32xbf16> to vector<1x50x32xbf16>
    %123 = vector.shape_cast %115 : vector<50x32xbf16> to vector<1x50x32xbf16>
    %124 = vector.shape_cast %116 : vector<50x32xbf16> to vector<1x50x32xbf16>
    %125 = tpu.concatenate %117, %118, %119, %120, %121, %122, %123, %124 in 0 : vector<1x50x32xbf16>, vector<1x50x32xbf16>, vector<1x50x32xbf16>, vector<1x50x32xbf16>, vector<1x50x32xbf16>, vector<1x50x32xbf16>, vector<1x50x32xbf16>, vector<1x50x32xbf16> -> vector<8x50x32xbf16>
    "tpu.trace_start"() <{level = 10 : i32, message = "zqd,zkd->zqk"}> : () -> ()
    %cst_32 = arith.constant dense<0.000000e+00> : vector<8x50x50xf32>
    %126 = tpu.matmul %91, %108, %cst_32 {dimension_numbers = #tpu.dot_dimension_numbers<[2], [2], [1], [1], [0, 0, 0, 1, 1, 1], [0], [0]>} : vector<8x50x32xbf16>, vector<8x50x32xbf16>, vector<8x50x50xf32> -> vector<8x50x50xf32>
    "tpu.trace_stop"() : () -> ()
    %cst_33 = arith.constant dense<0xFF800000> : vector<8x50xf32>
    %127 = vector.multi_reduction <maximumf>, %126, %cst_33 [2] : vector<8x50x50xf32> to vector<8x50xf32>
    %128 = vector.shape_cast %127 : vector<8x50xf32> to vector<8x50x1xf32>
    %129 = vector.broadcast %128 : vector<8x50x1xf32> to vector<8x50x50xf32>
    %130 = arith.subf %126, %129 : vector<8x50x50xf32>
    %131 = math.exp %130 : vector<8x50x50xf32>
    %cst_34 = arith.constant dense<0.000000e+00> : vector<8x50xf32>
    %132 = vector.multi_reduction <add>, %131, %cst_34 [2] : vector<8x50x50xf32> to vector<8x50xf32>
    %133 = vector.shape_cast %132 : vector<8x50xf32> to vector<8x50x1xf32>
    %134 = tpu.reciprocal %133 {approx = true} : vector<8x50x1xf32> -> vector<8x50x1xf32>
    %135 = vector.broadcast %134 : vector<8x50x1xf32> to vector<8x50x50xf32>
    %136 = arith.mulf %131, %135 : vector<8x50x50xf32>
    %137 = arith.truncf %136 : vector<8x50x50xf32> to vector<8x50x50xbf16>
    "tpu.trace_start"() <{level = 10 : i32, message = "zqk,zkd->zqd"}> : () -> ()
    %cst_35 = arith.constant dense<0.000000e+00> : vector<8x50x32xf32>
    %138 = tpu.matmul %137, %125, %cst_35 {dimension_numbers = #tpu.dot_dimension_numbers<[2], [1], [1], [2], [0, 0, 0, 1, 1, 2], [0], [0]>} : vector<8x50x50xbf16>, vector<8x50x32xbf16>, vector<8x50x32xf32> -> vector<8x50x32xf32>
    "tpu.trace_stop"() : () -> ()
    %139 = vector.extract_strided_slice %138 {offsets = [0, 0, 0], sizes = [1, 50, 32], strides = [1, 1, 1]} : vector<8x50x32xf32> to vector<1x50x32xf32>
    %140 = vector.shape_cast %139 : vector<1x50x32xf32> to vector<50x32xf32>
    %141 = vector.extract_strided_slice %138 {offsets = [1, 0, 0], sizes = [1, 50, 32], strides = [1, 1, 1]} : vector<8x50x32xf32> to vector<1x50x32xf32>
    %142 = vector.shape_cast %141 : vector<1x50x32xf32> to vector<50x32xf32>
    %143 = vector.extract_strided_slice %138 {offsets = [2, 0, 0], sizes = [1, 50, 32], strides = [1, 1, 1]} : vector<8x50x32xf32> to vector<1x50x32xf32>
    %144 = vector.shape_cast %143 : vector<1x50x32xf32> to vector<50x32xf32>
    %145 = vector.extract_strided_slice %138 {offsets = [3, 0, 0], sizes = [1, 50, 32], strides = [1, 1, 1]} : vector<8x50x32xf32> to vector<1x50x32xf32>
    %146 = vector.shape_cast %145 : vector<1x50x32xf32> to vector<50x32xf32>
    %147 = tpu.concatenate %140, %142, %144, %146 in 1 : vector<50x32xf32>, vector<50x32xf32>, vector<50x32xf32>, vector<50x32xf32> -> vector<50x128xf32>
    %148 = vector.extract_strided_slice %138 {offsets = [4, 0, 0], sizes = [1, 50, 32], strides = [1, 1, 1]} : vector<8x50x32xf32> to vector<1x50x32xf32>
    %149 = vector.shape_cast %148 : vector<1x50x32xf32> to vector<50x32xf32>
    %150 = vector.extract_strided_slice %138 {offsets = [5, 0, 0], sizes = [1, 50, 32], strides = [1, 1, 1]} : vector<8x50x32xf32> to vector<1x50x32xf32>
    %151 = vector.shape_cast %150 : vector<1x50x32xf32> to vector<50x32xf32>
    %152 = vector.extract_strided_slice %138 {offsets = [6, 0, 0], sizes = [1, 50, 32], strides = [1, 1, 1]} : vector<8x50x32xf32> to vector<1x50x32xf32>
    %153 = vector.shape_cast %152 : vector<1x50x32xf32> to vector<50x32xf32>
    %154 = vector.extract_strided_slice %138 {offsets = [7, 0, 0], sizes = [1, 50, 32], strides = [1, 1, 1]} : vector<8x50x32xf32> to vector<1x50x32xf32>
    %155 = vector.shape_cast %154 : vector<1x50x32xf32> to vector<50x32xf32>
    %156 = tpu.concatenate %149, %151, %153, %155 in 1 : vector<50x32xf32>, vector<50x32xf32>, vector<50x32xf32>, vector<50x32xf32> -> vector<50x128xf32>
    %157 = tpu.concatenate %147, %156 in 0 : vector<50x128xf32>, vector<50x128xf32> -> vector<100x128xf32>
    %158 = arith.truncf %157 : vector<100x128xf32> to vector<100x128xbf16>
    %c0_36 = arith.constant 0 : index
    %c0_37 = arith.constant 0 : index
    %159 = vector.load %arg11[%c0_36, %c0_37] : memref<128x128xbf16, #tpu.memory_space<vmem>>, vector<128x128xbf16>
    %cst_38 = arith.constant dense<0.000000e+00> : vector<100x128xf32>
    %160 = tpu.matmul %158, %159, %cst_38 {dimension_numbers = #tpu.dot_dimension_numbers<[1], [0], [0], [1], [0, 0, 1, 1], [], []>} : vector<100x128xbf16>, vector<128x128xbf16>, vector<100x128xf32> -> vector<100x128xf32>
    %c0_39 = arith.constant 0 : index
    %c0_40 = arith.constant 0 : index
    %161 = vector.load %arg12[%c0_39, %c0_40] : memref<1x128xf32, #tpu.memory_space<vmem>>, vector<1x128xf32>
    %162 = vector.broadcast %161 : vector<1x128xf32> to vector<100x128xf32>
    %163 = arith.addf %160, %162 : vector<100x128xf32>
    %164 = vector.extract_strided_slice %163 {offsets = [0, 0], sizes = [50, 128], strides = [1, 1]} : vector<100x128xf32> to vector<50x128xf32>
    %cst_41 = arith.constant dense<0.000000e+00> : vector<128xf32>
    %165 = vector.multi_reduction <add>, %164, %cst_41 [0] : vector<50x128xf32> to vector<128xf32>
    %166 = vector.shape_cast %165 : vector<128xf32> to vector<1x128xf32>
    %167 = vector.extract_strided_slice %163 {offsets = [50, 0], sizes = [50, 128], strides = [1, 1]} : vector<100x128xf32> to vector<50x128xf32>
    %cst_42 = arith.constant dense<0.000000e+00> : vector<128xf32>
    %168 = vector.multi_reduction <add>, %167, %cst_42 [0] : vector<50x128xf32> to vector<128xf32>
    %169 = vector.shape_cast %168 : vector<128xf32> to vector<1x128xf32>
    %170 = tpu.concatenate %166, %169 in 0 : vector<1x128xf32>, vector<1x128xf32> -> vector<2x128xf32>
    %171 = arith.truncf %170 : vector<2x128xf32> to vector<2x128xbf16>
    %c0_43 = arith.constant 0 : index
    %c0_44 = arith.constant 0 : index
    %172 = vector.load %arg13[%c0_43, %c0_44] : memref<128x128xbf16, #tpu.memory_space<vmem>>, vector<128x128xbf16>
    %cst_45 = arith.constant dense<0.000000e+00> : vector<2x128xf32>
    %173 = tpu.matmul %171, %172, %cst_45 {dimension_numbers = #tpu.dot_dimension_numbers<[1], [0], [0], [1], [0, 0, 1, 1], [], []>} : vector<2x128xbf16>, vector<128x128xbf16>, vector<2x128xf32> -> vector<2x128xf32>
    %c0_46 = arith.constant 0 : index
    %c0_47 = arith.constant 0 : index
    %174 = vector.load %arg14[%c0_46, %c0_47] : memref<1x128xf32, #tpu.memory_space<vmem>>, vector<1x128xf32>
    %175 = vector.broadcast %174 : vector<1x128xf32> to vector<2x128xf32>
    %176 = arith.addf %173, %175 : vector<2x128xf32>
    %c0_48 = arith.constant 0 : index
    %c0_49 = arith.constant 0 : index
    %177 = vector.load %arg15[%c0_48, %c0_49] : memref<2x128xf32, #tpu.memory_space<vmem>>, vector<2x128xf32>
    tpu.vector_store %arg15[%c0_48, %c0_49], %176 {strides = array<i32>} : memref<2x128xf32, #tpu.memory_space<vmem>>, vector<2x128xf32>,
    return
  }
  func.func @transform_0(%arg0: i32) -> (i32, i32, i32) {
    %c0_i32 = arith.constant 0 : i32
    %c0_i32_0 = arith.constant 0 : i32
    %c0_i32_1 = arith.constant 0 : i32
    return %arg0, %c0_i32, %c0_i32_0 : i32, i32, i32
  }
  func.func @transform_1(%arg0: i32) -> (i32, i32) {
    %c0_i32 = arith.constant 0 : i32
    %c0_i32_0 = arith.constant 0 : i32
    %c0_i32_1 = arith.constant 0 : i32
    return %c0_i32, %c0_i32_0 : i32, i32
  }
  func.func @transform_2(%arg0: i32) -> (i32, i32) {
    %c0_i32 = arith.constant 0 : i32
    %c0_i32_0 = arith.constant 0 : i32
    %c0_i32_1 = arith.constant 0 : i32
    return %c0_i32, %c0_i32_0 : i32, i32
  }
  func.func @transform_3(%arg0: i32) -> (i32, i32) {
    %c0_i32 = arith.constant 0 : i32
    %c0_i32_0 = arith.constant 0 : i32
    %c0_i32_1 = arith.constant 0 : i32
    return %c0_i32, %c0_i32_0 : i32, i32
  }
  func.func @transform_4(%arg0: i32) -> (i32, i32) {
    %c0_i32 = arith.constant 0 : i32
    %c0_i32_0 = arith.constant 0 : i32
    %c0_i32_1 = arith.constant 0 : i32
    return %c0_i32, %c0_i32_0 : i32, i32
  }
  func.func @transform_5(%arg0: i32) -> (i32, i32) {
    %c0_i32 = arith.constant 0 : i32
    %c0_i32_0 = arith.constant 0 : i32
    %c0_i32_1 = arith.constant 0 : i32
    return %c0_i32, %c0_i32_0 : i32, i32
  }
  func.func @transform_6(%arg0: i32) -> (i32, i32) {
    %c0_i32 = arith.constant 0 : i32
    %c0_i32_0 = arith.constant 0 : i32
    %c0_i32_1 = arith.constant 0 : i32
    return %c0_i32, %c0_i32_0 : i32, i32
  }
  func.func @transform_7(%arg0: i32) -> (i32, i32) {
    %c0_i32 = arith.constant 0 : i32
    %c0_i32_0 = arith.constant 0 : i32
    %c0_i32_1 = arith.constant 0 : i32
    return %c0_i32, %c0_i32_0 : i32, i32
  }
  func.func @transform_8(%arg0: i32) -> (i32, i32) {
    %c0_i32 = arith.constant 0 : i32
    %c0_i32_0 = arith.constant 0 : i32
    %c0_i32_1 = arith.constant 0 : i32
    return %c0_i32, %c0_i32_0 : i32, i32
  }
  func.func @transform_9(%arg0: i32) -> (i32, i32) {
    %c0_i32 = arith.constant 0 : i32
    %c0_i32_0 = arith.constant 0 : i32
    %c0_i32_1 = arith.constant 0 : i32
    return %c0_i32, %c0_i32_0 : i32, i32
  }
  func.func @transform_10(%arg0: i32) -> (i32, i32) {
    %c0_i32 = arith.constant 0 : i32
    %c0_i32_0 = arith.constant 0 : i32
    %c0_i32_1 = arith.constant 0 : i32
    return %c0_i32, %c0_i32_0 : i32, i32
  }
  func.func @transform_11(%arg0: i32) -> (i32, i32) {
    %c0_i32 = arith.constant 0 : i32
    %c0_i32_0 = arith.constant 0 : i32
    %c0_i32_1 = arith.constant 0 : i32
    return %c0_i32, %c0_i32_0 : i32, i32
  }
  func.func @transform_12(%arg0: i32) -> (i32, i32) {
    %c0_i32 = arith.constant 0 : i32
    %c0_i32_0 = arith.constant 0 : i32
    %c0_i32_1 = arith.constant 0 : i32
    return %c0_i32, %c0_i32_0 : i32, i32
  }
  func.func @transform_13(%arg0: i32) -> (i32, i32) {
    %c0_i32 = arith.constant 0 : i32
    %c0_i32_0 = arith.constant 0 : i32
    %c0_i32_1 = arith.constant 0 : i32
    return %c0_i32, %c0_i32_0 : i32, i32
  }
  func.func @transform_14(%arg0: i32) -> (i32, i32) {
    %c0_i32 = arith.constant 0 : i32
    %c0_i32_0 = arith.constant 0 : i32
    return %arg0, %c0_i32 : i32, i32
  }
}

</mosaic_0001>

<llo_original>
// kernel: forward.1
$region0: #{forward.1}
  #allocation0 [shape = 'u32[]', space=smem, size = 0x4, offset = 0x4, fixed_abs, tag = 'smem constant byte address 0x4 - core index']
  #allocation1 [shape = 'u32[72,128]{1,0:T(1,128)}', space=vmem, size = 0x9000, scoped, tag = 'internal scratch']
  %s0 = inlined_call_operand.vmem [shape: s32[1,128,1], index: 0, kind: input, shape index: {}]
  %s1 = inlined_call_operand.vmem [shape: bf16[64,32], index: 1, kind: input, shape index: {}]
  %s2 = inlined_call_operand.hbm [shape: bf16[384,384], index: 2, kind: input, shape index: {}]
  %s3 = inlined_call_operand.vmem [shape: f32[1,384], index: 3, kind: input, shape index: {}]
  %s4 = inlined_call_operand.hbm [shape: bf16[50,216], index: 4, kind: input, shape index: {}]
  %s5 = inlined_call_operand.hbm [shape: bf16[50,216], index: 5, kind: input, shape index: {}]
  %s6 = inlined_call_operand.hbm [shape: bf16[384,128], index: 6, kind: input, shape index: {}]
  %s7 = inlined_call_operand.vmem [shape: f32[1,128], index: 7, kind: input, shape index: {}]
  %s8 = inlined_call_operand.hbm [shape: bf16[128,384], index: 8, kind: input, shape index: {}]
  %s9 = inlined_call_operand.vmem [shape: f32[1,384], index: 9, kind: input, shape index: {}]
  %s10 = inlined_call_operand.vmem [shape: bf16[128,128], index: 10, kind: input, shape index: {}]
  %s11 = inlined_call_operand.vmem [shape: f32[1,128], index: 11, kind: input, shape index: {}]
  %s12 = inlined_call_operand.vmem [shape: bf16[128,128], index: 12, kind: input, shape index: {}]
  %s13 = inlined_call_operand.vmem [shape: f32[1,128], index: 13, kind: input, shape index: {}]
  %s14 = inlined_call_operand.hbm [shape: f32[2,128], index: 14, kind: output, shape index: {}]
  %s15 = sld [smem:[#allocation0]]
  $region86: #{forward.1} parent=0
    _
  %s17 = ssub.s32 1, %s15
  %s18 = scalar_select 0, %s17, %s15
  $region1: #{forward.1} parent=0
    #allocation2 [shape = 'u8[294912]{0}', space=vmem, size = 0x48000, scoped, tag = 'input window, operand 2, single buffered']
    #allocation3 [shape = 's32[1]{0}', space=sflag, size = 0x4, scoped, tag = 'scoped memory for forward.1']
    #allocation4 [shape = 's32[1]{0}', space=sflag, size = 0x4, scoped, tag = 'scoped memory for forward.1']
    #allocation5 [shape = 'u8[28672]{0}', space=vmem, size = 0x7000, scoped, tag = 'input window, operand 4, single buffered']
    #allocation6 [shape = 's32[1]{0}', space=sflag, size = 0x4, scoped, tag = 'scoped memory for forward.1']
    #allocation7 [shape = 'u8[28672]{0}', space=vmem, size = 0x7000, scoped, tag = 'input window, operand 5, single buffered']
    #allocation8 [shape = 'u8[98304]{0}', space=vmem, size = 0x18000, scoped, tag = 'input window, operand 6, single buffered']
    #allocation9 [shape = 's32[1]{0}', space=sflag, size = 0x4, scoped, tag = 'scoped memory for forward.1']
    #allocation10 [shape = 'u8[98304]{0}', space=vmem, size = 0x18000, scoped, tag = 'input window, operand 8, single buffered']
    #allocation11 [shape = 'u8[1024]{0}', space=vmem, size = 0x400, scoped, tag = 'output window, operand 0, single buffered']
    %19 = vsyncpa [#allocation3], 0
    %20 = vsyncpa [#allocation6], 0
    %21 = vsyncpa [#allocation9], 0
    %22 = vsyncpa [#allocation4], 0
    // Predicated region
    $region2: #{forward.1} parent=1 // pred_check
      _
    $region3: #{forward.1} parent=1 // pred_check_branch
      %24 = sbr.rel (0) target = $region5
    $region4: #{forward.1} parent=1 // pred_region
      _
    $region5: #{forward.1} parent=1 // pred_fallthru
      _
    // Predicated region
    $region6: #{forward.1} parent=1 // pred_check
      _
    $region7: #{forward.1} parent=1 // pred_check_branch
      %26 = sbr.rel (0) target = $region9
    $region8: #{forward.1} parent=1 // pred_region
      _
    $region9: #{forward.1} parent=1 // pred_fallthru
      _
    // Predicated region
    $region10: #{forward.1} parent=1 // pred_check
      _
    $region11: #{forward.1} parent=1 // pred_check_branch
      %28 = sbr.rel (0) target = $region13
    $region12: #{forward.1} parent=1 // pred_region
      %30 = vsyncadd [#allocation3], 0
      %s31 = sshll.u32 %s2, 4
      %s32 = int_to_ptr.hbm [resolvable:$true] %s31
      %s33 = sshll.u32 [#allocation2], 4
      %s34 = int_to_ptr.vmem [resolvable:$true] %s33
      %39 = dma.hbm_to_vmem [thread:$0]  %s32, 9216, %s34, [#allocation3], 192, 192, 12
    $region13: #{forward.1} parent=1 // pred_fallthru
      _
    // Predicated region
    $region14: #{forward.1} parent=1 // pred_check
      _
    $region15: #{forward.1} parent=1 // pred_check_branch
      %41 = sbr.rel (0) target = $region17
    $region16: #{forward.1} parent=1 // pred_region
      _
    $region17: #{forward.1} parent=1 // pred_fallthru
      _
    // Predicated region
    $region18: #{forward.1} parent=1 // pred_check
      _
    $region19: #{forward.1} parent=1 // pred_check_branch
      %43 = sbr.rel (0) target = $region21
    $region20: #{forward.1} parent=1 // pred_region
      %45 = vsyncadd [#allocation6], 0
      %s46 = sshll.u32 %s4, 4
      %s47 = int_to_ptr.hbm [resolvable:$true] %s46
      %s48 = sshll.u32 [#allocation5], 4
      %s49 = int_to_ptr.vmem [resolvable:$true] %s48
      %54 = dma.hbm_to_vmem [thread:$0]  %s47, 896, %s49, [#allocation6], 128, 128, 8
    $region21: #{forward.1} parent=1 // pred_fallthru
      _
    // Predicated region
    $region22: #{forward.1} parent=1 // pred_check
      _
    $region23: #{forward.1} parent=1 // pred_check_branch
      %56 = sbr.rel (0) target = $region25
    $region24: #{forward.1} parent=1 // pred_region
      %58 = vsyncadd [#allocation6], 0
      %s59 = sshll.u32 %s5, 4
      %s60 = int_to_ptr.hbm [resolvable:$true] %s59
      %s61 = sshll.u32 [#allocation7], 4
      %s62 = int_to_ptr.vmem [resolvable:$true] %s61
      %67 = dma.hbm_to_vmem [thread:$0]  %s60, 896, %s62, [#allocation6], 128, 128, 8
    $region25: #{forward.1} parent=1 // pred_fallthru
      _
    // Predicated region
    $region26: #{forward.1} parent=1 // pred_check
      _
    $region27: #{forward.1} parent=1 // pred_check_branch
      %69 = sbr.rel (0) target = $region29
    $region28: #{forward.1} parent=1 // pred_region
      %71 = vsyncadd [#allocation9], 0
      %s72 = sshll.u32 %s6, 4
      %s73 = int_to_ptr.hbm [resolvable:$true] %s72
      %s74 = sshll.u32 [#allocation8], 4
      %s75 = int_to_ptr.vmem [resolvable:$true] %s74
      %80 = dma.hbm_to_vmem [thread:$0]  %s73, 3072, %s75, [#allocation9], 64, 64, 4
    $region29: #{forward.1} parent=1 // pred_fallthru
      _
    // Predicated region
    $region30: #{forward.1} parent=1 // pred_check
      _
    $region31: #{forward.1} parent=1 // pred_check_branch
      %82 = sbr.rel (0) target = $region33
    $region32: #{forward.1} parent=1 // pred_region
      _
    $region33: #{forward.1} parent=1 // pred_fallthru
      _
    // Predicated region
    $region34: #{forward.1} parent=1 // pred_check
      _
    $region35: #{forward.1} parent=1 // pred_check_branch
      %84 = sbr.rel (0) target = $region37
    $region36: #{forward.1} parent=1 // pred_region
      %86 = vsyncadd [#allocation9], 0
      %s87 = sshll.u32 %s8, 4
      %s88 = int_to_ptr.hbm [resolvable:$true] %s87
      %s89 = sshll.u32 [#allocation10], 4
      %s90 = int_to_ptr.vmem [resolvable:$true] %s89
      %95 = dma.hbm_to_vmem [thread:$0]  %s88, 3072, %s90, [#allocation9], 192, 192, 12
    $region37: #{forward.1} parent=1 // pred_fallthru
      _
    // Predicated region
    $region38: #{forward.1} parent=1 // pred_check
      _
    $region39: #{forward.1} parent=1 // pred_check_branch
      %97 = sbr.rel (0) target = $region41
    $region40: #{forward.1} parent=1 // pred_region
      _
    $region41: #{forward.1} parent=1 // pred_fallthru
      _
    // Predicated region
    $region42: #{forward.1} parent=1 // pred_check
      _
    $region43: #{forward.1} parent=1 // pred_check_branch
      %99 = sbr.rel (0) target = $region45
    $region44: #{forward.1} parent=1 // pred_region
      _
    $region45: #{forward.1} parent=1 // pred_fallthru
      _
    // Predicated region
    $region46: #{forward.1} parent=1 // pred_check
      _
    $region47: #{forward.1} parent=1 // pred_check_branch
      %101 = sbr.rel (0) target = $region49
    $region48: #{forward.1} parent=1 // pred_region
      _
    $region49: #{forward.1} parent=1 // pred_fallthru
      _
    // Predicated region
    $region50: #{forward.1} parent=1 // pred_check
      _
    $region51: #{forward.1} parent=1 // pred_check_branch
      %103 = sbr.rel (0) target = $region53
    $region52: #{forward.1} parent=1 // pred_region
      _
    $region53: #{forward.1} parent=1 // pred_fallthru
      _
    // Predicated region
    $region54: #{forward.1} parent=1 // pred_check
      _
    $region55: #{forward.1} parent=1 // pred_check_branch
      %105 = sbr.rel (0) target = $region57
    $region56: #{forward.1} parent=1 // pred_region
      _
    $region57: #{forward.1} parent=1 // pred_fallthru
      _
    // Predicated region
    $region58: #{forward.1} parent=1 // pred_check
      _
    $region59: #{forward.1} parent=1 // pred_check_branch
      %107 = sbr.rel (0) target = $region61
    $region60: #{forward.1} parent=1 // pred_region
      %109 = dma.done [#allocation3], 9216
    $region61: #{forward.1} parent=1 // pred_fallthru
      _
    // Predicated region
    $region62: #{forward.1} parent=1 // pred_check
      _
    $region63: #{forward.1} parent=1 // pred_check_branch
      %111 = sbr.rel (0) target = $region65
    $region64: #{forward.1} parent=1 // pred_region
      %113 = dma.done [#allocation6], 896
    $region65: #{forward.1} parent=1 // pred_fallthru
      _
    // Predicated region
    $region66: #{forward.1} parent=1 // pred_check
      _
    $region67: #{forward.1} parent=1 // pred_check_branch
      %115 = sbr.rel (0) target = $region69
    $region68: #{forward.1} parent=1 // pred_region
      %117 = dma.done [#allocation6], 896
    $region69: #{forward.1} parent=1 // pred_fallthru
      _
    // Predicated region
    $region70: #{forward.1} parent=1 // pred_check
      _
    $region71: #{forward.1} parent=1 // pred_check_branch
      %119 = sbr.rel (0) target = $region73
    $region72: #{forward.1} parent=1 // pred_region
      %121 = dma.done [#allocation9], 3072
    $region73: #{forward.1} parent=1 // pred_fallthru
      _
    // Predicated region
    $region74: #{forward.1} parent=1 // pred_check
      _
    $region75: #{forward.1} parent=1 // pred_check_branch
      %123 = sbr.rel (0) target = $region77
    $region76: #{forward.1} parent=1 // pred_region
      %125 = dma.done [#allocation9], 3072
    $region77: #{forward.1} parent=1 // pred_fallthru
      _
    %v127 = vld [vmem:[%s0] sm:$0xff]
    %v128 = vld [vmem:[%s0 + $0x8] sm:$0xff]
    %v129 = vld [vmem:[%s0 + $0x10] sm:$0xff]
    %v130 = vld [vmem:[%s0 + $0x18] sm:$0xff]
    %v131 = vld [vmem:[%s0 + $0x20] sm:$0xff]
    %v132 = vld [vmem:[%s0 + $0x28] sm:$0xff]
    %v133 = vld [vmem:[%s0 + $0x30] sm:$0xff]
    %v134 = vld [vmem:[%s0 + $0x38] sm:$0xff]
    %v135 = vld [vmem:[%s0 + $0x40] sm:$0xff]
    %v136 = vld [vmem:[%s0 + $0x48] sm:$0xff]
    %v137 = vld [vmem:[%s0 + $0x50] sm:$0xff]
    %v138 = vld [vmem:[%s0 + $0x58] sm:$0xff]
    %v139 = vld [vmem:[%s0 + $0x60] sm:$0xff]
    %v140 = vld [vmem:[%s0 + $0x68] sm:$0xff]
    %v141 = vld [vmem:[%s0 + $0x70] sm:$0xff]
    %v142 = vld [vmem:[%s0 + $0x78] sm:$0xff]
    %v143 = vlaneseq
    %v144 = vand.u32 %v143, 127
    %145 = vset.pattern.permute.xlu0 0
    %146 = vperm.xlu0 %145, %v127
    %v147 = vpop.permute.xlu0 %146
    %148 = vset.pattern.permute.xlu0 0
    %149 = vperm.xlu0 %148, %v128
    %v150 = vpop.permute.xlu0 %149
    %151 = vset.pattern.permute.xlu0 0
    %152 = vperm.xlu0 %151, %v129
    %v153 = vpop.permute.xlu0 %152
    %154 = vset.pattern.permute.xlu0 0
    %155 = vperm.xlu0 %154, %v130
    %v156 = vpop.permute.xlu0 %155
    %157 = vset.pattern.permute.xlu0 0
    %158 = vperm.xlu0 %157, %v131
    %v159 = vpop.permute.xlu0 %158
    %160 = vset.pattern.permute.xlu0 0
    %161 = vperm.xlu0 %160, %v132
    %v162 = vpop.permute.xlu0 %161
    %163 = vset.pattern.permute.xlu0 0
    %164 = vperm.xlu0 %163, %v133
    %v165 = vpop.permute.xlu0 %164
    %166 = vset.pattern.permute.xlu0 0
    %167 = vperm.xlu0 %166, %v134
    %v168 = vpop.permute.xlu0 %167
    %169 = vset.pattern.permute.xlu0 0
    %170 = vperm.xlu0 %169, %v135
    %v171 = vpop.permute.xlu0 %170
    %172 = vset.pattern.permute.xlu0 0
    %173 = vperm.xlu0 %172, %v136
    %v174 = vpop.permute.xlu0 %173
    %175 = vset.pattern.permute.xlu0 0
    %176 = vperm.xlu0 %175, %v137
    %v177 = vpop.permute.xlu0 %176
    %178 = vset.pattern.permute.xlu0 0
    %179 = vperm.xlu0 %178, %v138
    %v180 = vpop.permute.xlu0 %179
    %181 = vset.pattern.permute.xlu0 0
    %182 = vperm.xlu0 %181, %v139
    %v183 = vpop.permute.xlu0 %182
    %184 = vset.pattern.permute.xlu0 0
    %185 = vperm.xlu0 %184, %v140
    %v186 = vpop.permute.xlu0 %185
    %187 = vset.pattern.permute.xlu0 0
    %188 = vperm.xlu0 %187, %v141
    %v189 = vpop.permute.xlu0 %188
    %190 = vset.pattern.permute.xlu0 0
    %191 = vperm.xlu0 %190, %v142
    %v192 = vpop.permute.xlu0 %191
    %vm193 = vcmp.eq.s32.totalorder %v144, %v147
    %vm194 = vcmp.eq.s32.totalorder %v144, %v150
    %vm195 = vcmp.eq.s32.totalorder %v144, %v153
    %vm196 = vcmp.eq.s32.totalorder %v144, %v156
    %vm197 = vcmp.eq.s32.totalorder %v144, %v159
    %vm198 = vcmp.eq.s32.totalorder %v144, %v162
    %vm199 = vcmp.eq.s32.totalorder %v144, %v165
    %vm200 = vcmp.eq.s32.totalorder %v144, %v168
    %vm201 = vcmp.eq.s32.totalorder %v144, %v171
    %vm202 = vcmp.eq.s32.totalorder %v144, %v174
    %vm203 = vcmp.eq.s32.totalorder %v144, %v177
    %vm204 = vcmp.eq.s32.totalorder %v144, %v180
    %vm205 = vcmp.eq.s32.totalorder %v144, %v183
    %vm206 = vcmp.eq.s32.totalorder %v144, %v186
    %vm207 = vcmp.eq.s32.totalorder %v144, %v189
    %vm208 = vcmp.eq.s32.totalorder %v144, %v192
    %v209 = vsel %vm193, 1.0, 0.0
    %v210 = vsel %vm194, 1.0, 0.0
    %v211 = vsel %vm195, 1.0, 0.0
    %v212 = vsel %vm196, 1.0, 0.0
    %v213 = vsel %vm197, 1.0, 0.0
    %v214 = vsel %vm198, 1.0, 0.0
    %v215 = vsel %vm199, 1.0, 0.0
    %v216 = vsel %vm200, 1.0, 0.0
    %v217 = vsel %vm201, 1.0, 0.0
    %v218 = vsel %vm202, 1.0, 0.0
    %v219 = vsel %vm203, 1.0, 0.0
    %v220 = vsel %vm204, 1.0, 0.0
    %v221 = vsel %vm205, 1.0, 0.0
    %v222 = vsel %vm206, 1.0, 0.0
    %v223 = vsel %vm207, 1.0, 0.0
    %v224 = vsel %vm208, 1.0, 0.0
    %v225 = vpack.c.bf16 %v210, %v209
    %v226 = vpack.c.bf16 %v212, %v211
    %v227 = vpack.c.bf16 %v214, %v213
    %v228 = vpack.c.bf16 %v216, %v215
    %v229 = vpack.c.bf16 %v218, %v217
    %v230 = vpack.c.bf16 %v220, %v219
    %v231 = vpack.c.bf16 %v222, %v221
    %v232 = vpack.c.bf16 %v224, %v223
    %v233 = vld [vmem:[%s1] sm:$0xf]
    %v234 = vld [vmem:[%s1 + $0x4] sm:$0xf]
    %v235 = vld [vmem:[%s1 + $0x8] sm:$0xf]
    %v236 = vld [vmem:[%s1 + $0xc] sm:$0xf]
    %v237 = vld [vmem:[%s1 + $0x10] sm:$0xf]
    %v238 = vld [vmem:[%s1 + $0x14] sm:$0xf]
    %v239 = vld [vmem:[%s1 + $0x18] sm:$0xf]
    %v240 = vld [vmem:[%s1 + $0x1c] sm:$0xf]
    %v249 = vunpack.c.l.b16 %v233
    %v250 = vunpack.c.l.b16 %v234
    %v251 = vunpack.c.l.b16 %v235
    %v252 = vunpack.c.l.b16 %v236
    %v253 = vunpack.c.l.b16 %v237
    %v254 = vunpack.c.l.b16 %v238
    %v255 = vunpack.c.l.b16 %v239
    %v256 = vunpack.c.l.b16 %v240
    %v257 = vpack.c.b16 %v250, %v249
    %v258 = vpack.c.b16 %v252, %v251
    %v259 = vpack.c.b16 %v254, %v253
    %v260 = vpack.c.b16 %v256, %v255
    %vm265 = vcmask 523264
    %v267 = vsel %vm265, %v225, 0
    %v270 = vsel %vm265, %v226, 0
    %v273 = vsel %vm265, %v227, 0
    %v276 = vsel %vm265, %v228, 0
    %v279 = vsel %vm265, %v229, 0
    %v282 = vsel %vm265, %v230, 0
    %v285 = vsel %vm265, %v231, 0
    %v288 = vsel %vm265, %v232, 0
    %290 = vmatpush.bf16.msra.mxu0 0
    %291 = vmatpush.bf16.msra.mxu0 0
    %292 = vmatpush.bf16.msra.mxu0 0
    %293 = vmatpush.bf16.msra.mxu0 0
    %294 = vmatpush.bf16.msra.mxu0 %v260
    %295 = vmatpush.bf16.msra.mxu0 %v259
    %296 = vmatpush.bf16.msra.mxu0 %v258
    %297 = vmatpush.bf16.msra.mxu0 %v257
    %298 = vmatmul.bf16.gmra.mxu0 %v267
    %v299 = vpop.f32.mrf.mxu0
    %v300 = vadd.f32 0.0, %v299
    %v301 = vpop.f32.mrf.mxu0
    %v302 = vadd.f32 0.0, %v301
    %303 = vmatmul.bf16.gmra.mxu0 %v270
    %v304 = vpop.f32.mrf.mxu0
    %v305 = vadd.f32 0.0, %v304
    %v306 = vpop.f32.mrf.mxu0
    %v307 = vadd.f32 0.0, %v306
    %308 = vmatmul.bf16.gmra.mxu0 %v273
    %v309 = vpop.f32.mrf.mxu0
    %v310 = vadd.f32 0.0, %v309
    %v311 = vpop.f32.mrf.mxu0
    %v312 = vadd.f32 0.0, %v311
    %313 = vmatmul.bf16.gmra.mxu0 %v276
    %v314 = vpop.f32.mrf.mxu0
    %v315 = vadd.f32 0.0, %v314
    %v316 = vpop.f32.mrf.mxu0
    %v317 = vadd.f32 0.0, %v316
    %318 = vmatmul.bf16.gmra.mxu0 %v279
    %v319 = vpop.f32.mrf.mxu0
    %v320 = vadd.f32 0.0, %v319
    %v321 = vpop.f32.mrf.mxu0
    %v322 = vadd.f32 0.0, %v321
    %323 = vmatmul.bf16.gmra.mxu0 %v282
    %v324 = vpop.f32.mrf.mxu0
    %v325 = vadd.f32 0.0, %v324
    %v326 = vpop.f32.mrf.mxu0
    %v327 = vadd.f32 0.0, %v326
    %328 = vmatmul.bf16.gmra.mxu0 %v285
    %v329 = vpop.f32.mrf.mxu0
    %v330 = vadd.f32 0.0, %v329
    %v331 = vpop.f32.mrf.mxu0
    %v332 = vadd.f32 0.0, %v331
    %333 = vmatmul.bf16.gmra.mxu0 %v288
    %v334 = vpop.f32.mrf.mxu0
    %v335 = vadd.f32 0.0, %v334
    %v336 = vpop.f32.mrf.mxu0
    %v337 = vadd.f32 0.0, %v336
    %338 = vdwg.mxu0
    %vm355 = vcmask 1041408
    %v356 = vrot.slane %v300, 6
    %v357 = vrot.slane %v302, 6
    %v358 = vsel %vm355, %v356, %v357
    %v359 = vrot.slane %v305, 6
    %v360 = vsel %vm355, %v357, %v359
    %v361 = vrot.slane %v307, 6
    %v362 = vsel %vm355, %v359, %v361
    %v363 = vrot.slane %v310, 6
    %v364 = vsel %vm355, %v361, %v363
    %v365 = vrot.slane %v312, 6
    %v366 = vsel %vm355, %v363, %v365
    %v367 = vrot.slane %v315, 6
    %v368 = vsel %vm355, %v365, %v367
    %v369 = vrot.slane %v317, 6
    %v370 = vsel %vm355, %v367, %v369
    %v371 = vrot.slane %v320, 6
    %v372 = vrot.slane %v322, 6
    %v373 = vsel %vm355, %v371, %v372
    %v374 = vrot.slane %v325, 6
    %v375 = vsel %vm355, %v372, %v374
    %v376 = vrot.slane %v327, 6
    %v377 = vsel %vm355, %v374, %v376
    %v378 = vrot.slane %v330, 6
    %v379 = vsel %vm355, %v376, %v378
    %v380 = vrot.slane %v332, 6
    %v381 = vsel %vm355, %v378, %v380
    %v382 = vrot.slane %v335, 6
    %v383 = vsel %vm355, %v380, %v382
    %v384 = vrot.slane %v337, 6
    %v385 = vsel %vm355, %v382, %v384
    %v404 = vsel %vm355, 0.0, %v356
    %v405 = vsel %vm355, 0.0, %v371
    %v406 = vsel %vm355, %v369, 0.0
    %v407 = vsel %vm355, %v384, 0.0
    %vm413 = vcmask 1046528
    %v414 = vrot.slane %v404, 1
    %v415 = vrot.slane %v358, 1
    %v416 = vsel %vm413, %v414, %v415
    %v417 = vrot.slane %v360, 1
    %v418 = vsel %vm413, %v415, %v417
    %v419 = vrot.slane %v362, 1
    %v420 = vsel %vm413, %v417, %v419
    %v421 = vrot.slane %v364, 1
    %v422 = vsel %vm413, %v419, %v421
    %v423 = vrot.slane %v366, 1
    %v424 = vsel %vm413, %v421, %v423
    %v425 = vrot.slane %v368, 1
    %v426 = vsel %vm413, %v423, %v425
    %v427 = vrot.slane %v370, 1
    %v428 = vsel %vm413, %v425, %v427
    %v429 = vrot.slane %v406, 1
    %v430 = vsel %vm413, %v427, %v429
    %v431 = vrot.slane 0.0, 1
    %v432 = vsel %vm413, %v429, %v431
    %v433 = vrot.slane %v405, 1
    %v434 = vrot.slane %v373, 1
    %v435 = vsel %vm413, %v433, %v434
    %v436 = vrot.slane %v375, 1
    %v437 = vsel %vm413, %v434, %v436
    %v438 = vrot.slane %v377, 1
    %v439 = vsel %vm413, %v436, %v438
    %v440 = vrot.slane %v379, 1
    %v441 = vsel %vm413, %v438, %v440
    %v442 = vrot.slane %v381, 1
    %v443 = vsel %vm413, %v440, %v442
    %v444 = vrot.slane %v383, 1
    %v445 = vsel %vm413, %v442, %v444
    %v446 = vrot.slane %v385, 1
    %v447 = vsel %vm413, %v444, %v446
    %v448 = vrot.slane %v407, 1
    %v449 = vsel %vm413, %v446, %v448
    %v450 = vsel %vm413, %v448, %v431
    %451 = vrot.lane.b32.xlu0 %v416, 32
    %v452 = vpop.permute.xlu0 %451
    %453 = vrot.lane.b32.xlu0 %v418, 32
    %v454 = vpop.permute.xlu0 %453
    %455 = vrot.lane.b32.xlu0 %v420, 32
    %v456 = vpop.permute.xlu0 %455
    %457 = vrot.lane.b32.xlu0 %v422, 32
    %v458 = vpop.permute.xlu0 %457
    %459 = vrot.lane.b32.xlu0 %v424, 32
    %v460 = vpop.permute.xlu0 %459
    %461 = vrot.lane.b32.xlu0 %v426, 32
    %v462 = vpop.permute.xlu0 %461
    %463 = vrot.lane.b32.xlu0 %v428, 32
    %v464 = vpop.permute.xlu0 %463
    %465 = vrot.lane.b32.xlu0 %v430, 32
    %v466 = vpop.permute.xlu0 %465
    %467 = vrot.lane.b32.xlu0 %v432, 32
    %v468 = vpop.permute.xlu0 %467
    %469 = vrot.lane.b32.xlu0 %v431, 32
    %v470 = vpop.permute.xlu0 %469
    %471 = vrot.lane.b32.xlu0 %v435, 32
    %v472 = vpop.permute.xlu0 %471
    %473 = vrot.lane.b32.xlu0 %v437, 32
    %v474 = vpop.permute.xlu0 %473
    %475 = vrot.lane.b32.xlu0 %v439, 32
    %v476 = vpop.permute.xlu0 %475
    %477 = vrot.lane.b32.xlu0 %v441, 32
    %v478 = vpop.permute.xlu0 %477
    %479 = vrot.lane.b32.xlu0 %v443, 32
    %v480 = vpop.permute.xlu0 %479
    %481 = vrot.lane.b32.xlu0 %v445, 32
    %v482 = vpop.permute.xlu0 %481
    %483 = vrot.lane.b32.xlu0 %v447, 32
    %v484 = vpop.permute.xlu0 %483
    %485 = vrot.lane.b32.xlu0 %v449, 32
    %v486 = vpop.permute.xlu0 %485
    %487 = vrot.lane.b32.xlu0 %v450, 32
    %v488 = vpop.permute.xlu0 %487
    %vm508 = vcmask 1045504
    %v509 = vrot.slane %v404, 2
    %v510 = vrot.slane %v358, 2
    %v511 = vsel %vm508, %v509, %v510
    %v512 = vrot.slane %v360, 2
    %v513 = vsel %vm508, %v510, %v512
    %v514 = vrot.slane %v362, 2
    %v515 = vsel %vm508, %v512, %v514
    %v516 = vrot.slane %v364, 2
    %v517 = vsel %vm508, %v514, %v516
    %v518 = vrot.slane %v366, 2
    %v519 = vsel %vm508, %v516, %v518
    %v520 = vrot.slane %v368, 2
    %v521 = vsel %vm508, %v518, %v520
    %v522 = vrot.slane %v370, 2
    %v523 = vsel %vm508, %v520, %v522
    %v524 = vrot.slane %v406, 2
    %v525 = vsel %vm508, %v522, %v524
    %v526 = vrot.slane 0.0, 2
    %v527 = vsel %vm508, %v524, %v526
    %v528 = vrot.slane %v405, 2
    %v529 = vrot.slane %v373, 2
    %v530 = vsel %vm508, %v528, %v529
    %v531 = vrot.slane %v375, 2
    %v532 = vsel %vm508, %v529, %v531
    %v533 = vrot.slane %v377, 2
    %v534 = vsel %vm508, %v531, %v533
    %v535 = vrot.slane %v379, 2
    %v536 = vsel %vm508, %v533, %v535
    %v537 = vrot.slane %v381, 2
    %v538 = vsel %vm508, %v535, %v537
    %v539 = vrot.slane %v383, 2
    %v540 = vsel %vm508, %v537, %v539
    %v541 = vrot.slane %v385, 2
    %v542 = vsel %vm508, %v539, %v541
    %v543 = vrot.slane %v407, 2
    %v544 = vsel %vm508, %v541, %v543
    %v545 = vsel %vm508, %v543, %v526
    %546 = vrot.lane.b32.xlu0 %v511, 64
    %v547 = vpop.permute.xlu0 %546
    %548 = vrot.lane.b32.xlu0 %v513, 64
    %v549 = vpop.permute.xlu0 %548
    %550 = vrot.lane.b32.xlu0 %v515, 64
    %v551 = vpop.permute.xlu0 %550
    %552 = vrot.lane.b32.xlu0 %v517, 64
    %v553 = vpop.permute.xlu0 %552
    %554 = vrot.lane.b32.xlu0 %v519, 64
    %v555 = vpop.permute.xlu0 %554
    %556 = vrot.lane.b32.xlu0 %v521, 64
    %v557 = vpop.permute.xlu0 %556
    %558 = vrot.lane.b32.xlu0 %v523, 64
    %v559 = vpop.permute.xlu0 %558
    %560 = vrot.lane.b32.xlu0 %v525, 64
    %v561 = vpop.permute.xlu0 %560
    %562 = vrot.lane.b32.xlu0 %v527, 64
    %v563 = vpop.permute.xlu0 %562
    %564 = vrot.lane.b32.xlu0 %v526, 64
    %v565 = vpop.permute.xlu0 %564
    %566 = vrot.lane.b32.xlu0 %v530, 64
    %v567 = vpop.permute.xlu0 %566
    %568 = vrot.lane.b32.xlu0 %v532, 64
    %v569 = vpop.permute.xlu0 %568
    %570 = vrot.lane.b32.xlu0 %v534, 64
    %v571 = vpop.permute.xlu0 %570
    %572 = vrot.lane.b32.xlu0 %v536, 64
    %v573 = vpop.permute.xlu0 %572
    %574 = vrot.lane.b32.xlu0 %v538, 64
    %v575 = vpop.permute.xlu0 %574
    %576 = vrot.lane.b32.xlu0 %v540, 64
    %v577 = vpop.permute.xlu0 %576
    %578 = vrot.lane.b32.xlu0 %v542, 64
    %v579 = vpop.permute.xlu0 %578
    %580 = vrot.lane.b32.xlu0 %v544, 64
    %v581 = vpop.permute.xlu0 %580
    %582 = vrot.lane.b32.xlu0 %v545, 64
    %v583 = vpop.permute.xlu0 %582
    %vm603 = vcmask 1040384
    %v604 = vrot.slane %v404, 7
    %v605 = vrot.slane %v358, 7
    %v606 = vsel %vm603, %v604, %v605
    %v607 = vrot.slane %v360, 7
    %v608 = vsel %vm603, %v605, %v607
    %v609 = vrot.slane %v362, 7
    %v610 = vsel %vm603, %v607, %v609
    %v611 = vrot.slane %v364, 7
    %v612 = vsel %vm603, %v609, %v611
    %v613 = vrot.slane %v366, 7
    %v614 = vsel %vm603, %v611, %v613
    %v615 = vrot.slane %v368, 7
    %v616 = vsel %vm603, %v613, %v615
    %v617 = vrot.slane %v370, 7
    %v618 = vsel %vm603, %v615, %v617
    %v619 = vrot.slane %v406, 7
    %v620 = vsel %vm603, %v617, %v619
    %v621 = vrot.slane %v405, 7
    %v622 = vrot.slane %v373, 7
    %v623 = vsel %vm603, %v621, %v622
    %v624 = vrot.slane %v375, 7
    %v625 = vsel %vm603, %v622, %v624
    %v626 = vrot.slane %v377, 7
    %v627 = vsel %vm603, %v624, %v626
    %v628 = vrot.slane %v379, 7
    %v629 = vsel %vm603, %v626, %v628
    %v630 = vrot.slane %v381, 7
    %v631 = vsel %vm603, %v628, %v630
    %v632 = vrot.slane %v383, 7
    %v633 = vsel %vm603, %v630, %v632
    %v634 = vrot.slane %v385, 7
    %v635 = vsel %vm603, %v632, %v634
    %v636 = vrot.slane %v407, 7
    %v637 = vsel %vm603, %v634, %v636
    %638 = vrot.lane.b32.xlu0 %v604, 96
    %v639 = vpop.permute.xlu0 %638
    %640 = vrot.lane.b32.xlu0 %v606, 96
    %v641 = vpop.permute.xlu0 %640
    %642 = vrot.lane.b32.xlu0 %v608, 96
    %v643 = vpop.permute.xlu0 %642
    %644 = vrot.lane.b32.xlu0 %v610, 96
    %v645 = vpop.permute.xlu0 %644
    %646 = vrot.lane.b32.xlu0 %v612, 96
    %v647 = vpop.permute.xlu0 %646
    %648 = vrot.lane.b32.xlu0 %v614, 96
    %v649 = vpop.permute.xlu0 %648
    %650 = vrot.lane.b32.xlu0 %v616, 96
    %v651 = vpop.permute.xlu0 %650
    %652 = vrot.lane.b32.xlu0 %v618, 96
    %v653 = vpop.permute.xlu0 %652
    %654 = vrot.lane.b32.xlu0 %v620, 96
    %v655 = vpop.permute.xlu0 %654
    %656 = vrot.lane.b32.xlu0 %v619, 96
    %v657 = vpop.permute.xlu0 %656
    %658 = vrot.lane.b32.xlu0 %v621, 96
    %v659 = vpop.permute.xlu0 %658
    %660 = vrot.lane.b32.xlu0 %v623, 96
    %v661 = vpop.permute.xlu0 %660
    %662 = vrot.lane.b32.xlu0 %v625, 96
    %v663 = vpop.permute.xlu0 %662
    %664 = vrot.lane.b32.xlu0 %v627, 96
    %v665 = vpop.permute.xlu0 %664
    %666 = vrot.lane.b32.xlu0 %v629, 96
    %v667 = vpop.permute.xlu0 %666
    %668 = vrot.lane.b32.xlu0 %v631, 96
    %v669 = vpop.permute.xlu0 %668
    %670 = vrot.lane.b32.xlu0 %v633, 96
    %v671 = vpop.permute.xlu0 %670
    %672 = vrot.lane.b32.xlu0 %v635, 96
    %v673 = vpop.permute.xlu0 %672
    %674 = vrot.lane.b32.xlu0 %v637, 96
    %v675 = vpop.permute.xlu0 %674
    %676 = vrot.lane.b32.xlu0 %v636, 96
    %v677 = vpop.permute.xlu0 %676
    %vm698 = vcmask 1044480
    %v699 = vrot.slane %v404, 3
    %v700 = vrot.slane %v358, 3
    %v701 = vsel %vm698, %v699, %v700
    %v702 = vrot.slane %v360, 3
    %v703 = vsel %vm698, %v700, %v702
    %v704 = vrot.slane %v362, 3
    %v705 = vsel %vm698, %v702, %v704
    %v706 = vrot.slane %v364, 3
    %v707 = vsel %vm698, %v704, %v706
    %v708 = vrot.slane %v366, 3
    %v709 = vsel %vm698, %v706, %v708
    %v710 = vrot.slane %v368, 3
    %v711 = vsel %vm698, %v708, %v710
    %v712 = vrot.slane %v370, 3
    %v713 = vsel %vm698, %v710, %v712
    %v714 = vrot.slane %v406, 3
    %v715 = vsel %vm698, %v712, %v714
    %v716 = vrot.slane 0.0, 3
    %v717 = vsel %vm698, %v714, %v716
    %v718 = vrot.slane %v405, 3
    %v719 = vrot.slane %v373, 3
    %v720 = vsel %vm698, %v718, %v719
    %v721 = vrot.slane %v375, 3
    %v722 = vsel %vm698, %v719, %v721
    %v723 = vrot.slane %v377, 3
    %v724 = vsel %vm698, %v721, %v723
    %v725 = vrot.slane %v379, 3
    %v726 = vsel %vm698, %v723, %v725
    %v727 = vrot.slane %v381, 3
    %v728 = vsel %vm698, %v725, %v727
    %v729 = vrot.slane %v383, 3
    %v730 = vsel %vm698, %v727, %v729
    %v731 = vrot.slane %v385, 3
    %v732 = vsel %vm698, %v729, %v731
    %v733 = vrot.slane %v407, 3
    %v734 = vsel %vm698, %v731, %v733
    %v735 = vsel %vm698, %v733, %v716
    %736 = vrot.lane.b32.xlu0 %v701, 96
    %v737 = vpop.permute.xlu0 %736
    %738 = vrot.lane.b32.xlu0 %v703, 96
    %v739 = vpop.permute.xlu0 %738
    %740 = vrot.lane.b32.xlu0 %v705, 96
    %v741 = vpop.permute.xlu0 %740
    %742 = vrot.lane.b32.xlu0 %v707, 96
    %v743 = vpop.permute.xlu0 %742
    %744 = vrot.lane.b32.xlu0 %v709, 96
    %v745 = vpop.permute.xlu0 %744
    %746 = vrot.lane.b32.xlu0 %v711, 96
    %v747 = vpop.permute.xlu0 %746
    %748 = vrot.lane.b32.xlu0 %v713, 96
    %v749 = vpop.permute.xlu0 %748
    %750 = vrot.lane.b32.xlu0 %v715, 96
    %v751 = vpop.permute.xlu0 %750
    %752 = vrot.lane.b32.xlu0 %v717, 96
    %v753 = vpop.permute.xlu0 %752
    %754 = vrot.lane.b32.xlu0 %v716, 96
    %v755 = vpop.permute.xlu0 %754
    %756 = vrot.lane.b32.xlu0 %v720, 96
    %v757 = vpop.permute.xlu0 %756
    %758 = vrot.lane.b32.xlu0 %v722, 96
    %v759 = vpop.permute.xlu0 %758
    %760 = vrot.lane.b32.xlu0 %v724, 96
    %v761 = vpop.permute.xlu0 %760
    %762 = vrot.lane.b32.xlu0 %v726, 96
    %v763 = vpop.permute.xlu0 %762
    %764 = vrot.lane.b32.xlu0 %v728, 96
    %v765 = vpop.permute.xlu0 %764
    %766 = vrot.lane.b32.xlu0 %v730, 96
    %v767 = vpop.permute.xlu0 %766
    %768 = vrot.lane.b32.xlu0 %v732, 96
    %v769 = vpop.permute.xlu0 %768
    %770 = vrot.lane.b32.xlu0 %v734, 96
    %v771 = vpop.permute.xlu0 %770
    %772 = vrot.lane.b32.xlu0 %v735, 96
    %v773 = vpop.permute.xlu0 %772
    %813 = vrot.lane.b32.xlu0 %v404, 32
    %v814 = vpop.permute.xlu0 %813
    %815 = vrot.lane.b32.xlu0 %v358, 32
    %v816 = vpop.permute.xlu0 %815
    %817 = vrot.lane.b32.xlu0 %v360, 32
    %v818 = vpop.permute.xlu0 %817
    %819 = vrot.lane.b32.xlu0 %v362, 32
    %v820 = vpop.permute.xlu0 %819
    %821 = vrot.lane.b32.xlu0 %v364, 32
    %v822 = vpop.permute.xlu0 %821
    %823 = vrot.lane.b32.xlu0 %v366, 32
    %v824 = vpop.permute.xlu0 %823
    %825 = vrot.lane.b32.xlu0 %v368, 32
    %v826 = vpop.permute.xlu0 %825
    %827 = vrot.lane.b32.xlu0 %v370, 32
    %v828 = vpop.permute.xlu0 %827
    %829 = vrot.lane.b32.xlu0 %v406, 32
    %v830 = vpop.permute.xlu0 %829
    %831 = vrot.lane.b32.xlu0 0.0, 32
    %v832 = vpop.permute.xlu0 %831
    %833 = vrot.lane.b32.xlu0 %v405, 32
    %v834 = vpop.permute.xlu0 %833
    %835 = vrot.lane.b32.xlu0 %v373, 32
    %v836 = vpop.permute.xlu0 %835
    %837 = vrot.lane.b32.xlu0 %v375, 32
    %v838 = vpop.permute.xlu0 %837
    %839 = vrot.lane.b32.xlu0 %v377, 32
    %v840 = vpop.permute.xlu0 %839
    %841 = vrot.lane.b32.xlu0 %v379, 32
    %v842 = vpop.permute.xlu0 %841
    %843 = vrot.lane.b32.xlu0 %v381, 32
    %v844 = vpop.permute.xlu0 %843
    %845 = vrot.lane.b32.xlu0 %v383, 32
    %v846 = vpop.permute.xlu0 %845
    %847 = vrot.lane.b32.xlu0 %v385, 32
    %v848 = vpop.permute.xlu0 %847
    %849 = vrot.lane.b32.xlu0 %v407, 32
    %v850 = vpop.permute.xlu0 %849
    %870 = vrot.lane.b32.xlu0 %v416, 64
    %v871 = vpop.permute.xlu0 %870
    %872 = vrot.lane.b32.xlu0 %v418, 64
    %v873 = vpop.permute.xlu0 %872
    %874 = vrot.lane.b32.xlu0 %v420, 64
    %v875 = vpop.permute.xlu0 %874
    %876 = vrot.lane.b32.xlu0 %v422, 64
    %v877 = vpop.permute.xlu0 %876
    %878 = vrot.lane.b32.xlu0 %v424, 64
    %v879 = vpop.permute.xlu0 %878
    %880 = vrot.lane.b32.xlu0 %v426, 64
    %v881 = vpop.permute.xlu0 %880
    %882 = vrot.lane.b32.xlu0 %v428, 64
    %v883 = vpop.permute.xlu0 %882
    %884 = vrot.lane.b32.xlu0 %v430, 64
    %v885 = vpop.permute.xlu0 %884
    %886 = vrot.lane.b32.xlu0 %v432, 64
    %v887 = vpop.permute.xlu0 %886
    %888 = vrot.lane.b32.xlu0 %v431, 64
    %v889 = vpop.permute.xlu0 %888
    %890 = vrot.lane.b32.xlu0 %v435, 64
    %v891 = vpop.permute.xlu0 %890
    %892 = vrot.lane.b32.xlu0 %v437, 64
    %v893 = vpop.permute.xlu0 %892
    %894 = vrot.lane.b32.xlu0 %v439, 64
    %v895 = vpop.permute.xlu0 %894
    %896 = vrot.lane.b32.xlu0 %v441, 64
    %v897 = vpop.permute.xlu0 %896
    %898 = vrot.lane.b32.xlu0 %v443, 64
    %v899 = vpop.permute.xlu0 %898
    %900 = vrot.lane.b32.xlu0 %v445, 64
    %v901 = vpop.permute.xlu0 %900
    %902 = vrot.lane.b32.xlu0 %v447, 64
    %v903 = vpop.permute.xlu0 %902
    %904 = vrot.lane.b32.xlu0 %v449, 64
    %v905 = vpop.permute.xlu0 %904
    %906 = vrot.lane.b32.xlu0 %v450, 64
    %v907 = vpop.permute.xlu0 %906
    %927 = vrot.lane.b32.xlu0 %v511, 96
    %v928 = vpop.permute.xlu0 %927
    %929 = vrot.lane.b32.xlu0 %v513, 96
    %v930 = vpop.permute.xlu0 %929
    %931 = vrot.lane.b32.xlu0 %v515, 96
    %v932 = vpop.permute.xlu0 %931
    %933 = vrot.lane.b32.xlu0 %v517, 96
    %v934 = vpop.permute.xlu0 %933
    %935 = vrot.lane.b32.xlu0 %v519, 96
    %v936 = vpop.permute.xlu0 %935
    %937 = vrot.lane.b32.xlu0 %v521, 96
    %v938 = vpop.permute.xlu0 %937
    %939 = vrot.lane.b32.xlu0 %v523, 96
    %v940 = vpop.permute.xlu0 %939
    %941 = vrot.lane.b32.xlu0 %v525, 96
    %v942 = vpop.permute.xlu0 %941
    %943 = vrot.lane.b32.xlu0 %v527, 96
    %v944 = vpop.permute.xlu0 %943
    %945 = vrot.lane.b32.xlu0 %v526, 96
    %v946 = vpop.permute.xlu0 %945
    %947 = vrot.lane.b32.xlu0 %v530, 96
    %v948 = vpop.permute.xlu0 %947
    %949 = vrot.lane.b32.xlu0 %v532, 96
    %v950 = vpop.permute.xlu0 %949
    %951 = vrot.lane.b32.xlu0 %v534, 96
    %v952 = vpop.permute.xlu0 %951
    %953 = vrot.lane.b32.xlu0 %v536, 96
    %v954 = vpop.permute.xlu0 %953
    %955 = vrot.lane.b32.xlu0 %v538, 96
    %v956 = vpop.permute.xlu0 %955
    %957 = vrot.lane.b32.xlu0 %v540, 96
    %v958 = vpop.permute.xlu0 %957
    %959 = vrot.lane.b32.xlu0 %v542, 96
    %v960 = vpop.permute.xlu0 %959
    %961 = vrot.lane.b32.xlu0 %v544, 96
    %v962 = vpop.permute.xlu0 %961
    %963 = vrot.lane.b32.xlu0 %v545, 96
    %v964 = vpop.permute.xlu0 %963
    %vm984 = vcmask 261120
    %v985 = vsel %vm984, %v404, %v452
    %v986 = vsel %vm984, %v358, %v454
    %v987 = vsel %vm984, %v360, %v456
    %v988 = vsel %vm984, %v362, %v458
    %v989 = vsel %vm984, %v364, %v460
    %v990 = vsel %vm984, %v366, %v462
    %v991 = vsel %vm984, %v368, %v464
    %v992 = vsel %vm984, %v370, %v466
    %v993 = vsel %vm984, %v406, %v468
    %v994 = vsel %vm984, 0.0, %v470
    %v995 = vsel %vm984, %v405, %v472
    %v996 = vsel %vm984, %v373, %v474
    %v997 = vsel %vm984, %v375, %v476
    %v998 = vsel %vm984, %v377, %v478
    %v999 = vsel %vm984, %v379, %v480
    %v1000 = vsel %vm984, %v381, %v482
    %v1001 = vsel %vm984, %v383, %v484
    %v1002 = vsel %vm984, %v385, %v486
    %v1003 = vsel %vm984, %v407, %v488
    %v1004 = vsel %vm265, %v985, %v547
    %v1005 = vsel %vm265, %v986, %v549
    %v1006 = vsel %vm265, %v987, %v551
    %v1007 = vsel %vm265, %v988, %v553
    %v1008 = vsel %vm265, %v989, %v555
    %v1009 = vsel %vm265, %v990, %v557
    %v1010 = vsel %vm265, %v991, %v559
    %v1011 = vsel %vm265, %v992, %v561
    %v1012 = vsel %vm265, %v993, %v563
    %v1013 = vsel %vm265, %v994, %v565
    %v1014 = vsel %vm265, %v995, %v567
    %v1015 = vsel %vm265, %v996, %v569
    %v1016 = vsel %vm265, %v997, %v571
    %v1017 = vsel %vm265, %v998, %v573
    %v1018 = vsel %vm265, %v999, %v575
    %v1019 = vsel %vm265, %v1000, %v577
    %v1020 = vsel %vm265, %v1001, %v579
    %v1021 = vsel %vm265, %v1002, %v581
    %v1022 = vsel %vm265, %v1003, %v583
    %vm1023 = vcmask 785408
    %v1024 = vsel %vm1023, %v1004, %v639
    %v1025 = vsel %vm1023, %v1005, %v641
    %v1026 = vsel %vm1023, %v1006, %v643
    %v1027 = vsel %vm1023, %v1007, %v645
    %v1028 = vsel %vm1023, %v1008, %v647
    %v1029 = vsel %vm1023, %v1009, %v649
    %v1030 = vsel %vm1023, %v1010, %v651
    %v1031 = vsel %vm1023, %v1011, %v653
    %v1032 = vsel %vm1023, %v1012, %v655
    %v1033 = vsel %vm1023, %v1013, %v657
    %v1034 = vsel %vm1023, %v1014, %v659
    %v1035 = vsel %vm1023, %v1015, %v661
    %v1036 = vsel %vm1023, %v1016, %v663
    %v1037 = vsel %vm1023, %v1017, %v665
    %v1038 = vsel %vm1023, %v1018, %v667
    %v1039 = vsel %vm1023, %v1019, %v669
    %v1040 = vsel %vm1023, %v1020, %v671
    %v1041 = vsel %vm1023, %v1021, %v673
    %v1042 = vsel %vm1023, %v1022, %v675
    %v1043 = vsel %vm1023, %v1013, %v677
    %v1044 = vsel %vm1023, %v1004, %v737
    %v1045 = vsel %vm1023, %v1005, %v739
    %v1046 = vsel %vm1023, %v1006, %v741
    %v1047 = vsel %vm1023, %v1007, %v743
    %v1048 = vsel %vm1023, %v1008, %v745
    %v1049 = vsel %vm1023, %v1009, %v747
    %v1050 = vsel %vm1023, %v1010, %v749
    %v1051 = vsel %vm1023, %v1011, %v751
    %v1052 = vsel %vm1023, %v1012, %v753
    %v1053 = vsel %vm1023, %v1013, %v755
    %v1054 = vsel %vm1023, %v1014, %v757
    %v1055 = vsel %vm1023, %v1015, %v759
    %v1056 = vsel %vm1023, %v1016, %v761
    %v1057 = vsel %vm1023, %v1017, %v763
    %v1058 = vsel %vm1023, %v1018, %v765
    %v1059 = vsel %vm1023, %v1019, %v767
    %v1060 = vsel %vm1023, %v1020, %v769
    %v1061 = vsel %vm1023, %v1021, %v771
    %v1062 = vsel %vm1023, %v1022, %v773
    %v1063 = vsel %vm984, %v604, %v814
    %v1064 = vsel %vm984, %v606, %v816
    %v1065 = vsel %vm984, %v608, %v818
    %v1066 = vsel %vm984, %v610, %v820
    %v1067 = vsel %vm984, %v612, %v822
    %v1068 = vsel %vm984, %v614, %v824
    %v1069 = vsel %vm984, %v616, %v826
    %v1070 = vsel %vm984, %v618, %v828
    %v1071 = vsel %vm984, %v620, %v830
    %v1072 = vsel %vm984, %v619, %v832
    %v1073 = vsel %vm984, %v621, %v834
    %v1074 = vsel %vm984, %v623, %v836
    %v1075 = vsel %vm984, %v625, %v838
    %v1076 = vsel %vm984, %v627, %v840
    %v1077 = vsel %vm984, %v629, %v842
    %v1078 = vsel %vm984, %v631, %v844
    %v1079 = vsel %vm984, %v633, %v846
    %v1080 = vsel %vm984, %v635, %v848
    %v1081 = vsel %vm984, %v637, %v850
    %v1082 = vsel %vm984, %v636, %v832
    %v1083 = vsel %vm265, %v1063, %v871
    %v1084 = vsel %vm265, %v1064, %v873
    %v1085 = vsel %vm265, %v1065, %v875
    %v1086 = vsel %vm265, %v1066, %v877
    %v1087 = vsel %vm265, %v1067, %v879
    %v1088 = vsel %vm265, %v1068, %v881
    %v1089 = vsel %vm265, %v1069, %v883
    %v1090 = vsel %vm265, %v1070, %v885
    %v1091 = vsel %vm265, %v1071, %v887
    %v1092 = vsel %vm265, %v1072, %v889
    %v1093 = vsel %vm265, %v1073, %v891
    %v1094 = vsel %vm265, %v1074, %v893
    %v1095 = vsel %vm265, %v1075, %v895
    %v1096 = vsel %vm265, %v1076, %v897
    %v1097 = vsel %vm265, %v1077, %v899
    %v1098 = vsel %vm265, %v1078, %v901
    %v1099 = vsel %vm265, %v1079, %v903
    %v1100 = vsel %vm265, %v1080, %v905
    %v1101 = vsel %vm265, %v1081, %v907
    %v1102 = vsel %vm265, %v1082, %v889
    %v1103 = vsel %vm1023, %v1083, %v928
    %v1104 = vsel %vm1023, %v1084, %v930
    %v1105 = vsel %vm1023, %v1085, %v932
    %v1106 = vsel %vm1023, %v1086, %v934
    %v1107 = vsel %vm1023, %v1087, %v936
    %v1108 = vsel %vm1023, %v1088, %v938
    %v1109 = vsel %vm1023, %v1089, %v940
    %v1110 = vsel %vm1023, %v1090, %v942
    %v1111 = vsel %vm1023, %v1091, %v944
    %v1112 = vsel %vm1023, %v1092, %v946
    %v1113 = vsel %vm1023, %v1093, %v948
    %v1114 = vsel %vm1023, %v1094, %v950
    %v1115 = vsel %vm1023, %v1095, %v952
    %v1116 = vsel %vm1023, %v1096, %v954
    %v1117 = vsel %vm1023, %v1097, %v956
    %v1118 = vsel %vm1023, %v1098, %v958
    %v1119 = vsel %vm1023, %v1099, %v960
    %v1120 = vsel %vm1023, %v1100, %v962
    %v1121 = vsel %vm1023, %v1101, %v964
    %v1122 = vsel %vm1023, %v1102, %v946
    %v1182 = vrot.slane %v1024, 1
    %v1183 = vrot.slane %v1025, 1
    %v1184 = vsel %vm413, %v1182, %v1183
    %v1185 = vrot.slane %v1044, 1
    %v1186 = vrot.slane %v1045, 1
    %v1187 = vsel %vm413, %v1185, %v1186
    %v1188 = vrot.slane %v1103, 1
    %v1189 = vrot.slane %v1104, 1
    %v1190 = vsel %vm413, %v1188, %v1189
    %v1191 = vrot.slane %v1026, 1
    %v1192 = vsel %vm413, %v1183, %v1191
    %v1193 = vrot.slane %v1046, 1
    %v1194 = vsel %vm413, %v1186, %v1193
    %v1195 = vrot.slane %v1105, 1
    %v1196 = vsel %vm413, %v1189, %v1195
    %v1197 = vrot.slane %v1027, 1
    %v1198 = vsel %vm413, %v1191, %v1197
    %v1199 = vrot.slane %v1047, 1
    %v1200 = vsel %vm413, %v1193, %v1199
    %v1201 = vrot.slane %v1106, 1
    %v1202 = vsel %vm413, %v1195, %v1201
    %v1203 = vrot.slane %v1028, 1
    %v1204 = vsel %vm413, %v1197, %v1203
    %v1205 = vrot.slane %v1048, 1
    %v1206 = vsel %vm413, %v1199, %v1205
    %v1207 = vrot.slane %v1107, 1
    %v1208 = vsel %vm413, %v1201, %v1207
    %v1209 = vrot.slane %v1029, 1
    %v1210 = vsel %vm413, %v1203, %v1209
    %v1211 = vrot.slane %v1049, 1
    %v1212 = vsel %vm413, %v1205, %v1211
    %v1213 = vrot.slane %v1108, 1
    %v1214 = vsel %vm413, %v1207, %v1213
    %v1215 = vrot.slane %v1030, 1
    %v1216 = vsel %vm413, %v1209, %v1215
    %v1217 = vrot.slane %v1050, 1
    %v1218 = vsel %vm413, %v1211, %v1217
    %v1219 = vrot.slane %v1109, 1
    %v1220 = vsel %vm413, %v1213, %v1219
    %v1221 = vrot.slane %v1031, 1
    %v1222 = vsel %vm413, %v1215, %v1221
    %v1223 = vrot.slane %v1051, 1
    %v1224 = vsel %vm413, %v1217, %v1223
    %v1225 = vrot.slane %v1110, 1
    %v1226 = vsel %vm413, %v1219, %v1225
    %v1227 = vrot.slane %v1032, 1
    %v1228 = vsel %vm413, %v1221, %v1227
    %v1229 = vrot.slane %v1052, 1
    %v1230 = vsel %vm413, %v1223, %v1229
    %v1231 = vrot.slane %v1111, 1
    %v1232 = vsel %vm413, %v1225, %v1231
    %v1233 = vrot.slane %v1033, 1
    %v1234 = vsel %vm413, %v1227, %v1233
    %v1235 = vrot.slane %v1053, 1
    %v1236 = vsel %vm413, %v1229, %v1235
    %v1237 = vrot.slane %v1112, 1
    %v1238 = vsel %vm413, %v1231, %v1237
    %v1239 = vrot.slane %v1034, 1
    %v1240 = vrot.slane %v1035, 1
    %v1241 = vsel %vm413, %v1239, %v1240
    %v1242 = vrot.slane %v1054, 1
    %v1243 = vrot.slane %v1055, 1
    %v1244 = vsel %vm413, %v1242, %v1243
    %v1245 = vrot.slane %v1113, 1
    %v1246 = vrot.slane %v1114, 1
    %v1247 = vsel %vm413, %v1245, %v1246
    %v1248 = vrot.slane %v1036, 1
    %v1249 = vsel %vm413, %v1240, %v1248
    %v1250 = vrot.slane %v1056, 1
    %v1251 = vsel %vm413, %v1243, %v1250
    %v1252 = vrot.slane %v1115, 1
    %v1253 = vsel %vm413, %v1246, %v1252
    %v1254 = vrot.slane %v1037, 1
    %v1255 = vsel %vm413, %v1248, %v1254
    %v1256 = vrot.slane %v1057, 1
    %v1257 = vsel %vm413, %v1250, %v1256
    %v1258 = vrot.slane %v1116, 1
    %v1259 = vsel %vm413, %v1252, %v1258
    %v1260 = vrot.slane %v1038, 1
    %v1261 = vsel %vm413, %v1254, %v1260
    %v1262 = vrot.slane %v1058, 1
    %v1263 = vsel %vm413, %v1256, %v1262
    %v1264 = vrot.slane %v1117, 1
    %v1265 = vsel %vm413, %v1258, %v1264
    %v1266 = vrot.slane %v1039, 1
    %v1267 = vsel %vm413, %v1260, %v1266
    %v1268 = vrot.slane %v1059, 1
    %v1269 = vsel %vm413, %v1262, %v1268
    %v1270 = vrot.slane %v1118, 1
    %v1271 = vsel %vm413, %v1264, %v1270
    %v1272 = vrot.slane %v1040, 1
    %v1273 = vsel %vm413, %v1266, %v1272
    %v1274 = vrot.slane %v1060, 1
    %v1275 = vsel %vm413, %v1268, %v1274
    %v1276 = vrot.slane %v1119, 1
    %v1277 = vsel %vm413, %v1270, %v1276
    %v1278 = vrot.slane %v1041, 1
    %v1279 = vsel %vm413, %v1272, %v1278
    %v1280 = vrot.slane %v1061, 1
    %v1281 = vsel %vm413, %v1274, %v1280
    %v1282 = vrot.slane %v1120, 1
    %v1283 = vsel %vm413, %v1276, %v1282
    %v1284 = vrot.slane %v1042, 1
    %v1285 = vsel %vm413, %v1278, %v1284
    %v1286 = vrot.slane %v1062, 1
    %v1287 = vsel %vm413, %v1280, %v1286
    %v1288 = vrot.slane %v1121, 1
    %v1289 = vsel %vm413, %v1282, %v1288
    %v1290 = vrot.slane %v1043, 1
    %v1291 = vsel %vm413, %v1284, %v1290
    %v1292 = vsel %vm413, %v1286, %v1235
    %v1293 = vrot.slane %v1122, 1
    %v1294 = vsel %vm413, %v1288, %v1293
    %v1349 = vpack.c.bf16 %v1192, %v1184
    %v1350 = vpack.c.bf16 %v1194, %v1187
    %v1351 = vpack.c.bf16 %v1196, %v1190
    %v1352 = vpack.c.bf16 %v1204, %v1198
    %v1353 = vpack.c.bf16 %v1206, %v1200
    %v1354 = vpack.c.bf16 %v1208, %v1202
    %v1355 = vpack.c.bf16 %v1216, %v1210
    %v1356 = vpack.c.bf16 %v1218, %v1212
    %v1357 = vpack.c.bf16 %v1220, %v1214
    %v1358 = vpack.c.bf16 %v1228, %v1222
    %v1359 = vpack.c.bf16 %v1230, %v1224
    %v1360 = vpack.c.bf16 %v1232, %v1226
    %v1361 = vpack.c.bf16 %v1241, %v1234
    %v1362 = vpack.c.bf16 %v1244, %v1236
    %v1363 = vpack.c.bf16 %v1247, %v1238
    %v1364 = vpack.c.bf16 %v1255, %v1249
    %v1365 = vpack.c.bf16 %v1257, %v1251
    %v1366 = vpack.c.bf16 %v1259, %v1253
    %v1367 = vpack.c.bf16 %v1267, %v1261
    %v1368 = vpack.c.bf16 %v1269, %v1263
    %v1369 = vpack.c.bf16 %v1271, %v1265
    %v1370 = vpack.c.bf16 %v1279, %v1273
    %v1371 = vpack.c.bf16 %v1281, %v1275
    %v1372 = vpack.c.bf16 %v1283, %v1277
    %v1373 = vpack.c.bf16 %v1291, %v1285
    %v1374 = vpack.c.bf16 %v1292, %v1287
    %v1375 = vpack.c.bf16 %v1294, %v1289
    %v1376 = vld [vmem:[#allocation2] sm:$0xff]
    %v1377 = vld [vmem:[#allocation2 + $0x8] sm:$0xf]
    %v1378 = vld [vmem:[#allocation2 + $0xc] sm:$0xff]
    %v1379 = vld [vmem:[#allocation2 + $0x14] sm:$0xf]
    %v1380 = vld [vmem:[#allocation2 + $0x18] sm:$0xff]
    %v1381 = vld [vmem:[#allocation2 + $0x20] sm:$0xf]
    %v1382 = vld [vmem:[#allocation2 + $0x24] sm:$0xff]
    %v1383 = vld [vmem:[#allocation2 + $0x2c] sm:$0xf]
    %v1384 = vld [vmem:[#allocation2 + $0x30] sm:$0xff]
    %v1385 = vld [vmem:[#allocation2 + $0x38] sm:$0xf]
    %v1386 = vld [vmem:[#allocation2 + $0x3c] sm:$0xff]
    %v1387 = vld [vmem:[#allocation2 + $0x44] sm:$0xf]
    %v1388 = vld [vmem:[#allocation2 + $0x48] sm:$0xff]
    %v1389 = vld [vmem:[#allocation2 + $0x50] sm:$0xf]
    %v1390 = vld [vmem:[#allocation2 + $0x54] sm:$0xff]
    %v1391 = vld [vmem:[#allocation2 + $0x5c] sm:$0xf]
    %v1392 = vld [vmem:[#allocation2 + $0x60] sm:$0xff]
    %v1393 = vld [vmem:[#allocation2 + $0x68] sm:$0xf]
    %v1394 = vld [vmem:[#allocation2 + $0x6c] sm:$0xff]
    %v1395 = vld [vmem:[#allocation2 + $0x74] sm:$0xf]
    %v1396 = vld [vmem:[#allocation2 + $0x78] sm:$0xff]
    %v1397 = vld [vmem:[#allocation2 + $0x80] sm:$0xf]
    %v1398 = vld [vmem:[#allocation2 + $0x84] sm:$0xff]
    %v1399 = vld [vmem:[#allocation2 + $0x8c] sm:$0xf]
    %v1400 = vld [vmem:[#allocation2 + $0x90] sm:$0xff]
    %v1401 = vld [vmem:[#allocation2 + $0x98] sm:$0xf]
    %v1402 = vld [vmem:[#allocation2 + $0x9c] sm:$0xff]
    %v1403 = vld [vmem:[#allocation2 + $0xa4] sm:$0xf]
    %v1404 = vld [vmem:[#allocation2 + $0xa8] sm:$0xff]
    %v1405 = vld [vmem:[#allocation2 + $0xb0] sm:$0xf]
    %v1406 = vld [vmem:[#allocation2 + $0xb4] sm:$0xff]
    %v1407 = vld [vmem:[#allocation2 + $0xbc] sm:$0xf]
    %v1408 = vld [vmem:[#allocation2 + $0xc0] sm:$0xff]
    %v1409 = vld [vmem:[#allocation2 + $0xc8] sm:$0xf]
    %v1410 = vld [vmem:[#allocation2 + $0xcc] sm:$0xff]
    %v1411 = vld [vmem:[#allocation2 + $0xd4] sm:$0xf]
    %v1412 = vld [vmem:[#allocation2 + $0xd8] sm:$0xff]
    %v1413 = vld [vmem:[#allocation2 + $0xe0] sm:$0xf]
    %v1414 = vld [vmem:[#allocation2 + $0xe4] sm:$0xff]
    %v1415 = vld [vmem:[#allocation2 + $0xec] sm:$0xf]
    %v1416 = vld [vmem:[#allocation2 + $0xf0] sm:$0xff]
    %v1417 = vld [vmem:[#allocation2 + $0xf8] sm:$0xf]
    %v1418 = vld [vmem:[#allocation2 + $0xfc] sm:$0xff]
    %v1419 = vld [vmem:[#allocation2 + $0x104] sm:$0xf]
    %v1420 = vld [vmem:[#allocation2 + $0x108] sm:$0xff]
    %v1421 = vld [vmem:[#allocation2 + $0x110] sm:$0xf]
    %v1422 = vld [vmem:[#allocation2 + $0x114] sm:$0xff]
    %v1423 = vld [vmem:[#allocation2 + $0x11c] sm:$0xf]
    %v1424 = vld [vmem:[#allocation2 + $0x120] sm:$0xff]
    %v1425 = vld [vmem:[#allocation2 + $0x128] sm:$0xf]
    %v1426 = vld [vmem:[#allocation2 + $0x12c] sm:$0xff]
    %v1427 = vld [vmem:[#allocation2 + $0x134] sm:$0xf]
    %v1428 = vld [vmem:[#allocation2 + $0x138] sm:$0xff]
    %v1429 = vld [vmem:[#allocation2 + $0x140] sm:$0xf]
    %v1430 = vld [vmem:[#allocation2 + $0x144] sm:$0xff]
    %v1431 = vld [vmem:[#allocation2 + $0x14c] sm:$0xf]
    %v1432 = vld [vmem:[#allocation2 + $0x150] sm:$0xff]
    %v1433 = vld [vmem:[#allocation2 + $0x158] sm:$0xf]
    %v1434 = vld [vmem:[#allocation2 + $0x15c] sm:$0xff]
    %v1435 = vld [vmem:[#allocation2 + $0x164] sm:$0xf]
    %v1436 = vld [vmem:[#allocation2 + $0x168] sm:$0xff]
    %v1437 = vld [vmem:[#allocation2 + $0x170] sm:$0xf]
    %v1438 = vld [vmem:[#allocation2 + $0x174] sm:$0xff]
    %v1439 = vld [vmem:[#allocation2 + $0x17c] sm:$0xf]
    %v1440 = vld [vmem:[#allocation2 + $0x180] sm:$0xff]
    %v1441 = vld [vmem:[#allocation2 + $0x188] sm:$0xf]
    %v1442 = vld [vmem:[#allocation2 + $0x18c] sm:$0xff]
    %v1443 = vld [vmem:[#allocation2 + $0x194] sm:$0xf]
    %v1444 = vld [vmem:[#allocation2 + $0x198] sm:$0xff]
    %v1445 = vld [vmem:[#allocation2 + $0x1a0] sm:$0xf]
    %v1446 = vld [vmem:[#allocation2 + $0x1a4] sm:$0xff]
    %v1447 = vld [vmem:[#allocation2 + $0x1ac] sm:$0xf]
    %v1448 = vld [vmem:[#allocation2 + $0x1b0] sm:$0xff]
    %v1449 = vld [vmem:[#allocation2 + $0x1b8] sm:$0xf]
    %v1450 = vld [vmem:[#allocation2 + $0x1bc] sm:$0xff]
    %v1451 = vld [vmem:[#allocation2 + $0x1c4] sm:$0xf]
    %v1452 = vld [vmem:[#allocation2 + $0x1c8] sm:$0xff]
    %v1453 = vld [vmem:[#allocation2 + $0x1d0] sm:$0xf]
    %v1454 = vld [vmem:[#allocation2 + $0x1d4] sm:$0xff]
    %v1455 = vld [vmem:[#allocation2 + $0x1dc] sm:$0xf]
    %v1456 = vld [vmem:[#allocation2 + $0x1e0] sm:$0xff]
    %v1457 = vld [vmem:[#allocation2 + $0x1e8] sm:$0xf]
    %v1458 = vld [vmem:[#allocation2 + $0x1ec] sm:$0xff]
    %v1459 = vld [vmem:[#allocation2 + $0x1f4] sm:$0xf]
    %v1460 = vld [vmem:[#allocation2 + $0x1f8] sm:$0xff]
    %v1461 = vld [vmem:[#allocation2 + $0x200] sm:$0xf]
    %v1462 = vld [vmem:[#allocation2 + $0x204] sm:$0xff]
    %v1463 = vld [vmem:[#allocation2 + $0x20c] sm:$0xf]
    %v1464 = vld [vmem:[#allocation2 + $0x210] sm:$0xff]
    %v1465 = vld [vmem:[#allocation2 + $0x218] sm:$0xf]
    %v1466 = vld [vmem:[#allocation2 + $0x21c] sm:$0xff]
    %v1467 = vld [vmem:[#allocation2 + $0x224] sm:$0xf]
    %v1468 = vld [vmem:[#allocation2 + $0x228] sm:$0xff]
    %v1469 = vld [vmem:[#allocation2 + $0x230] sm:$0xf]
    %v1470 = vld [vmem:[#allocation2 + $0x234] sm:$0xff]
    %v1471 = vld [vmem:[#allocation2 + $0x23c] sm:$0xf]
    %v1472 = vld [vmem:[%s3] sm:$0x7]
    %v1474 = vperm.slane %v1472, 0
    %v1475 = vperm.slane %v1472, 1
    %v1476 = vperm.slane %v1472, 2
    %v1576 = vunpack.c.l.b16 %v1376
    %v1577 = vunpack.c.h.b16 %v1376
    %v1578 = vunpack.c.l.b16 %v1377
    %v1579 = vunpack.c.l.b16 %v1378
    %v1580 = vunpack.c.h.b16 %v1378
    %v1581 = vunpack.c.l.b16 %v1379
    %v1582 = vunpack.c.l.b16 %v1380
    %v1583 = vunpack.c.h.b16 %v1380
    %v1584 = vunpack.c.l.b16 %v1381
    %v1585 = vunpack.c.l.b16 %v1382
    %v1586 = vunpack.c.h.b16 %v1382
    %v1587 = vunpack.c.l.b16 %v1383
    %v1588 = vunpack.c.l.b16 %v1384
    %v1589 = vunpack.c.h.b16 %v1384
    %v1590 = vunpack.c.l.b16 %v1385
    %v1591 = vunpack.c.l.b16 %v1386
    %v1592 = vunpack.c.h.b16 %v1386
    %v1593 = vunpack.c.l.b16 %v1387
    %v1594 = vunpack.c.l.b16 %v1388
    %v1595 = vunpack.c.h.b16 %v1388
    %v1596 = vunpack.c.l.b16 %v1389
    %v1597 = vunpack.c.l.b16 %v1390
    %v1598 = vunpack.c.h.b16 %v1390
    %v1599 = vunpack.c.l.b16 %v1391
    %v1600 = vunpack.c.l.b16 %v1392
    %v1601 = vunpack.c.h.b16 %v1392
    %v1602 = vunpack.c.l.b16 %v1393
    %v1603 = vunpack.c.l.b16 %v1394
    %v1604 = vunpack.c.h.b16 %v1394
    %v1605 = vunpack.c.l.b16 %v1395
    %v1606 = vunpack.c.l.b16 %v1396
    %v1607 = vunpack.c.h.b16 %v1396
    %v1608 = vunpack.c.l.b16 %v1397
    %v1609 = vunpack.c.l.b16 %v1398
    %v1610 = vunpack.c.h.b16 %v1398
    %v1611 = vunpack.c.l.b16 %v1399
    %v1612 = vunpack.c.l.b16 %v1400
    %v1613 = vunpack.c.h.b16 %v1400
    %v1614 = vunpack.c.l.b16 %v1401
    %v1615 = vunpack.c.l.b16 %v1402
    %v1616 = vunpack.c.h.b16 %v1402
    %v1617 = vunpack.c.l.b16 %v1403
    %v1618 = vunpack.c.l.b16 %v1404
    %v1619 = vunpack.c.h.b16 %v1404
    %v1620 = vunpack.c.l.b16 %v1405
    %v1621 = vunpack.c.l.b16 %v1406
    %v1622 = vunpack.c.h.b16 %v1406
    %v1623 = vunpack.c.l.b16 %v1407
    %v1624 = vunpack.c.l.b16 %v1408
    %v1625 = vunpack.c.h.b16 %v1408
    %v1626 = vunpack.c.l.b16 %v1409
    %v1627 = vunpack.c.l.b16 %v1410
    %v1628 = vunpack.c.h.b16 %v1410
    %v1629 = vunpack.c.l.b16 %v1411
    %v1630 = vunpack.c.l.b16 %v1412
    %v1631 = vunpack.c.h.b16 %v1412
    %v1632 = vunpack.c.l.b16 %v1413
    %v1633 = vunpack.c.l.b16 %v1414
    %v1634 = vunpack.c.h.b16 %v1414
    %v1635 = vunpack.c.l.b16 %v1415
    %v1636 = vunpack.c.l.b16 %v1416
    %v1637 = vunpack.c.h.b16 %v1416
    %v1638 = vunpack.c.l.b16 %v1417
    %v1639 = vunpack.c.l.b16 %v1418
    %v1640 = vunpack.c.h.b16 %v1418
    %v1641 = vunpack.c.l.b16 %v1419
    %v1642 = vunpack.c.l.b16 %v1420
    %v1643 = vunpack.c.h.b16 %v1420
    %v1644 = vunpack.c.l.b16 %v1421
    %v1645 = vunpack.c.l.b16 %v1422
    %v1646 = vunpack.c.h.b16 %v1422
    %v1647 = vunpack.c.l.b16 %v1423
    %v1648 = vunpack.c.l.b16 %v1424
    %v1649 = vunpack.c.h.b16 %v1424
    %v1650 = vunpack.c.l.b16 %v1425
    %v1651 = vunpack.c.l.b16 %v1426
    %v1652 = vunpack.c.h.b16 %v1426
    %v1653 = vunpack.c.l.b16 %v1427
    %v1654 = vunpack.c.l.b16 %v1428
    %v1655 = vunpack.c.h.b16 %v1428
    %v1656 = vunpack.c.l.b16 %v1429
    %v1657 = vunpack.c.l.b16 %v1430
    %v1658 = vunpack.c.h.b16 %v1430
    %v1659 = vunpack.c.l.b16 %v1431
    %v1660 = vunpack.c.l.b16 %v1432
    %v1661 = vunpack.c.h.b16 %v1432
    %v1662 = vunpack.c.l.b16 %v1433
    %v1663 = vunpack.c.l.b16 %v1434
    %v1664 = vunpack.c.h.b16 %v1434
    %v1665 = vunpack.c.l.b16 %v1435
    %v1666 = vunpack.c.l.b16 %v1436
    %v1667 = vunpack.c.h.b16 %v1436
    %v1668 = vunpack.c.l.b16 %v1437
    %v1669 = vunpack.c.l.b16 %v1438
    %v1670 = vunpack.c.h.b16 %v1438
    %v1671 = vunpack.c.l.b16 %v1439
    %v1672 = vunpack.c.l.b16 %v1440
    %v1673 = vunpack.c.h.b16 %v1440
    %v1674 = vunpack.c.l.b16 %v1441
    %v1675 = vunpack.c.l.b16 %v1442
    %v1676 = vunpack.c.h.b16 %v1442
    %v1677 = vunpack.c.l.b16 %v1443
    %v1678 = vunpack.c.l.b16 %v1444
    %v1679 = vunpack.c.h.b16 %v1444
    %v1680 = vunpack.c.l.b16 %v1445
    %v1681 = vunpack.c.l.b16 %v1446
    %v1682 = vunpack.c.h.b16 %v1446
    %v1683 = vunpack.c.l.b16 %v1447
    %v1684 = vunpack.c.l.b16 %v1448
    %v1685 = vunpack.c.h.b16 %v1448
    %v1686 = vunpack.c.l.b16 %v1449
    %v1687 = vunpack.c.l.b16 %v1450
    %v1688 = vunpack.c.h.b16 %v1450
    %v1689 = vunpack.c.l.b16 %v1451
    %v1690 = vunpack.c.l.b16 %v1452
    %v1691 = vunpack.c.h.b16 %v1452
    %v1692 = vunpack.c.l.b16 %v1453
    %v1693 = vunpack.c.l.b16 %v1454
    %v1694 = vunpack.c.h.b16 %v1454
    %v1695 = vunpack.c.l.b16 %v1455
    %v1696 = vunpack.c.l.b16 %v1456
    %v1697 = vunpack.c.h.b16 %v1456
    %v1698 = vunpack.c.l.b16 %v1457
    %v1699 = vunpack.c.l.b16 %v1458
    %v1700 = vunpack.c.h.b16 %v1458
    %v1701 = vunpack.c.l.b16 %v1459
    %v1702 = vunpack.c.l.b16 %v1460
    %v1703 = vunpack.c.h.b16 %v1460
    %v1704 = vunpack.c.l.b16 %v1461
    %v1705 = vunpack.c.l.b16 %v1462
    %v1706 = vunpack.c.h.b16 %v1462
    %v1707 = vunpack.c.l.b16 %v1463
    %v1708 = vunpack.c.l.b16 %v1464
    %v1709 = vunpack.c.h.b16 %v1464
    %v1710 = vunpack.c.l.b16 %v1465
    %v1711 = vunpack.c.l.b16 %v1466
    %v1712 = vunpack.c.h.b16 %v1466
    %v1713 = vunpack.c.l.b16 %v1467
    %v1714 = vunpack.c.l.b16 %v1468
    %v1715 = vunpack.c.h.b16 %v1468
    %v1716 = vunpack.c.l.b16 %v1469
    %v1717 = vunpack.c.l.b16 %v1470
    %v1718 = vunpack.c.h.b16 %v1470
    %v1719 = vunpack.c.l.b16 %v1471
    %v1720 = vpack.c.b16 %v1579, %v1576
    %v1721 = vpack.c.b16 %v1580, %v1577
    %v1722 = vpack.c.b16 %v1581, %v1578
    %v1723 = vpack.c.b16 %v1585, %v1582
    %v1724 = vpack.c.b16 %v1586, %v1583
    %v1725 = vpack.c.b16 %v1587, %v1584
    %v1726 = vpack.c.b16 %v1591, %v1588
    %v1727 = vpack.c.b16 %v1592, %v1589
    %v1728 = vpack.c.b16 %v1593, %v1590
    %v1729 = vpack.c.b16 %v1597, %v1594
    %v1730 = vpack.c.b16 %v1598, %v1595
    %v1731 = vpack.c.b16 %v1599, %v1596
    %v1732 = vpack.c.b16 %v1603, %v1600
    %v1733 = vpack.c.b16 %v1604, %v1601
    %v1734 = vpack.c.b16 %v1605, %v1602
    %v1735 = vpack.c.b16 %v1609, %v1606
    %v1736 = vpack.c.b16 %v1610, %v1607
    %v1737 = vpack.c.b16 %v1611, %v1608
    %v1738 = vpack.c.b16 %v1615, %v1612
    %v1739 = vpack.c.b16 %v1616, %v1613
    %v1740 = vpack.c.b16 %v1617, %v1614
    %v1741 = vpack.c.b16 %v1621, %v1618
    %v1742 = vpack.c.b16 %v1622, %v1619
    %v1743 = vpack.c.b16 %v1623, %v1620
    %v1744 = vpack.c.b16 %v1627, %v1624
    %v1745 = vpack.c.b16 %v1628, %v1625
    %v1746 = vpack.c.b16 %v1629, %v1626
    %v1747 = vpack.c.b16 %v1633, %v1630
    %v1748 = vpack.c.b16 %v1634, %v1631
    %v1749 = vpack.c.b16 %v1635, %v1632
    %v1750 = vpack.c.b16 %v1639, %v1636
    %v1751 = vpack.c.b16 %v1640, %v1637
    %v1752 = vpack.c.b16 %v1641, %v1638
    %v1753 = vpack.c.b16 %v1645, %v1642
    %v1754 = vpack.c.b16 %v1646, %v1643
    %v1755 = vpack.c.b16 %v1647, %v1644
    %v1756 = vpack.c.b16 %v1651, %v1648
    %v1757 = vpack.c.b16 %v1652, %v1649
    %v1758 = vpack.c.b16 %v1653, %v1650
    %v1759 = vpack.c.b16 %v1657, %v1654
    %v1760 = vpack.c.b16 %v1658, %v1655
    %v1761 = vpack.c.b16 %v1659, %v1656
    %v1762 = vpack.c.b16 %v1663, %v1660
    %v1763 = vpack.c.b16 %v1664, %v1661
    %v1764 = vpack.c.b16 %v1665, %v1662
    %v1765 = vpack.c.b16 %v1669, %v1666
    %v1766 = vpack.c.b16 %v1670, %v1667
    %v1767 = vpack.c.b16 %v1671, %v1668
    %v1768 = vpack.c.b16 %v1675, %v1672
    %v1769 = vpack.c.b16 %v1676, %v1673
    %v1770 = vpack.c.b16 %v1677, %v1674
    %v1771 = vpack.c.b16 %v1681, %v1678
    %v1772 = vpack.c.b16 %v1682, %v1679
    %v1773 = vpack.c.b16 %v1683, %v1680
    %v1774 = vpack.c.b16 %v1687, %v1684
    %v1775 = vpack.c.b16 %v1688, %v1685
    %v1776 = vpack.c.b16 %v1689, %v1686
    %v1777 = vpack.c.b16 %v1693, %v1690
    %v1778 = vpack.c.b16 %v1694, %v1691
    %v1779 = vpack.c.b16 %v1695, %v1692
    %v1780 = vpack.c.b16 %v1699, %v1696
    %v1781 = vpack.c.b16 %v1700, %v1697
    %v1782 = vpack.c.b16 %v1701, %v1698
    %v1783 = vpack.c.b16 %v1705, %v1702
    %v1784 = vpack.c.b16 %v1706, %v1703
    %v1785 = vpack.c.b16 %v1707, %v1704
    %v1786 = vpack.c.b16 %v1711, %v1708
    %v1787 = vpack.c.b16 %v1712, %v1709
    %v1788 = vpack.c.b16 %v1713, %v1710
    %v1789 = vpack.c.b16 %v1717, %v1714
    %v1790 = vpack.c.b16 %v1718, %v1715
    %v1791 = vpack.c.b16 %v1719, %v1716
    %1864 = vmatpush.bf16.msra.mxu0 %v1741
    %1865 = vmatpush.bf16.msra.mxu0 %v1738
    %1866 = vmatpush.bf16.msra.mxu0 %v1735
    %1867 = vmatpush.bf16.msra.mxu0 %v1732
    %1868 = vmatpush.bf16.msra.mxu0 %v1729
    %1869 = vmatpush.bf16.msra.mxu0 %v1726
    %1870 = vmatpush.bf16.msra.mxu0 %v1723
    %1871 = vmatpush.bf16.msra.mxu0 %v1720
    %1872 = vmatmul.bf16.gmra.mxu0 %v1349
    %v1873 = vpop.f32.mrf.mxu0
    %v1874 = vadd.f32 %v1474, %v1873
    %v1875 = vpop.f32.mrf.mxu0
    %v1876 = vadd.f32 %v1474, %v1875
    %1877 = vmatmul.bf16.gmra.mxu0 %v1352
    %v1878 = vpop.f32.mrf.mxu0
    %v1879 = vadd.f32 %v1474, %v1878
    %v1880 = vpop.f32.mrf.mxu0
    %v1881 = vadd.f32 %v1474, %v1880
    %1882 = vmatmul.bf16.gmra.mxu0 %v1355
    %v1883 = vpop.f32.mrf.mxu0
    %v1884 = vadd.f32 %v1474, %v1883
    %v1885 = vpop.f32.mrf.mxu0
    %v1886 = vadd.f32 %v1474, %v1885
    %1887 = vmatmul.bf16.gmra.mxu0 %v1358
    %v1888 = vpop.f32.mrf.mxu0
    %v1889 = vadd.f32 %v1474, %v1888
    %v1890 = vpop.f32.mrf.mxu0
    %v1891 = vadd.f32 %v1474, %v1890
    %1892 = vmatmul.bf16.gmra.mxu0 %v1361
    %v1893 = vpop.f32.mrf.mxu0
    %v1894 = vadd.f32 %v1474, %v1893
    %v1895 = vpop.f32.mrf.mxu0
    %v1896 = vadd.f32 %v1474, %v1895
    %1897 = vmatmul.bf16.gmra.mxu0 %v1364
    %v1898 = vpop.f32.mrf.mxu0
    %v1899 = vadd.f32 %v1474, %v1898
    %v1900 = vpop.f32.mrf.mxu0
    %v1901 = vadd.f32 %v1474, %v1900
    %1902 = vmatmul.bf16.gmra.mxu0 %v1367
    %v1903 = vpop.f32.mrf.mxu0
    %v1904 = vadd.f32 %v1474, %v1903
    %v1905 = vpop.f32.mrf.mxu0
    %v1906 = vadd.f32 %v1474, %v1905
    %1907 = vmatmul.bf16.gmra.mxu0 %v1370
    %v1908 = vpop.f32.mrf.mxu0
    %v1909 = vadd.f32 %v1474, %v1908
    %v1910 = vpop.f32.mrf.mxu0
    %v1911 = vadd.f32 %v1474, %v1910
    %1912 = vmatmul.bf16.gmra.mxu0 %v1373
    %v1913 = vpop.f32.mrf.mxu0
    %v1914 = vadd.f32 %v1474, %v1913
    %v1915 = vpop.f32.mrf.mxu0
    %v1916 = vadd.f32 %v1474, %v1915
    %1917 = vdwg.mxu0
    %1918 = vmatpush.bf16.msra.mxu0 %v1765
    %1919 = vmatpush.bf16.msra.mxu0 %v1762
    %1920 = vmatpush.bf16.msra.mxu0 %v1759
    %1921 = vmatpush.bf16.msra.mxu0 %v1756
    %1922 = vmatpush.bf16.msra.mxu0 %v1753
    %1923 = vmatpush.bf16.msra.mxu0 %v1750
    %1924 = vmatpush.bf16.msra.mxu0 %v1747
    %1925 = vmatpush.bf16.msra.mxu0 %v1744
    %1926 = vmatmul.bf16.gmra.mxu0 %v1350
    %v1927 = vpop.f32.mrf.mxu0
    %v1928 = vadd.f32 %v1874, %v1927
    %v1929 = vpop.f32.mrf.mxu0
    %v1930 = vadd.f32 %v1876, %v1929
    %1931 = vmatmul.bf16.gmra.mxu0 %v1353
    %v1932 = vpop.f32.mrf.mxu0
    %v1933 = vadd.f32 %v1879, %v1932
    %v1934 = vpop.f32.mrf.mxu0
    %v1935 = vadd.f32 %v1881, %v1934
    %1936 = vmatmul.bf16.gmra.mxu0 %v1356
    %v1937 = vpop.f32.mrf.mxu0
    %v1938 = vadd.f32 %v1884, %v1937
    %v1939 = vpop.f32.mrf.mxu0
    %v1940 = vadd.f32 %v1886, %v1939
    %1941 = vmatmul.bf16.gmra.mxu0 %v1359
    %v1942 = vpop.f32.mrf.mxu0
    %v1943 = vadd.f32 %v1889, %v1942
    %v1944 = vpop.f32.mrf.mxu0
    %v1945 = vadd.f32 %v1891, %v1944
    %1946 = vmatmul.bf16.gmra.mxu0 %v1362
    %v1947 = vpop.f32.mrf.mxu0
    %v1948 = vadd.f32 %v1894, %v1947
    %v1949 = vpop.f32.mrf.mxu0
    %v1950 = vadd.f32 %v1896, %v1949
    %1951 = vmatmul.bf16.gmra.mxu0 %v1365
    %v1952 = vpop.f32.mrf.mxu0
    %v1953 = vadd.f32 %v1899, %v1952
    %v1954 = vpop.f32.mrf.mxu0
    %v1955 = vadd.f32 %v1901, %v1954
    %1956 = vmatmul.bf16.gmra.mxu0 %v1368
    %v1957 = vpop.f32.mrf.mxu0
    %v1958 = vadd.f32 %v1904, %v1957
    %v1959 = vpop.f32.mrf.mxu0
    %v1960 = vadd.f32 %v1906, %v1959
    %1961 = vmatmul.bf16.gmra.mxu0 %v1371
    %v1962 = vpop.f32.mrf.mxu0
    %v1963 = vadd.f32 %v1909, %v1962
    %v1964 = vpop.f32.mrf.mxu0
    %v1965 = vadd.f32 %v1911, %v1964
    %1966 = vmatmul.bf16.gmra.mxu0 %v1374
    %v1967 = vpop.f32.mrf.mxu0
    %v1968 = vadd.f32 %v1914, %v1967
    %v1969 = vpop.f32.mrf.mxu0
    %v1970 = vadd.f32 %v1916, %v1969
    %1971 = vdwg.mxu0
    %1972 = vmatpush.bf16.msra.mxu0 %v1789
    %1973 = vmatpush.bf16.msra.mxu0 %v1786
    %1974 = vmatpush.bf16.msra.mxu0 %v1783
    %1975 = vmatpush.bf16.msra.mxu0 %v1780
    %1976 = vmatpush.bf16.msra.mxu0 %v1777
    %1977 = vmatpush.bf16.msra.mxu0 %v1774
    %1978 = vmatpush.bf16.msra.mxu0 %v1771
    %1979 = vmatpush.bf16.msra.mxu0 %v1768
    %1980 = vmatmul.bf16.gmra.mxu0 %v1351
    %v1981 = vpop.f32.mrf.mxu0
    %v1982 = vadd.f32 %v1928, %v1981
    %v1983 = vpop.f32.mrf.mxu0
    %v1984 = vadd.f32 %v1930, %v1983
    %1985 = vmatmul.bf16.gmra.mxu0 %v1354
    %v1986 = vpop.f32.mrf.mxu0
    %v1987 = vadd.f32 %v1933, %v1986
    %v1988 = vpop.f32.mrf.mxu0
    %v1989 = vadd.f32 %v1935, %v1988
    %1990 = vmatmul.bf16.gmra.mxu0 %v1357
    %v1991 = vpop.f32.mrf.mxu0
    %v1992 = vadd.f32 %v1938, %v1991
    %v1993 = vpop.f32.mrf.mxu0
    %v1994 = vadd.f32 %v1940, %v1993
    %1995 = vmatmul.bf16.gmra.mxu0 %v1360
    %v1996 = vpop.f32.mrf.mxu0
    %v1997 = vadd.f32 %v1943, %v1996
    %v1998 = vpop.f32.mrf.mxu0
    %v1999 = vadd.f32 %v1945, %v1998
    %2000 = vmatmul.bf16.gmra.mxu0 %v1363
    %v2001 = vpop.f32.mrf.mxu0
    %v2002 = vadd.f32 %v1948, %v2001
    %v2003 = vpop.f32.mrf.mxu0
    %v2004 = vadd.f32 %v1950, %v2003
    %2005 = vmatmul.bf16.gmra.mxu0 %v1366
    %v2006 = vpop.f32.mrf.mxu0
    %v2007 = vadd.f32 %v1953, %v2006
    %v2008 = vpop.f32.mrf.mxu0
    %v2009 = vadd.f32 %v1955, %v2008
    %2010 = vmatmul.bf16.gmra.mxu0 %v1369
    %v2011 = vpop.f32.mrf.mxu0
    %v2012 = vadd.f32 %v1958, %v2011
    %v2013 = vpop.f32.mrf.mxu0
    %v2014 = vadd.f32 %v1960, %v2013
    %2015 = vmatmul.bf16.gmra.mxu0 %v1372
    %v2016 = vpop.f32.mrf.mxu0
    %v2017 = vadd.f32 %v1963, %v2016
    %v2018 = vpop.f32.mrf.mxu0
    %v2019 = vadd.f32 %v1965, %v2018
    %2020 = vmatmul.bf16.gmra.mxu0 %v1375
    %v2021 = vpop.f32.mrf.mxu0
    %v2022 = vadd.f32 %v1968, %v2021
    %v2023 = vpop.f32.mrf.mxu0
    %v2024 = vadd.f32 %v1970, %v2023
    %2025 = vdwg.mxu0
    %2026 = vmatpush.bf16.msra.mxu0 %v1742
    %2027 = vmatpush.bf16.msra.mxu0 %v1739
    %2028 = vmatpush.bf16.msra.mxu0 %v1736
    %2029 = vmatpush.bf16.msra.mxu0 %v1733
    %2030 = vmatpush.bf16.msra.mxu0 %v1730
    %2031 = vmatpush.bf16.msra.mxu0 %v1727
    %2032 = vmatpush.bf16.msra.mxu0 %v1724
    %2033 = vmatpush.bf16.msra.mxu0 %v1721
    %2034 = vmatmul.bf16.gmra.mxu0 %v1349
    %v2035 = vpop.f32.mrf.mxu0
    %v2036 = vadd.f32 %v1475, %v2035
    %v2037 = vpop.f32.mrf.mxu0
    %v2038 = vadd.f32 %v1475, %v2037
    %2039 = vmatmul.bf16.gmra.mxu0 %v1352
    %v2040 = vpop.f32.mrf.mxu0
    %v2041 = vadd.f32 %v1475, %v2040
    %v2042 = vpop.f32.mrf.mxu0
    %v2043 = vadd.f32 %v1475, %v2042
    %2044 = vmatmul.bf16.gmra.mxu0 %v1355
    %v2045 = vpop.f32.mrf.mxu0
    %v2046 = vadd.f32 %v1475, %v2045
    %v2047 = vpop.f32.mrf.mxu0
    %v2048 = vadd.f32 %v1475, %v2047
    %2049 = vmatmul.bf16.gmra.mxu0 %v1358
    %v2050 = vpop.f32.mrf.mxu0
    %v2051 = vadd.f32 %v1475, %v2050
    %v2052 = vpop.f32.mrf.mxu0
    %v2053 = vadd.f32 %v1475, %v2052
    %2054 = vmatmul.bf16.gmra.mxu0 %v1361
    %v2055 = vpop.f32.mrf.mxu0
    %v2056 = vadd.f32 %v1475, %v2055
    %v2057 = vpop.f32.mrf.mxu0
    %v2058 = vadd.f32 %v1475, %v2057
    %2059 = vmatmul.bf16.gmra.mxu0 %v1364
    %v2060 = vpop.f32.mrf.mxu0
    %v2061 = vadd.f32 %v1475, %v2060
    %v2062 = vpop.f32.mrf.mxu0
    %v2063 = vadd.f32 %v1475, %v2062
    %2064 = vmatmul.bf16.gmra.mxu0 %v1367
    %v2065 = vpop.f32.mrf.mxu0
    %v2066 = vadd.f32 %v1475, %v2065
    %v2067 = vpop.f32.mrf.mxu0
    %v2068 = vadd.f32 %v1475, %v2067
    %2069 = vmatmul.bf16.gmra.mxu0 %v1370
    %v2070 = vpop.f32.mrf.mxu0
    %v2071 = vadd.f32 %v1475, %v2070
    %v2072 = vpop.f32.mrf.mxu0
    %v2073 = vadd.f32 %v1475, %v2072
    %2074 = vmatmul.bf16.gmra.mxu0 %v1373
    %v2075 = vpop.f32.mrf.mxu0
    %v2076 = vadd.f32 %v1475, %v2075
    %v2077 = vpop.f32.mrf.mxu0
    %v2078 = vadd.f32 %v1475, %v2077
    %2079 = vdwg.mxu0
    %2080 = vmatpush.bf16.msra.mxu0 %v1766
    %2081 = vmatpush.bf16.msra.mxu0 %v1763
    %2082 = vmatpush.bf16.msra.mxu0 %v1760
    %2083 = vmatpush.bf16.msra.mxu0 %v1757
    %2084 = vmatpush.bf16.msra.mxu0 %v1754
    %2085 = vmatpush.bf16.msra.mxu0 %v1751
    %2086 = vmatpush.bf16.msra.mxu0 %v1748
    %2087 = vmatpush.bf16.msra.mxu0 %v1745
    %2088 = vmatmul.bf16.gmra.mxu0 %v1350
    %v2089 = vpop.f32.mrf.mxu0
    %v2090 = vadd.f32 %v2036, %v2089
    %v2091 = vpop.f32.mrf.mxu0
    %v2092 = vadd.f32 %v2038, %v2091
    %2093 = vmatmul.bf16.gmra.mxu0 %v1353
    %v2094 = vpop.f32.mrf.mxu0
    %v2095 = vadd.f32 %v2041, %v2094
    %v2096 = vpop.f32.mrf.mxu0
    %v2097 = vadd.f32 %v2043, %v2096
    %2098 = vmatmul.bf16.gmra.mxu0 %v1356
    %v2099 = vpop.f32.mrf.mxu0
    %v2100 = vadd.f32 %v2046, %v2099
    %v2101 = vpop.f32.mrf.mxu0
    %v2102 = vadd.f32 %v2048, %v2101
    %2103 = vmatmul.bf16.gmra.mxu0 %v1359
    %v2104 = vpop.f32.mrf.mxu0
    %v2105 = vadd.f32 %v2051, %v2104
    %v2106 = vpop.f32.mrf.mxu0
    %v2107 = vadd.f32 %v2053, %v2106
    %2108 = vmatmul.bf16.gmra.mxu0 %v1362
    %v2109 = vpop.f32.mrf.mxu0
    %v2110 = vadd.f32 %v2056, %v2109
    %v2111 = vpop.f32.mrf.mxu0
    %v2112 = vadd.f32 %v2058, %v2111
    %2113 = vmatmul.bf16.gmra.mxu0 %v1365
    %v2114 = vpop.f32.mrf.mxu0
    %v2115 = vadd.f32 %v2061, %v2114
    %v2116 = vpop.f32.mrf.mxu0
    %v2117 = vadd.f32 %v2063, %v2116
    %2118 = vmatmul.bf16.gmra.mxu0 %v1368
    %v2119 = vpop.f32.mrf.mxu0
    %v2120 = vadd.f32 %v2066, %v2119
    %v2121 = vpop.f32.mrf.mxu0
    %v2122 = vadd.f32 %v2068, %v2121
    %2123 = vmatmul.bf16.gmra.mxu0 %v1371
    %v2124 = vpop.f32.mrf.mxu0
    %v2125 = vadd.f32 %v2071, %v2124
    %v2126 = vpop.f32.mrf.mxu0
    %v2127 = vadd.f32 %v2073, %v2126
    %2128 = vmatmul.bf16.gmra.mxu0 %v1374
    %v2129 = vpop.f32.mrf.mxu0
    %v2130 = vadd.f32 %v2076, %v2129
    %v2131 = vpop.f32.mrf.mxu0
    %v2132 = vadd.f32 %v2078, %v2131
    %2133 = vdwg.mxu0
    %2134 = vmatpush.bf16.msra.mxu0 %v1790
    %2135 = vmatpush.bf16.msra.mxu0 %v1787
    %2136 = vmatpush.bf16.msra.mxu0 %v1784
    %2137 = vmatpush.bf16.msra.mxu0 %v1781
    %2138 = vmatpush.bf16.msra.mxu0 %v1778
    %2139 = vmatpush.bf16.msra.mxu0 %v1775
    %2140 = vmatpush.bf16.msra.mxu0 %v1772
    %2141 = vmatpush.bf16.msra.mxu0 %v1769
    %2142 = vmatmul.bf16.gmra.mxu0 %v1351
    %v2143 = vpop.f32.mrf.mxu0
    %v2144 = vadd.f32 %v2090, %v2143
    %v2145 = vpop.f32.mrf.mxu0
    %v2146 = vadd.f32 %v2092, %v2145
    %2147 = vmatmul.bf16.gmra.mxu0 %v1354
    %v2148 = vpop.f32.mrf.mxu0
    %v2149 = vadd.f32 %v2095, %v2148
    %v2150 = vpop.f32.mrf.mxu0
    %v2151 = vadd.f32 %v2097, %v2150
    %2152 = vmatmul.bf16.gmra.mxu0 %v1357
    %v2153 = vpop.f32.mrf.mxu0
    %v2154 = vadd.f32 %v2100, %v2153
    %v2155 = vpop.f32.mrf.mxu0
    %v2156 = vadd.f32 %v2102, %v2155
    %2157 = vmatmul.bf16.gmra.mxu0 %v1360
    %v2158 = vpop.f32.mrf.mxu0
    %v2159 = vadd.f32 %v2105, %v2158
    %v2160 = vpop.f32.mrf.mxu0
    %v2161 = vadd.f32 %v2107, %v2160
    %2162 = vmatmul.bf16.gmra.mxu0 %v1363
    %v2163 = vpop.f32.mrf.mxu0
    %v2164 = vadd.f32 %v2110, %v2163
    %v2165 = vpop.f32.mrf.mxu0
    %v2166 = vadd.f32 %v2112, %v2165
    %2167 = vmatmul.bf16.gmra.mxu0 %v1366
    %v2168 = vpop.f32.mrf.mxu0
    %v2169 = vadd.f32 %v2115, %v2168
    %v2170 = vpop.f32.mrf.mxu0
    %v2171 = vadd.f32 %v2117, %v2170
    %2172 = vmatmul.bf16.gmra.mxu0 %v1369
    %v2173 = vpop.f32.mrf.mxu0
    %v2174 = vadd.f32 %v2120, %v2173
    %v2175 = vpop.f32.mrf.mxu0
    %v2176 = vadd.f32 %v2122, %v2175
    %2177 = vmatmul.bf16.gmra.mxu0 %v1372
    %v2178 = vpop.f32.mrf.mxu0
    %v2179 = vadd.f32 %v2125, %v2178
    %v2180 = vpop.f32.mrf.mxu0
    %v2181 = vadd.f32 %v2127, %v2180
    %2182 = vmatmul.bf16.gmra.mxu0 %v1375
    %v2183 = vpop.f32.mrf.mxu0
    %v2184 = vadd.f32 %v2130, %v2183
    %v2185 = vpop.f32.mrf.mxu0
    %v2186 = vadd.f32 %v2132, %v2185
    %2187 = vdwg.mxu0
    %2188 = vmatpush.bf16.msra.mxu0 %v1743
    %2189 = vmatpush.bf16.msra.mxu0 %v1740
    %2190 = vmatpush.bf16.msra.mxu0 %v1737
    %2191 = vmatpush.bf16.msra.mxu0 %v1734
    %2192 = vmatpush.bf16.msra.mxu0 %v1731
    %2193 = vmatpush.bf16.msra.mxu0 %v1728
    %2194 = vmatpush.bf16.msra.mxu0 %v1725
    %2195 = vmatpush.bf16.msra.mxu0 %v1722
    %2196 = vmatmul.bf16.gmra.mxu0 %v1349
    %v2197 = vpop.f32.mrf.mxu0
    %v2198 = vadd.f32 %v1476, %v2197
    %v2199 = vpop.f32.mrf.mxu0
    %v2200 = vadd.f32 %v1476, %v2199
    %2201 = vmatmul.bf16.gmra.mxu0 %v1352
    %v2202 = vpop.f32.mrf.mxu0
    %v2203 = vadd.f32 %v1476, %v2202
    %v2204 = vpop.f32.mrf.mxu0
    %v2205 = vadd.f32 %v1476, %v2204
    %2206 = vmatmul.bf16.gmra.mxu0 %v1355
    %v2207 = vpop.f32.mrf.mxu0
    %v2208 = vadd.f32 %v1476, %v2207
    %v2209 = vpop.f32.mrf.mxu0
    %v2210 = vadd.f32 %v1476, %v2209
    %2211 = vmatmul.bf16.gmra.mxu0 %v1358
    %v2212 = vpop.f32.mrf.mxu0
    %v2213 = vadd.f32 %v1476, %v2212
    %v2214 = vpop.f32.mrf.mxu0
    %v2215 = vadd.f32 %v1476, %v2214
    %2216 = vmatmul.bf16.gmra.mxu0 %v1361
    %v2217 = vpop.f32.mrf.mxu0
    %v2218 = vadd.f32 %v1476, %v2217
    %v2219 = vpop.f32.mrf.mxu0
    %v2220 = vadd.f32 %v1476, %v2219
    %2221 = vmatmul.bf16.gmra.mxu0 %v1364
    %v2222 = vpop.f32.mrf.mxu0
    %v2223 = vadd.f32 %v1476, %v2222
    %v2224 = vpop.f32.mrf.mxu0
    %v2225 = vadd.f32 %v1476, %v2224
    %2226 = vmatmul.bf16.gmra.mxu0 %v1367
    %v2227 = vpop.f32.mrf.mxu0
    %v2228 = vadd.f32 %v1476, %v2227
    %v2229 = vpop.f32.mrf.mxu0
    %v2230 = vadd.f32 %v1476, %v2229
    %2231 = vmatmul.bf16.gmra.mxu0 %v1370
    %v2232 = vpop.f32.mrf.mxu0
    %v2233 = vadd.f32 %v1476, %v2232
    %v2234 = vpop.f32.mrf.mxu0
    %v2235 = vadd.f32 %v1476, %v2234
    %2236 = vmatmul.bf16.gmra.mxu0 %v1373
    %v2237 = vpop.f32.mrf.mxu0
    %v2238 = vadd.f32 %v1476, %v2237
    %v2239 = vpop.f32.mrf.mxu0
    %v2240 = vadd.f32 %v1476, %v2239
    %2241 = vdwg.mxu0
    %2242 = vmatpush.bf16.msra.mxu0 %v1767
    %2243 = vmatpush.bf16.msra.mxu0 %v1764
    %2244 = vmatpush.bf16.msra.mxu0 %v1761
    %2245 = vmatpush.bf16.msra.mxu0 %v1758
    %2246 = vmatpush.bf16.msra.mxu0 %v1755
    %2247 = vmatpush.bf16.msra.mxu0 %v1752
    %2248 = vmatpush.bf16.msra.mxu0 %v1749
    %2249 = vmatpush.bf16.msra.mxu0 %v1746
    %2250 = vmatmul.bf16.gmra.mxu0 %v1350
    %v2251 = vpop.f32.mrf.mxu0
    %v2252 = vadd.f32 %v2198, %v2251
    %v2253 = vpop.f32.mrf.mxu0
    %v2254 = vadd.f32 %v2200, %v2253
    %2255 = vmatmul.bf16.gmra.mxu0 %v1353
    %v2256 = vpop.f32.mrf.mxu0
    %v2257 = vadd.f32 %v2203, %v2256
    %v2258 = vpop.f32.mrf.mxu0
    %v2259 = vadd.f32 %v2205, %v2258
    %2260 = vmatmul.bf16.gmra.mxu0 %v1356
    %v2261 = vpop.f32.mrf.mxu0
    %v2262 = vadd.f32 %v2208, %v2261
    %v2263 = vpop.f32.mrf.mxu0
    %v2264 = vadd.f32 %v2210, %v2263
    %2265 = vmatmul.bf16.gmra.mxu0 %v1359
    %v2266 = vpop.f32.mrf.mxu0
    %v2267 = vadd.f32 %v2213, %v2266
    %v2268 = vpop.f32.mrf.mxu0
    %v2269 = vadd.f32 %v2215, %v2268
    %2270 = vmatmul.bf16.gmra.mxu0 %v1362
    %v2271 = vpop.f32.mrf.mxu0
    %v2272 = vadd.f32 %v2218, %v2271
    %v2273 = vpop.f32.mrf.mxu0
    %v2274 = vadd.f32 %v2220, %v2273
    %2275 = vmatmul.bf16.gmra.mxu0 %v1365
    %v2276 = vpop.f32.mrf.mxu0
    %v2277 = vadd.f32 %v2223, %v2276
    %v2278 = vpop.f32.mrf.mxu0
    %v2279 = vadd.f32 %v2225, %v2278
    %2280 = vmatmul.bf16.gmra.mxu0 %v1368
    %v2281 = vpop.f32.mrf.mxu0
    %v2282 = vadd.f32 %v2228, %v2281
    %v2283 = vpop.f32.mrf.mxu0
    %v2284 = vadd.f32 %v2230, %v2283
    %2285 = vmatmul.bf16.gmra.mxu0 %v1371
    %v2286 = vpop.f32.mrf.mxu0
    %v2287 = vadd.f32 %v2233, %v2286
    %v2288 = vpop.f32.mrf.mxu0
    %v2289 = vadd.f32 %v2235, %v2288
    %2290 = vmatmul.bf16.gmra.mxu0 %v1374
    %v2291 = vpop.f32.mrf.mxu0
    %v2292 = vadd.f32 %v2238, %v2291
    %v2293 = vpop.f32.mrf.mxu0
    %v2294 = vadd.f32 %v2240, %v2293
    %2295 = vdwg.mxu0
    %2296 = vmatpush.bf16.msra.mxu0 %v1791
    %2297 = vmatpush.bf16.msra.mxu0 %v1788
    %2298 = vmatpush.bf16.msra.mxu0 %v1785
    %2299 = vmatpush.bf16.msra.mxu0 %v1782
    %2300 = vmatpush.bf16.msra.mxu0 %v1779
    %2301 = vmatpush.bf16.msra.mxu0 %v1776
    %2302 = vmatpush.bf16.msra.mxu0 %v1773
    %2303 = vmatpush.bf16.msra.mxu0 %v1770
    %2304 = vmatmul.bf16.gmra.mxu0 %v1351
    %v2305 = vpop.f32.mrf.mxu0
    %v2306 = vadd.f32 %v2252, %v2305
    %v2307 = vpop.f32.mrf.mxu0
    %v2308 = vadd.f32 %v2254, %v2307
    %2309 = vmatmul.bf16.gmra.mxu0 %v1354
    %v2310 = vpop.f32.mrf.mxu0
    %v2311 = vadd.f32 %v2257, %v2310
    %v2312 = vpop.f32.mrf.mxu0
    %v2313 = vadd.f32 %v2259, %v2312
    %2314 = vmatmul.bf16.gmra.mxu0 %v1357
    %v2315 = vpop.f32.mrf.mxu0
    %v2316 = vadd.f32 %v2262, %v2315
    %v2317 = vpop.f32.mrf.mxu0
    %v2318 = vadd.f32 %v2264, %v2317
    %2319 = vmatmul.bf16.gmra.mxu0 %v1360
    %v2320 = vpop.f32.mrf.mxu0
    %v2321 = vadd.f32 %v2267, %v2320
    %v2322 = vpop.f32.mrf.mxu0
    %v2323 = vadd.f32 %v2269, %v2322
    %2324 = vmatmul.bf16.gmra.mxu0 %v1363
    %v2325 = vpop.f32.mrf.mxu0
    %v2326 = vadd.f32 %v2272, %v2325
    %v2327 = vpop.f32.mrf.mxu0
    %v2328 = vadd.f32 %v2274, %v2327
    %2329 = vmatmul.bf16.gmra.mxu0 %v1366
    %v2330 = vpop.f32.mrf.mxu0
    %v2331 = vadd.f32 %v2277, %v2330
    %v2332 = vpop.f32.mrf.mxu0
    %v2333 = vadd.f32 %v2279, %v2332
    %2334 = vmatmul.bf16.gmra.mxu0 %v1369
    %v2335 = vpop.f32.mrf.mxu0
    %v2336 = vadd.f32 %v2282, %v2335
    %v2337 = vpop.f32.mrf.mxu0
    %v2338 = vadd.f32 %v2284, %v2337
    %2339 = vmatmul.bf16.gmra.mxu0 %v1372
    %v2340 = vpop.f32.mrf.mxu0
    %v2341 = vadd.f32 %v2287, %v2340
    %v2342 = vpop.f32.mrf.mxu0
    %v2343 = vadd.f32 %v2289, %v2342
    %2344 = vmatmul.bf16.gmra.mxu0 %v1375
    %v2345 = vpop.f32.mrf.mxu0
    %v2346 = vadd.f32 %v2292, %v2345
    %v2347 = vpop.f32.mrf.mxu0
    %v2348 = vadd.f32 %v2294, %v2347
    %2349 = vdwg.mxu0
    %v2350 = vmax.f32 %v1982, 0.0
    %v2351 = vmax.f32 %v2144, 0.0
    %v2352 = vmax.f32 %v2306, 0.0
    %v2353 = vmax.f32 %v1984, 0.0
    %v2354 = vmax.f32 %v2146, 0.0
    %v2355 = vmax.f32 %v2308, 0.0
    %v2356 = vmax.f32 %v1987, 0.0
    %v2357 = vmax.f32 %v2149, 0.0
    %v2358 = vmax.f32 %v2311, 0.0
    %v2359 = vmax.f32 %v1989, 0.0
    %v2360 = vmax.f32 %v2151, 0.0
    %v2361 = vmax.f32 %v2313, 0.0
    %v2362 = vmax.f32 %v1992, 0.0
    %v2363 = vmax.f32 %v2154, 0.0
    %v2364 = vmax.f32 %v2316, 0.0
    %v2365 = vmax.f32 %v1994, 0.0
    %v2366 = vmax.f32 %v2156, 0.0
    %v2367 = vmax.f32 %v2318, 0.0
    %v2368 = vmax.f32 %v1997, 0.0
    %v2369 = vmax.f32 %v2159, 0.0
    %v2370 = vmax.f32 %v2321, 0.0
    %v2371 = vmax.f32 %v1999, 0.0
    %v2372 = vmax.f32 %v2161, 0.0
    %v2373 = vmax.f32 %v2323, 0.0
    %v2374 = vmax.f32 %v2002, 0.0
    %v2375 = vmax.f32 %v2164, 0.0
    %v2376 = vmax.f32 %v2326, 0.0
    %v2377 = vmax.f32 %v2004, 0.0
    %v2378 = vmax.f32 %v2166, 0.0
    %v2379 = vmax.f32 %v2328, 0.0
    %v2380 = vmax.f32 %v2007, 0.0
    %v2381 = vmax.f32 %v2169, 0.0
    %v2382 = vmax.f32 %v2331, 0.0
    %v2383 = vmax.f32 %v2009, 0.0
    %v2384 = vmax.f32 %v2171, 0.0
    %v2385 = vmax.f32 %v2333, 0.0
    %v2386 = vmax.f32 %v2012, 0.0
    %v2387 = vmax.f32 %v2174, 0.0
    %v2388 = vmax.f32 %v2336, 0.0
    %v2389 = vmax.f32 %v2014, 0.0
    %v2390 = vmax.f32 %v2176, 0.0
    %v2391 = vmax.f32 %v2338, 0.0
    %v2392 = vmax.f32 %v2017, 0.0
    %v2393 = vmax.f32 %v2179, 0.0
    %v2394 = vmax.f32 %v2341, 0.0
    %v2395 = vmax.f32 %v2019, 0.0
    %v2396 = vmax.f32 %v2181, 0.0
    %v2397 = vmax.f32 %v2343, 0.0
    %v2398 = vmax.f32 %v2022, 0.0
    %v2399 = vmax.f32 %v2184, 0.0
    %v2400 = vmax.f32 %v2346, 0.0
    %v2401 = vmax.f32 %v2024, 0.0
    %v2402 = vmax.f32 %v2186, 0.0
    %v2403 = vmax.f32 %v2348, 0.0
    %v2458 = vrot.slane %v2350, 1
    %v2459 = vrot.slane %v2353, 1
    %v2460 = vsel %vm413, %v2458, %v2459
    %v2461 = vrot.slane %v2351, 1
    %v2462 = vrot.slane %v2354, 1
    %v2463 = vsel %vm413, %v2461, %v2462
    %v2464 = vrot.slane %v2352, 1
    %v2465 = vrot.slane %v2355, 1
    %v2466 = vsel %vm413, %v2464, %v2465
    %v2467 = vrot.slane %v2356, 1
    %v2468 = vsel %vm413, %v2459, %v2467
    %v2469 = vrot.slane %v2357, 1
    %v2470 = vsel %vm413, %v2462, %v2469
    %v2471 = vrot.slane %v2358, 1
    %v2472 = vsel %vm413, %v2465, %v2471
    %v2473 = vrot.slane %v2359, 1
    %v2474 = vsel %vm413, %v2467, %v2473
    %v2475 = vrot.slane %v2360, 1
    %v2476 = vsel %vm413, %v2469, %v2475
    %v2477 = vrot.slane %v2361, 1
    %v2478 = vsel %vm413, %v2471, %v2477
    %v2479 = vrot.slane %v2362, 1
    %v2480 = vsel %vm413, %v2473, %v2479
    %v2481 = vrot.slane %v2363, 1
    %v2482 = vsel %vm413, %v2475, %v2481
    %v2483 = vrot.slane %v2364, 1
    %v2484 = vsel %vm413, %v2477, %v2483
    %v2485 = vrot.slane %v2365, 1
    %v2486 = vsel %vm413, %v2479, %v2485
    %v2487 = vrot.slane %v2366, 1
    %v2488 = vsel %vm413, %v2481, %v2487
    %v2489 = vrot.slane %v2367, 1
    %v2490 = vsel %vm413, %v2483, %v2489
    %v2491 = vrot.slane %v2368, 1
    %v2492 = vsel %vm413, %v2485, %v2491
    %v2493 = vrot.slane %v2369, 1
    %v2494 = vsel %vm413, %v2487, %v2493
    %v2495 = vrot.slane %v2370, 1
    %v2496 = vsel %vm413, %v2489, %v2495
    %v2497 = vrot.slane %v2371, 1
    %v2498 = vsel %vm413, %v2491, %v2497
    %v2499 = vrot.slane %v2372, 1
    %v2500 = vsel %vm413, %v2493, %v2499
    %v2501 = vrot.slane %v2373, 1
    %v2502 = vsel %vm413, %v2495, %v2501
    %v2503 = vrot.slane %v2374, 1
    %v2504 = vsel %vm413, %v2497, %v2503
    %v2505 = vrot.slane %v2375, 1
    %v2506 = vsel %vm413, %v2499, %v2505
    %v2507 = vrot.slane %v2376, 1
    %v2508 = vsel %vm413, %v2501, %v2507
    %v2509 = vsel %vm413, %v2503, %v431
    %v2510 = vsel %vm413, %v2505, %v431
    %v2511 = vsel %vm413, %v2507, %v431
    %v2512 = vrot.slane %v2377, 1
    %v2513 = vrot.slane %v2380, 1
    %v2514 = vsel %vm413, %v2512, %v2513
    %v2515 = vrot.slane %v2378, 1
    %v2516 = vrot.slane %v2381, 1
    %v2517 = vsel %vm413, %v2515, %v2516
    %v2518 = vrot.slane %v2379, 1
    %v2519 = vrot.slane %v2382, 1
    %v2520 = vsel %vm413, %v2518, %v2519
    %v2521 = vrot.slane %v2383, 1
    %v2522 = vsel %vm413, %v2513, %v2521
    %v2523 = vrot.slane %v2384, 1
    %v2524 = vsel %vm413, %v2516, %v2523
    %v2525 = vrot.slane %v2385, 1
    %v2526 = vsel %vm413, %v2519, %v2525
    %v2527 = vrot.slane %v2386, 1
    %v2528 = vsel %vm413, %v2521, %v2527
    %v2529 = vrot.slane %v2387, 1
    %v2530 = vsel %vm413, %v2523, %v2529
    %v2531 = vrot.slane %v2388, 1
    %v2532 = vsel %vm413, %v2525, %v2531
    %v2533 = vrot.slane %v2389, 1
    %v2534 = vsel %vm413, %v2527, %v2533
    %v2535 = vrot.slane %v2390, 1
    %v2536 = vsel %vm413, %v2529, %v2535
    %v2537 = vrot.slane %v2391, 1
    %v2538 = vsel %vm413, %v2531, %v2537
    %v2539 = vrot.slane %v2392, 1
    %v2540 = vsel %vm413, %v2533, %v2539
    %v2541 = vrot.slane %v2393, 1
    %v2542 = vsel %vm413, %v2535, %v2541
    %v2543 = vrot.slane %v2394, 1
    %v2544 = vsel %vm413, %v2537, %v2543
    %v2545 = vrot.slane %v2395, 1
    %v2546 = vsel %vm413, %v2539, %v2545
    %v2547 = vrot.slane %v2396, 1
    %v2548 = vsel %vm413, %v2541, %v2547
    %v2549 = vrot.slane %v2397, 1
    %v2550 = vsel %vm413, %v2543, %v2549
    %v2551 = vrot.slane %v2398, 1
    %v2552 = vsel %vm413, %v2545, %v2551
    %v2553 = vrot.slane %v2399, 1
    %v2554 = vsel %vm413, %v2547, %v2553
    %v2555 = vrot.slane %v2400, 1
    %v2556 = vsel %vm413, %v2549, %v2555
    %v2557 = vrot.slane %v2401, 1
    %v2558 = vsel %vm413, %v2551, %v2557
    %v2559 = vrot.slane %v2402, 1
    %v2560 = vsel %vm413, %v2553, %v2559
    %v2561 = vrot.slane %v2403, 1
    %v2562 = vsel %vm413, %v2555, %v2561
    %v2563 = vsel %vm413, %v2557, %v431
    %v2564 = vsel %vm413, %v2559, %v431
    %v2565 = vsel %vm413, %v2561, %v431
    %v2620 = vmax.f32 %v2350, %v2460
    %v2621 = vmax.f32 %v2351, %v2463
    %v2622 = vmax.f32 %v2352, %v2466
    %v2623 = vmax.f32 %v2353, %v2468
    %v2624 = vmax.f32 %v2354, %v2470
    %v2625 = vmax.f32 %v2355, %v2472
    %v2626 = vmax.f32 %v2356, %v2474
    %v2627 = vmax.f32 %v2357, %v2476
    %v2628 = vmax.f32 %v2358, %v2478
    %v2629 = vmax.f32 %v2359, %v2480
    %v2630 = vmax.f32 %v2360, %v2482
    %v2631 = vmax.f32 %v2361, %v2484
    %v2632 = vmax.f32 %v2362, %v2486
    %v2633 = vmax.f32 %v2363, %v2488
    %v2634 = vmax.f32 %v2364, %v2490
    %v2635 = vmax.f32 %v2365, %v2492
    %v2636 = vmax.f32 %v2366, %v2494
    %v2637 = vmax.f32 %v2367, %v2496
    %v2638 = vmax.f32 %v2368, %v2498
    %v2639 = vmax.f32 %v2369, %v2500
    %v2640 = vmax.f32 %v2370, %v2502
    %v2641 = vmax.f32 %v2371, %v2504
    %v2642 = vmax.f32 %v2372, %v2506
    %v2643 = vmax.f32 %v2373, %v2508
    %v2644 = vmax.f32 %v2374, %v2509
    %v2645 = vmax.f32 %v2375, %v2510
    %v2646 = vmax.f32 %v2376, %v2511
    %v2647 = vmax.f32 %v2377, %v2514
    %v2648 = vmax.f32 %v2378, %v2517
    %v2649 = vmax.f32 %v2379, %v2520
    %v2650 = vmax.f32 %v2380, %v2522
    %v2651 = vmax.f32 %v2381, %v2524
    %v2652 = vmax.f32 %v2382, %v2526
    %v2653 = vmax.f32 %v2383, %v2528
    %v2654 = vmax.f32 %v2384, %v2530
    %v2655 = vmax.f32 %v2385, %v2532
    %v2656 = vmax.f32 %v2386, %v2534
    %v2657 = vmax.f32 %v2387, %v2536
    %v2658 = vmax.f32 %v2388, %v2538
    %v2659 = vmax.f32 %v2389, %v2540
    %v2660 = vmax.f32 %v2390, %v2542
    %v2661 = vmax.f32 %v2391, %v2544
    %v2662 = vmax.f32 %v2392, %v2546
    %v2663 = vmax.f32 %v2393, %v2548
    %v2664 = vmax.f32 %v2394, %v2550
    %v2665 = vmax.f32 %v2395, %v2552
    %v2666 = vmax.f32 %v2396, %v2554
    %v2667 = vmax.f32 %v2397, %v2556
    %v2668 = vmax.f32 %v2398, %v2558
    %v2669 = vmax.f32 %v2399, %v2560
    %v2670 = vmax.f32 %v2400, %v2562
    %v2671 = vmax.f32 %v2401, %v2563
    %v2672 = vmax.f32 %v2402, %v2564
    %v2673 = vmax.f32 %v2403, %v2565
    %v2674 = vrot.slane %v2350, 2
    %v2675 = vrot.slane %v2353, 2
    %v2676 = vsel %vm508, %v2674, %v2675
    %v2677 = vrot.slane %v2351, 2
    %v2678 = vrot.slane %v2354, 2
    %v2679 = vsel %vm508, %v2677, %v2678
    %v2680 = vrot.slane %v2352, 2
    %v2681 = vrot.slane %v2355, 2
    %v2682 = vsel %vm508, %v2680, %v2681
    %v2683 = vrot.slane %v2356, 2
    %v2684 = vsel %vm508, %v2675, %v2683
    %v2685 = vrot.slane %v2357, 2
    %v2686 = vsel %vm508, %v2678, %v2685
    %v2687 = vrot.slane %v2358, 2
    %v2688 = vsel %vm508, %v2681, %v2687
    %v2689 = vrot.slane %v2359, 2
    %v2690 = vsel %vm508, %v2683, %v2689
    %v2691 = vrot.slane %v2360, 2
    %v2692 = vsel %vm508, %v2685, %v2691
    %v2693 = vrot.slane %v2361, 2
    %v2694 = vsel %vm508, %v2687, %v2693
    %v2695 = vrot.slane %v2362, 2
    %v2696 = vsel %vm508, %v2689, %v2695
    %v2697 = vrot.slane %v2363, 2
    %v2698 = vsel %vm508, %v2691, %v2697
    %v2699 = vrot.slane %v2364, 2
    %v2700 = vsel %vm508, %v2693, %v2699
    %v2701 = vrot.slane %v2365, 2
    %v2702 = vsel %vm508, %v2695, %v2701
    %v2703 = vrot.slane %v2366, 2
    %v2704 = vsel %vm508, %v2697, %v2703
    %v2705 = vrot.slane %v2367, 2
    %v2706 = vsel %vm508, %v2699, %v2705
    %v2707 = vrot.slane %v2368, 2
    %v2708 = vsel %vm508, %v2701, %v2707
    %v2709 = vrot.slane %v2369, 2
    %v2710 = vsel %vm508, %v2703, %v2709
    %v2711 = vrot.slane %v2370, 2
    %v2712 = vsel %vm508, %v2705, %v2711
    %v2713 = vrot.slane %v2371, 2
    %v2714 = vsel %vm508, %v2707, %v2713
    %v2715 = vrot.slane %v2372, 2
    %v2716 = vsel %vm508, %v2709, %v2715
    %v2717 = vrot.slane %v2373, 2
    %v2718 = vsel %vm508, %v2711, %v2717
    %v2719 = vrot.slane %v2374, 2
    %v2720 = vsel %vm508, %v2713, %v2719
    %v2721 = vrot.slane %v2375, 2
    %v2722 = vsel %vm508, %v2715, %v2721
    %v2723 = vrot.slane %v2376, 2
    %v2724 = vsel %vm508, %v2717, %v2723
    %v2725 = vsel %vm508, %v2719, %v526
    %v2726 = vsel %vm508, %v2721, %v526
    %v2727 = vsel %vm508, %v2723, %v526
    %v2728 = vrot.slane %v2377, 2
    %v2729 = vrot.slane %v2380, 2
    %v2730 = vsel %vm508, %v2728, %v2729
    %v2731 = vrot.slane %v2378, 2
    %v2732 = vrot.slane %v2381, 2
    %v2733 = vsel %vm508, %v2731, %v2732
    %v2734 = vrot.slane %v2379, 2
    %v2735 = vrot.slane %v2382, 2
    %v2736 = vsel %vm508, %v2734, %v2735
    %v2737 = vrot.slane %v2383, 2
    %v2738 = vsel %vm508, %v2729, %v2737
    %v2739 = vrot.slane %v2384, 2
    %v2740 = vsel %vm508, %v2732, %v2739
    %v2741 = vrot.slane %v2385, 2
    %v2742 = vsel %vm508, %v2735, %v2741
    %v2743 = vrot.slane %v2386, 2
    %v2744 = vsel %vm508, %v2737, %v2743
    %v2745 = vrot.slane %v2387, 2
    %v2746 = vsel %vm508, %v2739, %v2745
    %v2747 = vrot.slane %v2388, 2
    %v2748 = vsel %vm508, %v2741, %v2747
    %v2749 = vrot.slane %v2389, 2
    %v2750 = vsel %vm508, %v2743, %v2749
    %v2751 = vrot.slane %v2390, 2
    %v2752 = vsel %vm508, %v2745, %v2751
    %v2753 = vrot.slane %v2391, 2
    %v2754 = vsel %vm508, %v2747, %v2753
    %v2755 = vrot.slane %v2392, 2
    %v2756 = vsel %vm508, %v2749, %v2755
    %v2757 = vrot.slane %v2393, 2
    %v2758 = vsel %vm508, %v2751, %v2757
    %v2759 = vrot.slane %v2394, 2
    %v2760 = vsel %vm508, %v2753, %v2759
    %v2761 = vrot.slane %v2395, 2
    %v2762 = vsel %vm508, %v2755, %v2761
    %v2763 = vrot.slane %v2396, 2
    %v2764 = vsel %vm508, %v2757, %v2763
    %v2765 = vrot.slane %v2397, 2
    %v2766 = vsel %vm508, %v2759, %v2765
    %v2767 = vrot.slane %v2398, 2
    %v2768 = vsel %vm508, %v2761, %v2767
    %v2769 = vrot.slane %v2399, 2
    %v2770 = vsel %vm508, %v2763, %v2769
    %v2771 = vrot.slane %v2400, 2
    %v2772 = vsel %vm508, %v2765, %v2771
    %v2773 = vrot.slane %v2401, 2
    %v2774 = vsel %vm508, %v2767, %v2773
    %v2775 = vrot.slane %v2402, 2
    %v2776 = vsel %vm508, %v2769, %v2775
    %v2777 = vrot.slane %v2403, 2
    %v2778 = vsel %vm508, %v2771, %v2777
    %v2779 = vsel %vm508, %v2773, %v526
    %v2780 = vsel %vm508, %v2775, %v526
    %v2781 = vsel %vm508, %v2777, %v526
    %v2836 = vmax.f32 %v2620, %v2676
    %v2837 = vmax.f32 %v2621, %v2679
    %v2838 = vmax.f32 %v2622, %v2682
    %v2839 = vmax.f32 %v2623, %v2684
    %v2840 = vmax.f32 %v2624, %v2686
    %v2841 = vmax.f32 %v2625, %v2688
    %v2842 = vmax.f32 %v2626, %v2690
    %v2843 = vmax.f32 %v2627, %v2692
    %v2844 = vmax.f32 %v2628, %v2694
    %v2845 = vmax.f32 %v2629, %v2696
    %v2846 = vmax.f32 %v2630, %v2698
    %v2847 = vmax.f32 %v2631, %v2700
    %v2848 = vmax.f32 %v2632, %v2702
    %v2849 = vmax.f32 %v2633, %v2704
    %v2850 = vmax.f32 %v2634, %v2706
    %v2851 = vmax.f32 %v2635, %v2708
    %v2852 = vmax.f32 %v2636, %v2710
    %v2853 = vmax.f32 %v2637, %v2712
    %v2854 = vmax.f32 %v2638, %v2714
    %v2855 = vmax.f32 %v2639, %v2716
    %v2856 = vmax.f32 %v2640, %v2718
    %v2857 = vmax.f32 %v2641, %v2720
    %v2858 = vmax.f32 %v2642, %v2722
    %v2859 = vmax.f32 %v2643, %v2724
    %v2860 = vmax.f32 %v2644, %v2725
    %v2861 = vmax.f32 %v2645, %v2726
    %v2862 = vmax.f32 %v2646, %v2727
    %v2863 = vmax.f32 %v2647, %v2730
    %v2864 = vmax.f32 %v2648, %v2733
    %v2865 = vmax.f32 %v2649, %v2736
    %v2866 = vmax.f32 %v2650, %v2738
    %v2867 = vmax.f32 %v2651, %v2740
    %v2868 = vmax.f32 %v2652, %v2742
    %v2869 = vmax.f32 %v2653, %v2744
    %v2870 = vmax.f32 %v2654, %v2746
    %v2871 = vmax.f32 %v2655, %v2748
    %v2872 = vmax.f32 %v2656, %v2750
    %v2873 = vmax.f32 %v2657, %v2752
    %v2874 = vmax.f32 %v2658, %v2754
    %v2875 = vmax.f32 %v2659, %v2756
    %v2876 = vmax.f32 %v2660, %v2758
    %v2877 = vmax.f32 %v2661, %v2760
    %v2878 = vmax.f32 %v2662, %v2762
    %v2879 = vmax.f32 %v2663, %v2764
    %v2880 = vmax.f32 %v2664, %v2766
    %v2881 = vmax.f32 %v2665, %v2768
    %v2882 = vmax.f32 %v2666, %v2770
    %v2883 = vmax.f32 %v2667, %v2772
    %v2884 = vmax.f32 %v2668, %v2774
    %v2885 = vmax.f32 %v2669, %v2776
    %v2886 = vmax.f32 %v2670, %v2778
    %v2887 = vmax.f32 %v2671, %v2779
    %v2888 = vmax.f32 %v2672, %v2780
    %v2889 = vmax.f32 %v2673, %v2781
    %v2890 = vpack.c.bf16 %v2351, %v2350
    %v2891 = vpack.c.bf16 %v2352, %v2352
    %v2892 = vpack.c.bf16 %v2354, %v2353
    %v2893 = vpack.c.bf16 %v2355, %v2355
    %v2894 = vpack.c.bf16 %v2357, %v2356
    %v2895 = vpack.c.bf16 %v2358, %v2358
    %v2896 = vpack.c.bf16 %v2360, %v2359
    %v2897 = vpack.c.bf16 %v2361, %v2361
    %v2898 = vpack.c.bf16 %v2363, %v2362
    %v2899 = vpack.c.bf16 %v2364, %v2364
    %v2900 = vpack.c.bf16 %v2366, %v2365
    %v2901 = vpack.c.bf16 %v2367, %v2367
    %v2902 = vpack.c.bf16 %v2369, %v2368
    %v2903 = vpack.c.bf16 %v2370, %v2370
    %v2904 = vpack.c.bf16 %v2372, %v2371
    %v2905 = vpack.c.bf16 %v2373, %v2373
    %v2906 = vpack.c.bf16 %v2375, %v2374
    %v2907 = vpack.c.bf16 %v2376, %v2376
    %v2908 = vpack.c.bf16 %v2621, %v2620
    %v2909 = vpack.c.bf16 %v2622, %v2622
    %v2910 = vpack.c.bf16 %v2624, %v2623
    %v2911 = vpack.c.bf16 %v2625, %v2625
    %v2912 = vpack.c.bf16 %v2627, %v2626
    %v2913 = vpack.c.bf16 %v2628, %v2628
    %v2914 = vpack.c.bf16 %v2630, %v2629
    %v2915 = vpack.c.bf16 %v2631, %v2631
    %v2916 = vpack.c.bf16 %v2633, %v2632
    %v2917 = vpack.c.bf16 %v2634, %v2634
    %v2918 = vpack.c.bf16 %v2636, %v2635
    %v2919 = vpack.c.bf16 %v2637, %v2637
    %v2920 = vpack.c.bf16 %v2639, %v2638
    %v2921 = vpack.c.bf16 %v2640, %v2640
    %v2922 = vpack.c.bf16 %v2642, %v2641
    %v2923 = vpack.c.bf16 %v2643, %v2643
    %v2924 = vpack.c.bf16 %v2645, %v2644
    %v2925 = vpack.c.bf16 %v2646, %v2646
    %v2926 = vpack.c.bf16 %v2837, %v2836
    %v2927 = vpack.c.bf16 %v2838, %v2838
    %v2928 = vpack.c.bf16 %v2840, %v2839
    %v2929 = vpack.c.bf16 %v2841, %v2841
    %v2930 = vpack.c.bf16 %v2843, %v2842
    %v2931 = vpack.c.bf16 %v2844, %v2844
    %v2932 = vpack.c.bf16 %v2846, %v2845
    %v2933 = vpack.c.bf16 %v2847, %v2847
    %v2934 = vpack.c.bf16 %v2849, %v2848
    %v2935 = vpack.c.bf16 %v2850, %v2850
    %v2936 = vpack.c.bf16 %v2852, %v2851
    %v2937 = vpack.c.bf16 %v2853, %v2853
    %v2938 = vpack.c.bf16 %v2855, %v2854
    %v2939 = vpack.c.bf16 %v2856, %v2856
    %v2940 = vpack.c.bf16 %v2858, %v2857
    %v2941 = vpack.c.bf16 %v2859, %v2859
    %v2942 = vpack.c.bf16 %v2861, %v2860
    %v2943 = vpack.c.bf16 %v2862, %v2862
    %v2944 = vpack.c.bf16 %v2378, %v2377
    %v2945 = vpack.c.bf16 %v2379, %v2379
    %v2946 = vpack.c.bf16 %v2381, %v2380
    %v2947 = vpack.c.bf16 %v2382, %v2382
    %v2948 = vpack.c.bf16 %v2384, %v2383
    %v2949 = vpack.c.bf16 %v2385, %v2385
    %v2950 = vpack.c.bf16 %v2387, %v2386
    %v2951 = vpack.c.bf16 %v2388, %v2388
    %v2952 = vpack.c.bf16 %v2390, %v2389
    %v2953 = vpack.c.bf16 %v2391, %v2391
    %v2954 = vpack.c.bf16 %v2393, %v2392
    %v2955 = vpack.c.bf16 %v2394, %v2394
    %v2956 = vpack.c.bf16 %v2396, %v2395
    %v2957 = vpack.c.bf16 %v2397, %v2397
    %v2958 = vpack.c.bf16 %v2399, %v2398
    %v2959 = vpack.c.bf16 %v2400, %v2400
    %v2960 = vpack.c.bf16 %v2402, %v2401
    %v2961 = vpack.c.bf16 %v2403, %v2403
    %v2962 = vpack.c.bf16 %v2648, %v2647
    %v2963 = vpack.c.bf16 %v2649, %v2649
    %v2964 = vpack.c.bf16 %v2651, %v2650
    %v2965 = vpack.c.bf16 %v2652, %v2652
    %v2966 = vpack.c.bf16 %v2654, %v2653
    %v2967 = vpack.c.bf16 %v2655, %v2655
    %v2968 = vpack.c.bf16 %v2657, %v2656
    %v2969 = vpack.c.bf16 %v2658, %v2658
    %v2970 = vpack.c.bf16 %v2660, %v2659
    %v2971 = vpack.c.bf16 %v2661, %v2661
    %v2972 = vpack.c.bf16 %v2663, %v2662
    %v2973 = vpack.c.bf16 %v2664, %v2664
    %v2974 = vpack.c.bf16 %v2666, %v2665
    %v2975 = vpack.c.bf16 %v2667, %v2667
    %v2976 = vpack.c.bf16 %v2669, %v2668
    %v2977 = vpack.c.bf16 %v2670, %v2670
    %v2978 = vpack.c.bf16 %v2672, %v2671
    %v2979 = vpack.c.bf16 %v2673, %v2673
    %v2980 = vpack.c.bf16 %v2864, %v2863
    %v2981 = vpack.c.bf16 %v2865, %v2865
    %v2982 = vpack.c.bf16 %v2867, %v2866
    %v2983 = vpack.c.bf16 %v2868, %v2868
    %v2984 = vpack.c.bf16 %v2870, %v2869
    %v2985 = vpack.c.bf16 %v2871, %v2871
    %v2986 = vpack.c.bf16 %v2873, %v2872
    %v2987 = vpack.c.bf16 %v2874, %v2874
    %v2988 = vpack.c.bf16 %v2876, %v2875
    %v2989 = vpack.c.bf16 %v2877, %v2877
    %v2990 = vpack.c.bf16 %v2879, %v2878
    %v2991 = vpack.c.bf16 %v2880, %v2880
    %v2992 = vpack.c.bf16 %v2882, %v2881
    %v2993 = vpack.c.bf16 %v2883, %v2883
    %v2994 = vpack.c.bf16 %v2885, %v2884
    %v2995 = vpack.c.bf16 %v2886, %v2886
    %v2996 = vpack.c.bf16 %v2888, %v2887
    %v2997 = vpack.c.bf16 %v2889, %v2889
    %v2998 = vld [vmem:[#allocation5] sm:$0xff]
    %v2999 = vld [vmem:[#allocation5 + $0x8] sm:$0xff]
    %v3000 = vld [vmem:[#allocation5 + $0x10] sm:$0xff]
    %v3001 = vld [vmem:[#allocation5 + $0x18] sm:$0xff]
    %v3002 = vld [vmem:[#allocation5 + $0x20] sm:$0xff]
    %v3003 = vld [vmem:[#allocation5 + $0x28] sm:$0xff]
    %v3004 = vld [vmem:[#allocation5 + $0x30] sm:$0x11]
    %v3012 = vunpack.c.l.b16 %v2998
    %v3013 = vunpack.c.h.b16 %v2998
    %v3014 = vunpack.c.l.b16 %v2999
    %v3015 = vunpack.c.h.b16 %v2999
    %v3016 = vunpack.c.l.b16 %v3000
    %v3017 = vunpack.c.h.b16 %v3000
    %v3018 = vunpack.c.l.b16 %v3001
    %v3019 = vunpack.c.h.b16 %v3001
    %v3020 = vunpack.c.l.b16 %v3002
    %v3021 = vunpack.c.h.b16 %v3002
    %v3022 = vunpack.c.l.b16 %v3003
    %v3023 = vunpack.c.h.b16 %v3003
    %v3024 = vunpack.c.l.b16 %v3004
    %v3025 = vunpack.c.h.b16 %v3004
    %v3026 = vpack.c.b16 %v3014, %v3012
    %v3027 = vpack.c.b16 %v3015, %v3013
    %v3028 = vpack.c.b16 %v3018, %v3016
    %v3029 = vpack.c.b16 %v3019, %v3017
    %v3030 = vpack.c.b16 %v3022, %v3020
    %v3031 = vpack.c.b16 %v3023, %v3021
    %v3032 = vpack.c.b16 %v3024, %v3024
    %v3033 = vpack.c.b16 %v3025, %v3025
    %v3065 = vunpack.c.l.b16 %v2890
    %v3066 = vunpack.c.h.b16 %v2890
    %v3067 = vunpack.c.l.b16 %v2892
    %v3068 = vunpack.c.h.b16 %v2892
    %v3069 = vunpack.c.l.b16 %v2894
    %v3070 = vunpack.c.h.b16 %v2894
    %v3071 = vunpack.c.l.b16 %v2896
    %v3072 = vunpack.c.h.b16 %v2896
    %v3073 = vunpack.c.l.b16 %v2898
    %v3074 = vunpack.c.h.b16 %v2898
    %v3075 = vunpack.c.l.b16 %v2900
    %v3076 = vunpack.c.h.b16 %v2900
    %v3077 = vunpack.c.l.b16 %v2902
    %v3078 = vunpack.c.h.b16 %v2902
    %v3079 = vunpack.c.l.b16 %v2904
    %v3080 = vunpack.c.h.b16 %v2904
    %v3081 = vunpack.c.l.b16 %v2906
    %v3082 = vunpack.c.h.b16 %v2906
    %v3083 = vunpack.c.l.b16 %v2908
    %v3084 = vunpack.c.h.b16 %v2908
    %v3085 = vunpack.c.l.b16 %v2910
    %v3086 = vunpack.c.h.b16 %v2910
    %v3087 = vunpack.c.l.b16 %v2912
    %v3088 = vunpack.c.h.b16 %v2912
    %v3089 = vunpack.c.l.b16 %v2914
    %v3090 = vunpack.c.h.b16 %v2914
    %v3091 = vunpack.c.l.b16 %v2916
    %v3092 = vunpack.c.h.b16 %v2916
    %v3093 = vunpack.c.l.b16 %v2918
    %v3094 = vunpack.c.h.b16 %v2918
    %v3095 = vunpack.c.l.b16 %v2920
    %v3096 = vunpack.c.h.b16 %v2920
    %v3097 = vunpack.c.l.b16 %v2922
    %v3098 = vunpack.c.h.b16 %v2922
    %v3099 = vunpack.c.l.b16 %v2924
    %v3100 = vunpack.c.h.b16 %v2924
    %v3101 = vunpack.c.l.b16 %v2926
    %v3102 = vunpack.c.h.b16 %v2926
    %v3103 = vunpack.c.l.b16 %v2928
    %v3104 = vunpack.c.h.b16 %v2928
    %v3105 = vunpack.c.l.b16 %v2930
    %v3106 = vunpack.c.h.b16 %v2930
    %v3107 = vunpack.c.l.b16 %v2932
    %v3108 = vunpack.c.h.b16 %v2932
    %v3109 = vunpack.c.l.b16 %v2934
    %v3110 = vunpack.c.h.b16 %v2934
    %v3111 = vunpack.c.l.b16 %v2936
    %v3112 = vunpack.c.h.b16 %v2936
    %v3113 = vunpack.c.l.b16 %v2938
    %v3114 = vunpack.c.h.b16 %v2938
    %v3115 = vunpack.c.l.b16 %v2940
    %v3116 = vunpack.c.h.b16 %v2940
    %v3117 = vunpack.c.l.b16 %v2942
    %v3118 = vunpack.c.h.b16 %v2942
    %v3119 = vpack.c.b16 %v3067, %v3065
    %v3120 = vpack.c.b16 %v3068, %v3066
    %v3121 = vpack.c.b16 %v3071, %v3069
    %v3122 = vpack.c.b16 %v3072, %v3070
    %v3123 = vpack.c.b16 %v3075, %v3073
    %v3124 = vpack.c.b16 %v3076, %v3074
    %v3125 = vpack.c.b16 %v3079, %v3077
    %v3126 = vpack.c.b16 %v3080, %v3078
    %v3127 = vpack.c.b16 %v3083, %v3081
    %v3128 = vpack.c.b16 %v3084, %v3082
    %v3129 = vpack.c.b16 %v3087, %v3085
    %v3130 = vpack.c.b16 %v3088, %v3086
    %v3131 = vpack.c.b16 %v3091, %v3089
    %v3132 = vpack.c.b16 %v3092, %v3090
    %v3133 = vpack.c.b16 %v3095, %v3093
    %v3134 = vpack.c.b16 %v3096, %v3094
    %v3135 = vpack.c.b16 %v3099, %v3097
    %v3136 = vpack.c.b16 %v3100, %v3098
    %v3137 = vpack.c.b16 %v3103, %v3101
    %v3138 = vpack.c.b16 %v3104, %v3102
    %v3139 = vpack.c.b16 %v3107, %v3105
    %v3140 = vpack.c.b16 %v3108, %v3106
    %v3141 = vpack.c.b16 %v3111, %v3109
    %v3142 = vpack.c.b16 %v3112, %v3110
    %v3143 = vpack.c.b16 %v3115, %v3113
    %v3144 = vpack.c.b16 %v3116, %v3114
    %v3145 = vpack.c.b16 %v3117, %v3117
    %v3146 = vpack.c.b16 %v3118, %v3118
    %vm3173 = vcmask 719872
    %v3175 = vsel %vm3173, %v3027, 0
    %v3178 = vsel %vm3173, %v3029, 0
    %v3181 = vsel %vm3173, %v3031, 0
    %v3184 = vsel %vm3173, %v3033, 0
    %vm3186 = vcmask 1043456
    %v3188 = vsel %vm3186, %v3145, 0
    %v3191 = vsel %vm3186, %v3146, 0
    %3193 = vmatpush.bf16.msra.mxu0 %v3133
    %3194 = vmatpush.bf16.msra.mxu0 %v3131
    %3195 = vmatpush.bf16.msra.mxu0 %v3129
    %3196 = vmatpush.bf16.msra.mxu0 %v3127
    %3197 = vmatpush.bf16.msra.mxu0 %v3125
    %3198 = vmatpush.bf16.msra.mxu0 %v3123
    %3199 = vmatpush.bf16.msra.mxu0 %v3121
    %3200 = vmatpush.bf16.msra.mxu0 %v3119
    %3201 = vmatmul.bf16.gmra.mxu0 %v3026
    %v3202 = vpop.f32.mrf.mxu0
    %v3203 = vadd.f32 0.0, %v3202
    %v3204 = vpop.f32.mrf.mxu0
    %v3205 = vadd.f32 0.0, %v3204
    %3206 = vmatmul.bf16.gmra.mxu0 %v3028
    %v3207 = vpop.f32.mrf.mxu0
    %v3208 = vadd.f32 0.0, %v3207
    %v3209 = vpop.f32.mrf.mxu0
    %v3210 = vadd.f32 0.0, %v3209
    %3211 = vmatmul.bf16.gmra.mxu0 %v3030
    %v3212 = vpop.f32.mrf.mxu0
    %v3213 = vadd.f32 0.0, %v3212
    %v3214 = vpop.f32.mrf.mxu0
    %v3215 = vadd.f32 0.0, %v3214
    %3216 = vmatmul.bf16.gmra.mxu0 %v3032
    %v3217 = vpop.f32.mrf.mxu0
    %v3218 = vadd.f32 0.0, %v3217
    %v3219 = vpop.f32.mrf.mxu0
    %3220 = vdwg.mxu0
    %3221 = vmatpush.bf16.msra.mxu0 0
    %3222 = vmatpush.bf16.msra.mxu0 0
    %3223 = vmatpush.bf16.msra.mxu0 %v3188
    %3224 = vmatpush.bf16.msra.mxu0 %v3143
    %3225 = vmatpush.bf16.msra.mxu0 %v3141
    %3226 = vmatpush.bf16.msra.mxu0 %v3139
    %3227 = vmatpush.bf16.msra.mxu0 %v3137
    %3228 = vmatpush.bf16.msra.mxu0 %v3135
    %3229 = vmatmul.bf16.gmra.mxu0 %v3175
    %v3230 = vpop.f32.mrf.mxu0
    %v3231 = vadd.f32 %v3203, %v3230
    %v3232 = vpop.f32.mrf.mxu0
    %v3233 = vadd.f32 %v3205, %v3232
    %3234 = vmatmul.bf16.gmra.mxu0 %v3178
    %v3235 = vpop.f32.mrf.mxu0
    %v3236 = vadd.f32 %v3208, %v3235
    %v3237 = vpop.f32.mrf.mxu0
    %v3238 = vadd.f32 %v3210, %v3237
    %3239 = vmatmul.bf16.gmra.mxu0 %v3181
    %v3240 = vpop.f32.mrf.mxu0
    %v3241 = vadd.f32 %v3213, %v3240
    %v3242 = vpop.f32.mrf.mxu0
    %v3243 = vadd.f32 %v3215, %v3242
    %3244 = vmatmul.bf16.gmra.mxu0 %v3184
    %v3245 = vpop.f32.mrf.mxu0
    %v3246 = vadd.f32 %v3218, %v3245
    %v3247 = vpop.f32.mrf.mxu0
    %3248 = vdwg.mxu0
    %3249 = vmatpush.bf16.msra.mxu0 %v3134
    %3250 = vmatpush.bf16.msra.mxu0 %v3132
    %3251 = vmatpush.bf16.msra.mxu0 %v3130
    %3252 = vmatpush.bf16.msra.mxu0 %v3128
    %3253 = vmatpush.bf16.msra.mxu0 %v3126
    %3254 = vmatpush.bf16.msra.mxu0 %v3124
    %3255 = vmatpush.bf16.msra.mxu0 %v3122
    %3256 = vmatpush.bf16.msra.mxu0 %v3120
    %3257 = vmatmul.bf16.gmra.mxu0 %v3026
    %v3258 = vpop.f32.mrf.mxu0
    %v3259 = vadd.f32 0.0, %v3258
    %v3260 = vpop.f32.mrf.mxu0
    %v3261 = vadd.f32 0.0, %v3260
    %3262 = vmatmul.bf16.gmra.mxu0 %v3028
    %v3263 = vpop.f32.mrf.mxu0
    %v3264 = vadd.f32 0.0, %v3263
    %v3265 = vpop.f32.mrf.mxu0
    %v3266 = vadd.f32 0.0, %v3265
    %3267 = vmatmul.bf16.gmra.mxu0 %v3030
    %v3268 = vpop.f32.mrf.mxu0
    %v3269 = vadd.f32 0.0, %v3268
    %v3270 = vpop.f32.mrf.mxu0
    %v3271 = vadd.f32 0.0, %v3270
    %3272 = vmatmul.bf16.gmra.mxu0 %v3032
    %v3273 = vpop.f32.mrf.mxu0
    %v3274 = vadd.f32 0.0, %v3273
    %v3275 = vpop.f32.mrf.mxu0
    %3276 = vdwg.mxu0
    %3277 = vmatpush.bf16.msra.mxu0 0
    %3278 = vmatpush.bf16.msra.mxu0 0
    %3279 = vmatpush.bf16.msra.mxu0 %v3191
    %3280 = vmatpush.bf16.msra.mxu0 %v3144
    %3281 = vmatpush.bf16.msra.mxu0 %v3142
    %3282 = vmatpush.bf16.msra.mxu0 %v3140
    %3283 = vmatpush.bf16.msra.mxu0 %v3138
    %3284 = vmatpush.bf16.msra.mxu0 %v3136
    %3285 = vmatmul.bf16.gmra.mxu0 %v3175
    %v3286 = vpop.f32.mrf.mxu0
    %v3287 = vadd.f32 %v3259, %v3286
    %v3288 = vpop.f32.mrf.mxu0
    %v3289 = vadd.f32 %v3261, %v3288
    %3290 = vmatmul.bf16.gmra.mxu0 %v3178
    %v3291 = vpop.f32.mrf.mxu0
    %v3292 = vadd.f32 %v3264, %v3291
    %v3293 = vpop.f32.mrf.mxu0
    %v3294 = vadd.f32 %v3266, %v3293
    %3295 = vmatmul.bf16.gmra.mxu0 %v3181
    %v3296 = vpop.f32.mrf.mxu0
    %v3297 = vadd.f32 %v3269, %v3296
    %v3298 = vpop.f32.mrf.mxu0
    %v3299 = vadd.f32 %v3271, %v3298
    %3300 = vmatmul.bf16.gmra.mxu0 %v3184
    %v3301 = vpop.f32.mrf.mxu0
    %v3302 = vadd.f32 %v3274, %v3301
    %v3303 = vpop.f32.mrf.mxu0
    %3304 = vdwg.mxu0
    %v3332 = vunpack.c.l.b16 %v2944
    %v3333 = vunpack.c.h.b16 %v2944
    %v3334 = vunpack.c.l.b16 %v2946
    %v3335 = vunpack.c.h.b16 %v2946
    %v3336 = vunpack.c.l.b16 %v2948
    %v3337 = vunpack.c.h.b16 %v2948
    %v3338 = vunpack.c.l.b16 %v2950
    %v3339 = vunpack.c.h.b16 %v2950
    %v3340 = vunpack.c.l.b16 %v2952
    %v3341 = vunpack.c.h.b16 %v2952
    %v3342 = vunpack.c.l.b16 %v2954
    %v3343 = vunpack.c.h.b16 %v2954
    %v3344 = vunpack.c.l.b16 %v2956
    %v3345 = vunpack.c.h.b16 %v2956
    %v3346 = vunpack.c.l.b16 %v2958
    %v3347 = vunpack.c.h.b16 %v2958
    %v3348 = vunpack.c.l.b16 %v2960
    %v3349 = vunpack.c.h.b16 %v2960
    %v3350 = vunpack.c.l.b16 %v2962
    %v3351 = vunpack.c.h.b16 %v2962
    %v3352 = vunpack.c.l.b16 %v2964
    %v3353 = vunpack.c.h.b16 %v2964
    %v3354 = vunpack.c.l.b16 %v2966
    %v3355 = vunpack.c.h.b16 %v2966
    %v3356 = vunpack.c.l.b16 %v2968
    %v3357 = vunpack.c.h.b16 %v2968
    %v3358 = vunpack.c.l.b16 %v2970
    %v3359 = vunpack.c.h.b16 %v2970
    %v3360 = vunpack.c.l.b16 %v2972
    %v3361 = vunpack.c.h.b16 %v2972
    %v3362 = vunpack.c.l.b16 %v2974
    %v3363 = vunpack.c.h.b16 %v2974
    %v3364 = vunpack.c.l.b16 %v2976
    %v3365 = vunpack.c.h.b16 %v2976
    %v3366 = vunpack.c.l.b16 %v2978
    %v3367 = vunpack.c.h.b16 %v2978
    %v3368 = vunpack.c.l.b16 %v2980
    %v3369 = vunpack.c.h.b16 %v2980
    %v3370 = vunpack.c.l.b16 %v2982
    %v3371 = vunpack.c.h.b16 %v2982
    %v3372 = vunpack.c.l.b16 %v2984
    %v3373 = vunpack.c.h.b16 %v2984
    %v3374 = vunpack.c.l.b16 %v2986
    %v3375 = vunpack.c.h.b16 %v2986
    %v3376 = vunpack.c.l.b16 %v2988
    %v3377 = vunpack.c.h.b16 %v2988
    %v3378 = vunpack.c.l.b16 %v2990
    %v3379 = vunpack.c.h.b16 %v2990
    %v3380 = vunpack.c.l.b16 %v2992
    %v3381 = vunpack.c.h.b16 %v2992
    %v3382 = vunpack.c.l.b16 %v2994
    %v3383 = vunpack.c.h.b16 %v2994
    %v3384 = vunpack.c.l.b16 %v2996
    %v3385 = vunpack.c.h.b16 %v2996
    %v3386 = vpack.c.b16 %v3334, %v3332
    %v3387 = vpack.c.b16 %v3335, %v3333
    %v3388 = vpack.c.b16 %v3338, %v3336
    %v3389 = vpack.c.b16 %v3339, %v3337
    %v3390 = vpack.c.b16 %v3342, %v3340
    %v3391 = vpack.c.b16 %v3343, %v3341
    %v3392 = vpack.c.b16 %v3346, %v3344
    %v3393 = vpack.c.b16 %v3347, %v3345
    %v3394 = vpack.c.b16 %v3350, %v3348
    %v3395 = vpack.c.b16 %v3351, %v3349
    %v3396 = vpack.c.b16 %v3354, %v3352
    %v3397 = vpack.c.b16 %v3355, %v3353
    %v3398 = vpack.c.b16 %v3358, %v3356
    %v3399 = vpack.c.b16 %v3359, %v3357
    %v3400 = vpack.c.b16 %v3362, %v3360
    %v3401 = vpack.c.b16 %v3363, %v3361
    %v3402 = vpack.c.b16 %v3366, %v3364
    %v3403 = vpack.c.b16 %v3367, %v3365
    %v3404 = vpack.c.b16 %v3370, %v3368
    %v3405 = vpack.c.b16 %v3371, %v3369
    %v3406 = vpack.c.b16 %v3374, %v3372
    %v3407 = vpack.c.b16 %v3375, %v3373
    %v3408 = vpack.c.b16 %v3378, %v3376
    %v3409 = vpack.c.b16 %v3379, %v3377
    %v3410 = vpack.c.b16 %v3382, %v3380
    %v3411 = vpack.c.b16 %v3383, %v3381
    %v3412 = vpack.c.b16 %v3384, %v3384
    %v3413 = vpack.c.b16 %v3385, %v3385
    %v3441 = vsel %vm3186, %v3412, 0
    %v3444 = vsel %vm3186, %v3413, 0
    %3446 = vmatpush.bf16.msra.mxu0 %v3400
    %3447 = vmatpush.bf16.msra.mxu0 %v3398
    %3448 = vmatpush.bf16.msra.mxu0 %v3396
    %3449 = vmatpush.bf16.msra.mxu0 %v3394
    %3450 = vmatpush.bf16.msra.mxu0 %v3392
    %3451 = vmatpush.bf16.msra.mxu0 %v3390
    %3452 = vmatpush.bf16.msra.mxu0 %v3388
    %3453 = vmatpush.bf16.msra.mxu0 %v3386
    %3454 = vmatmul.bf16.gmra.mxu0 %v3026
    %v3455 = vpop.f32.mrf.mxu0
    %v3456 = vadd.f32 0.0, %v3455
    %v3457 = vpop.f32.mrf.mxu0
    %v3458 = vadd.f32 0.0, %v3457
    %3459 = vmatmul.bf16.gmra.mxu0 %v3028
    %v3460 = vpop.f32.mrf.mxu0
    %v3461 = vadd.f32 0.0, %v3460
    %v3462 = vpop.f32.mrf.mxu0
    %v3463 = vadd.f32 0.0, %v3462
    %3464 = vmatmul.bf16.gmra.mxu0 %v3030
    %v3465 = vpop.f32.mrf.mxu0
    %v3466 = vadd.f32 0.0, %v3465
    %v3467 = vpop.f32.mrf.mxu0
    %v3468 = vadd.f32 0.0, %v3467
    %3469 = vmatmul.bf16.gmra.mxu0 %v3032
    %v3470 = vpop.f32.mrf.mxu0
    %v3471 = vadd.f32 0.0, %v3470
    %v3472 = vpop.f32.mrf.mxu0
    %3473 = vdwg.mxu0
    %3474 = vmatpush.bf16.msra.mxu0 0
    %3475 = vmatpush.bf16.msra.mxu0 0
    %3476 = vmatpush.bf16.msra.mxu0 %v3441
    %3477 = vmatpush.bf16.msra.mxu0 %v3410
    %3478 = vmatpush.bf16.msra.mxu0 %v3408
    %3479 = vmatpush.bf16.msra.mxu0 %v3406
    %3480 = vmatpush.bf16.msra.mxu0 %v3404
    %3481 = vmatpush.bf16.msra.mxu0 %v3402
    %3482 = vmatmul.bf16.gmra.mxu0 %v3175
    %v3483 = vpop.f32.mrf.mxu0
    %v3484 = vadd.f32 %v3456, %v3483
    %v3485 = vpop.f32.mrf.mxu0
    %v3486 = vadd.f32 %v3458, %v3485
    %3487 = vmatmul.bf16.gmra.mxu0 %v3178
    %v3488 = vpop.f32.mrf.mxu0
    %v3489 = vadd.f32 %v3461, %v3488
    %v3490 = vpop.f32.mrf.mxu0
    %v3491 = vadd.f32 %v3463, %v3490
    %3492 = vmatmul.bf16.gmra.mxu0 %v3181
    %v3493 = vpop.f32.mrf.mxu0
    %v3494 = vadd.f32 %v3466, %v3493
    %v3495 = vpop.f32.mrf.mxu0
    %v3496 = vadd.f32 %v3468, %v3495
    %3497 = vmatmul.bf16.gmra.mxu0 %v3184
    %v3498 = vpop.f32.mrf.mxu0
    %v3499 = vadd.f32 %v3471, %v3498
    %v3500 = vpop.f32.mrf.mxu0
    %3501 = vdwg.mxu0
    %3502 = vmatpush.bf16.msra.mxu0 %v3401
    %3503 = vmatpush.bf16.msra.mxu0 %v3399
    %3504 = vmatpush.bf16.msra.mxu0 %v3397
    %3505 = vmatpush.bf16.msra.mxu0 %v3395
    %3506 = vmatpush.bf16.msra.mxu0 %v3393
    %3507 = vmatpush.bf16.msra.mxu0 %v3391
    %3508 = vmatpush.bf16.msra.mxu0 %v3389
    %3509 = vmatpush.bf16.msra.mxu0 %v3387
    %3510 = vmatmul.bf16.gmra.mxu0 %v3026
    %v3511 = vpop.f32.mrf.mxu0
    %v3512 = vadd.f32 0.0, %v3511
    %v3513 = vpop.f32.mrf.mxu0
    %v3514 = vadd.f32 0.0, %v3513
    %3515 = vmatmul.bf16.gmra.mxu0 %v3028
    %v3516 = vpop.f32.mrf.mxu0
    %v3517 = vadd.f32 0.0, %v3516
    %v3518 = vpop.f32.mrf.mxu0
    %v3519 = vadd.f32 0.0, %v3518
    %3520 = vmatmul.bf16.gmra.mxu0 %v3030
    %v3521 = vpop.f32.mrf.mxu0
    %v3522 = vadd.f32 0.0, %v3521
    %v3523 = vpop.f32.mrf.mxu0
    %v3524 = vadd.f32 0.0, %v3523
    %3525 = vmatmul.bf16.gmra.mxu0 %v3032
    %v3526 = vpop.f32.mrf.mxu0
    %v3527 = vadd.f32 0.0, %v3526
    %v3528 = vpop.f32.mrf.mxu0
    %3529 = vdwg.mxu0
    %3530 = vmatpush.bf16.msra.mxu0 0
    %3531 = vmatpush.bf16.msra.mxu0 0
    %3532 = vmatpush.bf16.msra.mxu0 %v3444
    %3533 = vmatpush.bf16.msra.mxu0 %v3411
    %3534 = vmatpush.bf16.msra.mxu0 %v3409
    %3535 = vmatpush.bf16.msra.mxu0 %v3407
    %3536 = vmatpush.bf16.msra.mxu0 %v3405
    %3537 = vmatpush.bf16.msra.mxu0 %v3403
    %3538 = vmatmul.bf16.gmra.mxu0 %v3175
    %v3539 = vpop.f32.mrf.mxu0
    %v3540 = vadd.f32 %v3512, %v3539
    %v3541 = vpop.f32.mrf.mxu0
    %v3542 = vadd.f32 %v3514, %v3541
    %3543 = vmatmul.bf16.gmra.mxu0 %v3178
    %v3544 = vpop.f32.mrf.mxu0
    %v3545 = vadd.f32 %v3517, %v3544
    %v3546 = vpop.f32.mrf.mxu0
    %v3547 = vadd.f32 %v3519, %v3546
    %3548 = vmatmul.bf16.gmra.mxu0 %v3181
    %v3549 = vpop.f32.mrf.mxu0
    %v3550 = vadd.f32 %v3522, %v3549
    %v3551 = vpop.f32.mrf.mxu0
    %v3552 = vadd.f32 %v3524, %v3551
    %3553 = vmatmul.bf16.gmra.mxu0 %v3184
    %v3554 = vpop.f32.mrf.mxu0
    %v3555 = vadd.f32 %v3527, %v3554
    %v3556 = vpop.f32.mrf.mxu0
    %3557 = vdwg.mxu0
    %v3558 = vld [vmem:[#allocation7] sm:$0xff]
    %v3559 = vld [vmem:[#allocation7 + $0x8] sm:$0xff]
    %v3560 = vld [vmem:[#allocation7 + $0x10] sm:$0xff]
    %v3561 = vld [vmem:[#allocation7 + $0x18] sm:$0xff]
    %v3562 = vld [vmem:[#allocation7 + $0x20] sm:$0xff]
    %v3563 = vld [vmem:[#allocation7 + $0x28] sm:$0xff]
    %v3564 = vld [vmem:[#allocation7 + $0x30] sm:$0x11]
    %v3572 = vunpack.c.l.b16 %v3558
    %v3573 = vunpack.c.h.b16 %v3558
    %v3574 = vunpack.c.l.b16 %v3559
    %v3575 = vunpack.c.h.b16 %v3559
    %v3576 = vunpack.c.l.b16 %v3560
    %v3577 = vunpack.c.h.b16 %v3560
    %v3578 = vunpack.c.l.b16 %v3561
    %v3579 = vunpack.c.h.b16 %v3561
    %v3580 = vunpack.c.l.b16 %v3562
    %v3581 = vunpack.c.h.b16 %v3562
    %v3582 = vunpack.c.l.b16 %v3563
    %v3583 = vunpack.c.h.b16 %v3563
    %v3584 = vunpack.c.l.b16 %v3564
    %v3585 = vunpack.c.h.b16 %v3564
    %v3586 = vpack.c.b16 %v3574, %v3572
    %v3587 = vpack.c.b16 %v3575, %v3573
    %v3588 = vpack.c.b16 %v3578, %v3576
    %v3589 = vpack.c.b16 %v3579, %v3577
    %v3590 = vpack.c.b16 %v3582, %v3580
    %v3591 = vpack.c.b16 %v3583, %v3581
    %v3592 = vpack.c.b16 %v3584, %v3584
    %v3593 = vpack.c.b16 %v3585, %v3585
    %v3625 = vunpack.c.l.b16 %v2891
    %v3626 = vunpack.c.l.b16 %v2893
    %v3627 = vunpack.c.l.b16 %v2895
    %v3628 = vunpack.c.l.b16 %v2897
    %v3629 = vunpack.c.l.b16 %v2899
    %v3630 = vunpack.c.l.b16 %v2901
    %v3631 = vunpack.c.l.b16 %v2903
    %v3632 = vunpack.c.l.b16 %v2905
    %v3633 = vunpack.c.l.b16 %v2907
    %v3634 = vunpack.c.l.b16 %v2909
    %v3635 = vunpack.c.l.b16 %v2911
    %v3636 = vunpack.c.l.b16 %v2913
    %v3637 = vunpack.c.l.b16 %v2915
    %v3638 = vunpack.c.l.b16 %v2917
    %v3639 = vunpack.c.l.b16 %v2919
    %v3640 = vunpack.c.l.b16 %v2921
    %v3641 = vunpack.c.l.b16 %v2923
    %v3642 = vunpack.c.l.b16 %v2925
    %v3643 = vunpack.c.l.b16 %v2927
    %v3644 = vunpack.c.l.b16 %v2929
    %v3645 = vunpack.c.l.b16 %v2931
    %v3646 = vunpack.c.l.b16 %v2933
    %v3647 = vunpack.c.l.b16 %v2935
    %v3648 = vunpack.c.l.b16 %v2937
    %v3649 = vunpack.c.l.b16 %v2939
    %v3650 = vunpack.c.l.b16 %v2941
    %v3651 = vunpack.c.l.b16 %v2943
    %v3652 = vpack.c.b16 %v3626, %v3625
    %v3653 = vpack.c.b16 %v3628, %v3627
    %v3654 = vpack.c.b16 %v3630, %v3629
    %v3655 = vpack.c.b16 %v3632, %v3631
    %v3656 = vpack.c.b16 %v3634, %v3633
    %v3657 = vpack.c.b16 %v3636, %v3635
    %v3658 = vpack.c.b16 %v3638, %v3637
    %v3659 = vpack.c.b16 %v3640, %v3639
    %v3660 = vpack.c.b16 %v3642, %v3641
    %v3661 = vpack.c.b16 %v3644, %v3643
    %v3662 = vpack.c.b16 %v3646, %v3645
    %v3663 = vpack.c.b16 %v3648, %v3647
    %v3664 = vpack.c.b16 %v3650, %v3649
    %v3665 = vpack.c.b16 %v3651, %v3651
    %v3680 = vsel %vm3173, %v3587, 0
    %v3683 = vsel %vm3173, %v3589, 0
    %v3686 = vsel %vm3173, %v3591, 0
    %v3689 = vsel %vm3173, %v3593, 0
    %v3692 = vsel %vm3186, %v3665, 0
    %3694 = vmatpush.bf16.msra.mxu0 %v3659
    %3695 = vmatpush.bf16.msra.mxu0 %v3658
    %3696 = vmatpush.bf16.msra.mxu0 %v3657
    %3697 = vmatpush.bf16.msra.mxu0 %v3656
    %3698 = vmatpush.bf16.msra.mxu0 %v3655
    %3699 = vmatpush.bf16.msra.mxu0 %v3654
    %3700 = vmatpush.bf16.msra.mxu0 %v3653
    %3701 = vmatpush.bf16.msra.mxu0 %v3652
    %3702 = vmatmul.bf16.gmra.mxu0 %v3586
    %v3703 = vpop.f32.mrf.mxu0
    %v3704 = vadd.f32 0.0, %v3703
    %v3705 = vpop.f32.mrf.mxu0
    %v3706 = vadd.f32 0.0, %v3705
    %3707 = vmatmul.bf16.gmra.mxu0 %v3588
    %v3708 = vpop.f32.mrf.mxu0
    %v3709 = vadd.f32 0.0, %v3708
    %v3710 = vpop.f32.mrf.mxu0
    %v3711 = vadd.f32 0.0, %v3710
    %3712 = vmatmul.bf16.gmra.mxu0 %v3590
    %v3713 = vpop.f32.mrf.mxu0
    %v3714 = vadd.f32 0.0, %v3713
    %v3715 = vpop.f32.mrf.mxu0
    %v3716 = vadd.f32 0.0, %v3715
    %3717 = vmatmul.bf16.gmra.mxu0 %v3592
    %v3718 = vpop.f32.mrf.mxu0
    %v3719 = vadd.f32 0.0, %v3718
    %v3720 = vpop.f32.mrf.mxu0
    %3721 = vdwg.mxu0
    %3722 = vmatpush.bf16.msra.mxu0 0
    %3723 = vmatpush.bf16.msra.mxu0 0
    %3724 = vmatpush.bf16.msra.mxu0 %v3692
    %3725 = vmatpush.bf16.msra.mxu0 %v3664
    %3726 = vmatpush.bf16.msra.mxu0 %v3663
    %3727 = vmatpush.bf16.msra.mxu0 %v3662
    %3728 = vmatpush.bf16.msra.mxu0 %v3661
    %3729 = vmatpush.bf16.msra.mxu0 %v3660
    %3730 = vmatmul.bf16.gmra.mxu0 %v3680
    %v3731 = vpop.f32.mrf.mxu0
    %v3732 = vadd.f32 %v3704, %v3731
    %v3733 = vpop.f32.mrf.mxu0
    %v3734 = vadd.f32 %v3706, %v3733
    %3735 = vmatmul.bf16.gmra.mxu0 %v3683
    %v3736 = vpop.f32.mrf.mxu0
    %v3737 = vadd.f32 %v3709, %v3736
    %v3738 = vpop.f32.mrf.mxu0
    %v3739 = vadd.f32 %v3711, %v3738
    %3740 = vmatmul.bf16.gmra.mxu0 %v3686
    %v3741 = vpop.f32.mrf.mxu0
    %v3742 = vadd.f32 %v3714, %v3741
    %v3743 = vpop.f32.mrf.mxu0
    %v3744 = vadd.f32 %v3716, %v3743
    %3745 = vmatmul.bf16.gmra.mxu0 %v3689
    %v3746 = vpop.f32.mrf.mxu0
    %v3747 = vadd.f32 %v3719, %v3746
    %v3748 = vpop.f32.mrf.mxu0
    %3749 = vdwg.mxu0
    %v3777 = vunpack.c.l.b16 %v2945
    %v3778 = vunpack.c.l.b16 %v2947
    %v3779 = vunpack.c.l.b16 %v2949
    %v3780 = vunpack.c.l.b16 %v2951
    %v3781 = vunpack.c.l.b16 %v2953
    %v3782 = vunpack.c.l.b16 %v2955
    %v3783 = vunpack.c.l.b16 %v2957
    %v3784 = vunpack.c.l.b16 %v2959
    %v3785 = vunpack.c.l.b16 %v2961
    %v3786 = vunpack.c.l.b16 %v2963
    %v3787 = vunpack.c.l.b16 %v2965
    %v3788 = vunpack.c.l.b16 %v2967
    %v3789 = vunpack.c.l.b16 %v2969
    %v3790 = vunpack.c.l.b16 %v2971
    %v3791 = vunpack.c.l.b16 %v2973
    %v3792 = vunpack.c.l.b16 %v2975
    %v3793 = vunpack.c.l.b16 %v2977
    %v3794 = vunpack.c.l.b16 %v2979
    %v3795 = vunpack.c.l.b16 %v2981
    %v3796 = vunpack.c.l.b16 %v2983
    %v3797 = vunpack.c.l.b16 %v2985
    %v3798 = vunpack.c.l.b16 %v2987
    %v3799 = vunpack.c.l.b16 %v2989
    %v3800 = vunpack.c.l.b16 %v2991
    %v3801 = vunpack.c.l.b16 %v2993
    %v3802 = vunpack.c.l.b16 %v2995
    %v3803 = vunpack.c.l.b16 %v2997
    %v3804 = vpack.c.b16 %v3778, %v3777
    %v3805 = vpack.c.b16 %v3780, %v3779
    %v3806 = vpack.c.b16 %v3782, %v3781
    %v3807 = vpack.c.b16 %v3784, %v3783
    %v3808 = vpack.c.b16 %v3786, %v3785
    %v3809 = vpack.c.b16 %v3788, %v3787
    %v3810 = vpack.c.b16 %v3790, %v3789
    %v3811 = vpack.c.b16 %v3792, %v3791
    %v3812 = vpack.c.b16 %v3794, %v3793
    %v3813 = vpack.c.b16 %v3796, %v3795
    %v3814 = vpack.c.b16 %v3798, %v3797
    %v3815 = vpack.c.b16 %v3800, %v3799
    %v3816 = vpack.c.b16 %v3802, %v3801
    %v3817 = vpack.c.b16 %v3803, %v3803
    %v3832 = vsel %vm3186, %v3817, 0
    %3834 = vmatpush.bf16.msra.mxu0 %v3811
    %3835 = vmatpush.bf16.msra.mxu0 %v3810
    %3836 = vmatpush.bf16.msra.mxu0 %v3809
    %3837 = vmatpush.bf16.msra.mxu0 %v3808
    %3838 = vmatpush.bf16.msra.mxu0 %v3807
    %3839 = vmatpush.bf16.msra.mxu0 %v3806
    %3840 = vmatpush.bf16.msra.mxu0 %v3805
    %3841 = vmatpush.bf16.msra.mxu0 %v3804
    %3842 = vmatmul.bf16.gmra.mxu0 %v3586
    %v3843 = vpop.f32.mrf.mxu0
    %v3844 = vadd.f32 0.0, %v3843
    %v3845 = vpop.f32.mrf.mxu0
    %v3846 = vadd.f32 0.0, %v3845
    %3847 = vmatmul.bf16.gmra.mxu0 %v3588
    %v3848 = vpop.f32.mrf.mxu0
    %v3849 = vadd.f32 0.0, %v3848
    %v3850 = vpop.f32.mrf.mxu0
    %v3851 = vadd.f32 0.0, %v3850
    %3852 = vmatmul.bf16.gmra.mxu0 %v3590
    %v3853 = vpop.f32.mrf.mxu0
    %v3854 = vadd.f32 0.0, %v3853
    %v3855 = vpop.f32.mrf.mxu0
    %v3856 = vadd.f32 0.0, %v3855
    %3857 = vmatmul.bf16.gmra.mxu0 %v3592
    %v3858 = vpop.f32.mrf.mxu0
    %v3859 = vadd.f32 0.0, %v3858
    %v3860 = vpop.f32.mrf.mxu0
    %3861 = vdwg.mxu0
    %3862 = vmatpush.bf16.msra.mxu0 0
    %3863 = vmatpush.bf16.msra.mxu0 0
    %3864 = vmatpush.bf16.msra.mxu0 %v3832
    %3865 = vmatpush.bf16.msra.mxu0 %v3816
    %3866 = vmatpush.bf16.msra.mxu0 %v3815
    %3867 = vmatpush.bf16.msra.mxu0 %v3814
    %3868 = vmatpush.bf16.msra.mxu0 %v3813
    %3869 = vmatpush.bf16.msra.mxu0 %v3812
    %3870 = vmatmul.bf16.gmra.mxu0 %v3680
    %v3871 = vpop.f32.mrf.mxu0
    %v3872 = vadd.f32 %v3844, %v3871
    %v3873 = vpop.f32.mrf.mxu0
    %v3874 = vadd.f32 %v3846, %v3873
    %3875 = vmatmul.bf16.gmra.mxu0 %v3683
    %v3876 = vpop.f32.mrf.mxu0
    %v3877 = vadd.f32 %v3849, %v3876
    %v3878 = vpop.f32.mrf.mxu0
    %v3879 = vadd.f32 %v3851, %v3878
    %3880 = vmatmul.bf16.gmra.mxu0 %v3686
    %v3881 = vpop.f32.mrf.mxu0
    %v3882 = vadd.f32 %v3854, %v3881
    %v3883 = vpop.f32.mrf.mxu0
    %v3884 = vadd.f32 %v3856, %v3883
    %3885 = vmatmul.bf16.gmra.mxu0 %v3689
    %v3886 = vpop.f32.mrf.mxu0
    %v3887 = vadd.f32 %v3859, %v3886
    %v3888 = vpop.f32.mrf.mxu0
    %3889 = vdwg.mxu0
    %v3911 = vrot.slane %v3484, 6
    %v3912 = vrot.slane %v3540, 6
    %v3913 = vrot.slane %v3872, 6
    %v3914 = vrot.slane %v3486, 6
    %v3915 = vsel %vm355, %v3911, %v3914
    %v3916 = vrot.slane %v3542, 6
    %v3917 = vsel %vm355, %v3912, %v3916
    %v3918 = vrot.slane %v3874, 6
    %v3919 = vsel %vm355, %v3913, %v3918
    %v3920 = vrot.slane %v3489, 6
    %v3921 = vsel %vm355, %v3914, %v3920
    %v3922 = vrot.slane %v3545, 6
    %v3923 = vsel %vm355, %v3916, %v3922
    %v3924 = vrot.slane %v3877, 6
    %v3925 = vsel %vm355, %v3918, %v3924
    %v3926 = vrot.slane %v3491, 6
    %v3927 = vsel %vm355, %v3920, %v3926
    %v3928 = vrot.slane %v3547, 6
    %v3929 = vsel %vm355, %v3922, %v3928
    %v3930 = vrot.slane %v3879, 6
    %v3931 = vsel %vm355, %v3924, %v3930
    %v3932 = vrot.slane %v3494, 6
    %v3933 = vsel %vm355, %v3926, %v3932
    %v3934 = vrot.slane %v3550, 6
    %v3935 = vsel %vm355, %v3928, %v3934
    %v3936 = vrot.slane %v3882, 6
    %v3937 = vsel %vm355, %v3930, %v3936
    %v3938 = vrot.slane %v3496, 6
    %v3939 = vsel %vm355, %v3932, %v3938
    %v3940 = vrot.slane %v3552, 6
    %v3941 = vsel %vm355, %v3934, %v3940
    %v3942 = vrot.slane %v3884, 6
    %v3943 = vsel %vm355, %v3936, %v3942
    %v3944 = vrot.slane %v3499, 6
    %v3945 = vsel %vm355, %v3938, %v3944
    %v3946 = vrot.slane %v3555, 6
    %v3947 = vsel %vm355, %v3940, %v3946
    %v3948 = vrot.slane %v3887, 6
    %v3949 = vsel %vm355, %v3942, %v3948
    %v3971 = vsel %vm355, %v3246, %v3911
    %v3972 = vsel %vm355, %v3302, %v3912
    %v3973 = vsel %vm355, %v3747, %v3913
    %v3974 = vpack.c.bf16 %v3233, %v3231
    %v3975 = vpack.c.bf16 %v3289, %v3287
    %v3976 = vpack.c.bf16 %v3734, %v3732
    %v3977 = vpack.c.bf16 %v3238, %v3236
    %v3978 = vpack.c.bf16 %v3294, %v3292
    %v3979 = vpack.c.bf16 %v3739, %v3737
    %v3980 = vpack.c.bf16 %v3243, %v3241
    %v3981 = vpack.c.bf16 %v3299, %v3297
    %v3982 = vpack.c.bf16 %v3744, %v3742
    %v3983 = vpack.c.bf16 %v3915, %v3971
    %v3984 = vpack.c.bf16 %v3917, %v3972
    %v3985 = vpack.c.bf16 %v3919, %v3973
    %v3986 = vpack.c.bf16 %v3927, %v3921
    %v3987 = vpack.c.bf16 %v3929, %v3923
    %v3988 = vpack.c.bf16 %v3931, %v3925
    %v3989 = vpack.c.bf16 %v3939, %v3933
    %v3990 = vpack.c.bf16 %v3941, %v3935
    %v3991 = vpack.c.bf16 %v3943, %v3937
    %v3992 = vpack.c.bf16 %v3945, %v3945
    %v3993 = vpack.c.bf16 %v3947, %v3947
    %v3994 = vpack.c.bf16 %v3949, %v3949
    %v3995 = vld [vmem:[#allocation8] sm:$0xf]
    %v3996 = vld [vmem:[#allocation8 + $0x4] sm:$0xf]
    %v3997 = vld [vmem:[#allocation8 + $0x8] sm:$0xf]
    %v3998 = vld [vmem:[#allocation8 + $0xc] sm:$0xf]
    %v3999 = vld [vmem:[#allocation8 + $0x10] sm:$0xf]
    %v4000 = vld [vmem:[#allocation8 + $0x14] sm:$0xf]
    %v4001 = vld [vmem:[#allocation8 + $0x18] sm:$0xf]
    %v4002 = vld [vmem:[#allocation8 + $0x1c] sm:$0xf]
    %v4003 = vld [vmem:[#allocation8 + $0x20] sm:$0xf]
    %v4004 = vld [vmem:[#allocation8 + $0x24] sm:$0xf]
    %v4005 = vld [vmem:[#allocation8 + $0x28] sm:$0xf]
    %v4006 = vld [vmem:[#allocation8 + $0x2c] sm:$0xf]
    %v4007 = vld [vmem:[#allocation8 + $0x30] sm:$0xf]
    %v4008 = vld [vmem:[#allocation8 + $0x34] sm:$0xf]
    %v4009 = vld [vmem:[#allocation8 + $0x38] sm:$0xf]
    %v4010 = vld [vmem:[#allocation8 + $0x3c] sm:$0xf]
    %v4011 = vld [vmem:[#allocation8 + $0x40] sm:$0xf]
    %v4012 = vld [vmem:[#allocation8 + $0x44] sm:$0xf]
    %v4013 = vld [vmem:[#allocation8 + $0x48] sm:$0xf]
    %v4014 = vld [vmem:[#allocation8 + $0x4c] sm:$0xf]
    %v4015 = vld [vmem:[#allocation8 + $0x50] sm:$0xf]
    %v4016 = vld [vmem:[#allocation8 + $0x54] sm:$0xf]
    %v4017 = vld [vmem:[#allocation8 + $0x58] sm:$0xf]
    %v4018 = vld [vmem:[#allocation8 + $0x5c] sm:$0xf]
    %v4019 = vld [vmem:[#allocation8 + $0x60] sm:$0xf]
    %v4020 = vld [vmem:[#allocation8 + $0x64] sm:$0xf]
    %v4021 = vld [vmem:[#allocation8 + $0x68] sm:$0xf]
    %v4022 = vld [vmem:[#allocation8 + $0x6c] sm:$0xf]
    %v4023 = vld [vmem:[#allocation8 + $0x70] sm:$0xf]
    %v4024 = vld [vmem:[#allocation8 + $0x74] sm:$0xf]
    %v4025 = vld [vmem:[#allocation8 + $0x78] sm:$0xf]
    %v4026 = vld [vmem:[#allocation8 + $0x7c] sm:$0xf]
    %v4027 = vld [vmem:[#allocation8 + $0x80] sm:$0xf]
    %v4028 = vld [vmem:[#allocation8 + $0x84] sm:$0xf]
    %v4029 = vld [vmem:[#allocation8 + $0x88] sm:$0xf]
    %v4030 = vld [vmem:[#allocation8 + $0x8c] sm:$0xf]
    %v4031 = vld [vmem:[#allocation8 + $0x90] sm:$0xf]
    %v4032 = vld [vmem:[#allocation8 + $0x94] sm:$0xf]
    %v4033 = vld [vmem:[#allocation8 + $0x98] sm:$0xf]
    %v4034 = vld [vmem:[#allocation8 + $0x9c] sm:$0xf]
    %v4035 = vld [vmem:[#allocation8 + $0xa0] sm:$0xf]
    %v4036 = vld [vmem:[#allocation8 + $0xa4] sm:$0xf]
    %v4037 = vld [vmem:[#allocation8 + $0xa8] sm:$0xf]
    %v4038 = vld [vmem:[#allocation8 + $0xac] sm:$0xf]
    %v4039 = vld [vmem:[#allocation8 + $0xb0] sm:$0xf]
    %v4040 = vld [vmem:[#allocation8 + $0xb4] sm:$0xf]
    %v4041 = vld [vmem:[#allocation8 + $0xb8] sm:$0xf]
    %v4042 = vld [vmem:[#allocation8 + $0xbc] sm:$0xf]
    %v4043 = vld [vmem:[%s7] sm:$0x1]
    %v4045 = vperm.slane %v4043, 0
    %v4095 = vunpack.c.l.b16 %v3995
    %v4096 = vunpack.c.l.b16 %v3996
    %v4097 = vunpack.c.l.b16 %v3997
    %v4098 = vunpack.c.l.b16 %v3998
    %v4099 = vunpack.c.l.b16 %v3999
    %v4100 = vunpack.c.l.b16 %v4000
    %v4101 = vunpack.c.l.b16 %v4001
    %v4102 = vunpack.c.l.b16 %v4002
    %v4103 = vunpack.c.l.b16 %v4003
    %v4104 = vunpack.c.l.b16 %v4004
    %v4105 = vunpack.c.l.b16 %v4005
    %v4106 = vunpack.c.l.b16 %v4006
    %v4107 = vunpack.c.l.b16 %v4007
    %v4108 = vunpack.c.l.b16 %v4008
    %v4109 = vunpack.c.l.b16 %v4009
    %v4110 = vunpack.c.l.b16 %v4010
    %v4111 = vunpack.c.l.b16 %v4011
    %v4112 = vunpack.c.l.b16 %v4012
    %v4113 = vunpack.c.l.b16 %v4013
    %v4114 = vunpack.c.l.b16 %v4014
    %v4115 = vunpack.c.l.b16 %v4015
    %v4116 = vunpack.c.l.b16 %v4016
    %v4117 = vunpack.c.l.b16 %v4017
    %v4118 = vunpack.c.l.b16 %v4018
    %v4119 = vunpack.c.l.b16 %v4019
    %v4120 = vunpack.c.l.b16 %v4020
    %v4121 = vunpack.c.l.b16 %v4021
    %v4122 = vunpack.c.l.b16 %v4022
    %v4123 = vunpack.c.l.b16 %v4023
    %v4124 = vunpack.c.l.b16 %v4024
    %v4125 = vunpack.c.l.b16 %v4025
    %v4126 = vunpack.c.l.b16 %v4026
    %v4127 = vunpack.c.l.b16 %v4027
    %v4128 = vunpack.c.l.b16 %v4028
    %v4129 = vunpack.c.l.b16 %v4029
    %v4130 = vunpack.c.l.b16 %v4030
    %v4131 = vunpack.c.l.b16 %v4031
    %v4132 = vunpack.c.l.b16 %v4032
    %v4133 = vunpack.c.l.b16 %v4033
    %v4134 = vunpack.c.l.b16 %v4034
    %v4135 = vunpack.c.l.b16 %v4035
    %v4136 = vunpack.c.l.b16 %v4036
    %v4137 = vunpack.c.l.b16 %v4037
    %v4138 = vunpack.c.l.b16 %v4038
    %v4139 = vunpack.c.l.b16 %v4039
    %v4140 = vunpack.c.l.b16 %v4040
    %v4141 = vunpack.c.l.b16 %v4041
    %v4142 = vunpack.c.l.b16 %v4042
    %v4143 = vpack.c.b16 %v4096, %v4095
    %v4144 = vpack.c.b16 %v4098, %v4097
    %v4145 = vpack.c.b16 %v4100, %v4099
    %v4146 = vpack.c.b16 %v4102, %v4101
    %v4147 = vpack.c.b16 %v4104, %v4103
    %v4148 = vpack.c.b16 %v4106, %v4105
    %v4149 = vpack.c.b16 %v4108, %v4107
    %v4150 = vpack.c.b16 %v4110, %v4109
    %v4151 = vpack.c.b16 %v4112, %v4111
    %v4152 = vpack.c.b16 %v4114, %v4113
    %v4153 = vpack.c.b16 %v4116, %v4115
    %v4154 = vpack.c.b16 %v4118, %v4117
    %v4155 = vpack.c.b16 %v4120, %v4119
    %v4156 = vpack.c.b16 %v4122, %v4121
    %v4157 = vpack.c.b16 %v4124, %v4123
    %v4158 = vpack.c.b16 %v4126, %v4125
    %v4159 = vpack.c.b16 %v4128, %v4127
    %v4160 = vpack.c.b16 %v4130, %v4129
    %v4161 = vpack.c.b16 %v4132, %v4131
    %v4162 = vpack.c.b16 %v4134, %v4133
    %v4163 = vpack.c.b16 %v4136, %v4135
    %v4164 = vpack.c.b16 %v4138, %v4137
    %v4165 = vpack.c.b16 %v4140, %v4139
    %v4166 = vpack.c.b16 %v4142, %v4141
    %4191 = vmatpush.bf16.msra.mxu0 %v4150
    %4192 = vmatpush.bf16.msra.mxu0 %v4149
    %4193 = vmatpush.bf16.msra.mxu0 %v4148
    %4194 = vmatpush.bf16.msra.mxu0 %v4147
    %4195 = vmatpush.bf16.msra.mxu0 %v4146
    %4196 = vmatpush.bf16.msra.mxu0 %v4145
    %4197 = vmatpush.bf16.msra.mxu0 %v4144
    %4198 = vmatpush.bf16.msra.mxu0 %v4143
    %4199 = vmatmul.bf16.gmra.mxu0 %v3974
    %v4200 = vpop.f32.mrf.mxu0
    %v4201 = vadd.f32 %v4045, %v4200
    %v4202 = vpop.f32.mrf.mxu0
    %v4203 = vadd.f32 %v4045, %v4202
    %4204 = vmatmul.bf16.gmra.mxu0 %v3977
    %v4205 = vpop.f32.mrf.mxu0
    %v4206 = vadd.f32 %v4045, %v4205
    %v4207 = vpop.f32.mrf.mxu0
    %v4208 = vadd.f32 %v4045, %v4207
    %4209 = vmatmul.bf16.gmra.mxu0 %v3980
    %v4210 = vpop.f32.mrf.mxu0
    %v4211 = vadd.f32 %v4045, %v4210
    %v4212 = vpop.f32.mrf.mxu0
    %v4213 = vadd.f32 %v4045, %v4212
    %4214 = vmatmul.bf16.gmra.mxu0 %v3983
    %v4215 = vpop.f32.mrf.mxu0
    %v4216 = vadd.f32 %v4045, %v4215
    %v4217 = vpop.f32.mrf.mxu0
    %v4218 = vadd.f32 %v4045, %v4217
    %4219 = vmatmul.bf16.gmra.mxu0 %v3986
    %v4220 = vpop.f32.mrf.mxu0
    %v4221 = vadd.f32 %v4045, %v4220
    %v4222 = vpop.f32.mrf.mxu0
    %v4223 = vadd.f32 %v4045, %v4222
    %4224 = vmatmul.bf16.gmra.mxu0 %v3989
    %v4225 = vpop.f32.mrf.mxu0
    %v4226 = vadd.f32 %v4045, %v4225
    %v4227 = vpop.f32.mrf.mxu0
    %v4228 = vadd.f32 %v4045, %v4227
    %4229 = vmatmul.bf16.gmra.mxu0 %v3992
    %v4230 = vpop.f32.mrf.mxu0
    %v4231 = vadd.f32 %v4045, %v4230
    %v4232 = vpop.f32.mrf.mxu0
    %4233 = vdwg.mxu0
    %4234 = vmatpush.bf16.msra.mxu0 %v4158
    %4235 = vmatpush.bf16.msra.mxu0 %v4157
    %4236 = vmatpush.bf16.msra.mxu0 %v4156
    %4237 = vmatpush.bf16.msra.mxu0 %v4155
    %4238 = vmatpush.bf16.msra.mxu0 %v4154
    %4239 = vmatpush.bf16.msra.mxu0 %v4153
    %4240 = vmatpush.bf16.msra.mxu0 %v4152
    %4241 = vmatpush.bf16.msra.mxu0 %v4151
    %4242 = vmatmul.bf16.gmra.mxu0 %v3975
    %v4243 = vpop.f32.mrf.mxu0
    %v4244 = vadd.f32 %v4201, %v4243
    %v4245 = vpop.f32.mrf.mxu0
    %v4246 = vadd.f32 %v4203, %v4245
    %4247 = vmatmul.bf16.gmra.mxu0 %v3978
    %v4248 = vpop.f32.mrf.mxu0
    %v4249 = vadd.f32 %v4206, %v4248
    %v4250 = vpop.f32.mrf.mxu0
    %v4251 = vadd.f32 %v4208, %v4250
    %4252 = vmatmul.bf16.gmra.mxu0 %v3981
    %v4253 = vpop.f32.mrf.mxu0
    %v4254 = vadd.f32 %v4211, %v4253
    %v4255 = vpop.f32.mrf.mxu0
    %v4256 = vadd.f32 %v4213, %v4255
    %4257 = vmatmul.bf16.gmra.mxu0 %v3984
    %v4258 = vpop.f32.mrf.mxu0
    %v4259 = vadd.f32 %v4216, %v4258
    %v4260 = vpop.f32.mrf.mxu0
    %v4261 = vadd.f32 %v4218, %v4260
    %4262 = vmatmul.bf16.gmra.mxu0 %v3987
    %v4263 = vpop.f32.mrf.mxu0
    %v4264 = vadd.f32 %v4221, %v4263
    %v4265 = vpop.f32.mrf.mxu0
    %v4266 = vadd.f32 %v4223, %v4265
    %4267 = vmatmul.bf16.gmra.mxu0 %v3990
    %v4268 = vpop.f32.mrf.mxu0
    %v4269 = vadd.f32 %v4226, %v4268
    %v4270 = vpop.f32.mrf.mxu0
    %v4271 = vadd.f32 %v4228, %v4270
    %4272 = vmatmul.bf16.gmra.mxu0 %v3993
    %v4273 = vpop.f32.mrf.mxu0
    %v4274 = vadd.f32 %v4231, %v4273
    %v4275 = vpop.f32.mrf.mxu0
    %4276 = vdwg.mxu0
    %4277 = vmatpush.bf16.msra.mxu0 %v4166
    %4278 = vmatpush.bf16.msra.mxu0 %v4165
    %4279 = vmatpush.bf16.msra.mxu0 %v4164
    %4280 = vmatpush.bf16.msra.mxu0 %v4163
    %4281 = vmatpush.bf16.msra.mxu0 %v4162
    %4282 = vmatpush.bf16.msra.mxu0 %v4161
    %4283 = vmatpush.bf16.msra.mxu0 %v4160
    %4284 = vmatpush.bf16.msra.mxu0 %v4159
    %4285 = vmatmul.bf16.gmra.mxu0 %v3976
    %v4286 = vpop.f32.mrf.mxu0
    %v4287 = vadd.f32 %v4244, %v4286
    %v4288 = vpop.f32.mrf.mxu0
    %v4289 = vadd.f32 %v4246, %v4288
    %4290 = vmatmul.bf16.gmra.mxu0 %v3979
    %v4291 = vpop.f32.mrf.mxu0
    %v4292 = vadd.f32 %v4249, %v4291
    %v4293 = vpop.f32.mrf.mxu0
    %v4294 = vadd.f32 %v4251, %v4293
    %4295 = vmatmul.bf16.gmra.mxu0 %v3982
    %v4296 = vpop.f32.mrf.mxu0
    %v4297 = vadd.f32 %v4254, %v4296
    %v4298 = vpop.f32.mrf.mxu0
    %v4299 = vadd.f32 %v4256, %v4298
    %4300 = vmatmul.bf16.gmra.mxu0 %v3985
    %v4301 = vpop.f32.mrf.mxu0
    %v4302 = vadd.f32 %v4259, %v4301
    %v4303 = vpop.f32.mrf.mxu0
    %v4304 = vadd.f32 %v4261, %v4303
    %4305 = vmatmul.bf16.gmra.mxu0 %v3988
    %v4306 = vpop.f32.mrf.mxu0
    %v4307 = vadd.f32 %v4264, %v4306
    %v4308 = vpop.f32.mrf.mxu0
    %v4309 = vadd.f32 %v4266, %v4308
    %4310 = vmatmul.bf16.gmra.mxu0 %v3991
    %v4311 = vpop.f32.mrf.mxu0
    %v4312 = vadd.f32 %v4269, %v4311
    %v4313 = vpop.f32.mrf.mxu0
    %v4314 = vadd.f32 %v4271, %v4313
    %4315 = vmatmul.bf16.gmra.mxu0 %v3994
    %v4316 = vpop.f32.mrf.mxu0
    %v4317 = vadd.f32 %v4274, %v4316
    %v4318 = vpop.f32.mrf.mxu0
    %4319 = vdwg.mxu0
    %v4320 = vpack.c.bf16 %v4289, %v4287
    %v4321 = vpack.c.bf16 %v4294, %v4292
    %v4322 = vpack.c.bf16 %v4299, %v4297
    %v4323 = vpack.c.bf16 %v4304, %v4302
    %v4324 = vpack.c.bf16 %v4309, %v4307
    %v4325 = vpack.c.bf16 %v4314, %v4312
    %v4326 = vpack.c.bf16 %v4317, %v4317
    %v4327 = vld [vmem:[#allocation10] sm:$0xff]
    %v4328 = vld [vmem:[#allocation10 + $0x8] sm:$0xf]
    %v4329 = vld [vmem:[#allocation10 + $0xc] sm:$0xff]
    %v4330 = vld [vmem:[#allocation10 + $0x14] sm:$0xf]
    %v4331 = vld [vmem:[#allocation10 + $0x18] sm:$0xff]
    %v4332 = vld [vmem:[#allocation10 + $0x20] sm:$0xf]
    %v4333 = vld [vmem:[#allocation10 + $0x24] sm:$0xff]
    %v4334 = vld [vmem:[#allocation10 + $0x2c] sm:$0xf]
    %v4335 = vld [vmem:[#allocation10 + $0x30] sm:$0xff]
    %v4336 = vld [vmem:[#allocation10 + $0x38] sm:$0xf]
    %v4337 = vld [vmem:[#allocation10 + $0x3c] sm:$0xff]
    %v4338 = vld [vmem:[#allocation10 + $0x44] sm:$0xf]
    %v4339 = vld [vmem:[#allocation10 + $0x48] sm:$0xff]
    %v4340 = vld [vmem:[#allocation10 + $0x50] sm:$0xf]
    %v4341 = vld [vmem:[#allocation10 + $0x54] sm:$0xff]
    %v4342 = vld [vmem:[#allocation10 + $0x5c] sm:$0xf]
    %v4343 = vld [vmem:[#allocation10 + $0x60] sm:$0xff]
    %v4344 = vld [vmem:[#allocation10 + $0x68] sm:$0xf]
    %v4345 = vld [vmem:[#allocation10 + $0x6c] sm:$0xff]
    %v4346 = vld [vmem:[#allocation10 + $0x74] sm:$0xf]
    %v4347 = vld [vmem:[#allocation10 + $0x78] sm:$0xff]
    %v4348 = vld [vmem:[#allocation10 + $0x80] sm:$0xf]
    %v4349 = vld [vmem:[#allocation10 + $0x84] sm:$0xff]
    %v4350 = vld [vmem:[#allocation10 + $0x8c] sm:$0xf]
    %v4351 = vld [vmem:[#allocation10 + $0x90] sm:$0xff]
    %v4352 = vld [vmem:[#allocation10 + $0x98] sm:$0xf]
    %v4353 = vld [vmem:[#allocation10 + $0x9c] sm:$0xff]
    %v4354 = vld [vmem:[#allocation10 + $0xa4] sm:$0xf]
    %v4355 = vld [vmem:[#allocation10 + $0xa8] sm:$0xff]
    %v4356 = vld [vmem:[#allocation10 + $0xb0] sm:$0xf]
    %v4357 = vld [vmem:[#allocation10 + $0xb4] sm:$0xff]
    %v4358 = vld [vmem:[#allocation10 + $0xbc] sm:$0xf]
    %v4359 = vld [vmem:[%s9] sm:$0x7]
    %v4361 = vperm.slane %v4359, 0
    %v4362 = vperm.slane %v4359, 1
    %v4363 = vperm.slane %v4359, 2
    %v4399 = vunpack.c.l.b16 %v4327
    %v4400 = vunpack.c.h.b16 %v4327
    %v4401 = vunpack.c.l.b16 %v4328
    %v4402 = vunpack.c.l.b16 %v4329
    %v4403 = vunpack.c.h.b16 %v4329
    %v4404 = vunpack.c.l.b16 %v4330
    %v4405 = vunpack.c.l.b16 %v4331
    %v4406 = vunpack.c.h.b16 %v4331
    %v4407 = vunpack.c.l.b16 %v4332
    %v4408 = vunpack.c.l.b16 %v4333
    %v4409 = vunpack.c.h.b16 %v4333
    %v4410 = vunpack.c.l.b16 %v4334
    %v4411 = vunpack.c.l.b16 %v4335
    %v4412 = vunpack.c.h.b16 %v4335
    %v4413 = vunpack.c.l.b16 %v4336
    %v4414 = vunpack.c.l.b16 %v4337
    %v4415 = vunpack.c.h.b16 %v4337
    %v4416 = vunpack.c.l.b16 %v4338
    %v4417 = vunpack.c.l.b16 %v4339
    %v4418 = vunpack.c.h.b16 %v4339
    %v4419 = vunpack.c.l.b16 %v4340
    %v4420 = vunpack.c.l.b16 %v4341
    %v4421 = vunpack.c.h.b16 %v4341
    %v4422 = vunpack.c.l.b16 %v4342
    %v4423 = vunpack.c.l.b16 %v4343
    %v4424 = vunpack.c.h.b16 %v4343
    %v4425 = vunpack.c.l.b16 %v4344
    %v4426 = vunpack.c.l.b16 %v4345
    %v4427 = vunpack.c.h.b16 %v4345
    %v4428 = vunpack.c.l.b16 %v4346
    %v4429 = vunpack.c.l.b16 %v4347
    %v4430 = vunpack.c.h.b16 %v4347
    %v4431 = vunpack.c.l.b16 %v4348
    %v4432 = vunpack.c.l.b16 %v4349
    %v4433 = vunpack.c.h.b16 %v4349
    %v4434 = vunpack.c.l.b16 %v4350
    %v4435 = vunpack.c.l.b16 %v4351
    %v4436 = vunpack.c.h.b16 %v4351
    %v4437 = vunpack.c.l.b16 %v4352
    %v4438 = vunpack.c.l.b16 %v4353
    %v4439 = vunpack.c.h.b16 %v4353
    %v4440 = vunpack.c.l.b16 %v4354
    %v4441 = vunpack.c.l.b16 %v4355
    %v4442 = vunpack.c.h.b16 %v4355
    %v4443 = vunpack.c.l.b16 %v4356
    %v4444 = vunpack.c.l.b16 %v4357
    %v4445 = vunpack.c.h.b16 %v4357
    %v4446 = vunpack.c.l.b16 %v4358
    %v4447 = vpack.c.b16 %v4402, %v4399
    %v4448 = vpack.c.b16 %v4403, %v4400
    %v4449 = vpack.c.b16 %v4404, %v4401
    %v4450 = vpack.c.b16 %v4408, %v4405
    %v4451 = vpack.c.b16 %v4409, %v4406
    %v4452 = vpack.c.b16 %v4410, %v4407
    %v4453 = vpack.c.b16 %v4414, %v4411
    %v4454 = vpack.c.b16 %v4415, %v4412
    %v4455 = vpack.c.b16 %v4416, %v4413
    %v4456 = vpack.c.b16 %v4420, %v4417
    %v4457 = vpack.c.b16 %v4421, %v4418
    %v4458 = vpack.c.b16 %v4422, %v4419
    %v4459 = vpack.c.b16 %v4426, %v4423
    %v4460 = vpack.c.b16 %v4427, %v4424
    %v4461 = vpack.c.b16 %v4428, %v4425
    %v4462 = vpack.c.b16 %v4432, %v4429
    %v4463 = vpack.c.b16 %v4433, %v4430
    %v4464 = vpack.c.b16 %v4434, %v4431
    %v4465 = vpack.c.b16 %v4438, %v4435
    %v4466 = vpack.c.b16 %v4439, %v4436
    %v4467 = vpack.c.b16 %v4440, %v4437
    %v4468 = vpack.c.b16 %v4444, %v4441
    %v4469 = vpack.c.b16 %v4445, %v4442
    %v4470 = vpack.c.b16 %v4446, %v4443
    %4495 = vmatpush.bf16.msra.mxu0 %v4468
    %4496 = vmatpush.bf16.msra.mxu0 %v4465
    %4497 = vmatpush.bf16.msra.mxu0 %v4462
    %4498 = vmatpush.bf16.msra.mxu0 %v4459
    %4499 = vmatpush.bf16.msra.mxu0 %v4456
    %4500 = vmatpush.bf16.msra.mxu0 %v4453
    %4501 = vmatpush.bf16.msra.mxu0 %v4450
    %4502 = vmatpush.bf16.msra.mxu0 %v4447
    %4503 = vmatmul.bf16.gmra.mxu0 %v4320
    %v4504 = vpop.f32.mrf.mxu0
    %v4505 = vadd.f32 %v4361, %v4504
    %v4506 = vpop.f32.mrf.mxu0
    %v4507 = vadd.f32 %v4361, %v4506
    %4508 = vmatmul.bf16.gmra.mxu0 %v4321
    %v4509 = vpop.f32.mrf.mxu0
    %v4510 = vadd.f32 %v4361, %v4509
    %v4511 = vpop.f32.mrf.mxu0
    %v4512 = vadd.f32 %v4361, %v4511
    %4513 = vmatmul.bf16.gmra.mxu0 %v4322
    %v4514 = vpop.f32.mrf.mxu0
    %v4515 = vadd.f32 %v4361, %v4514
    %v4516 = vpop.f32.mrf.mxu0
    %v4517 = vadd.f32 %v4361, %v4516
    %4518 = vmatmul.bf16.gmra.mxu0 %v4323
    %v4519 = vpop.f32.mrf.mxu0
    %v4520 = vadd.f32 %v4361, %v4519
    %v4521 = vpop.f32.mrf.mxu0
    %v4522 = vadd.f32 %v4361, %v4521
    %4523 = vmatmul.bf16.gmra.mxu0 %v4324
    %v4524 = vpop.f32.mrf.mxu0
    %v4525 = vadd.f32 %v4361, %v4524
    %v4526 = vpop.f32.mrf.mxu0
    %v4527 = vadd.f32 %v4361, %v4526
    %4528 = vmatmul.bf16.gmra.mxu0 %v4325
    %v4529 = vpop.f32.mrf.mxu0
    %v4530 = vadd.f32 %v4361, %v4529
    %v4531 = vpop.f32.mrf.mxu0
    %v4532 = vadd.f32 %v4361, %v4531
    %4533 = vmatmul.bf16.gmra.mxu0 %v4326
    %v4534 = vpop.f32.mrf.mxu0
    %v4535 = vadd.f32 %v4361, %v4534
    %v4536 = vpop.f32.mrf.mxu0
    %4537 = vdwg.mxu0
    %4538 = vmatpush.bf16.msra.mxu0 %v4469
    %4539 = vmatpush.bf16.msra.mxu0 %v4466
    %4540 = vmatpush.bf16.msra.mxu0 %v4463
    %4541 = vmatpush.bf16.msra.mxu0 %v4460
    %4542 = vmatpush.bf16.msra.mxu0 %v4457
    %4543 = vmatpush.bf16.msra.mxu0 %v4454
    %4544 = vmatpush.bf16.msra.mxu0 %v4451
    %4545 = vmatpush.bf16.msra.mxu0 %v4448
    %4546 = vmatmul.bf16.gmra.mxu0 %v4320
    %v4547 = vpop.f32.mrf.mxu0
    %v4548 = vadd.f32 %v4362, %v4547
    %v4549 = vpop.f32.mrf.mxu0
    %v4550 = vadd.f32 %v4362, %v4549
    %4551 = vmatmul.bf16.gmra.mxu0 %v4321
    %v4552 = vpop.f32.mrf.mxu0
    %v4553 = vadd.f32 %v4362, %v4552
    %v4554 = vpop.f32.mrf.mxu0
    %v4555 = vadd.f32 %v4362, %v4554
    %4556 = vmatmul.bf16.gmra.mxu0 %v4322
    %v4557 = vpop.f32.mrf.mxu0
    %v4558 = vadd.f32 %v4362, %v4557
    %v4559 = vpop.f32.mrf.mxu0
    %v4560 = vadd.f32 %v4362, %v4559
    %4561 = vmatmul.bf16.gmra.mxu0 %v4323
    %v4562 = vpop.f32.mrf.mxu0
    %v4563 = vadd.f32 %v4362, %v4562
    %v4564 = vpop.f32.mrf.mxu0
    %v4565 = vadd.f32 %v4362, %v4564
    %4566 = vmatmul.bf16.gmra.mxu0 %v4324
    %v4567 = vpop.f32.mrf.mxu0
    %v4568 = vadd.f32 %v4362, %v4567
    %v4569 = vpop.f32.mrf.mxu0
    %v4570 = vadd.f32 %v4362, %v4569
    %4571 = vmatmul.bf16.gmra.mxu0 %v4325
    %v4572 = vpop.f32.mrf.mxu0
    %v4573 = vadd.f32 %v4362, %v4572
    %v4574 = vpop.f32.mrf.mxu0
    %v4575 = vadd.f32 %v4362, %v4574
    %4576 = vmatmul.bf16.gmra.mxu0 %v4326
    %v4577 = vpop.f32.mrf.mxu0
    %v4578 = vadd.f32 %v4362, %v4577
    %v4579 = vpop.f32.mrf.mxu0
    %4580 = vdwg.mxu0
    %4581 = vmatpush.bf16.msra.mxu0 %v4470
    %4582 = vmatpush.bf16.msra.mxu0 %v4467
    %4583 = vmatpush.bf16.msra.mxu0 %v4464
    %4584 = vmatpush.bf16.msra.mxu0 %v4461
    %4585 = vmatpush.bf16.msra.mxu0 %v4458
    %4586 = vmatpush.bf16.msra.mxu0 %v4455
    %4587 = vmatpush.bf16.msra.mxu0 %v4452
    %4588 = vmatpush.bf16.msra.mxu0 %v4449
    %4589 = vmatmul.bf16.gmra.mxu0 %v4320
    %v4590 = vpop.f32.mrf.mxu0
    %v4591 = vadd.f32 %v4363, %v4590
    %v4592 = vpop.f32.mrf.mxu0
    %v4593 = vadd.f32 %v4363, %v4592
    %4594 = vmatmul.bf16.gmra.mxu0 %v4321
    %v4595 = vpop.f32.mrf.mxu0
    %v4596 = vadd.f32 %v4363, %v4595
    %v4597 = vpop.f32.mrf.mxu0
    %v4598 = vadd.f32 %v4363, %v4597
    %4599 = vmatmul.bf16.gmra.mxu0 %v4322
    %v4600 = vpop.f32.mrf.mxu0
    %v4601 = vadd.f32 %v4363, %v4600
    %v4602 = vpop.f32.mrf.mxu0
    %v4603 = vadd.f32 %v4363, %v4602
    %4604 = vmatmul.bf16.gmra.mxu0 %v4323
    %v4605 = vpop.f32.mrf.mxu0
    %v4606 = vadd.f32 %v4363, %v4605
    %v4607 = vpop.f32.mrf.mxu0
    %v4608 = vadd.f32 %v4363, %v4607
    %4609 = vmatmul.bf16.gmra.mxu0 %v4324
    %v4610 = vpop.f32.mrf.mxu0
    %v4611 = vadd.f32 %v4363, %v4610
    %v4612 = vpop.f32.mrf.mxu0
    %v4613 = vadd.f32 %v4363, %v4612
    %4614 = vmatmul.bf16.gmra.mxu0 %v4325
    %v4615 = vpop.f32.mrf.mxu0
    %v4616 = vadd.f32 %v4363, %v4615
    %v4617 = vpop.f32.mrf.mxu0
    %v4618 = vadd.f32 %v4363, %v4617
    %4619 = vmatmul.bf16.gmra.mxu0 %v4326
    %v4620 = vpop.f32.mrf.mxu0
    %v4621 = vadd.f32 %v4363, %v4620
    %v4622 = vpop.f32.mrf.mxu0
    %4623 = vdwg.mxu0
    %v4624 = vmul.f32 %v4505, 0.17677669
    %v4625 = vmul.f32 %v4507, 0.17677669
    %v4626 = vmul.f32 %v4510, 0.17677669
    %v4627 = vmul.f32 %v4512, 0.17677669
    %v4628 = vmul.f32 %v4515, 0.17677669
    %v4629 = vmul.f32 %v4517, 0.17677669
    %v4630 = vmul.f32 %v4520, 0.17677669
    %v4631 = vmul.f32 %v4522, 0.17677669
    %v4632 = vmul.f32 %v4525, 0.17677669
    %v4633 = vmul.f32 %v4527, 0.17677669
    %v4634 = vmul.f32 %v4530, 0.17677669
    %v4635 = vmul.f32 %v4532, 0.17677669
    %v4636 = vmul.f32 %v4535, 0.17677669
    %v4637 = vpack.c.bf16 %v4624, %v4624
    %v4638 = vpack.c.bf16 %v4625, %v4625
    %v4639 = vpack.c.bf16 %v4626, %v4626
    %v4640 = vpack.c.bf16 %v4627, %v4627
    %v4641 = vpack.c.bf16 %v4628, %v4628
    %v4642 = vpack.c.bf16 %v4629, %v4629
    %v4643 = vpack.c.bf16 %v4630, %v4630
    %v4644 = vpack.c.bf16 %v4631, %v4631
    %v4645 = vpack.c.bf16 %v4632, %v4632
    %v4646 = vpack.c.bf16 %v4633, %v4633
    %v4647 = vpack.c.bf16 %v4634, %v4634
    %v4648 = vpack.c.bf16 %v4635, %v4635
    %v4649 = vpack.c.bf16 %v4636, %v4636
    %v4650 = vpack.c.bf16 %v4548, %v4548
    %v4651 = vpack.c.bf16 %v4550, %v4550
    %v4652 = vpack.c.bf16 %v4553, %v4553
    %v4653 = vpack.c.bf16 %v4555, %v4555
    %v4654 = vpack.c.bf16 %v4558, %v4558
    %v4655 = vpack.c.bf16 %v4560, %v4560
    %v4656 = vpack.c.bf16 %v4563, %v4563
    %v4657 = vpack.c.bf16 %v4565, %v4565
    %v4658 = vpack.c.bf16 %v4568, %v4568
    %v4659 = vpack.c.bf16 %v4570, %v4570
    %v4660 = vpack.c.bf16 %v4573, %v4573
    %v4661 = vpack.c.bf16 %v4575, %v4575
    %v4662 = vpack.c.bf16 %v4578, %v4578
    %v4663 = vpack.c.bf16 %v4591, %v4591
    %v4664 = vpack.c.bf16 %v4593, %v4593
    %v4665 = vpack.c.bf16 %v4596, %v4596
    %v4666 = vpack.c.bf16 %v4598, %v4598
    %v4667 = vpack.c.bf16 %v4601, %v4601
    %v4668 = vpack.c.bf16 %v4603, %v4603
    %v4669 = vpack.c.bf16 %v4606, %v4606
    %v4670 = vpack.c.bf16 %v4608, %v4608
    %v4671 = vpack.c.bf16 %v4611, %v4611
    %v4672 = vpack.c.bf16 %v4613, %v4613
    %v4673 = vpack.c.bf16 %v4616, %v4616
    %v4674 = vpack.c.bf16 %v4618, %v4618
    %v4675 = vpack.c.bf16 %v4621, %v4621
    %4683 = vrot.lane.b32.xlu0 %v4637, 96
    %v4684 = vpop.permute.xlu0 %4683
    %4685 = vrot.lane.b32.xlu0 %v4638, 96
    %v4686 = vpop.permute.xlu0 %4685
    %4687 = vrot.lane.b32.xlu0 %v4639, 96
    %v4688 = vpop.permute.xlu0 %4687
    %4689 = vrot.lane.b32.xlu0 %v4640, 96
    %v4690 = vpop.permute.xlu0 %4689
    %4691 = vrot.lane.b32.xlu0 %v4641, 96
    %v4692 = vpop.permute.xlu0 %4691
    %4693 = vrot.lane.b32.xlu0 %v4642, 96
    %v4694 = vpop.permute.xlu0 %4693
    %4695 = vrot.lane.b32.xlu0 %v4643, 96
    %v4696 = vpop.permute.xlu0 %4695
    %4697 = vrot.lane.b32.xlu0 %v4637, 64
    %v4698 = vpop.permute.xlu0 %4697
    %4699 = vrot.lane.b32.xlu0 %v4638, 64
    %v4700 = vpop.permute.xlu0 %4699
    %4701 = vrot.lane.b32.xlu0 %v4639, 64
    %v4702 = vpop.permute.xlu0 %4701
    %4703 = vrot.lane.b32.xlu0 %v4640, 64
    %v4704 = vpop.permute.xlu0 %4703
    %4705 = vrot.lane.b32.xlu0 %v4641, 64
    %v4706 = vpop.permute.xlu0 %4705
    %4707 = vrot.lane.b32.xlu0 %v4642, 64
    %v4708 = vpop.permute.xlu0 %4707
    %4709 = vrot.lane.b32.xlu0 %v4643, 64
    %v4710 = vpop.permute.xlu0 %4709
    %4711 = vrot.lane.b32.xlu0 %v4637, 32
    %v4712 = vpop.permute.xlu0 %4711
    %4713 = vrot.lane.b32.xlu0 %v4638, 32
    %v4714 = vpop.permute.xlu0 %4713
    %4715 = vrot.lane.b32.xlu0 %v4639, 32
    %v4716 = vpop.permute.xlu0 %4715
    %4717 = vrot.lane.b32.xlu0 %v4640, 32
    %v4718 = vpop.permute.xlu0 %4717
    %4719 = vrot.lane.b32.xlu0 %v4641, 32
    %v4720 = vpop.permute.xlu0 %4719
    %4721 = vrot.lane.b32.xlu0 %v4642, 32
    %v4722 = vpop.permute.xlu0 %4721
    %4723 = vrot.lane.b32.xlu0 %v4643, 32
    %v4724 = vpop.permute.xlu0 %4723
    %vm4731 = vcmask 1042432
    %vm4732 = vcmask 1046532
    %vm4733 = vmor %vm4731, %vm4732
    %v4734 = vrot.slane %v4643, 5
    %v4735 = vrot.slane %v4734, 4
    %v4736 = vrot.slane %v4644, 5
    %v4737 = vsel %vm4733, %v4735, %v4736
    %v4738 = vrot.slane %v4736, 4
    %v4739 = vrot.slane %v4645, 5
    %v4740 = vsel %vm4733, %v4738, %v4739
    %v4741 = vrot.slane %v4739, 4
    %v4742 = vrot.slane %v4646, 5
    %v4743 = vsel %vm4733, %v4741, %v4742
    %v4744 = vrot.slane %v4742, 4
    %v4745 = vrot.slane %v4647, 5
    %v4746 = vsel %vm4733, %v4744, %v4745
    %v4747 = vrot.slane %v4745, 4
    %v4748 = vrot.slane %v4648, 5
    %v4749 = vsel %vm4733, %v4747, %v4748
    %v4750 = vrot.slane %v4748, 4
    %v4751 = vrot.slane %v4649, 5
    %v4752 = vsel %vm4733, %v4750, %v4751
    %v4753 = vrot.slane %v4751, 4
    %4754 = vrot.lane.b32.xlu0 %v4737, 96
    %v4755 = vpop.permute.xlu0 %4754
    %4756 = vrot.lane.b32.xlu0 %v4740, 96
    %v4757 = vpop.permute.xlu0 %4756
    %4758 = vrot.lane.b32.xlu0 %v4743, 96
    %v4759 = vpop.permute.xlu0 %4758
    %4760 = vrot.lane.b32.xlu0 %v4746, 96
    %v4761 = vpop.permute.xlu0 %4760
    %4762 = vrot.lane.b32.xlu0 %v4749, 96
    %v4763 = vpop.permute.xlu0 %4762
    %4764 = vrot.lane.b32.xlu0 %v4752, 96
    %v4765 = vpop.permute.xlu0 %4764
    %4766 = vrot.lane.b32.xlu0 %v4753, 96
    %v4767 = vpop.permute.xlu0 %4766
    %4768 = vrot.lane.b32.xlu0 %v4737, 64
    %v4769 = vpop.permute.xlu0 %4768
    %4770 = vrot.lane.b32.xlu0 %v4740, 64
    %v4771 = vpop.permute.xlu0 %4770
    %4772 = vrot.lane.b32.xlu0 %v4743, 64
    %v4773 = vpop.permute.xlu0 %4772
    %4774 = vrot.lane.b32.xlu0 %v4746, 64
    %v4775 = vpop.permute.xlu0 %4774
    %4776 = vrot.lane.b32.xlu0 %v4749, 64
    %v4777 = vpop.permute.xlu0 %4776
    %4778 = vrot.lane.b32.xlu0 %v4752, 64
    %v4779 = vpop.permute.xlu0 %4778
    %4780 = vrot.lane.b32.xlu0 %v4753, 64
    %v4781 = vpop.permute.xlu0 %4780
    %4782 = vrot.lane.b32.xlu0 %v4737, 32
    %v4783 = vpop.permute.xlu0 %4782
    %4784 = vrot.lane.b32.xlu0 %v4740, 32
    %v4785 = vpop.permute.xlu0 %4784
    %4786 = vrot.lane.b32.xlu0 %v4743, 32
    %v4787 = vpop.permute.xlu0 %4786
    %4788 = vrot.lane.b32.xlu0 %v4746, 32
    %v4789 = vpop.permute.xlu0 %4788
    %4790 = vrot.lane.b32.xlu0 %v4749, 32
    %v4791 = vpop.permute.xlu0 %4790
    %4792 = vrot.lane.b32.xlu0 %v4752, 32
    %v4793 = vpop.permute.xlu0 %4792
    %4794 = vrot.lane.b32.xlu0 %v4753, 32
    %v4795 = vpop.permute.xlu0 %4794
    %4803 = vrot.lane.b32.xlu0 %v4650, 96
    %v4804 = vpop.permute.xlu0 %4803
    %4805 = vrot.lane.b32.xlu0 %v4651, 96
    %v4806 = vpop.permute.xlu0 %4805
    %4807 = vrot.lane.b32.xlu0 %v4652, 96
    %v4808 = vpop.permute.xlu0 %4807
    %4809 = vrot.lane.b32.xlu0 %v4653, 96
    %v4810 = vpop.permute.xlu0 %4809
    %4811 = vrot.lane.b32.xlu0 %v4654, 96
    %v4812 = vpop.permute.xlu0 %4811
    %4813 = vrot.lane.b32.xlu0 %v4655, 96
    %v4814 = vpop.permute.xlu0 %4813
    %4815 = vrot.lane.b32.xlu0 %v4656, 96
    %v4816 = vpop.permute.xlu0 %4815
    %4817 = vrot.lane.b32.xlu0 %v4650, 64
    %v4818 = vpop.permute.xlu0 %4817
    %4819 = vrot.lane.b32.xlu0 %v4651, 64
    %v4820 = vpop.permute.xlu0 %4819
    %4821 = vrot.lane.b32.xlu0 %v4652, 64
    %v4822 = vpop.permute.xlu0 %4821
    %4823 = vrot.lane.b32.xlu0 %v4653, 64
    %v4824 = vpop.permute.xlu0 %4823
    %4825 = vrot.lane.b32.xlu0 %v4654, 64
    %v4826 = vpop.permute.xlu0 %4825
    %4827 = vrot.lane.b32.xlu0 %v4655, 64
    %v4828 = vpop.permute.xlu0 %4827
    %4829 = vrot.lane.b32.xlu0 %v4656, 64
    %v4830 = vpop.permute.xlu0 %4829
    %4831 = vrot.lane.b32.xlu0 %v4650, 32
    %v4832 = vpop.permute.xlu0 %4831
    %4833 = vrot.lane.b32.xlu0 %v4651, 32
    %v4834 = vpop.permute.xlu0 %4833
    %4835 = vrot.lane.b32.xlu0 %v4652, 32
    %v4836 = vpop.permute.xlu0 %4835
    %4837 = vrot.lane.b32.xlu0 %v4653, 32
    %v4838 = vpop.permute.xlu0 %4837
    %4839 = vrot.lane.b32.xlu0 %v4654, 32
    %v4840 = vpop.permute.xlu0 %4839
    %4841 = vrot.lane.b32.xlu0 %v4655, 32
    %v4842 = vpop.permute.xlu0 %4841
    %4843 = vrot.lane.b32.xlu0 %v4656, 32
    %v4844 = vpop.permute.xlu0 %4843
    %v4851 = vrot.slane %v4656, 5
    %v4852 = vrot.slane %v4851, 4
    %v4853 = vrot.slane %v4657, 5
    %v4854 = vsel %vm4733, %v4852, %v4853
    %v4855 = vrot.slane %v4853, 4
    %v4856 = vrot.slane %v4658, 5
    %v4857 = vsel %vm4733, %v4855, %v4856
    %v4858 = vrot.slane %v4856, 4
    %v4859 = vrot.slane %v4659, 5
    %v4860 = vsel %vm4733, %v4858, %v4859
    %v4861 = vrot.slane %v4859, 4
    %v4862 = vrot.slane %v4660, 5
    %v4863 = vsel %vm4733, %v4861, %v4862
    %v4864 = vrot.slane %v4862, 4
    %v4865 = vrot.slane %v4661, 5
    %v4866 = vsel %vm4733, %v4864, %v4865
    %v4867 = vrot.slane %v4865, 4
    %v4868 = vrot.slane %v4662, 5
    %v4869 = vsel %vm4733, %v4867, %v4868
    %v4870 = vrot.slane %v4868, 4
    %4871 = vrot.lane.b32.xlu0 %v4854, 96
    %v4872 = vpop.permute.xlu0 %4871
    %4873 = vrot.lane.b32.xlu0 %v4857, 96
    %v4874 = vpop.permute.xlu0 %4873
    %4875 = vrot.lane.b32.xlu0 %v4860, 96
    %v4876 = vpop.permute.xlu0 %4875
    %4877 = vrot.lane.b32.xlu0 %v4863, 96
    %v4878 = vpop.permute.xlu0 %4877
    %4879 = vrot.lane.b32.xlu0 %v4866, 96
    %v4880 = vpop.permute.xlu0 %4879
    %4881 = vrot.lane.b32.xlu0 %v4869, 96
    %v4882 = vpop.permute.xlu0 %4881
    %4883 = vrot.lane.b32.xlu0 %v4870, 96
    %v4884 = vpop.permute.xlu0 %4883
    %4885 = vrot.lane.b32.xlu0 %v4854, 64
    %v4886 = vpop.permute.xlu0 %4885
    %4887 = vrot.lane.b32.xlu0 %v4857, 64
    %v4888 = vpop.permute.xlu0 %4887
    %4889 = vrot.lane.b32.xlu0 %v4860, 64
    %v4890 = vpop.permute.xlu0 %4889
    %4891 = vrot.lane.b32.xlu0 %v4863, 64
    %v4892 = vpop.permute.xlu0 %4891
    %4893 = vrot.lane.b32.xlu0 %v4866, 64
    %v4894 = vpop.permute.xlu0 %4893
    %4895 = vrot.lane.b32.xlu0 %v4869, 64
    %v4896 = vpop.permute.xlu0 %4895
    %4897 = vrot.lane.b32.xlu0 %v4870, 64
    %v4898 = vpop.permute.xlu0 %4897
    %4899 = vrot.lane.b32.xlu0 %v4854, 32
    %v4900 = vpop.permute.xlu0 %4899
    %4901 = vrot.lane.b32.xlu0 %v4857, 32
    %v4902 = vpop.permute.xlu0 %4901
    %4903 = vrot.lane.b32.xlu0 %v4860, 32
    %v4904 = vpop.permute.xlu0 %4903
    %4905 = vrot.lane.b32.xlu0 %v4863, 32
    %v4906 = vpop.permute.xlu0 %4905
    %4907 = vrot.lane.b32.xlu0 %v4866, 32
    %v4908 = vpop.permute.xlu0 %4907
    %4909 = vrot.lane.b32.xlu0 %v4869, 32
    %v4910 = vpop.permute.xlu0 %4909
    %4911 = vrot.lane.b32.xlu0 %v4870, 32
    %v4912 = vpop.permute.xlu0 %4911
    %4920 = vrot.lane.b32.xlu0 %v4663, 96
    %v4921 = vpop.permute.xlu0 %4920
    %4922 = vrot.lane.b32.xlu0 %v4664, 96
    %v4923 = vpop.permute.xlu0 %4922
    %4924 = vrot.lane.b32.xlu0 %v4665, 96
    %v4925 = vpop.permute.xlu0 %4924
    %4926 = vrot.lane.b32.xlu0 %v4666, 96
    %v4927 = vpop.permute.xlu0 %4926
    %4928 = vrot.lane.b32.xlu0 %v4667, 96
    %v4929 = vpop.permute.xlu0 %4928
    %4930 = vrot.lane.b32.xlu0 %v4668, 96
    %v4931 = vpop.permute.xlu0 %4930
    %4932 = vrot.lane.b32.xlu0 %v4669, 96
    %v4933 = vpop.permute.xlu0 %4932
    %4934 = vrot.lane.b32.xlu0 %v4663, 64
    %v4935 = vpop.permute.xlu0 %4934
    %4936 = vrot.lane.b32.xlu0 %v4664, 64
    %v4937 = vpop.permute.xlu0 %4936
    %4938 = vrot.lane.b32.xlu0 %v4665, 64
    %v4939 = vpop.permute.xlu0 %4938
    %4940 = vrot.lane.b32.xlu0 %v4666, 64
    %v4941 = vpop.permute.xlu0 %4940
    %4942 = vrot.lane.b32.xlu0 %v4667, 64
    %v4943 = vpop.permute.xlu0 %4942
    %4944 = vrot.lane.b32.xlu0 %v4668, 64
    %v4945 = vpop.permute.xlu0 %4944
    %4946 = vrot.lane.b32.xlu0 %v4669, 64
    %v4947 = vpop.permute.xlu0 %4946
    %4948 = vrot.lane.b32.xlu0 %v4663, 32
    %v4949 = vpop.permute.xlu0 %4948
    %4950 = vrot.lane.b32.xlu0 %v4664, 32
    %v4951 = vpop.permute.xlu0 %4950
    %4952 = vrot.lane.b32.xlu0 %v4665, 32
    %v4953 = vpop.permute.xlu0 %4952
    %4954 = vrot.lane.b32.xlu0 %v4666, 32
    %v4955 = vpop.permute.xlu0 %4954
    %4956 = vrot.lane.b32.xlu0 %v4667, 32
    %v4957 = vpop.permute.xlu0 %4956
    %4958 = vrot.lane.b32.xlu0 %v4668, 32
    %v4959 = vpop.permute.xlu0 %4958
    %4960 = vrot.lane.b32.xlu0 %v4669, 32
    %v4961 = vpop.permute.xlu0 %4960
    %v4968 = vrot.slane %v4669, 5
    %v4969 = vrot.slane %v4968, 4
    %v4970 = vrot.slane %v4670, 5
    %v4971 = vsel %vm4733, %v4969, %v4970
    %v4972 = vrot.slane %v4970, 4
    %v4973 = vrot.slane %v4671, 5
    %v4974 = vsel %vm4733, %v4972, %v4973
    %v4975 = vrot.slane %v4973, 4
    %v4976 = vrot.slane %v4672, 5
    %v4977 = vsel %vm4733, %v4975, %v4976
    %v4978 = vrot.slane %v4976, 4
    %v4979 = vrot.slane %v4673, 5
    %v4980 = vsel %vm4733, %v4978, %v4979
    %v4981 = vrot.slane %v4979, 4
    %v4982 = vrot.slane %v4674, 5
    %v4983 = vsel %vm4733, %v4981, %v4982
    %v4984 = vrot.slane %v4982, 4
    %v4985 = vrot.slane %v4675, 5
    %v4986 = vsel %vm4733, %v4984, %v4985
    %v4987 = vrot.slane %v4985, 4
    %4988 = vrot.lane.b32.xlu0 %v4971, 96
    %v4989 = vpop.permute.xlu0 %4988
    %4990 = vrot.lane.b32.xlu0 %v4974, 96
    %v4991 = vpop.permute.xlu0 %4990
    %4992 = vrot.lane.b32.xlu0 %v4977, 96
    %v4993 = vpop.permute.xlu0 %4992
    %4994 = vrot.lane.b32.xlu0 %v4980, 96
    %v4995 = vpop.permute.xlu0 %4994
    %4996 = vrot.lane.b32.xlu0 %v4983, 96
    %v4997 = vpop.permute.xlu0 %4996
    %4998 = vrot.lane.b32.xlu0 %v4986, 96
    %v4999 = vpop.permute.xlu0 %4998
    %5000 = vrot.lane.b32.xlu0 %v4987, 96
    %v5001 = vpop.permute.xlu0 %5000
    %5002 = vrot.lane.b32.xlu0 %v4971, 64
    %v5003 = vpop.permute.xlu0 %5002
    %5004 = vrot.lane.b32.xlu0 %v4974, 64
    %v5005 = vpop.permute.xlu0 %5004
    %5006 = vrot.lane.b32.xlu0 %v4977, 64
    %v5007 = vpop.permute.xlu0 %5006
    %5008 = vrot.lane.b32.xlu0 %v4980, 64
    %v5009 = vpop.permute.xlu0 %5008
    %5010 = vrot.lane.b32.xlu0 %v4983, 64
    %v5011 = vpop.permute.xlu0 %5010
    %5012 = vrot.lane.b32.xlu0 %v4986, 64
    %v5013 = vpop.permute.xlu0 %5012
    %5014 = vrot.lane.b32.xlu0 %v4987, 64
    %v5015 = vpop.permute.xlu0 %5014
    %5016 = vrot.lane.b32.xlu0 %v4971, 32
    %v5017 = vpop.permute.xlu0 %5016
    %5018 = vrot.lane.b32.xlu0 %v4974, 32
    %v5019 = vpop.permute.xlu0 %5018
    %5020 = vrot.lane.b32.xlu0 %v4977, 32
    %v5021 = vpop.permute.xlu0 %5020
    %5022 = vrot.lane.b32.xlu0 %v4980, 32
    %v5023 = vpop.permute.xlu0 %5022
    %5024 = vrot.lane.b32.xlu0 %v4983, 32
    %v5025 = vpop.permute.xlu0 %5024
    %5026 = vrot.lane.b32.xlu0 %v4986, 32
    %v5027 = vpop.permute.xlu0 %5026
    %5028 = vrot.lane.b32.xlu0 %v4987, 32
    %v5029 = vpop.permute.xlu0 %5028
    %v5030 = vunpack.c.l.b16 %v4637
    %v5031 = vunpack.c.l.b16 %v4638
    %v5032 = vunpack.c.l.b16 %v4639
    %v5033 = vunpack.c.l.b16 %v4640
    %v5034 = vunpack.c.l.b16 %v4641
    %v5035 = vunpack.c.l.b16 %v4642
    %v5036 = vunpack.c.l.b16 %v4643
    %v5037 = vpack.c.b16 %v5031, %v5030
    %v5038 = vpack.c.b16 %v5033, %v5032
    %v5039 = vpack.c.b16 %v5035, %v5034
    %v5040 = vpack.c.b16 %v5036, %v5036
    %v5041 = vunpack.c.l.b16 %v4650
    %v5042 = vunpack.c.l.b16 %v4651
    %v5043 = vunpack.c.l.b16 %v4652
    %v5044 = vunpack.c.l.b16 %v4653
    %v5045 = vunpack.c.l.b16 %v4654
    %v5046 = vunpack.c.l.b16 %v4655
    %v5047 = vunpack.c.l.b16 %v4656
    %v5048 = vpack.c.b16 %v5042, %v5041
    %v5049 = vpack.c.b16 %v5044, %v5043
    %v5050 = vpack.c.b16 %v5046, %v5045
    %v5051 = vpack.c.b16 %v5047, %v5047
    %v5053 = vsel %vm984, %v5037, 0
    %v5056 = vsel %vm984, %v5038, 0
    %v5059 = vsel %vm984, %v5039, 0
    %v5062 = vsel %vm984, %v5040, 0
    %v5065 = vsel %vm984, %v5048, 0
    %v5068 = vsel %vm984, %v5049, 0
    %v5071 = vsel %vm984, %v5050, 0
    %v5074 = vsel %vm984, %v5051, 0
    %5076 = vmatpush.bf16.xpose.msra.mxu0 0
    %5077 = vmatpush.bf16.xpose.msra.mxu0 0
    %5078 = vmatpush.bf16.xpose.msra.mxu0 0
    %5079 = vmatpush.bf16.xpose.msra.mxu0 0
    %5080 = vmatpush.bf16.xpose.msra.mxu0 %v5074
    %5081 = vmatpush.bf16.xpose.msra.mxu0 %v5071
    %5082 = vmatpush.bf16.xpose.msra.mxu0 %v5068
    %5083 = vmatpush.bf16.xpose.msra.mxu0 %v5065
    %5084 = vmatmul.bf16.gmra.mxu0 %v5053
    %v5085 = vpop.f32.mrf.mxu0
    %v5086 = vadd.f32 0.0, %v5085
    %v5087 = vpop.f32.mrf.mxu0
    %v5088 = vadd.f32 0.0, %v5087
    %5089 = vmatmul.bf16.gmra.mxu0 %v5056
    %v5090 = vpop.f32.mrf.mxu0
    %v5091 = vadd.f32 0.0, %v5090
    %v5092 = vpop.f32.mrf.mxu0
    %v5093 = vadd.f32 0.0, %v5092
    %5094 = vmatmul.bf16.gmra.mxu0 %v5059
    %v5095 = vpop.f32.mrf.mxu0
    %v5096 = vadd.f32 0.0, %v5095
    %v5097 = vpop.f32.mrf.mxu0
    %v5098 = vadd.f32 0.0, %v5097
    %5099 = vmatmul.bf16.gmra.mxu0 %v5062
    %v5100 = vpop.f32.mrf.mxu0
    %v5101 = vadd.f32 0.0, %v5100
    %v5102 = vpop.f32.mrf.mxu0
    %5103 = vdwg.mxu0
    %v5104 = vunpack.c.l.b16 %v4684
    %v5105 = vunpack.c.l.b16 %v4686
    %v5106 = vunpack.c.l.b16 %v4688
    %v5107 = vunpack.c.l.b16 %v4690
    %v5108 = vunpack.c.l.b16 %v4692
    %v5109 = vunpack.c.l.b16 %v4694
    %v5110 = vunpack.c.l.b16 %v4696
    %v5111 = vpack.c.b16 %v5105, %v5104
    %v5112 = vpack.c.b16 %v5107, %v5106
    %v5113 = vpack.c.b16 %v5109, %v5108
    %v5114 = vpack.c.b16 %v5110, %v5110
    %v5115 = vunpack.c.l.b16 %v4804
    %v5116 = vunpack.c.l.b16 %v4806
    %v5117 = vunpack.c.l.b16 %v4808
    %v5118 = vunpack.c.l.b16 %v4810
    %v5119 = vunpack.c.l.b16 %v4812
    %v5120 = vunpack.c.l.b16 %v4814
    %v5121 = vunpack.c.l.b16 %v4816
    %v5122 = vpack.c.b16 %v5116, %v5115
    %v5123 = vpack.c.b16 %v5118, %v5117
    %v5124 = vpack.c.b16 %v5120, %v5119
    %v5125 = vpack.c.b16 %v5121, %v5121
    %v5127 = vsel %vm984, %v5111, 0
    %v5130 = vsel %vm984, %v5112, 0
    %v5133 = vsel %vm984, %v5113, 0
    %v5136 = vsel %vm984, %v5114, 0
    %v5139 = vsel %vm984, %v5122, 0
    %v5142 = vsel %vm984, %v5123, 0
    %v5145 = vsel %vm984, %v5124, 0
    %v5148 = vsel %vm984, %v5125, 0
    %5150 = vmatpush.bf16.xpose.msra.mxu0 0
    %5151 = vmatpush.bf16.xpose.msra.mxu0 0
    %5152 = vmatpush.bf16.xpose.msra.mxu0 0
    %5153 = vmatpush.bf16.xpose.msra.mxu0 0
    %5154 = vmatpush.bf16.xpose.msra.mxu0 %v5148
    %5155 = vmatpush.bf16.xpose.msra.mxu0 %v5145
    %5156 = vmatpush.bf16.xpose.msra.mxu0 %v5142
    %5157 = vmatpush.bf16.xpose.msra.mxu0 %v5139
    %5158 = vmatmul.bf16.gmra.mxu0 %v5127
    %v5159 = vpop.f32.mrf.mxu0
    %v5160 = vadd.f32 0.0, %v5159
    %v5161 = vpop.f32.mrf.mxu0
    %v5162 = vadd.f32 0.0, %v5161
    %5163 = vmatmul.bf16.gmra.mxu0 %v5130
    %v5164 = vpop.f32.mrf.mxu0
    %v5165 = vadd.f32 0.0, %v5164
    %v5166 = vpop.f32.mrf.mxu0
    %v5167 = vadd.f32 0.0, %v5166
    %5168 = vmatmul.bf16.gmra.mxu0 %v5133
    %v5169 = vpop.f32.mrf.mxu0
    %v5170 = vadd.f32 0.0, %v5169
    %v5171 = vpop.f32.mrf.mxu0
    %v5172 = vadd.f32 0.0, %v5171
    %5173 = vmatmul.bf16.gmra.mxu0 %v5136
    %v5174 = vpop.f32.mrf.mxu0
    %v5175 = vadd.f32 0.0, %v5174
    %v5176 = vpop.f32.mrf.mxu0
    %5177 = vdwg.mxu0
    %v5178 = vunpack.c.l.b16 %v4698
    %v5179 = vunpack.c.l.b16 %v4700
    %v5180 = vunpack.c.l.b16 %v4702
    %v5181 = vunpack.c.l.b16 %v4704
    %v5182 = vunpack.c.l.b16 %v4706
    %v5183 = vunpack.c.l.b16 %v4708
    %v5184 = vunpack.c.l.b16 %v4710
    %v5185 = vpack.c.b16 %v5179, %v5178
    %v5186 = vpack.c.b16 %v5181, %v5180
    %v5187 = vpack.c.b16 %v5183, %v5182
    %v5188 = vpack.c.b16 %v5184, %v5184
    %v5189 = vunpack.c.l.b16 %v4818
    %v5190 = vunpack.c.l.b16 %v4820
    %v5191 = vunpack.c.l.b16 %v4822
    %v5192 = vunpack.c.l.b16 %v4824
    %v5193 = vunpack.c.l.b16 %v4826
    %v5194 = vunpack.c.l.b16 %v4828
    %v5195 = vunpack.c.l.b16 %v4830
    %v5196 = vpack.c.b16 %v5190, %v5189
    %v5197 = vpack.c.b16 %v5192, %v5191
    %v5198 = vpack.c.b16 %v5194, %v5193
    %v5199 = vpack.c.b16 %v5195, %v5195
    %v5201 = vsel %vm984, %v5185, 0
    %v5204 = vsel %vm984, %v5186, 0
    %v5207 = vsel %vm984, %v5187, 0
    %v5210 = vsel %vm984, %v5188, 0
    %v5213 = vsel %vm984, %v5196, 0
    %v5216 = vsel %vm984, %v5197, 0
    %v5219 = vsel %vm984, %v5198, 0
    %v5222 = vsel %vm984, %v5199, 0
    %5224 = vmatpush.bf16.xpose.msra.mxu0 0
    %5225 = vmatpush.bf16.xpose.msra.mxu0 0
    %5226 = vmatpush.bf16.xpose.msra.mxu0 0
    %5227 = vmatpush.bf16.xpose.msra.mxu0 0
    %5228 = vmatpush.bf16.xpose.msra.mxu0 %v5222
    %5229 = vmatpush.bf16.xpose.msra.mxu0 %v5219
    %5230 = vmatpush.bf16.xpose.msra.mxu0 %v5216
    %5231 = vmatpush.bf16.xpose.msra.mxu0 %v5213
    %5232 = vmatmul.bf16.gmra.mxu0 %v5201
    %v5233 = vpop.f32.mrf.mxu0
    %v5234 = vadd.f32 0.0, %v5233
    %v5235 = vpop.f32.mrf.mxu0
    %v5236 = vadd.f32 0.0, %v5235
    %5237 = vmatmul.bf16.gmra.mxu0 %v5204
    %v5238 = vpop.f32.mrf.mxu0
    %v5239 = vadd.f32 0.0, %v5238
    %v5240 = vpop.f32.mrf.mxu0
    %v5241 = vadd.f32 0.0, %v5240
    %5242 = vmatmul.bf16.gmra.mxu0 %v5207
    %v5243 = vpop.f32.mrf.mxu0
    %v5244 = vadd.f32 0.0, %v5243
    %v5245 = vpop.f32.mrf.mxu0
    %v5246 = vadd.f32 0.0, %v5245
    %5247 = vmatmul.bf16.gmra.mxu0 %v5210
    %v5248 = vpop.f32.mrf.mxu0
    %v5249 = vadd.f32 0.0, %v5248
    %v5250 = vpop.f32.mrf.mxu0
    %5251 = vdwg.mxu0
    %v5252 = vunpack.c.l.b16 %v4712
    %v5253 = vunpack.c.l.b16 %v4714
    %v5254 = vunpack.c.l.b16 %v4716
    %v5255 = vunpack.c.l.b16 %v4718
    %v5256 = vunpack.c.l.b16 %v4720
    %v5257 = vunpack.c.l.b16 %v4722
    %v5258 = vunpack.c.l.b16 %v4724
    %v5259 = vpack.c.b16 %v5253, %v5252
    %v5260 = vpack.c.b16 %v5255, %v5254
    %v5261 = vpack.c.b16 %v5257, %v5256
    %v5262 = vpack.c.b16 %v5258, %v5258
    %v5263 = vunpack.c.l.b16 %v4832
    %v5264 = vunpack.c.l.b16 %v4834
    %v5265 = vunpack.c.l.b16 %v4836
    %v5266 = vunpack.c.l.b16 %v4838
    %v5267 = vunpack.c.l.b16 %v4840
    %v5268 = vunpack.c.l.b16 %v4842
    %v5269 = vunpack.c.l.b16 %v4844
    %v5270 = vpack.c.b16 %v5264, %v5263
    %v5271 = vpack.c.b16 %v5266, %v5265
    %v5272 = vpack.c.b16 %v5268, %v5267
    %v5273 = vpack.c.b16 %v5269, %v5269
    %v5275 = vsel %vm984, %v5259, 0
    %v5278 = vsel %vm984, %v5260, 0
    %v5281 = vsel %vm984, %v5261, 0
    %v5284 = vsel %vm984, %v5262, 0
    %v5287 = vsel %vm984, %v5270, 0
    %v5290 = vsel %vm984, %v5271, 0
    %v5293 = vsel %vm984, %v5272, 0
    %v5296 = vsel %vm984, %v5273, 0
    %5298 = vmatpush.bf16.xpose.msra.mxu0 0
    %5299 = vmatpush.bf16.xpose.msra.mxu0 0
    %5300 = vmatpush.bf16.xpose.msra.mxu0 0
    %5301 = vmatpush.bf16.xpose.msra.mxu0 0
    %5302 = vmatpush.bf16.xpose.msra.mxu0 %v5296
    %5303 = vmatpush.bf16.xpose.msra.mxu0 %v5293
    %5304 = vmatpush.bf16.xpose.msra.mxu0 %v5290
    %5305 = vmatpush.bf16.xpose.msra.mxu0 %v5287
    %5306 = vmatmul.bf16.gmra.mxu0 %v5275
    %v5307 = vpop.f32.mrf.mxu0
    %v5308 = vadd.f32 0.0, %v5307
    %v5309 = vpop.f32.mrf.mxu0
    %v5310 = vadd.f32 0.0, %v5309
    %5311 = vmatmul.bf16.gmra.mxu0 %v5278
    %v5312 = vpop.f32.mrf.mxu0
    %v5313 = vadd.f32 0.0, %v5312
    %v5314 = vpop.f32.mrf.mxu0
    %v5315 = vadd.f32 0.0, %v5314
    %5316 = vmatmul.bf16.gmra.mxu0 %v5281
    %v5317 = vpop.f32.mrf.mxu0
    %v5318 = vadd.f32 0.0, %v5317
    %v5319 = vpop.f32.mrf.mxu0
    %v5320 = vadd.f32 0.0, %v5319
    %5321 = vmatmul.bf16.gmra.mxu0 %v5284
    %v5322 = vpop.f32.mrf.mxu0
    %v5323 = vadd.f32 0.0, %v5322
    %v5324 = vpop.f32.mrf.mxu0
    %5325 = vdwg.mxu0
    %v5326 = vunpack.c.l.b16 %v4737
    %v5327 = vunpack.c.l.b16 %v4740
    %v5328 = vunpack.c.l.b16 %v4743
    %v5329 = vunpack.c.l.b16 %v4746
    %v5330 = vunpack.c.l.b16 %v4749
    %v5331 = vunpack.c.l.b16 %v4752
    %v5332 = vunpack.c.l.b16 %v4753
    %v5333 = vpack.c.b16 %v5327, %v5326
    %v5334 = vpack.c.b16 %v5329, %v5328
    %v5335 = vpack.c.b16 %v5331, %v5330
    %v5336 = vpack.c.b16 %v5332, %v5332
    %v5337 = vunpack.c.l.b16 %v4854
    %v5338 = vunpack.c.l.b16 %v4857
    %v5339 = vunpack.c.l.b16 %v4860
    %v5340 = vunpack.c.l.b16 %v4863
    %v5341 = vunpack.c.l.b16 %v4866
    %v5342 = vunpack.c.l.b16 %v4869
    %v5343 = vunpack.c.l.b16 %v4870
    %v5344 = vpack.c.b16 %v5338, %v5337
    %v5345 = vpack.c.b16 %v5340, %v5339
    %v5346 = vpack.c.b16 %v5342, %v5341
    %v5347 = vpack.c.b16 %v5343, %v5343
    %v5349 = vsel %vm984, %v5333, 0
    %v5352 = vsel %vm984, %v5334, 0
    %v5355 = vsel %vm984, %v5335, 0
    %v5358 = vsel %vm984, %v5336, 0
    %v5361 = vsel %vm984, %v5344, 0
    %v5364 = vsel %vm984, %v5345, 0
    %v5367 = vsel %vm984, %v5346, 0
    %v5370 = vsel %vm984, %v5347, 0
    %5372 = vmatpush.bf16.xpose.msra.mxu0 0
    %5373 = vmatpush.bf16.xpose.msra.mxu0 0
    %5374 = vmatpush.bf16.xpose.msra.mxu0 0
    %5375 = vmatpush.bf16.xpose.msra.mxu0 0
    %5376 = vmatpush.bf16.xpose.msra.mxu0 %v5370
    %5377 = vmatpush.bf16.xpose.msra.mxu0 %v5367
    %5378 = vmatpush.bf16.xpose.msra.mxu0 %v5364
    %5379 = vmatpush.bf16.xpose.msra.mxu0 %v5361
    %5380 = vmatmul.bf16.gmra.mxu0 %v5349
    %v5381 = vpop.f32.mrf.mxu0
    %v5382 = vadd.f32 0.0, %v5381
    %v5383 = vpop.f32.mrf.mxu0
    %v5384 = vadd.f32 0.0, %v5383
    %5385 = vmatmul.bf16.gmra.mxu0 %v5352
    %v5386 = vpop.f32.mrf.mxu0
    %v5387 = vadd.f32 0.0, %v5386
    %v5388 = vpop.f32.mrf.mxu0
    %v5389 = vadd.f32 0.0, %v5388
    %5390 = vmatmul.bf16.gmra.mxu0 %v5355
    %v5391 = vpop.f32.mrf.mxu0
    %v5392 = vadd.f32 0.0, %v5391
    %v5393 = vpop.f32.mrf.mxu0
    %v5394 = vadd.f32 0.0, %v5393
    %5395 = vmatmul.bf16.gmra.mxu0 %v5358
    %v5396 = vpop.f32.mrf.mxu0
    %v5397 = vadd.f32 0.0, %v5396
    %v5398 = vpop.f32.mrf.mxu0
    %5399 = vdwg.mxu0
    %v5400 = vunpack.c.l.b16 %v4755
    %v5401 = vunpack.c.l.b16 %v4757
    %v5402 = vunpack.c.l.b16 %v4759
    %v5403 = vunpack.c.l.b16 %v4761
    %v5404 = vunpack.c.l.b16 %v4763
    %v5405 = vunpack.c.l.b16 %v4765
    %v5406 = vunpack.c.l.b16 %v4767
    %v5407 = vpack.c.b16 %v5401, %v5400
    %v5408 = vpack.c.b16 %v5403, %v5402
    %v5409 = vpack.c.b16 %v5405, %v5404
    %v5410 = vpack.c.b16 %v5406, %v5406
    %v5411 = vunpack.c.l.b16 %v4872
    %v5412 = vunpack.c.l.b16 %v4874
    %v5413 = vunpack.c.l.b16 %v4876
    %v5414 = vunpack.c.l.b16 %v4878
    %v5415 = vunpack.c.l.b16 %v4880
    %v5416 = vunpack.c.l.b16 %v4882
    %v5417 = vunpack.c.l.b16 %v4884
    %v5418 = vpack.c.b16 %v5412, %v5411
    %v5419 = vpack.c.b16 %v5414, %v5413
    %v5420 = vpack.c.b16 %v5416, %v5415
    %v5421 = vpack.c.b16 %v5417, %v5417
    %v5423 = vsel %vm984, %v5407, 0
    %v5426 = vsel %vm984, %v5408, 0
    %v5429 = vsel %vm984, %v5409, 0
    %v5432 = vsel %vm984, %v5410, 0
    %v5435 = vsel %vm984, %v5418, 0
    %v5438 = vsel %vm984, %v5419, 0
    %v5441 = vsel %vm984, %v5420, 0
    %v5444 = vsel %vm984, %v5421, 0
    %5446 = vmatpush.bf16.xpose.msra.mxu0 0
    %5447 = vmatpush.bf16.xpose.msra.mxu0 0
    %5448 = vmatpush.bf16.xpose.msra.mxu0 0
    %5449 = vmatpush.bf16.xpose.msra.mxu0 0
    %5450 = vmatpush.bf16.xpose.msra.mxu0 %v5444
    %5451 = vmatpush.bf16.xpose.msra.mxu0 %v5441
    %5452 = vmatpush.bf16.xpose.msra.mxu0 %v5438
    %5453 = vmatpush.bf16.xpose.msra.mxu0 %v5435
    %5454 = vmatmul.bf16.gmra.mxu0 %v5423
    %v5455 = vpop.f32.mrf.mxu0
    %v5456 = vadd.f32 0.0, %v5455
    %v5457 = vpop.f32.mrf.mxu0
    %v5458 = vadd.f32 0.0, %v5457
    %5459 = vmatmul.bf16.gmra.mxu0 %v5426
    %v5460 = vpop.f32.mrf.mxu0
    %v5461 = vadd.f32 0.0, %v5460
    %v5462 = vpop.f32.mrf.mxu0
    %v5463 = vadd.f32 0.0, %v5462
    %5464 = vmatmul.bf16.gmra.mxu0 %v5429
    %v5465 = vpop.f32.mrf.mxu0
    %v5466 = vadd.f32 0.0, %v5465
    %v5467 = vpop.f32.mrf.mxu0
    %v5468 = vadd.f32 0.0, %v5467
    %5469 = vmatmul.bf16.gmra.mxu0 %v5432
    %v5470 = vpop.f32.mrf.mxu0
    %v5471 = vadd.f32 0.0, %v5470
    %v5472 = vpop.f32.mrf.mxu0
    %5473 = vdwg.mxu0
    %v5474 = vunpack.c.l.b16 %v4769
    %v5475 = vunpack.c.l.b16 %v4771
    %v5476 = vunpack.c.l.b16 %v4773
    %v5477 = vunpack.c.l.b16 %v4775
    %v5478 = vunpack.c.l.b16 %v4777
    %v5479 = vunpack.c.l.b16 %v4779
    %v5480 = vunpack.c.l.b16 %v4781
    %v5481 = vpack.c.b16 %v5475, %v5474
    %v5482 = vpack.c.b16 %v5477, %v5476
    %v5483 = vpack.c.b16 %v5479, %v5478
    %v5484 = vpack.c.b16 %v5480, %v5480
    %v5485 = vunpack.c.l.b16 %v4886
    %v5486 = vunpack.c.l.b16 %v4888
    %v5487 = vunpack.c.l.b16 %v4890
    %v5488 = vunpack.c.l.b16 %v4892
    %v5489 = vunpack.c.l.b16 %v4894
    %v5490 = vunpack.c.l.b16 %v4896
    %v5491 = vunpack.c.l.b16 %v4898
    %v5492 = vpack.c.b16 %v5486, %v5485
    %v5493 = vpack.c.b16 %v5488, %v5487
    %v5494 = vpack.c.b16 %v5490, %v5489
    %v5495 = vpack.c.b16 %v5491, %v5491
    %v5497 = vsel %vm984, %v5481, 0
    %v5500 = vsel %vm984, %v5482, 0
    %v5503 = vsel %vm984, %v5483, 0
    %v5506 = vsel %vm984, %v5484, 0
    %v5509 = vsel %vm984, %v5492, 0
    %v5512 = vsel %vm984, %v5493, 0
    %v5515 = vsel %vm984, %v5494, 0
    %v5518 = vsel %vm984, %v5495, 0
    %5520 = vmatpush.bf16.xpose.msra.mxu0 0
    %5521 = vmatpush.bf16.xpose.msra.mxu0 0
    %5522 = vmatpush.bf16.xpose.msra.mxu0 0
    %5523 = vmatpush.bf16.xpose.msra.mxu0 0
    %5524 = vmatpush.bf16.xpose.msra.mxu0 %v5518
    %5525 = vmatpush.bf16.xpose.msra.mxu0 %v5515
    %5526 = vmatpush.bf16.xpose.msra.mxu0 %v5512
    %5527 = vmatpush.bf16.xpose.msra.mxu0 %v5509
    %5528 = vmatmul.bf16.gmra.mxu0 %v5497
    %v5529 = vpop.f32.mrf.mxu0
    %v5530 = vadd.f32 0.0, %v5529
    %v5531 = vpop.f32.mrf.mxu0
    %v5532 = vadd.f32 0.0, %v5531
    %5533 = vmatmul.bf16.gmra.mxu0 %v5500
    %v5534 = vpop.f32.mrf.mxu0
    %v5535 = vadd.f32 0.0, %v5534
    %v5536 = vpop.f32.mrf.mxu0
    %v5537 = vadd.f32 0.0, %v5536
    %5538 = vmatmul.bf16.gmra.mxu0 %v5503
    %v5539 = vpop.f32.mrf.mxu0
    %v5540 = vadd.f32 0.0, %v5539
    %v5541 = vpop.f32.mrf.mxu0
    %v5542 = vadd.f32 0.0, %v5541
    %5543 = vmatmul.bf16.gmra.mxu0 %v5506
    %v5544 = vpop.f32.mrf.mxu0
    %v5545 = vadd.f32 0.0, %v5544
    %v5546 = vpop.f32.mrf.mxu0
    %5547 = vdwg.mxu0
    %v5548 = vunpack.c.l.b16 %v4783
    %v5549 = vunpack.c.l.b16 %v4785
    %v5550 = vunpack.c.l.b16 %v4787
    %v5551 = vunpack.c.l.b16 %v4789
    %v5552 = vunpack.c.l.b16 %v4791
    %v5553 = vunpack.c.l.b16 %v4793
    %v5554 = vunpack.c.l.b16 %v4795
    %v5555 = vpack.c.b16 %v5549, %v5548
    %v5556 = vpack.c.b16 %v5551, %v5550
    %v5557 = vpack.c.b16 %v5553, %v5552
    %v5558 = vpack.c.b16 %v5554, %v5554
    %v5559 = vunpack.c.l.b16 %v4900
    %v5560 = vunpack.c.l.b16 %v4902
    %v5561 = vunpack.c.l.b16 %v4904
    %v5562 = vunpack.c.l.b16 %v4906
    %v5563 = vunpack.c.l.b16 %v4908
    %v5564 = vunpack.c.l.b16 %v4910
    %v5565 = vunpack.c.l.b16 %v4912
    %v5566 = vpack.c.b16 %v5560, %v5559
    %v5567 = vpack.c.b16 %v5562, %v5561
    %v5568 = vpack.c.b16 %v5564, %v5563
    %v5569 = vpack.c.b16 %v5565, %v5565
    %v5571 = vsel %vm984, %v5555, 0
    %v5574 = vsel %vm984, %v5556, 0
    %v5577 = vsel %vm984, %v5557, 0
    %v5580 = vsel %vm984, %v5558, 0
    %v5583 = vsel %vm984, %v5566, 0
    %v5586 = vsel %vm984, %v5567, 0
    %v5589 = vsel %vm984, %v5568, 0
    %v5592 = vsel %vm984, %v5569, 0
    %5594 = vmatpush.bf16.xpose.msra.mxu0 0
    %5595 = vmatpush.bf16.xpose.msra.mxu0 0
    %5596 = vmatpush.bf16.xpose.msra.mxu0 0
    %5597 = vmatpush.bf16.xpose.msra.mxu0 0
    %5598 = vmatpush.bf16.xpose.msra.mxu0 %v5592
    %5599 = vmatpush.bf16.xpose.msra.mxu0 %v5589
    %5600 = vmatpush.bf16.xpose.msra.mxu0 %v5586
    %5601 = vmatpush.bf16.xpose.msra.mxu0 %v5583
    %5602 = vmatmul.bf16.gmra.mxu0 %v5571
    %v5603 = vpop.f32.mrf.mxu0
    %v5604 = vadd.f32 0.0, %v5603
    %v5605 = vpop.f32.mrf.mxu0
    %v5606 = vadd.f32 0.0, %v5605
    %5607 = vmatmul.bf16.gmra.mxu0 %v5574
    %v5608 = vpop.f32.mrf.mxu0
    %v5609 = vadd.f32 0.0, %v5608
    %v5610 = vpop.f32.mrf.mxu0
    %v5611 = vadd.f32 0.0, %v5610
    %5612 = vmatmul.bf16.gmra.mxu0 %v5577
    %v5613 = vpop.f32.mrf.mxu0
    %v5614 = vadd.f32 0.0, %v5613
    %v5615 = vpop.f32.mrf.mxu0
    %v5616 = vadd.f32 0.0, %v5615
    %5617 = vmatmul.bf16.gmra.mxu0 %v5580
    %v5618 = vpop.f32.mrf.mxu0
    %v5619 = vadd.f32 0.0, %v5618
    %v5620 = vpop.f32.mrf.mxu0
    %5621 = vdwg.mxu0
    %vm5622 = vcmask 408576
    %v5623 = vsel %vm5622, %v5086, -inf
    %5624 = vmax.xlane.f32.xlu0 %v5623
    %v5625 = vpop.xlane.xlu0 %5624
    %v5626 = vsel %vm5622, %v5088, -inf
    %5627 = vmax.xlane.f32.xlu0 %v5626
    %v5628 = vpop.xlane.xlu0 %5627
    %v5629 = vsel %vm5622, %v5091, -inf
    %5630 = vmax.xlane.f32.xlu0 %v5629
    %v5631 = vpop.xlane.xlu0 %5630
    %v5632 = vsel %vm5622, %v5093, -inf
    %5633 = vmax.xlane.f32.xlu0 %v5632
    %v5634 = vpop.xlane.xlu0 %5633
    %v5635 = vsel %vm5622, %v5096, -inf
    %5636 = vmax.xlane.f32.xlu0 %v5635
    %v5637 = vpop.xlane.xlu0 %5636
    %v5638 = vsel %vm5622, %v5098, -inf
    %5639 = vmax.xlane.f32.xlu0 %v5638
    %v5640 = vpop.xlane.xlu0 %5639
    %vm5641 = vcmask 402432
    %v5642 = vsel %vm5641, %v5101, -inf
    %5643 = vmax.xlane.f32.xlu0 %v5642
    %v5644 = vpop.xlane.xlu0 %5643
    %v5645 = vsel %vm5622, %v5160, -inf
    %5646 = vmax.xlane.f32.xlu0 %v5645
    %v5647 = vpop.xlane.xlu0 %5646
    %v5648 = vsel %vm5622, %v5162, -inf
    %5649 = vmax.xlane.f32.xlu0 %v5648
    %v5650 = vpop.xlane.xlu0 %5649
    %v5651 = vsel %vm5622, %v5165, -inf
    %5652 = vmax.xlane.f32.xlu0 %v5651
    %v5653 = vpop.xlane.xlu0 %5652
    %v5654 = vsel %vm5622, %v5167, -inf
    %5655 = vmax.xlane.f32.xlu0 %v5654
    %v5656 = vpop.xlane.xlu0 %5655
    %v5657 = vsel %vm5622, %v5170, -inf
    %5658 = vmax.xlane.f32.xlu0 %v5657
    %v5659 = vpop.xlane.xlu0 %5658
    %v5660 = vsel %vm5622, %v5172, -inf
    %5661 = vmax.xlane.f32.xlu0 %v5660
    %v5662 = vpop.xlane.xlu0 %5661
    %v5663 = vsel %vm5641, %v5175, -inf
    %5664 = vmax.xlane.f32.xlu0 %v5663
    %v5665 = vpop.xlane.xlu0 %5664
    %v5666 = vsel %vm5622, %v5234, -inf
    %5667 = vmax.xlane.f32.xlu0 %v5666
    %v5668 = vpop.xlane.xlu0 %5667
    %v5669 = vsel %vm5622, %v5236, -inf
    %5670 = vmax.xlane.f32.xlu0 %v5669
    %v5671 = vpop.xlane.xlu0 %5670
    %v5672 = vsel %vm5622, %v5239, -inf
    %5673 = vmax.xlane.f32.xlu0 %v5672
    %v5674 = vpop.xlane.xlu0 %5673
    %v5675 = vsel %vm5622, %v5241, -inf
    %5676 = vmax.xlane.f32.xlu0 %v5675
    %v5677 = vpop.xlane.xlu0 %5676
    %v5678 = vsel %vm5622, %v5244, -inf
    %5679 = vmax.xlane.f32.xlu0 %v5678
    %v5680 = vpop.xlane.xlu0 %5679
    %v5681 = vsel %vm5622, %v5246, -inf
    %5682 = vmax.xlane.f32.xlu0 %v5681
    %v5683 = vpop.xlane.xlu0 %5682
    %v5684 = vsel %vm5641, %v5249, -inf
    %5685 = vmax.xlane.f32.xlu0 %v5684
    %v5686 = vpop.xlane.xlu0 %5685
    %v5687 = vsel %vm5622, %v5308, -inf
    %5688 = vmax.xlane.f32.xlu0 %v5687
    %v5689 = vpop.xlane.xlu0 %5688
    %v5690 = vsel %vm5622, %v5310, -inf
    %5691 = vmax.xlane.f32.xlu0 %v5690
    %v5692 = vpop.xlane.xlu0 %5691
    %v5693 = vsel %vm5622, %v5313, -inf
    %5694 = vmax.xlane.f32.xlu0 %v5693
    %v5695 = vpop.xlane.xlu0 %5694
    %v5696 = vsel %vm5622, %v5315, -inf
    %5697 = vmax.xlane.f32.xlu0 %v5696
    %v5698 = vpop.xlane.xlu0 %5697
    %v5699 = vsel %vm5622, %v5318, -inf
    %5700 = vmax.xlane.f32.xlu0 %v5699
    %v5701 = vpop.xlane.xlu0 %5700
    %v5702 = vsel %vm5622, %v5320, -inf
    %5703 = vmax.xlane.f32.xlu0 %v5702
    %v5704 = vpop.xlane.xlu0 %5703
    %v5705 = vsel %vm5641, %v5323, -inf
    %5706 = vmax.xlane.f32.xlu0 %v5705
    %v5707 = vpop.xlane.xlu0 %5706
    %v5708 = vsel %vm5622, %v5382, -inf
    %5709 = vmax.xlane.f32.xlu0 %v5708
    %v5710 = vpop.xlane.xlu0 %5709
    %v5711 = vsel %vm5622, %v5384, -inf
    %5712 = vmax.xlane.f32.xlu0 %v5711
    %v5713 = vpop.xlane.xlu0 %5712
    %v5714 = vsel %vm5622, %v5387, -inf
    %5715 = vmax.xlane.f32.xlu0 %v5714
    %v5716 = vpop.xlane.xlu0 %5715
    %v5717 = vsel %vm5622, %v5389, -inf
    %5718 = vmax.xlane.f32.xlu0 %v5717
    %v5719 = vpop.xlane.xlu0 %5718
    %v5720 = vsel %vm5622, %v5392, -inf
    %5721 = vmax.xlane.f32.xlu0 %v5720
    %v5722 = vpop.xlane.xlu0 %5721
    %v5723 = vsel %vm5622, %v5394, -inf
    %5724 = vmax.xlane.f32.xlu0 %v5723
    %v5725 = vpop.xlane.xlu0 %5724
    %v5726 = vsel %vm5641, %v5397, -inf
    %5727 = vmax.xlane.f32.xlu0 %v5726
    %v5728 = vpop.xlane.xlu0 %5727
    %v5729 = vsel %vm5622, %v5456, -inf
    %5730 = vmax.xlane.f32.xlu0 %v5729
    %v5731 = vpop.xlane.xlu0 %5730
    %v5732 = vsel %vm5622, %v5458, -inf
    %5733 = vmax.xlane.f32.xlu0 %v5732
    %v5734 = vpop.xlane.xlu0 %5733
    %v5735 = vsel %vm5622, %v5461, -inf
    %5736 = vmax.xlane.f32.xlu0 %v5735
    %v5737 = vpop.xlane.xlu0 %5736
    %v5738 = vsel %vm5622, %v5463, -inf
    %5739 = vmax.xlane.f32.xlu0 %v5738
    %v5740 = vpop.xlane.xlu0 %5739
    %v5741 = vsel %vm5622, %v5466, -inf
    %5742 = vmax.xlane.f32.xlu0 %v5741
    %v5743 = vpop.xlane.xlu0 %5742
    %v5744 = vsel %vm5622, %v5468, -inf
    %5745 = vmax.xlane.f32.xlu0 %v5744
    %v5746 = vpop.xlane.xlu0 %5745
    %v5747 = vsel %vm5641, %v5471, -inf
    %5748 = vmax.xlane.f32.xlu0 %v5747
    %v5749 = vpop.xlane.xlu0 %5748
    %v5750 = vsel %vm5622, %v5530, -inf
    %5751 = vmax.xlane.f32.xlu0 %v5750
    %v5752 = vpop.xlane.xlu0 %5751
    %v5753 = vsel %vm5622, %v5532, -inf
    %5754 = vmax.xlane.f32.xlu0 %v5753
    %v5755 = vpop.xlane.xlu0 %5754
    %v5756 = vsel %vm5622, %v5535, -inf
    %5757 = vmax.xlane.f32.xlu0 %v5756
    %v5758 = vpop.xlane.xlu0 %5757
    %v5759 = vsel %vm5622, %v5537, -inf
    %5760 = vmax.xlane.f32.xlu0 %v5759
    %v5761 = vpop.xlane.xlu0 %5760
    %v5762 = vsel %vm5622, %v5540, -inf
    %5763 = vmax.xlane.f32.xlu0 %v5762
    %v5764 = vpop.xlane.xlu0 %5763
    %v5765 = vsel %vm5622, %v5542, -inf
    %5766 = vmax.xlane.f32.xlu0 %v5765
    %v5767 = vpop.xlane.xlu0 %5766
    %v5768 = vsel %vm5641, %v5545, -inf
    %5769 = vmax.xlane.f32.xlu0 %v5768
    %v5770 = vpop.xlane.xlu0 %5769
    %v5771 = vsel %vm5622, %v5604, -inf
    %5772 = vmax.xlane.f32.xlu0 %v5771
    %v5773 = vpop.xlane.xlu0 %5772
    %v5774 = vsel %vm5622, %v5606, -inf
    %5775 = vmax.xlane.f32.xlu0 %v5774
    %v5776 = vpop.xlane.xlu0 %5775
    %v5777 = vsel %vm5622, %v5609, -inf
    %5778 = vmax.xlane.f32.xlu0 %v5777
    %v5779 = vpop.xlane.xlu0 %5778
    %v5780 = vsel %vm5622, %v5611, -inf
    %5781 = vmax.xlane.f32.xlu0 %v5780
    %v5782 = vpop.xlane.xlu0 %5781
    %v5783 = vsel %vm5622, %v5614, -inf
    %5784 = vmax.xlane.f32.xlu0 %v5783
    %v5785 = vpop.xlane.xlu0 %5784
    %v5786 = vsel %vm5622, %v5616, -inf
    %5787 = vmax.xlane.f32.xlu0 %v5786
    %v5788 = vpop.xlane.xlu0 %5787
    %v5789 = vsel %vm5641, %v5619, -inf
    %5790 = vmax.xlane.f32.xlu0 %v5789
    %v5791 = vpop.xlane.xlu0 %5790
    %v5792 = vsub.f32 %v5086, %v5625
    %v5793 = vsub.f32 %v5088, %v5628
    %v5794 = vsub.f32 %v5091, %v5631
    %v5795 = vsub.f32 %v5093, %v5634
    %v5796 = vsub.f32 %v5096, %v5637
    %v5797 = vsub.f32 %v5098, %v5640
    %v5798 = vsub.f32 %v5101, %v5644
    %v5799 = vsub.f32 %v5160, %v5647
    %v5800 = vsub.f32 %v5162, %v5650
    %v5801 = vsub.f32 %v5165, %v5653
    %v5802 = vsub.f32 %v5167, %v5656
    %v5803 = vsub.f32 %v5170, %v5659
    %v5804 = vsub.f32 %v5172, %v5662
    %v5805 = vsub.f32 %v5175, %v5665
    %v5806 = vsub.f32 %v5234, %v5668
    %v5807 = vsub.f32 %v5236, %v5671
    %v5808 = vsub.f32 %v5239, %v5674
    %v5809 = vsub.f32 %v5241, %v5677
    %v5810 = vsub.f32 %v5244, %v5680
    %v5811 = vsub.f32 %v5246, %v5683
    %v5812 = vsub.f32 %v5249, %v5686
    %v5813 = vsub.f32 %v5308, %v5689
    %v5814 = vsub.f32 %v5310, %v5692
    %v5815 = vsub.f32 %v5313, %v5695
    %v5816 = vsub.f32 %v5315, %v5698
    %v5817 = vsub.f32 %v5318, %v5701
    %v5818 = vsub.f32 %v5320, %v5704
    %v5819 = vsub.f32 %v5323, %v5707
    %v5820 = vsub.f32 %v5382, %v5710
    %v5821 = vsub.f32 %v5384, %v5713
    %v5822 = vsub.f32 %v5387, %v5716
    %v5823 = vsub.f32 %v5389, %v5719
    %v5824 = vsub.f32 %v5392, %v5722
    %v5825 = vsub.f32 %v5394, %v5725
    %v5826 = vsub.f32 %v5397, %v5728
    %v5827 = vsub.f32 %v5456, %v5731
    %v5828 = vsub.f32 %v5458, %v5734
    %v5829 = vsub.f32 %v5461, %v5737
    %v5830 = vsub.f32 %v5463, %v5740
    %v5831 = vsub.f32 %v5466, %v5743
    %v5832 = vsub.f32 %v5468, %v5746
    %v5833 = vsub.f32 %v5471, %v5749
    %v5834 = vsub.f32 %v5530, %v5752
    %v5835 = vsub.f32 %v5532, %v5755
    %v5836 = vsub.f32 %v5535, %v5758
    %v5837 = vsub.f32 %v5537, %v5761
    %v5838 = vsub.f32 %v5540, %v5764
    %v5839 = vsub.f32 %v5542, %v5767
    %v5840 = vsub.f32 %v5545, %v5770
    %v5841 = vsub.f32 %v5604, %v5773
    %v5842 = vsub.f32 %v5606, %v5776
    %v5843 = vsub.f32 %v5609, %v5779
    %v5844 = vsub.f32 %v5611, %v5782
    %v5845 = vsub.f32 %v5614, %v5785
    %v5846 = vsub.f32 %v5616, %v5788
    %v5847 = vsub.f32 %v5619, %v5791
    %v5848 = vmul.f32 %v5792, 1.442695
    %v5849 = vpow.pop %v5848
    %v5850 = vmul.f32 %v5793, 1.442695
    %v5851 = vpow.pop %v5850
    %v5852 = vmul.f32 %v5794, 1.442695
    %v5853 = vpow.pop %v5852
    %v5854 = vmul.f32 %v5795, 1.442695
    %v5855 = vpow.pop %v5854
    %v5856 = vmul.f32 %v5796, 1.442695
    %v5857 = vpow.pop %v5856
    %v5858 = vmul.f32 %v5797, 1.442695
    %v5859 = vpow.pop %v5858
    %v5860 = vmul.f32 %v5798, 1.442695
    %v5861 = vpow.pop %v5860
    %v5862 = vmul.f32 %v5799, 1.442695
    %v5863 = vpow.pop %v5862
    %v5864 = vmul.f32 %v5800, 1.442695
    %v5865 = vpow.pop %v5864
    %v5866 = vmul.f32 %v5801, 1.442695
    %v5867 = vpow.pop %v5866
    %v5868 = vmul.f32 %v5802, 1.442695
    %v5869 = vpow.pop %v5868
    %v5870 = vmul.f32 %v5803, 1.442695
    %v5871 = vpow.pop %v5870
    %v5872 = vmul.f32 %v5804, 1.442695
    %v5873 = vpow.pop %v5872
    %v5874 = vmul.f32 %v5805, 1.442695
    %v5875 = vpow.pop %v5874
    %v5876 = vmul.f32 %v5806, 1.442695
    %v5877 = vpow.pop %v5876
    %v5878 = vmul.f32 %v5807, 1.442695
    %v5879 = vpow.pop %v5878
    %v5880 = vmul.f32 %v5808, 1.442695
    %v5881 = vpow.pop %v5880
    %v5882 = vmul.f32 %v5809, 1.442695
    %v5883 = vpow.pop %v5882
    %v5884 = vmul.f32 %v5810, 1.442695
    %v5885 = vpow.pop %v5884
    %v5886 = vmul.f32 %v5811, 1.442695
    %v5887 = vpow.pop %v5886
    %v5888 = vmul.f32 %v5812, 1.442695
    %v5889 = vpow.pop %v5888
    %v5890 = vmul.f32 %v5813, 1.442695
    %v5891 = vpow.pop %v5890
    %v5892 = vmul.f32 %v5814, 1.442695
    %v5893 = vpow.pop %v5892
    %v5894 = vmul.f32 %v5815, 1.442695
    %v5895 = vpow.pop %v5894
    %v5896 = vmul.f32 %v5816, 1.442695
    %v5897 = vpow.pop %v5896
    %v5898 = vmul.f32 %v5817, 1.442695
    %v5899 = vpow.pop %v5898
    %v5900 = vmul.f32 %v5818, 1.442695
    %v5901 = vpow.pop %v5900
    %v5902 = vmul.f32 %v5819, 1.442695
    %v5903 = vpow.pop %v5902
    %v5904 = vmul.f32 %v5820, 1.442695
    %v5905 = vpow.pop %v5904
    %v5906 = vmul.f32 %v5821, 1.442695
    %v5907 = vpow.pop %v5906
    %v5908 = vmul.f32 %v5822, 1.442695
    %v5909 = vpow.pop %v5908
    %v5910 = vmul.f32 %v5823, 1.442695
    %v5911 = vpow.pop %v5910
    %v5912 = vmul.f32 %v5824, 1.442695
    %v5913 = vpow.pop %v5912
    %v5914 = vmul.f32 %v5825, 1.442695
    %v5915 = vpow.pop %v5914
    %v5916 = vmul.f32 %v5826, 1.442695
    %v5917 = vpow.pop %v5916
    %v5918 = vmul.f32 %v5827, 1.442695
    %v5919 = vpow.pop %v5918
    %v5920 = vmul.f32 %v5828, 1.442695
    %v5921 = vpow.pop %v5920
    %v5922 = vmul.f32 %v5829, 1.442695
    %v5923 = vpow.pop %v5922
    %v5924 = vmul.f32 %v5830, 1.442695
    %v5925 = vpow.pop %v5924
    %v5926 = vmul.f32 %v5831, 1.442695
    %v5927 = vpow.pop %v5926
    %v5928 = vmul.f32 %v5832, 1.442695
    %v5929 = vpow.pop %v5928
    %v5930 = vmul.f32 %v5833, 1.442695
    %v5931 = vpow.pop %v5930
    %v5932 = vmul.f32 %v5834, 1.442695
    %v5933 = vpow.pop %v5932
    %v5934 = vmul.f32 %v5835, 1.442695
    %v5935 = vpow.pop %v5934
    %v5936 = vmul.f32 %v5836, 1.442695
    %v5937 = vpow.pop %v5936
    %v5938 = vmul.f32 %v5837, 1.442695
    %v5939 = vpow.pop %v5938
    %v5940 = vmul.f32 %v5838, 1.442695
    %v5941 = vpow.pop %v5940
    %v5942 = vmul.f32 %v5839, 1.442695
    %v5943 = vpow.pop %v5942
    %v5944 = vmul.f32 %v5840, 1.442695
    %v5945 = vpow.pop %v5944
    %v5946 = vmul.f32 %v5841, 1.442695
    %v5947 = vpow.pop %v5946
    %v5948 = vmul.f32 %v5842, 1.442695
    %v5949 = vpow.pop %v5948
    %v5950 = vmul.f32 %v5843, 1.442695
    %v5951 = vpow.pop %v5950
    %v5952 = vmul.f32 %v5844, 1.442695
    %v5953 = vpow.pop %v5952
    %v5954 = vmul.f32 %v5845, 1.442695
    %v5955 = vpow.pop %v5954
    %v5956 = vmul.f32 %v5846, 1.442695
    %v5957 = vpow.pop %v5956
    %v5958 = vmul.f32 %v5847, 1.442695
    %v5959 = vpow.pop %v5958
    %v5960 = vsel %vm5622, %v5849, 0.0
    %5961 = vadd.xlane.f32.xlu0 %v5960
    %v5962 = vpop.xlane.xlu0 %5961
    %v5963 = vsel %vm5622, %v5851, 0.0
    %5964 = vadd.xlane.f32.xlu0 %v5963
    %v5965 = vpop.xlane.xlu0 %5964
    %v5966 = vsel %vm5622, %v5853, 0.0
    %5967 = vadd.xlane.f32.xlu0 %v5966
    %v5968 = vpop.xlane.xlu0 %5967
    %v5969 = vsel %vm5622, %v5855, 0.0
    %5970 = vadd.xlane.f32.xlu0 %v5969
    %v5971 = vpop.xlane.xlu0 %5970
    %v5972 = vsel %vm5622, %v5857, 0.0
    %5973 = vadd.xlane.f32.xlu0 %v5972
    %v5974 = vpop.xlane.xlu0 %5973
    %v5975 = vsel %vm5622, %v5859, 0.0
    %5976 = vadd.xlane.f32.xlu0 %v5975
    %v5977 = vpop.xlane.xlu0 %5976
    %v5978 = vsel %vm5641, %v5861, 0.0
    %5979 = vadd.xlane.f32.xlu0 %v5978
    %v5980 = vpop.xlane.xlu0 %5979
    %v5981 = vsel %vm5622, %v5863, 0.0
    %5982 = vadd.xlane.f32.xlu0 %v5981
    %v5983 = vpop.xlane.xlu0 %5982
    %v5984 = vsel %vm5622, %v5865, 0.0
    %5985 = vadd.xlane.f32.xlu0 %v5984
    %v5986 = vpop.xlane.xlu0 %5985
    %v5987 = vsel %vm5622, %v5867, 0.0
    %5988 = vadd.xlane.f32.xlu0 %v5987
    %v5989 = vpop.xlane.xlu0 %5988
    %v5990 = vsel %vm5622, %v5869, 0.0
    %5991 = vadd.xlane.f32.xlu0 %v5990
    %v5992 = vpop.xlane.xlu0 %5991
    %v5993 = vsel %vm5622, %v5871, 0.0
    %5994 = vadd.xlane.f32.xlu0 %v5993
    %v5995 = vpop.xlane.xlu0 %5994
    %v5996 = vsel %vm5622, %v5873, 0.0
    %5997 = vadd.xlane.f32.xlu0 %v5996
    %v5998 = vpop.xlane.xlu0 %5997
    %v5999 = vsel %vm5641, %v5875, 0.0
    %6000 = vadd.xlane.f32.xlu0 %v5999
    %v6001 = vpop.xlane.xlu0 %6000
    %v6002 = vsel %vm5622, %v5877, 0.0
    %6003 = vadd.xlane.f32.xlu0 %v6002
    %v6004 = vpop.xlane.xlu0 %6003
    %v6005 = vsel %vm5622, %v5879, 0.0
    %6006 = vadd.xlane.f32.xlu0 %v6005
    %v6007 = vpop.xlane.xlu0 %6006
    %v6008 = vsel %vm5622, %v5881, 0.0
    %6009 = vadd.xlane.f32.xlu0 %v6008
    %v6010 = vpop.xlane.xlu0 %6009
    %v6011 = vsel %vm5622, %v5883, 0.0
    %6012 = vadd.xlane.f32.xlu0 %v6011
    %v6013 = vpop.xlane.xlu0 %6012
    %v6014 = vsel %vm5622, %v5885, 0.0
    %6015 = vadd.xlane.f32.xlu0 %v6014
    %v6016 = vpop.xlane.xlu0 %6015
    %v6017 = vsel %vm5622, %v5887, 0.0
    %6018 = vadd.xlane.f32.xlu0 %v6017
    %v6019 = vpop.xlane.xlu0 %6018
    %v6020 = vsel %vm5641, %v5889, 0.0
    %6021 = vadd.xlane.f32.xlu0 %v6020
    %v6022 = vpop.xlane.xlu0 %6021
    %v6023 = vsel %vm5622, %v5891, 0.0
    %6024 = vadd.xlane.f32.xlu0 %v6023
    %v6025 = vpop.xlane.xlu0 %6024
    %v6026 = vsel %vm5622, %v5893, 0.0
    %6027 = vadd.xlane.f32.xlu0 %v6026
    %v6028 = vpop.xlane.xlu0 %6027
    %v6029 = vsel %vm5622, %v5895, 0.0
    %6030 = vadd.xlane.f32.xlu0 %v6029
    %v6031 = vpop.xlane.xlu0 %6030
    %v6032 = vsel %vm5622, %v5897, 0.0
    %6033 = vadd.xlane.f32.xlu0 %v6032
    %v6034 = vpop.xlane.xlu0 %6033
    %v6035 = vsel %vm5622, %v5899, 0.0
    %6036 = vadd.xlane.f32.xlu0 %v6035
    %v6037 = vpop.xlane.xlu0 %6036
    %v6038 = vsel %vm5622, %v5901, 0.0
    %6039 = vadd.xlane.f32.xlu0 %v6038
    %v6040 = vpop.xlane.xlu0 %6039
    %v6041 = vsel %vm5641, %v5903, 0.0
    %6042 = vadd.xlane.f32.xlu0 %v6041
    %v6043 = vpop.xlane.xlu0 %6042
    %v6044 = vsel %vm5622, %v5905, 0.0
    %6045 = vadd.xlane.f32.xlu0 %v6044
    %v6046 = vpop.xlane.xlu0 %6045
    %v6047 = vsel %vm5622, %v5907, 0.0
    %6048 = vadd.xlane.f32.xlu0 %v6047
    %v6049 = vpop.xlane.xlu0 %6048
    %v6050 = vsel %vm5622, %v5909, 0.0
    %6051 = vadd.xlane.f32.xlu0 %v6050
    %v6052 = vpop.xlane.xlu0 %6051
    %v6053 = vsel %vm5622, %v5911, 0.0
    %6054 = vadd.xlane.f32.xlu0 %v6053
    %v6055 = vpop.xlane.xlu0 %6054
    %v6056 = vsel %vm5622, %v5913, 0.0
    %6057 = vadd.xlane.f32.xlu0 %v6056
    %v6058 = vpop.xlane.xlu0 %6057
    %v6059 = vsel %vm5622, %v5915, 0.0
    %6060 = vadd.xlane.f32.xlu0 %v6059
    %v6061 = vpop.xlane.xlu0 %6060
    %v6062 = vsel %vm5641, %v5917, 0.0
    %6063 = vadd.xlane.f32.xlu0 %v6062
    %v6064 = vpop.xlane.xlu0 %6063
    %v6065 = vsel %vm5622, %v5919, 0.0
    %6066 = vadd.xlane.f32.xlu0 %v6065
    %v6067 = vpop.xlane.xlu0 %6066
    %v6068 = vsel %vm5622, %v5921, 0.0
    %6069 = vadd.xlane.f32.xlu0 %v6068
    %v6070 = vpop.xlane.xlu0 %6069
    %v6071 = vsel %vm5622, %v5923, 0.0
    %6072 = vadd.xlane.f32.xlu0 %v6071
    %v6073 = vpop.xlane.xlu0 %6072
    %v6074 = vsel %vm5622, %v5925, 0.0
    %6075 = vadd.xlane.f32.xlu0 %v6074
    %v6076 = vpop.xlane.xlu0 %6075
    %v6077 = vsel %vm5622, %v5927, 0.0
    %6078 = vadd.xlane.f32.xlu0 %v6077
    %v6079 = vpop.xlane.xlu0 %6078
    %v6080 = vsel %vm5622, %v5929, 0.0
    %6081 = vadd.xlane.f32.xlu0 %v6080
    %v6082 = vpop.xlane.xlu0 %6081
    %v6083 = vsel %vm5641, %v5931, 0.0
    %6084 = vadd.xlane.f32.xlu0 %v6083
    %v6085 = vpop.xlane.xlu0 %6084
    %v6086 = vsel %vm5622, %v5933, 0.0
    %6087 = vadd.xlane.f32.xlu0 %v6086
    %v6088 = vpop.xlane.xlu0 %6087
    %v6089 = vsel %vm5622, %v5935, 0.0
    %6090 = vadd.xlane.f32.xlu0 %v6089
    %v6091 = vpop.xlane.xlu0 %6090
    %v6092 = vsel %vm5622, %v5937, 0.0
    %6093 = vadd.xlane.f32.xlu0 %v6092
    %v6094 = vpop.xlane.xlu0 %6093
    %v6095 = vsel %vm5622, %v5939, 0.0
    %6096 = vadd.xlane.f32.xlu0 %v6095
    %v6097 = vpop.xlane.xlu0 %6096
    %v6098 = vsel %vm5622, %v5941, 0.0
    %6099 = vadd.xlane.f32.xlu0 %v6098
    %v6100 = vpop.xlane.xlu0 %6099
    %v6101 = vsel %vm5622, %v5943, 0.0
    %6102 = vadd.xlane.f32.xlu0 %v6101
    %v6103 = vpop.xlane.xlu0 %6102
    %v6104 = vsel %vm5641, %v5945, 0.0
    %6105 = vadd.xlane.f32.xlu0 %v6104
    %v6106 = vpop.xlane.xlu0 %6105
    %v6107 = vsel %vm5622, %v5947, 0.0
    %6108 = vadd.xlane.f32.xlu0 %v6107
    %v6109 = vpop.xlane.xlu0 %6108
    %v6110 = vsel %vm5622, %v5949, 0.0
    %6111 = vadd.xlane.f32.xlu0 %v6110
    %v6112 = vpop.xlane.xlu0 %6111
    %v6113 = vsel %vm5622, %v5951, 0.0
    %6114 = vadd.xlane.f32.xlu0 %v6113
    %v6115 = vpop.xlane.xlu0 %6114
    %v6116 = vsel %vm5622, %v5953, 0.0
    %6117 = vadd.xlane.f32.xlu0 %v6116
    %v6118 = vpop.xlane.xlu0 %6117
    %v6119 = vsel %vm5622, %v5955, 0.0
    %6120 = vadd.xlane.f32.xlu0 %v6119
    %v6121 = vpop.xlane.xlu0 %6120
    %v6122 = vsel %vm5622, %v5957, 0.0
    %6123 = vadd.xlane.f32.xlu0 %v6122
    %v6124 = vpop.xlane.xlu0 %6123
    %v6125 = vsel %vm5641, %v5959, 0.0
    %6126 = vadd.xlane.f32.xlu0 %v6125
    %v6127 = vpop.xlane.xlu0 %6126
    %v6128 = vrcp.pop %v5962
    %v6129 = vrcp.pop %v5965
    %v6130 = vrcp.pop %v5968
    %v6131 = vrcp.pop %v5971
    %v6132 = vrcp.pop %v5974
    %v6133 = vrcp.pop %v5977
    %v6134 = vrcp.pop %v5980
    %v6135 = vrcp.pop %v5983
    %v6136 = vrcp.pop %v5986
    %v6137 = vrcp.pop %v5989
    %v6138 = vrcp.pop %v5992
    %v6139 = vrcp.pop %v5995
    %v6140 = vrcp.pop %v5998
    %v6141 = vrcp.pop %v6001
    %v6142 = vrcp.pop %v6004
    %v6143 = vrcp.pop %v6007
    %v6144 = vrcp.pop %v6010
    %v6145 = vrcp.pop %v6013
    %v6146 = vrcp.pop %v6016
    %v6147 = vrcp.pop %v6019
    %v6148 = vrcp.pop %v6022
    %v6149 = vrcp.pop %v6025
    %v6150 = vrcp.pop %v6028
    %v6151 = vrcp.pop %v6031
    %v6152 = vrcp.pop %v6034
    %v6153 = vrcp.pop %v6037
    %v6154 = vrcp.pop %v6040
    %v6155 = vrcp.pop %v6043
    %v6156 = vrcp.pop %v6046
    %v6157 = vrcp.pop %v6049
    %v6158 = vrcp.pop %v6052
    %v6159 = vrcp.pop %v6055
    %v6160 = vrcp.pop %v6058
    %v6161 = vrcp.pop %v6061
    %v6162 = vrcp.pop %v6064
    %v6163 = vrcp.pop %v6067
    %v6164 = vrcp.pop %v6070
    %v6165 = vrcp.pop %v6073
    %v6166 = vrcp.pop %v6076
    %v6167 = vrcp.pop %v6079
    %v6168 = vrcp.pop %v6082
    %v6169 = vrcp.pop %v6085
    %v6170 = vrcp.pop %v6088
    %v6171 = vrcp.pop %v6091
    %v6172 = vrcp.pop %v6094
    %v6173 = vrcp.pop %v6097
    %v6174 = vrcp.pop %v6100
    %v6175 = vrcp.pop %v6103
    %v6176 = vrcp.pop %v6106
    %v6177 = vrcp.pop %v6109
    %v6178 = vrcp.pop %v6112
    %v6179 = vrcp.pop %v6115
    %v6180 = vrcp.pop %v6118
    %v6181 = vrcp.pop %v6121
    %v6182 = vrcp.pop %v6124
    %v6183 = vrcp.pop %v6127
    %v6184 = vmul.f32 %v5849, %v6128
    %v6185 = vmul.f32 %v5851, %v6129
    %v6186 = vmul.f32 %v5853, %v6130
    %v6187 = vmul.f32 %v5855, %v6131
    %v6188 = vmul.f32 %v5857, %v6132
    %v6189 = vmul.f32 %v5859, %v6133
    %v6190 = vmul.f32 %v5861, %v6134
    %v6191 = vmul.f32 %v5863, %v6135
    %v6192 = vmul.f32 %v5865, %v6136
    %v6193 = vmul.f32 %v5867, %v6137
    %v6194 = vmul.f32 %v5869, %v6138
    %v6195 = vmul.f32 %v5871, %v6139
    %v6196 = vmul.f32 %v5873, %v6140
    %v6197 = vmul.f32 %v5875, %v6141
    %v6198 = vmul.f32 %v5877, %v6142
    %v6199 = vmul.f32 %v5879, %v6143
    %v6200 = vmul.f32 %v5881, %v6144
    %v6201 = vmul.f32 %v5883, %v6145
    %v6202 = vmul.f32 %v5885, %v6146
    %v6203 = vmul.f32 %v5887, %v6147
    %v6204 = vmul.f32 %v5889, %v6148
    %v6205 = vmul.f32 %v5891, %v6149
    %v6206 = vmul.f32 %v5893, %v6150
    %v6207 = vmul.f32 %v5895, %v6151
    %v6208 = vmul.f32 %v5897, %v6152
    %v6209 = vmul.f32 %v5899, %v6153
    %v6210 = vmul.f32 %v5901, %v6154
    %v6211 = vmul.f32 %v5903, %v6155
    %v6212 = vmul.f32 %v5905, %v6156
    %v6213 = vmul.f32 %v5907, %v6157
    %v6214 = vmul.f32 %v5909, %v6158
    %v6215 = vmul.f32 %v5911, %v6159
    %v6216 = vmul.f32 %v5913, %v6160
    %v6217 = vmul.f32 %v5915, %v6161
    %v6218 = vmul.f32 %v5917, %v6162
    %v6219 = vmul.f32 %v5919, %v6163
    %v6220 = vmul.f32 %v5921, %v6164
    %v6221 = vmul.f32 %v5923, %v6165
    %v6222 = vmul.f32 %v5925, %v6166
    %v6223 = vmul.f32 %v5927, %v6167
    %v6224 = vmul.f32 %v5929, %v6168
    %v6225 = vmul.f32 %v5931, %v6169
    %v6226 = vmul.f32 %v5933, %v6170
    %v6227 = vmul.f32 %v5935, %v6171
    %v6228 = vmul.f32 %v5937, %v6172
    %v6229 = vmul.f32 %v5939, %v6173
    %v6230 = vmul.f32 %v5941, %v6174
    %v6231 = vmul.f32 %v5943, %v6175
    %v6232 = vmul.f32 %v5945, %v6176
    %v6233 = vmul.f32 %v5947, %v6177
    %v6234 = vmul.f32 %v5949, %v6178
    %v6235 = vmul.f32 %v5951, %v6179
    %v6236 = vmul.f32 %v5953, %v6180
    %v6237 = vmul.f32 %v5955, %v6181
    %v6238 = vmul.f32 %v5957, %v6182
    %v6239 = vmul.f32 %v5959, %v6183
    %v6240 = vpack.c.bf16 %v6184, %v6184
    %v6241 = vpack.c.bf16 %v6185, %v6185
    %v6242 = vpack.c.bf16 %v6186, %v6186
    %v6243 = vpack.c.bf16 %v6187, %v6187
    %v6244 = vpack.c.bf16 %v6188, %v6188
    %v6245 = vpack.c.bf16 %v6189, %v6189
    %v6246 = vpack.c.bf16 %v6190, %v6190
    %v6247 = vpack.c.bf16 %v6191, %v6191
    %v6248 = vpack.c.bf16 %v6192, %v6192
    %v6249 = vpack.c.bf16 %v6193, %v6193
    %v6250 = vpack.c.bf16 %v6194, %v6194
    %v6251 = vpack.c.bf16 %v6195, %v6195
    %v6252 = vpack.c.bf16 %v6196, %v6196
    %v6253 = vpack.c.bf16 %v6197, %v6197
    %v6254 = vpack.c.bf16 %v6198, %v6198
    %v6255 = vpack.c.bf16 %v6199, %v6199
    %v6256 = vpack.c.bf16 %v6200, %v6200
    %v6257 = vpack.c.bf16 %v6201, %v6201
    %v6258 = vpack.c.bf16 %v6202, %v6202
    %v6259 = vpack.c.bf16 %v6203, %v6203
    %v6260 = vpack.c.bf16 %v6204, %v6204
    %v6261 = vpack.c.bf16 %v6205, %v6205
    %v6262 = vpack.c.bf16 %v6206, %v6206
    %v6263 = vpack.c.bf16 %v6207, %v6207
    %v6264 = vpack.c.bf16 %v6208, %v6208
    %v6265 = vpack.c.bf16 %v6209, %v6209
    %v6266 = vpack.c.bf16 %v6210, %v6210
    %v6267 = vpack.c.bf16 %v6211, %v6211
    %v6268 = vpack.c.bf16 %v6212, %v6212
    %v6269 = vpack.c.bf16 %v6213, %v6213
    %v6270 = vpack.c.bf16 %v6214, %v6214
    %v6271 = vpack.c.bf16 %v6215, %v6215
    %v6272 = vpack.c.bf16 %v6216, %v6216
    %v6273 = vpack.c.bf16 %v6217, %v6217
    %v6274 = vpack.c.bf16 %v6218, %v6218
    %v6275 = vpack.c.bf16 %v6219, %v6219
    %v6276 = vpack.c.bf16 %v6220, %v6220
    %v6277 = vpack.c.bf16 %v6221, %v6221
    %v6278 = vpack.c.bf16 %v6222, %v6222
    %v6279 = vpack.c.bf16 %v6223, %v6223
    %v6280 = vpack.c.bf16 %v6224, %v6224
    %v6281 = vpack.c.bf16 %v6225, %v6225
    %v6282 = vpack.c.bf16 %v6226, %v6226
    %v6283 = vpack.c.bf16 %v6227, %v6227
    %v6284 = vpack.c.bf16 %v6228, %v6228
    %v6285 = vpack.c.bf16 %v6229, %v6229
    %v6286 = vpack.c.bf16 %v6230, %v6230
    %v6287 = vpack.c.bf16 %v6231, %v6231
    %v6288 = vpack.c.bf16 %v6232, %v6232
    %v6289 = vpack.c.bf16 %v6233, %v6233
    %v6290 = vpack.c.bf16 %v6234, %v6234
    %v6291 = vpack.c.bf16 %v6235, %v6235
    %v6292 = vpack.c.bf16 %v6236, %v6236
    %v6293 = vpack.c.bf16 %v6237, %v6237
    %v6294 = vpack.c.bf16 %v6238, %v6238
    %v6295 = vpack.c.bf16 %v6239, %v6239
    %v6303 = vunpack.c.l.b16 %v6240
    %v6304 = vunpack.c.l.b16 %v6241
    %v6305 = vunpack.c.l.b16 %v6242
    %v6306 = vunpack.c.l.b16 %v6243
    %v6307 = vunpack.c.l.b16 %v6244
    %v6308 = vunpack.c.l.b16 %v6245
    %v6309 = vunpack.c.l.b16 %v6246
    %v6310 = vpack.c.b16 %v6304, %v6303
    %v6311 = vpack.c.b16 %v6306, %v6305
    %v6312 = vpack.c.b16 %v6308, %v6307
    %v6313 = vpack.c.b16 %v6309, %v6309
    %v6314 = vunpack.c.l.b16 %v4663
    %v6315 = vunpack.c.l.b16 %v4664
    %v6316 = vunpack.c.l.b16 %v4665
    %v6317 = vunpack.c.l.b16 %v4666
    %v6318 = vunpack.c.l.b16 %v4667
    %v6319 = vunpack.c.l.b16 %v4668
    %v6320 = vunpack.c.l.b16 %v4669
    %v6321 = vpack.c.b16 %v6315, %v6314
    %v6322 = vpack.c.b16 %v6317, %v6316
    %v6323 = vpack.c.b16 %v6319, %v6318
    %v6324 = vpack.c.b16 %v6320, %v6320
    %v6329 = vsel %vm5622, %v6310, 0
    %v6332 = vsel %vm5622, %v6311, 0
    %v6335 = vsel %vm5622, %v6312, 0
    %v6338 = vsel %vm5622, %v6313, 0
    %v6341 = vsel %vm603, %v6324, 0
    %6343 = vmatpush.bf16.msra.mxu0 0
    %6344 = vmatpush.bf16.msra.mxu0 0
    %6345 = vmatpush.bf16.msra.mxu0 0
    %6346 = vmatpush.bf16.msra.mxu0 0
    %6347 = vmatpush.bf16.msra.mxu0 %v6341
    %6348 = vmatpush.bf16.msra.mxu0 %v6323
    %6349 = vmatpush.bf16.msra.mxu0 %v6322
    %6350 = vmatpush.bf16.msra.mxu0 %v6321
    %6351 = vmatmul.bf16.gmra.mxu0 %v6329
    %v6352 = vpop.f32.mrf.mxu0
    %v6353 = vadd.f32 0.0, %v6352
    %v6354 = vpop.f32.mrf.mxu0
    %v6355 = vadd.f32 0.0, %v6354
    %6356 = vmatmul.bf16.gmra.mxu0 %v6332
    %v6357 = vpop.f32.mrf.mxu0
    %v6358 = vadd.f32 0.0, %v6357
    %v6359 = vpop.f32.mrf.mxu0
    %v6360 = vadd.f32 0.0, %v6359
    %6361 = vmatmul.bf16.gmra.mxu0 %v6335
    %v6362 = vpop.f32.mrf.mxu0
    %v6363 = vadd.f32 0.0, %v6362
    %v6364 = vpop.f32.mrf.mxu0
    %v6365 = vadd.f32 0.0, %v6364
    %6366 = vmatmul.bf16.gmra.mxu0 %v6338
    %v6367 = vpop.f32.mrf.mxu0
    %v6368 = vadd.f32 0.0, %v6367
    %v6369 = vpop.f32.mrf.mxu0
    %6370 = vdwg.mxu0
    %v6378 = vunpack.c.l.b16 %v6247
    %v6379 = vunpack.c.l.b16 %v6248
    %v6380 = vunpack.c.l.b16 %v6249
    %v6381 = vunpack.c.l.b16 %v6250
    %v6382 = vunpack.c.l.b16 %v6251
    %v6383 = vunpack.c.l.b16 %v6252
    %v6384 = vunpack.c.l.b16 %v6253
    %v6385 = vpack.c.b16 %v6379, %v6378
    %v6386 = vpack.c.b16 %v6381, %v6380
    %v6387 = vpack.c.b16 %v6383, %v6382
    %v6388 = vpack.c.b16 %v6384, %v6384
    %v6389 = vunpack.c.l.b16 %v4921
    %v6390 = vunpack.c.l.b16 %v4923
    %v6391 = vunpack.c.l.b16 %v4925
    %v6392 = vunpack.c.l.b16 %v4927
    %v6393 = vunpack.c.l.b16 %v4929
    %v6394 = vunpack.c.l.b16 %v4931
    %v6395 = vunpack.c.l.b16 %v4933
    %v6396 = vpack.c.b16 %v6390, %v6389
    %v6397 = vpack.c.b16 %v6392, %v6391
    %v6398 = vpack.c.b16 %v6394, %v6393
    %v6399 = vpack.c.b16 %v6395, %v6395
    %v6404 = vsel %vm5622, %v6385, 0
    %v6407 = vsel %vm5622, %v6386, 0
    %v6410 = vsel %vm5622, %v6387, 0
    %v6413 = vsel %vm5622, %v6388, 0
    %v6416 = vsel %vm603, %v6399, 0
    %6418 = vmatpush.bf16.msra.mxu0 0
    %6419 = vmatpush.bf16.msra.mxu0 0
    %6420 = vmatpush.bf16.msra.mxu0 0
    %6421 = vmatpush.bf16.msra.mxu0 0
    %6422 = vmatpush.bf16.msra.mxu0 %v6416
    %6423 = vmatpush.bf16.msra.mxu0 %v6398
    %6424 = vmatpush.bf16.msra.mxu0 %v6397
    %6425 = vmatpush.bf16.msra.mxu0 %v6396
    %6426 = vmatmul.bf16.gmra.mxu0 %v6404
    %v6427 = vpop.f32.mrf.mxu0
    %v6428 = vadd.f32 0.0, %v6427
    %v6429 = vpop.f32.mrf.mxu0
    %v6430 = vadd.f32 0.0, %v6429
    %6431 = vmatmul.bf16.gmra.mxu0 %v6407
    %v6432 = vpop.f32.mrf.mxu0
    %v6433 = vadd.f32 0.0, %v6432
    %v6434 = vpop.f32.mrf.mxu0
    %v6435 = vadd.f32 0.0, %v6434
    %6436 = vmatmul.bf16.gmra.mxu0 %v6410
    %v6437 = vpop.f32.mrf.mxu0
    %v6438 = vadd.f32 0.0, %v6437
    %v6439 = vpop.f32.mrf.mxu0
    %v6440 = vadd.f32 0.0, %v6439
    %6441 = vmatmul.bf16.gmra.mxu0 %v6413
    %v6442 = vpop.f32.mrf.mxu0
    %v6443 = vadd.f32 0.0, %v6442
    %v6444 = vpop.f32.mrf.mxu0
    %6445 = vdwg.mxu0
    %v6453 = vunpack.c.l.b16 %v6254
    %v6454 = vunpack.c.l.b16 %v6255
    %v6455 = vunpack.c.l.b16 %v6256
    %v6456 = vunpack.c.l.b16 %v6257
    %v6457 = vunpack.c.l.b16 %v6258
    %v6458 = vunpack.c.l.b16 %v6259
    %v6459 = vunpack.c.l.b16 %v6260
    %v6460 = vpack.c.b16 %v6454, %v6453
    %v6461 = vpack.c.b16 %v6456, %v6455
    %v6462 = vpack.c.b16 %v6458, %v6457
    %v6463 = vpack.c.b16 %v6459, %v6459
    %v6464 = vunpack.c.l.b16 %v4935
    %v6465 = vunpack.c.l.b16 %v4937
    %v6466 = vunpack.c.l.b16 %v4939
    %v6467 = vunpack.c.l.b16 %v4941
    %v6468 = vunpack.c.l.b16 %v4943
    %v6469 = vunpack.c.l.b16 %v4945
    %v6470 = vunpack.c.l.b16 %v4947
    %v6471 = vpack.c.b16 %v6465, %v6464
    %v6472 = vpack.c.b16 %v6467, %v6466
    %v6473 = vpack.c.b16 %v6469, %v6468
    %v6474 = vpack.c.b16 %v6470, %v6470
    %v6479 = vsel %vm5622, %v6460, 0
    %v6482 = vsel %vm5622, %v6461, 0
    %v6485 = vsel %vm5622, %v6462, 0
    %v6488 = vsel %vm5622, %v6463, 0
    %v6491 = vsel %vm603, %v6474, 0
    %6493 = vmatpush.bf16.msra.mxu0 0
    %6494 = vmatpush.bf16.msra.mxu0 0
    %6495 = vmatpush.bf16.msra.mxu0 0
    %6496 = vmatpush.bf16.msra.mxu0 0
    %6497 = vmatpush.bf16.msra.mxu0 %v6491
    %6498 = vmatpush.bf16.msra.mxu0 %v6473
    %6499 = vmatpush.bf16.msra.mxu0 %v6472
    %6500 = vmatpush.bf16.msra.mxu0 %v6471
    %6501 = vmatmul.bf16.gmra.mxu0 %v6479
    %v6502 = vpop.f32.mrf.mxu0
    %v6503 = vadd.f32 0.0, %v6502
    %v6504 = vpop.f32.mrf.mxu0
    %v6505 = vadd.f32 0.0, %v6504
    %6506 = vmatmul.bf16.gmra.mxu0 %v6482
    %v6507 = vpop.f32.mrf.mxu0
    %v6508 = vadd.f32 0.0, %v6507
    %v6509 = vpop.f32.mrf.mxu0
    %v6510 = vadd.f32 0.0, %v6509
    %6511 = vmatmul.bf16.gmra.mxu0 %v6485
    %v6512 = vpop.f32.mrf.mxu0
    %v6513 = vadd.f32 0.0, %v6512
    %v6514 = vpop.f32.mrf.mxu0
    %v6515 = vadd.f32 0.0, %v6514
    %6516 = vmatmul.bf16.gmra.mxu0 %v6488
    %v6517 = vpop.f32.mrf.mxu0
    %v6518 = vadd.f32 0.0, %v6517
    %v6519 = vpop.f32.mrf.mxu0
    %6520 = vdwg.mxu0
    %v6528 = vunpack.c.l.b16 %v6261
    %v6529 = vunpack.c.l.b16 %v6262
    %v6530 = vunpack.c.l.b16 %v6263
    %v6531 = vunpack.c.l.b16 %v6264
    %v6532 = vunpack.c.l.b16 %v6265
    %v6533 = vunpack.c.l.b16 %v6266
    %v6534 = vunpack.c.l.b16 %v6267
    %v6535 = vpack.c.b16 %v6529, %v6528
    %v6536 = vpack.c.b16 %v6531, %v6530
    %v6537 = vpack.c.b16 %v6533, %v6532
    %v6538 = vpack.c.b16 %v6534, %v6534
    %v6539 = vunpack.c.l.b16 %v4949
    %v6540 = vunpack.c.l.b16 %v4951
    %v6541 = vunpack.c.l.b16 %v4953
    %v6542 = vunpack.c.l.b16 %v4955
    %v6543 = vunpack.c.l.b16 %v4957
    %v6544 = vunpack.c.l.b16 %v4959
    %v6545 = vunpack.c.l.b16 %v4961
    %v6546 = vpack.c.b16 %v6540, %v6539
    %v6547 = vpack.c.b16 %v6542, %v6541
    %v6548 = vpack.c.b16 %v6544, %v6543
    %v6549 = vpack.c.b16 %v6545, %v6545
    %v6554 = vsel %vm5622, %v6535, 0
    %v6557 = vsel %vm5622, %v6536, 0
    %v6560 = vsel %vm5622, %v6537, 0
    %v6563 = vsel %vm5622, %v6538, 0
    %v6566 = vsel %vm603, %v6549, 0
    %6568 = vmatpush.bf16.msra.mxu0 0
    %6569 = vmatpush.bf16.msra.mxu0 0
    %6570 = vmatpush.bf16.msra.mxu0 0
    %6571 = vmatpush.bf16.msra.mxu0 0
    %6572 = vmatpush.bf16.msra.mxu0 %v6566
    %6573 = vmatpush.bf16.msra.mxu0 %v6548
    %6574 = vmatpush.bf16.msra.mxu0 %v6547
    %6575 = vmatpush.bf16.msra.mxu0 %v6546
    %6576 = vmatmul.bf16.gmra.mxu0 %v6554
    %v6577 = vpop.f32.mrf.mxu0
    %v6578 = vadd.f32 0.0, %v6577
    %v6579 = vpop.f32.mrf.mxu0
    %v6580 = vadd.f32 0.0, %v6579
    %6581 = vmatmul.bf16.gmra.mxu0 %v6557
    %v6582 = vpop.f32.mrf.mxu0
    %v6583 = vadd.f32 0.0, %v6582
    %v6584 = vpop.f32.mrf.mxu0
    %v6585 = vadd.f32 0.0, %v6584
    %6586 = vmatmul.bf16.gmra.mxu0 %v6560
    %v6587 = vpop.f32.mrf.mxu0
    %v6588 = vadd.f32 0.0, %v6587
    %v6589 = vpop.f32.mrf.mxu0
    %v6590 = vadd.f32 0.0, %v6589
    %6591 = vmatmul.bf16.gmra.mxu0 %v6563
    %v6592 = vpop.f32.mrf.mxu0
    %v6593 = vadd.f32 0.0, %v6592
    %v6594 = vpop.f32.mrf.mxu0
    %6595 = vdwg.mxu0
    %v6603 = vunpack.c.l.b16 %v6268
    %v6604 = vunpack.c.l.b16 %v6269
    %v6605 = vunpack.c.l.b16 %v6270
    %v6606 = vunpack.c.l.b16 %v6271
    %v6607 = vunpack.c.l.b16 %v6272
    %v6608 = vunpack.c.l.b16 %v6273
    %v6609 = vunpack.c.l.b16 %v6274
    %v6610 = vpack.c.b16 %v6604, %v6603
    %v6611 = vpack.c.b16 %v6606, %v6605
    %v6612 = vpack.c.b16 %v6608, %v6607
    %v6613 = vpack.c.b16 %v6609, %v6609
    %v6614 = vunpack.c.l.b16 %v4971
    %v6615 = vunpack.c.l.b16 %v4974
    %v6616 = vunpack.c.l.b16 %v4977
    %v6617 = vunpack.c.l.b16 %v4980
    %v6618 = vunpack.c.l.b16 %v4983
    %v6619 = vunpack.c.l.b16 %v4986
    %v6620 = vunpack.c.l.b16 %v4987
    %v6621 = vpack.c.b16 %v6615, %v6614
    %v6622 = vpack.c.b16 %v6617, %v6616
    %v6623 = vpack.c.b16 %v6619, %v6618
    %v6624 = vpack.c.b16 %v6620, %v6620
    %v6629 = vsel %vm5622, %v6610, 0
    %v6632 = vsel %vm5622, %v6611, 0
    %v6635 = vsel %vm5622, %v6612, 0
    %v6638 = vsel %vm5622, %v6613, 0
    %v6641 = vsel %vm603, %v6624, 0
    %6643 = vmatpush.bf16.msra.mxu0 0
    %6644 = vmatpush.bf16.msra.mxu0 0
    %6645 = vmatpush.bf16.msra.mxu0 0
    %6646 = vmatpush.bf16.msra.mxu0 0
    %6647 = vmatpush.bf16.msra.mxu0 %v6641
    %6648 = vmatpush.bf16.msra.mxu0 %v6623
    %6649 = vmatpush.bf16.msra.mxu0 %v6622
    %6650 = vmatpush.bf16.msra.mxu0 %v6621
    %6651 = vmatmul.bf16.gmra.mxu0 %v6629
    %v6652 = vpop.f32.mrf.mxu0
    %v6653 = vadd.f32 0.0, %v6652
    %v6654 = vpop.f32.mrf.mxu0
    %v6655 = vadd.f32 0.0, %v6654
    %6656 = vmatmul.bf16.gmra.mxu0 %v6632
    %v6657 = vpop.f32.mrf.mxu0
    %v6658 = vadd.f32 0.0, %v6657
    %v6659 = vpop.f32.mrf.mxu0
    %v6660 = vadd.f32 0.0, %v6659
    %6661 = vmatmul.bf16.gmra.mxu0 %v6635
    %v6662 = vpop.f32.mrf.mxu0
    %v6663 = vadd.f32 0.0, %v6662
    %v6664 = vpop.f32.mrf.mxu0
    %v6665 = vadd.f32 0.0, %v6664
    %6666 = vmatmul.bf16.gmra.mxu0 %v6638
    %v6667 = vpop.f32.mrf.mxu0
    %v6668 = vadd.f32 0.0, %v6667
    %v6669 = vpop.f32.mrf.mxu0
    %6670 = vdwg.mxu0
    %v6678 = vunpack.c.l.b16 %v6275
    %v6679 = vunpack.c.l.b16 %v6276
    %v6680 = vunpack.c.l.b16 %v6277
    %v6681 = vunpack.c.l.b16 %v6278
    %v6682 = vunpack.c.l.b16 %v6279
    %v6683 = vunpack.c.l.b16 %v6280
    %v6684 = vunpack.c.l.b16 %v6281
    %v6685 = vpack.c.b16 %v6679, %v6678
    %v6686 = vpack.c.b16 %v6681, %v6680
    %v6687 = vpack.c.b16 %v6683, %v6682
    %v6688 = vpack.c.b16 %v6684, %v6684
    %v6689 = vunpack.c.l.b16 %v4989
    %v6690 = vunpack.c.l.b16 %v4991
    %v6691 = vunpack.c.l.b16 %v4993
    %v6692 = vunpack.c.l.b16 %v4995
    %v6693 = vunpack.c.l.b16 %v4997
    %v6694 = vunpack.c.l.b16 %v4999
    %v6695 = vunpack.c.l.b16 %v5001
    %v6696 = vpack.c.b16 %v6690, %v6689
    %v6697 = vpack.c.b16 %v6692, %v6691
    %v6698 = vpack.c.b16 %v6694, %v6693
    %v6699 = vpack.c.b16 %v6695, %v6695
    %v6704 = vsel %vm5622, %v6685, 0
    %v6707 = vsel %vm5622, %v6686, 0
    %v6710 = vsel %vm5622, %v6687, 0
    %v6713 = vsel %vm5622, %v6688, 0
    %v6716 = vsel %vm603, %v6699, 0
    %6718 = vmatpush.bf16.msra.mxu0 0
    %6719 = vmatpush.bf16.msra.mxu0 0
    %6720 = vmatpush.bf16.msra.mxu0 0
    %6721 = vmatpush.bf16.msra.mxu0 0
    %6722 = vmatpush.bf16.msra.mxu0 %v6716
    %6723 = vmatpush.bf16.msra.mxu0 %v6698
    %6724 = vmatpush.bf16.msra.mxu0 %v6697
    %6725 = vmatpush.bf16.msra.mxu0 %v6696
    %6726 = vmatmul.bf16.gmra.mxu0 %v6704
    %v6727 = vpop.f32.mrf.mxu0
    %v6728 = vadd.f32 0.0, %v6727
    %v6729 = vpop.f32.mrf.mxu0
    %v6730 = vadd.f32 0.0, %v6729
    %6731 = vmatmul.bf16.gmra.mxu0 %v6707
    %v6732 = vpop.f32.mrf.mxu0
    %v6733 = vadd.f32 0.0, %v6732
    %v6734 = vpop.f32.mrf.mxu0
    %v6735 = vadd.f32 0.0, %v6734
    %6736 = vmatmul.bf16.gmra.mxu0 %v6710
    %v6737 = vpop.f32.mrf.mxu0
    %v6738 = vadd.f32 0.0, %v6737
    %v6739 = vpop.f32.mrf.mxu0
    %v6740 = vadd.f32 0.0, %v6739
    %6741 = vmatmul.bf16.gmra.mxu0 %v6713
    %v6742 = vpop.f32.mrf.mxu0
    %v6743 = vadd.f32 0.0, %v6742
    %v6744 = vpop.f32.mrf.mxu0
    %6745 = vdwg.mxu0
    %v6753 = vunpack.c.l.b16 %v6282
    %v6754 = vunpack.c.l.b16 %v6283
    %v6755 = vunpack.c.l.b16 %v6284
    %v6756 = vunpack.c.l.b16 %v6285
    %v6757 = vunpack.c.l.b16 %v6286
    %v6758 = vunpack.c.l.b16 %v6287
    %v6759 = vunpack.c.l.b16 %v6288
    %v6760 = vpack.c.b16 %v6754, %v6753
    %v6761 = vpack.c.b16 %v6756, %v6755
    %v6762 = vpack.c.b16 %v6758, %v6757
    %v6763 = vpack.c.b16 %v6759, %v6759
    %v6764 = vunpack.c.l.b16 %v5003
    %v6765 = vunpack.c.l.b16 %v5005
    %v6766 = vunpack.c.l.b16 %v5007
    %v6767 = vunpack.c.l.b16 %v5009
    %v6768 = vunpack.c.l.b16 %v5011
    %v6769 = vunpack.c.l.b16 %v5013
    %v6770 = vunpack.c.l.b16 %v5015
    %v6771 = vpack.c.b16 %v6765, %v6764
    %v6772 = vpack.c.b16 %v6767, %v6766
    %v6773 = vpack.c.b16 %v6769, %v6768
    %v6774 = vpack.c.b16 %v6770, %v6770
    %v6779 = vsel %vm5622, %v6760, 0
    %v6782 = vsel %vm5622, %v6761, 0
    %v6785 = vsel %vm5622, %v6762, 0
    %v6788 = vsel %vm5622, %v6763, 0
    %v6791 = vsel %vm603, %v6774, 0
    %6793 = vmatpush.bf16.msra.mxu0 0
    %6794 = vmatpush.bf16.msra.mxu0 0
    %6795 = vmatpush.bf16.msra.mxu0 0
    %6796 = vmatpush.bf16.msra.mxu0 0
    %6797 = vmatpush.bf16.msra.mxu0 %v6791
    %6798 = vmatpush.bf16.msra.mxu0 %v6773
    %6799 = vmatpush.bf16.msra.mxu0 %v6772
    %6800 = vmatpush.bf16.msra.mxu0 %v6771
    %6801 = vmatmul.bf16.gmra.mxu0 %v6779
    %v6802 = vpop.f32.mrf.mxu0
    %v6803 = vadd.f32 0.0, %v6802
    %v6804 = vpop.f32.mrf.mxu0
    %v6805 = vadd.f32 0.0, %v6804
    %6806 = vmatmul.bf16.gmra.mxu0 %v6782
    %v6807 = vpop.f32.mrf.mxu0
    %v6808 = vadd.f32 0.0, %v6807
    %v6809 = vpop.f32.mrf.mxu0
    %v6810 = vadd.f32 0.0, %v6809
    %6811 = vmatmul.bf16.gmra.mxu0 %v6785
    %v6812 = vpop.f32.mrf.mxu0
    %v6813 = vadd.f32 0.0, %v6812
    %v6814 = vpop.f32.mrf.mxu0
    %v6815 = vadd.f32 0.0, %v6814
    %6816 = vmatmul.bf16.gmra.mxu0 %v6788
    %v6817 = vpop.f32.mrf.mxu0
    %v6818 = vadd.f32 0.0, %v6817
    %v6819 = vpop.f32.mrf.mxu0
    %6820 = vdwg.mxu0
    %v6828 = vunpack.c.l.b16 %v6289
    %v6829 = vunpack.c.l.b16 %v6290
    %v6830 = vunpack.c.l.b16 %v6291
    %v6831 = vunpack.c.l.b16 %v6292
    %v6832 = vunpack.c.l.b16 %v6293
    %v6833 = vunpack.c.l.b16 %v6294
    %v6834 = vunpack.c.l.b16 %v6295
    %v6835 = vpack.c.b16 %v6829, %v6828
    %v6836 = vpack.c.b16 %v6831, %v6830
    %v6837 = vpack.c.b16 %v6833, %v6832
    %v6838 = vpack.c.b16 %v6834, %v6834
    %v6839 = vunpack.c.l.b16 %v5017
    %v6840 = vunpack.c.l.b16 %v5019
    %v6841 = vunpack.c.l.b16 %v5021
    %v6842 = vunpack.c.l.b16 %v5023
    %v6843 = vunpack.c.l.b16 %v5025
    %v6844 = vunpack.c.l.b16 %v5027
    %v6845 = vunpack.c.l.b16 %v5029
    %v6846 = vpack.c.b16 %v6840, %v6839
    %v6847 = vpack.c.b16 %v6842, %v6841
    %v6848 = vpack.c.b16 %v6844, %v6843
    %v6849 = vpack.c.b16 %v6845, %v6845
    %v6854 = vsel %vm5622, %v6835, 0
    %v6857 = vsel %vm5622, %v6836, 0
    %v6860 = vsel %vm5622, %v6837, 0
    %v6863 = vsel %vm5622, %v6838, 0
    %v6866 = vsel %vm603, %v6849, 0
    %6868 = vmatpush.bf16.msra.mxu0 0
    %6869 = vmatpush.bf16.msra.mxu0 0
    %6870 = vmatpush.bf16.msra.mxu0 0
    %6871 = vmatpush.bf16.msra.mxu0 0
    %6872 = vmatpush.bf16.msra.mxu0 %v6866
    %6873 = vmatpush.bf16.msra.mxu0 %v6848
    %6874 = vmatpush.bf16.msra.mxu0 %v6847
    %6875 = vmatpush.bf16.msra.mxu0 %v6846
    %6876 = vmatmul.bf16.gmra.mxu0 %v6854
    %v6877 = vpop.f32.mrf.mxu0
    %v6878 = vadd.f32 0.0, %v6877
    %v6879 = vpop.f32.mrf.mxu0
    %v6880 = vadd.f32 0.0, %v6879
    %6881 = vmatmul.bf16.gmra.mxu0 %v6857
    %v6882 = vpop.f32.mrf.mxu0
    %v6883 = vadd.f32 0.0, %v6882
    %v6884 = vpop.f32.mrf.mxu0
    %v6885 = vadd.f32 0.0, %v6884
    %6886 = vmatmul.bf16.gmra.mxu0 %v6860
    %v6887 = vpop.f32.mrf.mxu0
    %v6888 = vadd.f32 0.0, %v6887
    %v6889 = vpop.f32.mrf.mxu0
    %v6890 = vadd.f32 0.0, %v6889
    %6891 = vmatmul.bf16.gmra.mxu0 %v6863
    %v6892 = vpop.f32.mrf.mxu0
    %v6893 = vadd.f32 0.0, %v6892
    %v6894 = vpop.f32.mrf.mxu0
    %6895 = vdwg.mxu0
    %6903 = vrot.lane.b32.xlu0 %v6428, 32
    %v6904 = vpop.permute.xlu0 %6903
    %6905 = vrot.lane.b32.xlu0 %v6430, 32
    %v6906 = vpop.permute.xlu0 %6905
    %6907 = vrot.lane.b32.xlu0 %v6433, 32
    %v6908 = vpop.permute.xlu0 %6907
    %6909 = vrot.lane.b32.xlu0 %v6435, 32
    %v6910 = vpop.permute.xlu0 %6909
    %6911 = vrot.lane.b32.xlu0 %v6438, 32
    %v6912 = vpop.permute.xlu0 %6911
    %6913 = vrot.lane.b32.xlu0 %v6440, 32
    %v6914 = vpop.permute.xlu0 %6913
    %6915 = vrot.lane.b32.xlu0 %v6443, 32
    %v6916 = vpop.permute.xlu0 %6915
    %6931 = vrot.lane.b32.xlu0 %v6503, 64
    %v6932 = vpop.permute.xlu0 %6931
    %6933 = vrot.lane.b32.xlu0 %v6505, 64
    %v6934 = vpop.permute.xlu0 %6933
    %6935 = vrot.lane.b32.xlu0 %v6508, 64
    %v6936 = vpop.permute.xlu0 %6935
    %6937 = vrot.lane.b32.xlu0 %v6510, 64
    %v6938 = vpop.permute.xlu0 %6937
    %6939 = vrot.lane.b32.xlu0 %v6513, 64
    %v6940 = vpop.permute.xlu0 %6939
    %6941 = vrot.lane.b32.xlu0 %v6515, 64
    %v6942 = vpop.permute.xlu0 %6941
    %6943 = vrot.lane.b32.xlu0 %v6518, 64
    %v6944 = vpop.permute.xlu0 %6943
    %6959 = vrot.lane.b32.xlu0 %v6578, 96
    %v6960 = vpop.permute.xlu0 %6959
    %6961 = vrot.lane.b32.xlu0 %v6580, 96
    %v6962 = vpop.permute.xlu0 %6961
    %6963 = vrot.lane.b32.xlu0 %v6583, 96
    %v6964 = vpop.permute.xlu0 %6963
    %6965 = vrot.lane.b32.xlu0 %v6585, 96
    %v6966 = vpop.permute.xlu0 %6965
    %6967 = vrot.lane.b32.xlu0 %v6588, 96
    %v6968 = vpop.permute.xlu0 %6967
    %6969 = vrot.lane.b32.xlu0 %v6590, 96
    %v6970 = vpop.permute.xlu0 %6969
    %6971 = vrot.lane.b32.xlu0 %v6593, 96
    %v6972 = vpop.permute.xlu0 %6971
    %v6980 = vsel %vm984, %v6353, %v6904
    %v6981 = vsel %vm984, %v6355, %v6906
    %v6982 = vsel %vm984, %v6358, %v6908
    %v6983 = vsel %vm984, %v6360, %v6910
    %v6984 = vsel %vm984, %v6363, %v6912
    %v6985 = vsel %vm984, %v6365, %v6914
    %v6986 = vsel %vm984, %v6368, %v6916
    %v6987 = vsel %vm265, %v6980, %v6932
    %v6988 = vsel %vm265, %v6981, %v6934
    %v6989 = vsel %vm265, %v6982, %v6936
    %v6990 = vsel %vm265, %v6983, %v6938
    %v6991 = vsel %vm265, %v6984, %v6940
    %v6992 = vsel %vm265, %v6985, %v6942
    %v6993 = vsel %vm265, %v6986, %v6944
    %v6994 = vsel %vm1023, %v6987, %v6960
    %v6995 = vsel %vm1023, %v6988, %v6962
    %v6996 = vsel %vm1023, %v6989, %v6964
    %v6997 = vsel %vm1023, %v6990, %v6966
    %v6998 = vsel %vm1023, %v6991, %v6968
    %v6999 = vsel %vm1023, %v6992, %v6970
    %v7000 = vsel %vm1023, %v6993, %v6972
    %7008 = vrot.lane.b32.xlu0 %v6728, 32
    %v7009 = vpop.permute.xlu0 %7008
    %7010 = vrot.lane.b32.xlu0 %v6730, 32
    %v7011 = vpop.permute.xlu0 %7010
    %7012 = vrot.lane.b32.xlu0 %v6733, 32
    %v7013 = vpop.permute.xlu0 %7012
    %7014 = vrot.lane.b32.xlu0 %v6735, 32
    %v7015 = vpop.permute.xlu0 %7014
    %7016 = vrot.lane.b32.xlu0 %v6738, 32
    %v7017 = vpop.permute.xlu0 %7016
    %7018 = vrot.lane.b32.xlu0 %v6740, 32
    %v7019 = vpop.permute.xlu0 %7018
    %7020 = vrot.lane.b32.xlu0 %v6743, 32
    %v7021 = vpop.permute.xlu0 %7020
    %7036 = vrot.lane.b32.xlu0 %v6803, 64
    %v7037 = vpop.permute.xlu0 %7036
    %7038 = vrot.lane.b32.xlu0 %v6805, 64
    %v7039 = vpop.permute.xlu0 %7038
    %7040 = vrot.lane.b32.xlu0 %v6808, 64
    %v7041 = vpop.permute.xlu0 %7040
    %7042 = vrot.lane.b32.xlu0 %v6810, 64
    %v7043 = vpop.permute.xlu0 %7042
    %7044 = vrot.lane.b32.xlu0 %v6813, 64
    %v7045 = vpop.permute.xlu0 %7044
    %7046 = vrot.lane.b32.xlu0 %v6815, 64
    %v7047 = vpop.permute.xlu0 %7046
    %7048 = vrot.lane.b32.xlu0 %v6818, 64
    %v7049 = vpop.permute.xlu0 %7048
    %7064 = vrot.lane.b32.xlu0 %v6878, 96
    %v7065 = vpop.permute.xlu0 %7064
    %7066 = vrot.lane.b32.xlu0 %v6880, 96
    %v7067 = vpop.permute.xlu0 %7066
    %7068 = vrot.lane.b32.xlu0 %v6883, 96
    %v7069 = vpop.permute.xlu0 %7068
    %7070 = vrot.lane.b32.xlu0 %v6885, 96
    %v7071 = vpop.permute.xlu0 %7070
    %7072 = vrot.lane.b32.xlu0 %v6888, 96
    %v7073 = vpop.permute.xlu0 %7072
    %7074 = vrot.lane.b32.xlu0 %v6890, 96
    %v7075 = vpop.permute.xlu0 %7074
    %7076 = vrot.lane.b32.xlu0 %v6893, 96
    %v7077 = vpop.permute.xlu0 %7076
    %v7085 = vsel %vm984, %v6653, %v7009
    %v7086 = vsel %vm984, %v6655, %v7011
    %v7087 = vsel %vm984, %v6658, %v7013
    %v7088 = vsel %vm984, %v6660, %v7015
    %v7089 = vsel %vm984, %v6663, %v7017
    %v7090 = vsel %vm984, %v6665, %v7019
    %v7091 = vsel %vm984, %v6668, %v7021
    %v7092 = vsel %vm265, %v7085, %v7037
    %v7093 = vsel %vm265, %v7086, %v7039
    %v7094 = vsel %vm265, %v7087, %v7041
    %v7095 = vsel %vm265, %v7088, %v7043
    %v7096 = vsel %vm265, %v7089, %v7045
    %v7097 = vsel %vm265, %v7090, %v7047
    %v7098 = vsel %vm265, %v7091, %v7049
    %v7099 = vsel %vm1023, %v7092, %v7065
    %v7100 = vsel %vm1023, %v7093, %v7067
    %v7101 = vsel %vm1023, %v7094, %v7069
    %v7102 = vsel %vm1023, %v7095, %v7071
    %v7103 = vsel %vm1023, %v7096, %v7073
    %v7104 = vsel %vm1023, %v7097, %v7075
    %v7105 = vsel %vm1023, %v7098, %v7077
    %v7113 = vrot.slane %v7099, 6
    %v7114 = vrot.slane %v7100, 6
    %v7115 = vsel %vm355, %v7113, %v7114
    %v7116 = vrot.slane %v7101, 6
    %v7117 = vsel %vm355, %v7114, %v7116
    %v7118 = vrot.slane %v7102, 6
    %v7119 = vsel %vm355, %v7116, %v7118
    %v7120 = vrot.slane %v7103, 6
    %v7121 = vsel %vm355, %v7118, %v7120
    %v7122 = vrot.slane %v7104, 6
    %v7123 = vsel %vm355, %v7120, %v7122
    %v7124 = vrot.slane %v7105, 6
    %v7125 = vsel %vm355, %v7122, %v7124
    %v7133 = vsel %vm355, %v7000, %v7113
    %v7134 = vpack.c.bf16 %v6995, %v6994
    %v7135 = vpack.c.bf16 %v6997, %v6996
    %v7136 = vpack.c.bf16 %v6999, %v6998
    %v7137 = vpack.c.bf16 %v7115, %v7133
    %v7138 = vpack.c.bf16 %v7119, %v7117
    %v7139 = vpack.c.bf16 %v7123, %v7121
    %v7140 = vpack.c.bf16 %v7125, %v7125
    %v7141 = vld [vmem:[%s10] sm:$0xf]
    %v7142 = vld [vmem:[%s10 + $0x4] sm:$0xf]
    %v7143 = vld [vmem:[%s10 + $0x8] sm:$0xf]
    %v7144 = vld [vmem:[%s10 + $0xc] sm:$0xf]
    %v7145 = vld [vmem:[%s10 + $0x10] sm:$0xf]
    %v7146 = vld [vmem:[%s10 + $0x14] sm:$0xf]
    %v7147 = vld [vmem:[%s10 + $0x18] sm:$0xf]
    %v7148 = vld [vmem:[%s10 + $0x1c] sm:$0xf]
    %v7149 = vld [vmem:[%s10 + $0x20] sm:$0xf]
    %v7150 = vld [vmem:[%s10 + $0x24] sm:$0xf]
    %v7151 = vld [vmem:[%s10 + $0x28] sm:$0xf]
    %v7152 = vld [vmem:[%s10 + $0x2c] sm:$0xf]
    %v7153 = vld [vmem:[%s10 + $0x30] sm:$0xf]
    %v7154 = vld [vmem:[%s10 + $0x34] sm:$0xf]
    %v7155 = vld [vmem:[%s10 + $0x38] sm:$0xf]
    %v7156 = vld [vmem:[%s10 + $0x3c] sm:$0xf]
    %v7157 = vld [vmem:[%s11] sm:$0x1]
    %v7159 = vperm.slane %v7157, 0
    %v7177 = vunpack.c.l.b16 %v7141
    %v7178 = vunpack.c.l.b16 %v7142
    %v7179 = vunpack.c.l.b16 %v7143
    %v7180 = vunpack.c.l.b16 %v7144
    %v7181 = vunpack.c.l.b16 %v7145
    %v7182 = vunpack.c.l.b16 %v7146
    %v7183 = vunpack.c.l.b16 %v7147
    %v7184 = vunpack.c.l.b16 %v7148
    %v7185 = vunpack.c.l.b16 %v7149
    %v7186 = vunpack.c.l.b16 %v7150
    %v7187 = vunpack.c.l.b16 %v7151
    %v7188 = vunpack.c.l.b16 %v7152
    %v7189 = vunpack.c.l.b16 %v7153
    %v7190 = vunpack.c.l.b16 %v7154
    %v7191 = vunpack.c.l.b16 %v7155
    %v7192 = vunpack.c.l.b16 %v7156
    %v7193 = vpack.c.b16 %v7178, %v7177
    %v7194 = vpack.c.b16 %v7180, %v7179
    %v7195 = vpack.c.b16 %v7182, %v7181
    %v7196 = vpack.c.b16 %v7184, %v7183
    %v7197 = vpack.c.b16 %v7186, %v7185
    %v7198 = vpack.c.b16 %v7188, %v7187
    %v7199 = vpack.c.b16 %v7190, %v7189
    %v7200 = vpack.c.b16 %v7192, %v7191
    %7209 = vmatpush.bf16.msra.mxu0 %v7200
    %7210 = vmatpush.bf16.msra.mxu0 %v7199
    %7211 = vmatpush.bf16.msra.mxu0 %v7198
    %7212 = vmatpush.bf16.msra.mxu0 %v7197
    %7213 = vmatpush.bf16.msra.mxu0 %v7196
    %7214 = vmatpush.bf16.msra.mxu0 %v7195
    %7215 = vmatpush.bf16.msra.mxu0 %v7194
    %7216 = vmatpush.bf16.msra.mxu0 %v7193
    %7217 = vmatmul.bf16.gmra.mxu0 %v7134
    %v7218 = vpop.f32.mrf.mxu0
    %v7219 = vadd.f32 %v7159, %v7218
    %v7220 = vpop.f32.mrf.mxu0
    %v7221 = vadd.f32 %v7159, %v7220
    %7222 = vmatmul.bf16.gmra.mxu0 %v7135
    %v7223 = vpop.f32.mrf.mxu0
    %v7224 = vadd.f32 %v7159, %v7223
    %v7225 = vpop.f32.mrf.mxu0
    %v7226 = vadd.f32 %v7159, %v7225
    %7227 = vmatmul.bf16.gmra.mxu0 %v7136
    %v7228 = vpop.f32.mrf.mxu0
    %v7229 = vadd.f32 %v7159, %v7228
    %v7230 = vpop.f32.mrf.mxu0
    %v7231 = vadd.f32 %v7159, %v7230
    %7232 = vmatmul.bf16.gmra.mxu0 %v7137
    %v7233 = vpop.f32.mrf.mxu0
    %v7234 = vadd.f32 %v7159, %v7233
    %v7235 = vpop.f32.mrf.mxu0
    %v7236 = vadd.f32 %v7159, %v7235
    %7237 = vmatmul.bf16.gmra.mxu0 %v7138
    %v7238 = vpop.f32.mrf.mxu0
    %v7239 = vadd.f32 %v7159, %v7238
    %v7240 = vpop.f32.mrf.mxu0
    %v7241 = vadd.f32 %v7159, %v7240
    %7242 = vmatmul.bf16.gmra.mxu0 %v7139
    %v7243 = vpop.f32.mrf.mxu0
    %v7244 = vadd.f32 %v7159, %v7243
    %v7245 = vpop.f32.mrf.mxu0
    %v7246 = vadd.f32 %v7159, %v7245
    %7247 = vmatmul.bf16.gmra.mxu0 %v7140
    %v7248 = vpop.f32.mrf.mxu0
    %v7249 = vadd.f32 %v7159, %v7248
    %v7250 = vpop.f32.mrf.mxu0
    %7251 = vdwg.mxu0
    %v7252 = vadd.f32 %v7219, %v7221
    %v7253 = vadd.f32 %v7252, %v7224
    %v7254 = vadd.f32 %v7253, %v7226
    %v7255 = vadd.f32 %v7254, %v7229
    %v7256 = vadd.f32 %v7255, %v7231
    %v7257 = vsel %vm355, %v7234, 0.0
    %v7258 = vadd.f32 %v7256, %v7257
    %v7259 = vrot.slane %v7258, 4
    %v7260 = vadd.f32 %v7258, %v7259
    %v7261 = vrot.slane %v7260, 2
    %v7262 = vadd.f32 %v7260, %v7261
    %v7263 = vrot.slane %v7262, 1
    %v7264 = vadd.f32 %v7262, %v7263
    %v7272 = vrot.slane %v7234, 2
    %v7273 = vrot.slane %v7236, 2
    %v7274 = vsel %vm508, %v7272, %v7273
    %v7275 = vrot.slane %v7239, 2
    %v7276 = vsel %vm508, %v7273, %v7275
    %v7277 = vrot.slane %v7241, 2
    %v7278 = vsel %vm508, %v7275, %v7277
    %v7279 = vrot.slane %v7244, 2
    %v7280 = vsel %vm508, %v7277, %v7279
    %v7281 = vrot.slane %v7246, 2
    %v7282 = vsel %vm508, %v7279, %v7281
    %v7283 = vrot.slane %v7249, 2
    %v7284 = vsel %vm508, %v7281, %v7283
    %v7292 = vadd.f32 %v7274, %v7276
    %v7293 = vadd.f32 %v7292, %v7278
    %v7294 = vadd.f32 %v7293, %v7280
    %v7295 = vadd.f32 %v7294, %v7282
    %v7296 = vadd.f32 %v7295, %v7284
    %v7297 = vsel %vm355, %v7283, 0.0
    %v7298 = vadd.f32 %v7296, %v7297
    %v7299 = vrot.slane %v7298, 4
    %v7300 = vadd.f32 %v7298, %v7299
    %v7301 = vrot.slane %v7300, 2
    %v7302 = vadd.f32 %v7300, %v7301
    %v7303 = vrot.slane %v7302, 1
    %v7304 = vadd.f32 %v7302, %v7303
    %v7305 = vsel %vm603, %v7264, %v7304
    %v7306 = vpack.c.bf16 %v7305, %v7305
    %v7307 = vld [vmem:[%s12] sm:$0xf]
    %v7308 = vld [vmem:[%s12 + $0x4] sm:$0xf]
    %v7309 = vld [vmem:[%s12 + $0x8] sm:$0xf]
    %v7310 = vld [vmem:[%s12 + $0xc] sm:$0xf]
    %v7311 = vld [vmem:[%s12 + $0x10] sm:$0xf]
    %v7312 = vld [vmem:[%s12 + $0x14] sm:$0xf]
    %v7313 = vld [vmem:[%s12 + $0x18] sm:$0xf]
    %v7314 = vld [vmem:[%s12 + $0x1c] sm:$0xf]
    %v7315 = vld [vmem:[%s12 + $0x20] sm:$0xf]
    %v7316 = vld [vmem:[%s12 + $0x24] sm:$0xf]
    %v7317 = vld [vmem:[%s12 + $0x28] sm:$0xf]
    %v7318 = vld [vmem:[%s12 + $0x2c] sm:$0xf]
    %v7319 = vld [vmem:[%s12 + $0x30] sm:$0xf]
    %v7320 = vld [vmem:[%s12 + $0x34] sm:$0xf]
    %v7321 = vld [vmem:[%s12 + $0x38] sm:$0xf]
    %v7322 = vld [vmem:[%s12 + $0x3c] sm:$0xf]
    %v7323 = vld [vmem:[%s13] sm:$0x1]
    %v7325 = vperm.slane %v7323, 0
    %v7343 = vunpack.c.l.b16 %v7307
    %v7344 = vunpack.c.l.b16 %v7308
    %v7345 = vunpack.c.l.b16 %v7309
    %v7346 = vunpack.c.l.b16 %v7310
    %v7347 = vunpack.c.l.b16 %v7311
    %v7348 = vunpack.c.l.b16 %v7312
    %v7349 = vunpack.c.l.b16 %v7313
    %v7350 = vunpack.c.l.b16 %v7314
    %v7351 = vunpack.c.l.b16 %v7315
    %v7352 = vunpack.c.l.b16 %v7316
    %v7353 = vunpack.c.l.b16 %v7317
    %v7354 = vunpack.c.l.b16 %v7318
    %v7355 = vunpack.c.l.b16 %v7319
    %v7356 = vunpack.c.l.b16 %v7320
    %v7357 = vunpack.c.l.b16 %v7321
    %v7358 = vunpack.c.l.b16 %v7322
    %v7359 = vpack.c.b16 %v7344, %v7343
    %v7360 = vpack.c.b16 %v7346, %v7345
    %v7361 = vpack.c.b16 %v7348, %v7347
    %v7362 = vpack.c.b16 %v7350, %v7349
    %v7363 = vpack.c.b16 %v7352, %v7351
    %v7364 = vpack.c.b16 %v7354, %v7353
    %v7365 = vpack.c.b16 %v7356, %v7355
    %v7366 = vpack.c.b16 %v7358, %v7357
    %7375 = vmatpush.bf16.msra.mxu0 %v7366
    %7376 = vmatpush.bf16.msra.mxu0 %v7365
    %7377 = vmatpush.bf16.msra.mxu0 %v7364
    %7378 = vmatpush.bf16.msra.mxu0 %v7363
    %7379 = vmatpush.bf16.msra.mxu0 %v7362
    %7380 = vmatpush.bf16.msra.mxu0 %v7361
    %7381 = vmatpush.bf16.msra.mxu0 %v7360
    %7382 = vmatpush.bf16.msra.mxu0 %v7359
    %7383 = vmatmul.bf16.gmra.mxu0 %v7306
    %v7384 = vpop.f32.mrf.mxu0
    %v7385 = vadd.f32 %v7325, %v7384
    %v7386 = vpop.f32.mrf.mxu0
    %7387 = vdwg.mxu0
    %7388 = vst [vmem:[#allocation11] sm:$0x3] %v7385
    // Predicated region
    $region78: #{forward.1} parent=1 // pred_check
      _
    $region79: #{forward.1} parent=1 // pred_check_branch
      %7390 = sbr.rel (0) target = $region81
    $region80: #{forward.1} parent=1 // pred_region
      %7392 = vsyncadd [#allocation4], 0
      %s7394 = sshll.u32 [#allocation11], 4
      %s7395 = int_to_ptr.vmem [resolvable:$true] %s7394
      %s7396 = sshll.u32 %s14, 4
      %s7397 = int_to_ptr.hbm [resolvable:$true] %s7396
      %7399 = dma.vmem_to_hbm [thread:$0]  %s7395, 32, %s7397, [#allocation4]
    $region81: #{forward.1} parent=1 // pred_fallthru
      _
    // Predicated region
    $region82: #{forward.1} parent=1 // pred_check
      _
    $region83: #{forward.1} parent=1 // pred_check_branch
      %7401 = sbr.rel (0) target = $region85
    $region84: #{forward.1} parent=1 // pred_region
      %7403 = dma.done [#allocation4], 32
    $region85: #{forward.1} parent=1 // pred_fallthru
      _
    %7404 = vsyncpa [#allocation3], 1
    %7405 = vsyncpa [#allocation6], 1
    %7406 = vsyncpa [#allocation9], 1
    %7407 = vsyncpa [#allocation4], 1

</llo_original>
